<compile_context>
chip_gen: v7x
topology: tpu7x:2x2x1
jax: 0.10.0
libtpu: 0.0.40
codegen_flags: <defaults>
</compile_context>

<pallas_src>
import functools

import jax
import jax.numpy as jnp
from jax.experimental import pallas as pl
from jax.experimental.pallas import tpu as pltpu


def _row_interleave(arrs):
    """arrs: list of s arrays of shape (R, C) -> (R*s, C), out[r*s + j] = arrs[j][r]."""
    s = len(arrs)
    if s == 1:
        return arrs[0]
    r, c = arrs[0].shape
    return jnp.stack(arrs, axis=1).reshape(r * s, c)


def _pixel_shuffle3d_kernel(x_ref, o_ref, *, scale, d_blk, h, w):
    """x_ref: (1, s**3, d_blk, H, W); o_ref: (1, d_blk, s, H*s, W*s).

    For each sd (unrolled, s is tiny), build the (d_blk, H*s, W*s) slab
        out[d, hh*s+sh, ww*s+sw] = x[sd*s**2 + sh*s + sw, d, hh, ww]
    using sublane interleaves + 2-D (XLU) transposes batched over the whole
    depth chunk, then store it lane-dense at o_ref[0, :, sd].
    """
    s = scale
    for sd in range(s):
        cols = []
        for sw in range(s):
            # Sublane interleave over sh on the flattened (d_blk*H, W) slab:
            #   m[(d*H + hh)*s + sh, ww] = x[sd*s**2 + sh*s + sw, d, hh, ww]
            planes = [x_ref[0, sd * s * s + sh * s + sw].reshape(d_blk * h, w)
                      for sh in range(s)]
            m = _row_interleave(planes)             # (d_blk*H*s, W)
            cols.append(m.T)                        # (W, d_blk*H*s), XLU transpose
        # Sublane interleave over sw:
        #   z[ww*s + sw, d*H*s + hh*s + sh] = x[sd*s**2 + sh*s + sw, d, hh, ww]
        z = _row_interleave(cols)                   # (W*s, d_blk*H*s)
        out = z.T.reshape(d_blk, h * s, w * s)      # (d_blk, H*s, W*s), lane-dense
        o_ref[0, :, sd] = out


def _choose_d_blk(d, num_bc, bytes_per_depth,
                  target_bytes=1 << 20, cap_bytes=2 << 20, min_steps=8):
    """Largest divisor of `d` whose block stays under `cap_bytes`, stopping once
    blocks reach `target_bytes` or growing further would leave the software
    pipeline with too few grid steps (while blocks are already >= 128 KiB)."""
    best = 1
    for cand in range(2, d + 1):
        if d % cand:
            continue
        blk = cand * bytes_per_depth
        if blk > cap_bytes:
            break
        if num_bc * (d // cand) < min_steps and best * bytes_per_depth >= (128 << 10):
            break
        best = cand
        if blk >= target_bytes:
            break
    return best


def pixel_shuffle3d(x, scale):
    """x: (B, C, D, H, W) -> (B, C//scale**3, D*scale, H*scale, W*scale)."""
    s = scale
    B, C, D, H, W = x.shape
    assert C % (s ** 3) == 0
    n_out = C // (s ** 3)
    itemsize = jnp.dtype(x.dtype).itemsize

    # TODO(synk): for real shapes where (W*s) % 128 != 0, pad W in this wrapper so
    # the output stores stay lane-dense (avoids masked vst.msk partial stores).

    # Free row-major reshape: group the s**3 sub-channels of each output channel.
    xr = x.reshape(B * n_out, s ** 3, D, H, W)

    bytes_per_depth = (s ** 3) * H * W * itemsize       # per input depth, per (b, co)
    d_blk = _choose_d_blk(D, B * n_out, bytes_per_depth)

    kernel = functools.partial(
        _pixel_shuffle3d_kernel, scale=s, d_blk=d_blk, h=H, w=W)

    out5 = pl.pallas_call(
        kernel,
        out_shape=jax.ShapeDtypeStruct((B * n_out, D, s, H * s, W * s), x.dtype),
        grid_spec=pltpu.PrefetchScalarGridSpec(
            num_scalar_prefetch=0,
            grid=(B * n_out, D // d_blk),
            in_specs=[
                # All s**3 sub-channels for this (b, co) and a contiguous depth chunk.
                pl.BlockSpec((1, s ** 3, d_blk, H, W),
                             lambda bc, db: (bc, 0, db, 0, 0)),
            ],
            # One contiguous output chunk; the (D, s) merge happens in the wrapper.
            out_specs=pl.BlockSpec((1, d_blk, s, H * s, W * s),
                                   lambda bc, db: (bc, db, 0, 0, 0)),
        ),
        compiler_params=pltpu.CompilerParams(
            dimension_semantics=("parallel", "parallel")),
        cost_estimate=pl.CostEstimate(
            flops=0,
            transcendentals=0,
            bytes_accessed=2 * x.size * itemsize),
    )(xr)

    # Pure row-major reshapes (free): split B*n_out and merge the adjacent (D, s).
    return out5.reshape(B, n_out, D * s, H * s, W * s)


def _reference_pixel_shuffle3d(x, scale):
    """Pure-JAX mirror of the PyTorch module (view -> permute -> view)."""
    s = scale
    B, C, D, H, W = x.shape
    n_out = C // (s ** 3)
    v = x.reshape(B, n_out, s, s, s, D, H, W)
    v = jnp.transpose(v, (0, 1, 5, 2, 6, 3, 7, 4))
    return v.reshape(B, n_out, D * s, H * s, W * s)


if __name__ == "__main__":
    # Small shapes consistent with the module's forward.
    # W chosen so both the input lane dim (W=128) and the output lane dim
    # (W*scale=256) are fully lane-dense.
    scale = 2
    batch, channels, in_depth, in_height, in_width = 2, 16, 8, 8, 128

    key = jax.random.PRNGKey(0)
    x = jax.random.normal(
        key, (batch, channels, in_depth, in_height, in_width), jnp.float32)

    out = pixel_shuffle3d(x, scale)
    out = jax.block_until_ready(out)

    ref = _reference_pixel_shuffle3d(x, scale)
    assert out.shape == (batch, channels // scale ** 3,
                         in_depth * scale, in_height * scale, in_width * scale)
    assert jnp.array_equal(out, ref), "pixel shuffle mismatch vs. reference"

    print("KERNEL_OK")
</pallas_src>

<mosaic_0001>
module attributes {stable_mosaic.version = 11 : i64} {
  func.func @_pixel_shuffle3d_kernel(%arg0: i32, %arg1: i32, %arg2: memref<1x8x4x8x128xf32, #tpu.memory_space<vmem>>, %arg3: memref<1x4x2x16x256xf32, #tpu.memory_space<vmem>>) attributes {dimension_semantics = [#tpu.dimension_semantics<parallel>, #tpu.dimension_semantics<parallel>], iteration_bounds = array<i64: 4, 2>, scalar_prefetch = 0 : i64, scratch_operands = 0 : i64, tpu.core_type = #tpu.core_type<tc>, window_params = [{transform_indices = @transform_0, window_bounds = array<i64: 1, 8, 4, 8, 128>}, {transform_indices = @transform_1, window_bounds = array<i64: 1, 4, 2, 16, 256>}]} {
    %c0 = arith.constant 0 : index
    %c0_0 = arith.constant 0 : index
    %c0_1 = arith.constant 0 : index
    %c0_2 = arith.constant 0 : index
    %c0_3 = arith.constant 0 : index
    %0 = vector.load %arg2[%c0, %c0_0, %c0_1, %c0_2, %c0_3] : memref<1x8x4x8x128xf32, #tpu.memory_space<vmem>>, vector<1x1x4x8x128xf32>
    %1 = vector.shape_cast %0 : vector<1x1x4x8x128xf32> to vector<4x8x128xf32>
    %2 = vector.shape_cast %1 : vector<4x8x128xf32> to vector<32x128xf32>
    %c0_4 = arith.constant 0 : index
    %c2 = arith.constant 2 : index
    %c0_5 = arith.constant 0 : index
    %c0_6 = arith.constant 0 : index
    %c0_7 = arith.constant 0 : index
    %3 = vector.load %arg2[%c0_4, %c2, %c0_5, %c0_6, %c0_7] : memref<1x8x4x8x128xf32, #tpu.memory_space<vmem>>, vector<1x1x4x8x128xf32>
    %4 = vector.shape_cast %3 : vector<1x1x4x8x128xf32> to vector<4x8x128xf32>
    %5 = vector.shape_cast %4 : vector<4x8x128xf32> to vector<32x128xf32>
    %6 = vector.shape_cast %2 : vector<32x128xf32> to vector<32x1x128xf32>
    %7 = vector.shape_cast %5 : vector<32x128xf32> to vector<32x1x128xf32>
    %8 = tpu.concatenate %6, %7 in 1 : vector<32x1x128xf32>, vector<32x1x128xf32> -> vector<32x2x128xf32>
    %9 = vector.shape_cast %8 : vector<32x2x128xf32> to vector<64x128xf32>
    %10 = tpu.transpose %9, [1, 0] : vector<64x128xf32> -> vector<128x64xf32>
    %c0_8 = arith.constant 0 : index
    %c1 = arith.constant 1 : index
    %c0_9 = arith.constant 0 : index
    %c0_10 = arith.constant 0 : index
    %c0_11 = arith.constant 0 : index
    %11 = vector.load %arg2[%c0_8, %c1, %c0_9, %c0_10, %c0_11] : memref<1x8x4x8x128xf32, #tpu.memory_space<vmem>>, vector<1x1x4x8x128xf32>
    %12 = vector.shape_cast %11 : vector<1x1x4x8x128xf32> to vector<4x8x128xf32>
    %13 = vector.shape_cast %12 : vector<4x8x128xf32> to vector<32x128xf32>
    %c0_12 = arith.constant 0 : index
    %c3 = arith.constant 3 : index
    %c0_13 = arith.constant 0 : index
    %c0_14 = arith.constant 0 : index
    %c0_15 = arith.constant 0 : index
    %14 = vector.load %arg2[%c0_12, %c3, %c0_13, %c0_14, %c0_15] : memref<1x8x4x8x128xf32, #tpu.memory_space<vmem>>, vector<1x1x4x8x128xf32>
    %15 = vector.shape_cast %14 : vector<1x1x4x8x128xf32> to vector<4x8x128xf32>
    %16 = vector.shape_cast %15 : vector<4x8x128xf32> to vector<32x128xf32>
    %17 = vector.shape_cast %13 : vector<32x128xf32> to vector<32x1x128xf32>
    %18 = vector.shape_cast %16 : vector<32x128xf32> to vector<32x1x128xf32>
    %19 = tpu.concatenate %17, %18 in 1 : vector<32x1x128xf32>, vector<32x1x128xf32> -> vector<32x2x128xf32>
    %20 = vector.shape_cast %19 : vector<32x2x128xf32> to vector<64x128xf32>
    %21 = tpu.transpose %20, [1, 0] : vector<64x128xf32> -> vector<128x64xf32>
    %22 = vector.shape_cast %10 : vector<128x64xf32> to vector<128x1x64xf32>
    %23 = vector.shape_cast %21 : vector<128x64xf32> to vector<128x1x64xf32>
    %24 = tpu.concatenate %22, %23 in 1 : vector<128x1x64xf32>, vector<128x1x64xf32> -> vector<128x2x64xf32>
    %25 = vector.shape_cast %24 : vector<128x2x64xf32> to vector<256x64xf32>
    %26 = tpu.transpose %25, [1, 0] : vector<256x64xf32> -> vector<64x256xf32>
    %27 = vector.shape_cast %26 : vector<64x256xf32> to vector<4x16x256xf32>
    %c0_16 = arith.constant 0 : index
    %c0_17 = arith.constant 0 : index
    %c0_18 = arith.constant 0 : index
    %c0_19 = arith.constant 0 : index
    %c0_20 = arith.constant 0 : index
    %28 = vector.load %arg3[%c0_16, %c0_17, %c0_18, %c0_19, %c0_20] : memref<1x4x2x16x256xf32, #tpu.memory_space<vmem>>, vector<1x4x1x16x256xf32>
    %29 = vector.shape_cast %28 : vector<1x4x1x16x256xf32> to vector<4x16x256xf32>
    %30 = vector.shape_cast %27 : vector<4x16x256xf32> to vector<1x4x1x16x256xf32>
    tpu.vector_store %arg3[%c0_16, %c0_17, %c0_18, %c0_19, %c0_20], %30 {strides = array<i32>} : memref<1x4x2x16x256xf32, #tpu.memory_space<vmem>>, vector<1x4x1x16x256xf32>,
    %c0_21 = arith.constant 0 : index
    %c4 = arith.constant 4 : index
    %c0_22 = arith.constant 0 : index
    %c0_23 = arith.constant 0 : index
    %c0_24 = arith.constant 0 : index
    %31 = vector.load %arg2[%c0_21, %c4, %c0_22, %c0_23, %c0_24] : memref<1x8x4x8x128xf32, #tpu.memory_space<vmem>>, vector<1x1x4x8x128xf32>
    %32 = vector.shape_cast %31 : vector<1x1x4x8x128xf32> to vector<4x8x128xf32>
    %33 = vector.shape_cast %32 : vector<4x8x128xf32> to vector<32x128xf32>
    %c0_25 = arith.constant 0 : index
    %c6 = arith.constant 6 : index
    %c0_26 = arith.constant 0 : index
    %c0_27 = arith.constant 0 : index
    %c0_28 = arith.constant 0 : index
    %34 = vector.load %arg2[%c0_25, %c6, %c0_26, %c0_27, %c0_28] : memref<1x8x4x8x128xf32, #tpu.memory_space<vmem>>, vector<1x1x4x8x128xf32>
    %35 = vector.shape_cast %34 : vector<1x1x4x8x128xf32> to vector<4x8x128xf32>
    %36 = vector.shape_cast %35 : vector<4x8x128xf32> to vector<32x128xf32>
    %37 = vector.shape_cast %33 : vector<32x128xf32> to vector<32x1x128xf32>
    %38 = vector.shape_cast %36 : vector<32x128xf32> to vector<32x1x128xf32>
    %39 = tpu.concatenate %37, %38 in 1 : vector<32x1x128xf32>, vector<32x1x128xf32> -> vector<32x2x128xf32>
    %40 = vector.shape_cast %39 : vector<32x2x128xf32> to vector<64x128xf32>
    %41 = tpu.transpose %40, [1, 0] : vector<64x128xf32> -> vector<128x64xf32>
    %c0_29 = arith.constant 0 : index
    %c5 = arith.constant 5 : index
    %c0_30 = arith.constant 0 : index
    %c0_31 = arith.constant 0 : index
    %c0_32 = arith.constant 0 : index
    %42 = vector.load %arg2[%c0_29, %c5, %c0_30, %c0_31, %c0_32] : memref<1x8x4x8x128xf32, #tpu.memory_space<vmem>>, vector<1x1x4x8x128xf32>
    %43 = vector.shape_cast %42 : vector<1x1x4x8x128xf32> to vector<4x8x128xf32>
    %44 = vector.shape_cast %43 : vector<4x8x128xf32> to vector<32x128xf32>
    %c0_33 = arith.constant 0 : index
    %c7 = arith.constant 7 : index
    %c0_34 = arith.constant 0 : index
    %c0_35 = arith.constant 0 : index
    %c0_36 = arith.constant 0 : index
    %45 = vector.load %arg2[%c0_33, %c7, %c0_34, %c0_35, %c0_36] : memref<1x8x4x8x128xf32, #tpu.memory_space<vmem>>, vector<1x1x4x8x128xf32>
    %46 = vector.shape_cast %45 : vector<1x1x4x8x128xf32> to vector<4x8x128xf32>
    %47 = vector.shape_cast %46 : vector<4x8x128xf32> to vector<32x128xf32>
    %48 = vector.shape_cast %44 : vector<32x128xf32> to vector<32x1x128xf32>
    %49 = vector.shape_cast %47 : vector<32x128xf32> to vector<32x1x128xf32>
    %50 = tpu.concatenate %48, %49 in 1 : vector<32x1x128xf32>, vector<32x1x128xf32> -> vector<32x2x128xf32>
    %51 = vector.shape_cast %50 : vector<32x2x128xf32> to vector<64x128xf32>
    %52 = tpu.transpose %51, [1, 0] : vector<64x128xf32> -> vector<128x64xf32>
    %53 = vector.shape_cast %41 : vector<128x64xf32> to vector<128x1x64xf32>
    %54 = vector.shape_cast %52 : vector<128x64xf32> to vector<128x1x64xf32>
    %55 = tpu.concatenate %53, %54 in 1 : vector<128x1x64xf32>, vector<128x1x64xf32> -> vector<128x2x64xf32>
    %56 = vector.shape_cast %55 : vector<128x2x64xf32> to vector<256x64xf32>
    %57 = tpu.transpose %56, [1, 0] : vector<256x64xf32> -> vector<64x256xf32>
    %58 = vector.shape_cast %57 : vector<64x256xf32> to vector<4x16x256xf32>
    %c0_37 = arith.constant 0 : index
    %c0_38 = arith.constant 0 : index
    %c1_39 = arith.constant 1 : index
    %c0_40 = arith.constant 0 : index
    %c0_41 = arith.constant 0 : index
    %59 = vector.load %arg3[%c0_37, %c0_38, %c1_39, %c0_40, %c0_41] : memref<1x4x2x16x256xf32, #tpu.memory_space<vmem>>, vector<1x4x1x16x256xf32>
    %60 = vector.shape_cast %59 : vector<1x4x1x16x256xf32> to vector<4x16x256xf32>
    %61 = vector.shape_cast %58 : vector<4x16x256xf32> to vector<1x4x1x16x256xf32>
    tpu.vector_store %arg3[%c0_37, %c0_38, %c1_39, %c0_40, %c0_41], %61 {strides = array<i32>} : memref<1x4x2x16x256xf32, #tpu.memory_space<vmem>>, vector<1x4x1x16x256xf32>,
    return
  }
  func.func @transform_0(%arg0: i32, %arg1: i32) -> (i32, i32, i32, i32, i32) {
    %c0_i32 = arith.constant 0 : i32
    %c0_i32_0 = arith.constant 0 : i32
    %c0_i32_1 = arith.constant 0 : i32
    %c0_i32_2 = arith.constant 0 : i32
    return %arg0, %c0_i32, %arg1, %c0_i32_0, %c0_i32_1 : i32, i32, i32, i32, i32
  }
  func.func @transform_1(%arg0: i32, %arg1: i32) -> (i32, i32, i32, i32, i32) {
    %c0_i32 = arith.constant 0 : i32
    %c0_i32_0 = arith.constant 0 : i32
    %c0_i32_1 = arith.constant 0 : i32
    %c0_i32_2 = arith.constant 0 : i32
    return %arg0, %arg1, %c0_i32, %c0_i32_0, %c0_i32_1 : i32, i32, i32, i32, i32
  }
}

</mosaic_0001>

<llo_original>
// kernel: tpu_custom_call.1
$region0: #{tpu_custom_call.1}
  #allocation0 [shape = 'u32[]', space=smem, size = 0x4, offset = 0x4, fixed_abs, tag = 'smem constant byte address 0x4 - core index']
  #allocation1 [shape = 'u32[144,128]{1,0:T(1,128)}', space=vmem, size = 0x12000, scoped, tag = 'internal scratch']
  #allocation6 [shape = 's32[]', space=sflag, size = 0x4, offset = 0, fixed_abs, tag = 'sflag constant byte address 0x0 - dummy sync flag']
  %s0 = inlined_call_operand.hbm [shape: f32[4,8,8,8,128], index: 0, kind: input, shape index: {}]
  %s1 = inlined_call_operand.hbm [shape: f32[4,8,2,16,256], index: 1, kind: output, shape index: {}]
  %s2 = sld [smem:[#allocation0]]
  $region41: #{tpu_custom_call.1} parent=0
    _
  %s4 = ssub.s32 1, %s2
  %s5 = scalar_select 0, %s4, %s2
  $region1: #{tpu_custom_call.1} parent=0
    #allocation2 [shape = 'u8[262144]{0}', space=vmem, size = 0x40000, scoped, tag = 'input window, operand 0']
    #allocation3 [shape = 's32[2]{0}', space=sflag, size = 0x8, scoped, tag = 'scoped memory for tpu_custom_call.1']
    #allocation4 [shape = 's32[2]{0}', space=sflag, size = 0x8, scoped, tag = 'scoped memory for tpu_custom_call.1']
    #allocation5 [shape = 'u8[262144]{0}', space=vmem, size = 0x40000, scoped, tag = 'output window, operand 0']
    %6 = vsyncpa [#allocation3], 0
    %s7 = scalar_lea.sflag [#allocation3], 1
    %8 = vsyncpa %s7, 0
    %9 = vsyncpa [#allocation4], 0
    %s10 = scalar_lea.sflag [#allocation4], 1
    %11 = vsyncpa %s10, 0
    loop: start=0, step=1, limit=10
    $region2: #{tpu_custom_call.1} parent=1 // loop_pre_header
      _
    $region3: #{tpu_custom_call.1} parent=1 // loop_header
      %s13 = sphi 0, %s17
      %p14 = scmp.ge.s32.totalorder %s13, 10
      %s20 = sphi 0, %s32
      %s21 = sphi 0, %s28
      %s22 = sphi 0, %s20
      %s23 = sphi 0, %s21
      %s24 = sphi 0, %s22
      %s25 = sphi 0, %s23
      %s37 = sphi 0, %s39
      %s40 = sphi 0, %s37
      %s41 = sphi 0, %s40
      %s57 = sphi 0, %s41
      %s65 = sphi 0, %s67
      %s68 = sphi 0, %s65
      %s69 = sphi 0, %s68
      %s85 = sphi 0, %s69
    $region4: #{tpu_custom_call.1} parent=1 // loop_header_branch
      %16 = sbr.rel (%p14) target = $region8
    $region5: #{tpu_custom_call.1} parent=1 // loop_body
      %s18 = ssub.s32 %s13, 1
      %s19 = ssub.s32 %s13, 2
      %s26 = sadd.s32 1, %s21
      %p27 = scmp.ge.s32.totalorder %s26, 2
      %s28 = scalar_select %p27, 0, %s26
      %s29 = sadd.s32 1, %s20
      %s30 = scalar_select %p27, %s29, %s20
      %p31 = scmp.ge.s32.totalorder %s30, 4
      %s32 = scalar_select %p31, 0, %s30
      %s33 = ssub.s32 %s20, %s32
      %s34 = ssub.s32 %s21, %s28
      %s35 = sor.u32 %s33, %s34
      %p36 = scmp.eq.s32.totalorder %s35, 0
      %s38 = sadd.s32 %s37, 1
      %s39 = scalar_select %p36, %s37, %s38
      %p42 = pneg %p36
      %p43 = scmp.eq.s32.totalorder %s13, 7
      %p44 = por %p42, %p43
      %p45 = scmp.ne.s32.totalorder %s37, %s40
      %p46 = scmp.eq.s32.totalorder %s13, 0
      %p47 = por %p45, %p46
      %p48 = scmp.ne.s32.totalorder %s37, %s40
      %p49 = scmp.eq.s32.totalorder %s18, 7
      %p50 = por %p48, %p49
      %p51 = scmp.ne.s32.totalorder %s40, %s41
      %p52 = scmp.eq.s32.totalorder %s18, 0
      %p53 = por %p51, %p52
      %p54 = scmp.ne.s32.totalorder %s40, %s41
      %p55 = scmp.eq.s32.totalorder %s19, 7
      %p56 = por %p54, %p55
      %p58 = scmp.ne.s32.totalorder %s41, %s57
      %p59 = scmp.eq.s32.totalorder %s19, 0
      %p60 = por %p58, %p59
      %s61 = ssub.s32 %s20, %s32
      %s62 = ssub.s32 %s21, %s28
      %s63 = sor.u32 %s61, %s62
      %p64 = scmp.eq.s32.totalorder %s63, 0
      %s66 = sadd.s32 %s65, 1
      %s67 = scalar_select %p64, %s65, %s66
      %p70 = pneg %p64
      %p71 = scmp.eq.s32.totalorder %s13, 7
      %p72 = por %p70, %p71
      %p73 = scmp.ne.s32.totalorder %s65, %s68
      %p74 = scmp.eq.s32.totalorder %s13, 0
      %p75 = por %p73, %p74
      %p76 = scmp.ne.s32.totalorder %s65, %s68
      %p77 = scmp.eq.s32.totalorder %s18, 7
      %p78 = por %p76, %p77
      %p79 = scmp.ne.s32.totalorder %s68, %s69
      %p80 = scmp.eq.s32.totalorder %s18, 0
      %p81 = por %p79, %p80
      %p82 = scmp.ne.s32.totalorder %s68, %s69
      %p83 = scmp.eq.s32.totalorder %s19, 7
      %p84 = por %p82, %p83
      %p86 = scmp.ne.s32.totalorder %s69, %s85
      %p87 = scmp.eq.s32.totalorder %s19, 0
      %p88 = por %p86, %p87
      %p89 = scmp.le.s32.totalorder 1, %s13
      %p90 = scmp.lt.s32.totalorder %s13, 9
      %p91 = pnand %p89, %p90
      %p92 = pneg %p91
      // Predicated region
      $region9: #{tpu_custom_call.1} parent=5 // pred_check
        _
      $region10: #{tpu_custom_call.1} parent=5 // pred_check_branch
        %94 = sbr.rel (%p91) target = $region12
      $region11: #{tpu_custom_call.1} parent=5 // pred_region
        %s95 = ssub.s32 %s13, 1
      $region12: #{tpu_custom_call.1} parent=5 // pred_fallthru
        _
      %p96 = scmp.lt.s32.totalorder %s13, 8
      // Predicated region
      $region13: #{tpu_custom_call.1} parent=5 // pred_check
        %p97 = pneg %p96
      $region14: #{tpu_custom_call.1} parent=5 // pred_check_branch
        %99 = sbr.rel (%p97) target = $region16
      $region15: #{tpu_custom_call.1} parent=5 // pred_region
        // Predicated region
        $region17: #{tpu_custom_call.1} parent=15 // pred_check
          %p100 = pneg %p47
        $region18: #{tpu_custom_call.1} parent=15 // pred_check_branch
          %102 = sbr.rel (%p100) target = $region20
        $region19: #{tpu_custom_call.1} parent=15 // pred_region
          #allocation7 [shape = 'u32[6]{0}', space=smem, size = 0x18, scoped, tag = 'DMA stride descriptor']
          %s103 = sand.u32 %s37, 1
          %s104 = scalar_lea.sflag [#allocation3], %s103
          %s105 = sand.u32 %s37, 1
          %s106 = smul.addr %s105, 256
          %s107 = scalar_lea.vmem [#allocation2], %s106
          %s108 = smul.u32 4, %s21
          %s110 = ssub.s32 4096, 4096
          %111 = vsyncadd %s104, %s110
          %s112 = smul.addr %s20, 64
          %s113 = sadd.s32 %s108, %s112
          %s114 = smul.addr %s113, 128
          %s115 = scalar_lea.hbm %s0, %s114
          %s117 = sshll.u32 1, 14
          %s118 = sxor.u32 4294967295, %s117
          %s120 = sld [smem:[#allocation0]]
          %s121 = sadd.s32 2, %s120
          %s123 = sshll.u32 7, 26
          %s124 = sxor.u32 4294967295, %s123
          %s125 = sand.u32 0, %s124
          %s126 = sshll.u32 %s121, 26
          %s127 = sor.u32 %s125, %s126
          %s128 = sshll.u32 %s107, 4
          %s129 = int_to_ptr.vmem [resolvable:$true] %s128
          %135 = sst [smem:[#allocation7]] 1024
          %s136 = scalar_lea.smem [#allocation7], 1
          %137 = sst [smem:[%s136]] 512
          %s138 = scalar_lea.smem [#allocation7], 2
          %139 = sst [smem:[%s138]] 4
          %s140 = scalar_lea.smem [#allocation7], 3
          %141 = sst [smem:[%s140]] 128
          %s142 = scalar_lea.smem [#allocation7], 4
          %143 = sst [smem:[%s142]] 128
          %s144 = scalar_lea.smem [#allocation7], 5
          %145 = sst [smem:[%s144]] 8
          %147 = dma.general %s115, 4096, %s129, %s104, [#allocation6], [#allocation7], %s127, 0
        $region20: #{tpu_custom_call.1} parent=15 // pred_fallthru
          _
      $region16: #{tpu_custom_call.1} parent=5 // pred_fallthru
        _
      %p148 = scmp.le.s32.totalorder 1, %s13
      %p149 = scmp.lt.s32.totalorder %s13, 9
      %p150 = pnand %p148, %p149
      %p151 = pneg %p150
      // Predicated region
      $region21: #{tpu_custom_call.1} parent=5 // pred_check
        _
      $region22: #{tpu_custom_call.1} parent=5 // pred_check_branch
        %153 = sbr.rel (%p150) target = $region24
      $region23: #{tpu_custom_call.1} parent=5 // pred_region
        %s154 = ssub.s32 %s13, 1
        %s155 = sand.u32 %s40, 1
        %s156 = scalar_lea.sflag [#allocation3], %s155
        %s157 = sand.u32 %s40, 1
        %s158 = smul.addr %s157, 256
        %s159 = scalar_lea.vmem [#allocation2], %s158
        // Predicated region
        $region25: #{tpu_custom_call.1} parent=23 // pred_check
          %p160 = pneg %p53
        $region26: #{tpu_custom_call.1} parent=23 // pred_check_branch
          %162 = sbr.rel (%p160) target = $region28
        $region27: #{tpu_custom_call.1} parent=23 // pred_region
          %163 = dma.done %s156, 4096
        $region28: #{tpu_custom_call.1} parent=23 // pred_fallthru
          _
        %s164 = sand.u32 %s40, 1
        %s165 = scalar_lea.sflag [#allocation3], %s164
        %s166 = sand.u32 %s40, 1
        %s167 = smul.addr %s166, 256
        %s168 = scalar_lea.vmem [#allocation2], %s167
        %p169 = pneg %p53
        %p170 = pneg %p50
        %p171 = pneg %p81
        %p172 = pneg %p78
        %s173 = sand.u32 %s68, 1
        %s174 = scalar_lea.sflag [#allocation4], %s173
        %s175 = sand.u32 %s68, 1
        %s176 = smul.addr %s175, 256
        %s177 = scalar_lea.vmem [#allocation5], %s176
        %s178 = smul.u32 4, %s23
        %s179 = smul.u32 4, %s23
        %v180 = vld [vmem:[%s159] sm:$0xff]
        %v181 = vld [vmem:[%s159 + $0x8] sm:$0xff]
        %v182 = vld [vmem:[%s159 + $0x10] sm:$0xff]
        %v183 = vld [vmem:[%s159 + $0x18] sm:$0xff]
        %s184 = scalar_lea.vmem %s159, 64 [#allocation2]
        %v185 = vld [vmem:[%s184] sm:$0xff]
        %v186 = vld [vmem:[%s184 + $0x8] sm:$0xff]
        %v187 = vld [vmem:[%s184 + $0x10] sm:$0xff]
        %v188 = vld [vmem:[%s184 + $0x18] sm:$0xff]
        %v193 = vcombine.high %v180, %v180
        %v195 = vunpack.c.l.s4 1966171168
        %v196 = vunpack.c.0.s8 %v195
        %v197 = vlaneseq
        %v198 = vshrl.u32 %v197, 7
        %v199 = vsub.s32 %v196, %v198
        %v200 = vrot.slane %v180, %v199
        %v202 = vunpack.c.l.s4 1966171168
        %v203 = vunpack.c.0.s8 %v202
        %v204 = vlaneseq
        %v205 = vshrl.u32 %v204, 7
        %v206 = vsub.s32 %v203, %v205
        %v207 = vrot.slane %v193, %v206
        %v208 = vcombine.high %v200, %v200
        %v209 = vcombine.high %v207, %v207
        %v211 = vunpack.c.l.s4 1966171168
        %v212 = vunpack.c.0.s8 %v211
        %v213 = vlaneseq
        %v214 = vshrl.u32 %v213, 7
        %v215 = vsub.s32 %v212, %v214
        %v216 = vrot.slane %v200, %v215
        %v218 = vunpack.c.l.s4 1966171168
        %v219 = vunpack.c.0.s8 %v218
        %v220 = vlaneseq
        %v221 = vshrl.u32 %v220, 7
        %v222 = vsub.s32 %v219, %v221
        %v223 = vrot.slane %v207, %v222
        %v225 = vunpack.c.l.s4 1966171168
        %v226 = vunpack.c.0.s8 %v225
        %v227 = vlaneseq
        %v228 = vshrl.u32 %v227, 7
        %v229 = vsub.s32 %v226, %v228
        %v230 = vrot.slane %v208, %v229
        %v232 = vunpack.c.l.s4 1966171168
        %v233 = vunpack.c.0.s8 %v232
        %v234 = vlaneseq
        %v235 = vshrl.u32 %v234, 7
        %v236 = vsub.s32 %v233, %v235
        %v237 = vrot.slane %v209, %v236
        %v238 = vcombine.high %v216, %v216
        %v239 = vcombine.high %v223, %v223
        %v240 = vcombine.high %v230, %v230
        %v241 = vcombine.high %v237, %v237
        %v242 = vcombine.high %v181, %v181
        %v244 = vunpack.c.l.s4 1966171168
        %v245 = vunpack.c.0.s8 %v244
        %v246 = vlaneseq
        %v247 = vshrl.u32 %v246, 7
        %v248 = vsub.s32 %v245, %v247
        %v249 = vrot.slane %v181, %v248
        %v251 = vunpack.c.l.s4 1966171168
        %v252 = vunpack.c.0.s8 %v251
        %v253 = vlaneseq
        %v254 = vshrl.u32 %v253, 7
        %v255 = vsub.s32 %v252, %v254
        %v256 = vrot.slane %v242, %v255
        %v257 = vcombine.high %v249, %v249
        %v258 = vcombine.high %v256, %v256
        %v260 = vunpack.c.l.s4 1966171168
        %v261 = vunpack.c.0.s8 %v260
        %v262 = vlaneseq
        %v263 = vshrl.u32 %v262, 7
        %v264 = vsub.s32 %v261, %v263
        %v265 = vrot.slane %v249, %v264
        %v267 = vunpack.c.l.s4 1966171168
        %v268 = vunpack.c.0.s8 %v267
        %v269 = vlaneseq
        %v270 = vshrl.u32 %v269, 7
        %v271 = vsub.s32 %v268, %v270
        %v272 = vrot.slane %v256, %v271
        %v274 = vunpack.c.l.s4 1966171168
        %v275 = vunpack.c.0.s8 %v274
        %v276 = vlaneseq
        %v277 = vshrl.u32 %v276, 7
        %v278 = vsub.s32 %v275, %v277
        %v279 = vrot.slane %v257, %v278
        %v281 = vunpack.c.l.s4 1966171168
        %v282 = vunpack.c.0.s8 %v281
        %v283 = vlaneseq
        %v284 = vshrl.u32 %v283, 7
        %v285 = vsub.s32 %v282, %v284
        %v286 = vrot.slane %v258, %v285
        %v287 = vcombine.high %v265, %v265
        %v288 = vcombine.high %v272, %v272
        %v289 = vcombine.high %v279, %v279
        %v290 = vcombine.high %v286, %v286
        %v291 = vcombine.high %v182, %v182
        %v293 = vunpack.c.l.s4 1966171168
        %v294 = vunpack.c.0.s8 %v293
        %v295 = vlaneseq
        %v296 = vshrl.u32 %v295, 7
        %v297 = vsub.s32 %v294, %v296
        %v298 = vrot.slane %v182, %v297
        %v300 = vunpack.c.l.s4 1966171168
        %v301 = vunpack.c.0.s8 %v300
        %v302 = vlaneseq
        %v303 = vshrl.u32 %v302, 7
        %v304 = vsub.s32 %v301, %v303
        %v305 = vrot.slane %v291, %v304
        %v306 = vcombine.high %v298, %v298
        %v307 = vcombine.high %v305, %v305
        %v309 = vunpack.c.l.s4 1966171168
        %v310 = vunpack.c.0.s8 %v309
        %v311 = vlaneseq
        %v312 = vshrl.u32 %v311, 7
        %v313 = vsub.s32 %v310, %v312
        %v314 = vrot.slane %v298, %v313
        %v316 = vunpack.c.l.s4 1966171168
        %v317 = vunpack.c.0.s8 %v316
        %v318 = vlaneseq
        %v319 = vshrl.u32 %v318, 7
        %v320 = vsub.s32 %v317, %v319
        %v321 = vrot.slane %v305, %v320
        %v323 = vunpack.c.l.s4 1966171168
        %v324 = vunpack.c.0.s8 %v323
        %v325 = vlaneseq
        %v326 = vshrl.u32 %v325, 7
        %v327 = vsub.s32 %v324, %v326
        %v328 = vrot.slane %v306, %v327
        %v330 = vunpack.c.l.s4 1966171168
        %v331 = vunpack.c.0.s8 %v330
        %v332 = vlaneseq
        %v333 = vshrl.u32 %v332, 7
        %v334 = vsub.s32 %v331, %v333
        %v335 = vrot.slane %v307, %v334
        %v336 = vcombine.high %v314, %v314
        %v337 = vcombine.high %v321, %v321
        %v338 = vcombine.high %v328, %v328
        %v339 = vcombine.high %v335, %v335
        %v340 = vcombine.high %v183, %v183
        %v342 = vunpack.c.l.s4 1966171168
        %v343 = vunpack.c.0.s8 %v342
        %v344 = vlaneseq
        %v345 = vshrl.u32 %v344, 7
        %v346 = vsub.s32 %v343, %v345
        %v347 = vrot.slane %v183, %v346
        %v349 = vunpack.c.l.s4 1966171168
        %v350 = vunpack.c.0.s8 %v349
        %v351 = vlaneseq
        %v352 = vshrl.u32 %v351, 7
        %v353 = vsub.s32 %v350, %v352
        %v354 = vrot.slane %v340, %v353
        %v355 = vcombine.high %v347, %v347
        %v356 = vcombine.high %v354, %v354
        %v358 = vunpack.c.l.s4 1966171168
        %v359 = vunpack.c.0.s8 %v358
        %v360 = vlaneseq
        %v361 = vshrl.u32 %v360, 7
        %v362 = vsub.s32 %v359, %v361
        %v363 = vrot.slane %v347, %v362
        %v365 = vunpack.c.l.s4 1966171168
        %v366 = vunpack.c.0.s8 %v365
        %v367 = vlaneseq
        %v368 = vshrl.u32 %v367, 7
        %v369 = vsub.s32 %v366, %v368
        %v370 = vrot.slane %v354, %v369
        %v372 = vunpack.c.l.s4 1966171168
        %v373 = vunpack.c.0.s8 %v372
        %v374 = vlaneseq
        %v375 = vshrl.u32 %v374, 7
        %v376 = vsub.s32 %v373, %v375
        %v377 = vrot.slane %v355, %v376
        %v379 = vunpack.c.l.s4 1966171168
        %v380 = vunpack.c.0.s8 %v379
        %v381 = vlaneseq
        %v382 = vshrl.u32 %v381, 7
        %v383 = vsub.s32 %v380, %v382
        %v384 = vrot.slane %v356, %v383
        %v385 = vcombine.high %v363, %v363
        %v386 = vcombine.high %v370, %v370
        %v387 = vcombine.high %v377, %v377
        %v388 = vcombine.high %v384, %v384
        %v425 = vcombine.high %v185, %v185
        %v427 = vunpack.c.l.s4 1966171168
        %v428 = vunpack.c.0.s8 %v427
        %v429 = vlaneseq
        %v430 = vshrl.u32 %v429, 7
        %v431 = vsub.s32 %v428, %v430
        %v432 = vrot.slane %v185, %v431
        %v434 = vunpack.c.l.s4 1966171168
        %v435 = vunpack.c.0.s8 %v434
        %v436 = vlaneseq
        %v437 = vshrl.u32 %v436, 7
        %v438 = vsub.s32 %v435, %v437
        %v439 = vrot.slane %v425, %v438
        %v440 = vcombine.high %v432, %v432
        %v441 = vcombine.high %v439, %v439
        %v443 = vunpack.c.l.s4 1966171168
        %v444 = vunpack.c.0.s8 %v443
        %v445 = vlaneseq
        %v446 = vshrl.u32 %v445, 7
        %v447 = vsub.s32 %v444, %v446
        %v448 = vrot.slane %v432, %v447
        %v450 = vunpack.c.l.s4 1966171168
        %v451 = vunpack.c.0.s8 %v450
        %v452 = vlaneseq
        %v453 = vshrl.u32 %v452, 7
        %v454 = vsub.s32 %v451, %v453
        %v455 = vrot.slane %v439, %v454
        %v457 = vunpack.c.l.s4 1966171168
        %v458 = vunpack.c.0.s8 %v457
        %v459 = vlaneseq
        %v460 = vshrl.u32 %v459, 7
        %v461 = vsub.s32 %v458, %v460
        %v462 = vrot.slane %v440, %v461
        %v464 = vunpack.c.l.s4 1966171168
        %v465 = vunpack.c.0.s8 %v464
        %v466 = vlaneseq
        %v467 = vshrl.u32 %v466, 7
        %v468 = vsub.s32 %v465, %v467
        %v469 = vrot.slane %v441, %v468
        %v470 = vcombine.high %v448, %v448
        %v471 = vcombine.high %v455, %v455
        %v472 = vcombine.high %v462, %v462
        %v473 = vcombine.high %v469, %v469
        %v474 = vcombine.high %v186, %v186
        %v476 = vunpack.c.l.s4 1966171168
        %v477 = vunpack.c.0.s8 %v476
        %v478 = vlaneseq
        %v479 = vshrl.u32 %v478, 7
        %v480 = vsub.s32 %v477, %v479
        %v481 = vrot.slane %v186, %v480
        %v483 = vunpack.c.l.s4 1966171168
        %v484 = vunpack.c.0.s8 %v483
        %v485 = vlaneseq
        %v486 = vshrl.u32 %v485, 7
        %v487 = vsub.s32 %v484, %v486
        %v488 = vrot.slane %v474, %v487
        %v489 = vcombine.high %v481, %v481
        %v490 = vcombine.high %v488, %v488
        %v492 = vunpack.c.l.s4 1966171168
        %v493 = vunpack.c.0.s8 %v492
        %v494 = vlaneseq
        %v495 = vshrl.u32 %v494, 7
        %v496 = vsub.s32 %v493, %v495
        %v497 = vrot.slane %v481, %v496
        %v499 = vunpack.c.l.s4 1966171168
        %v500 = vunpack.c.0.s8 %v499
        %v501 = vlaneseq
        %v502 = vshrl.u32 %v501, 7
        %v503 = vsub.s32 %v500, %v502
        %v504 = vrot.slane %v488, %v503
        %v506 = vunpack.c.l.s4 1966171168
        %v507 = vunpack.c.0.s8 %v506
        %v508 = vlaneseq
        %v509 = vshrl.u32 %v508, 7
        %v510 = vsub.s32 %v507, %v509
        %v511 = vrot.slane %v489, %v510
        %v513 = vunpack.c.l.s4 1966171168
        %v514 = vunpack.c.0.s8 %v513
        %v515 = vlaneseq
        %v516 = vshrl.u32 %v515, 7
        %v517 = vsub.s32 %v514, %v516
        %v518 = vrot.slane %v490, %v517
        %v519 = vcombine.high %v497, %v497
        %v520 = vcombine.high %v504, %v504
        %v521 = vcombine.high %v511, %v511
        %v522 = vcombine.high %v518, %v518
        %v523 = vcombine.high %v187, %v187
        %v525 = vunpack.c.l.s4 1966171168
        %v526 = vunpack.c.0.s8 %v525
        %v527 = vlaneseq
        %v528 = vshrl.u32 %v527, 7
        %v529 = vsub.s32 %v526, %v528
        %v530 = vrot.slane %v187, %v529
        %v532 = vunpack.c.l.s4 1966171168
        %v533 = vunpack.c.0.s8 %v532
        %v534 = vlaneseq
        %v535 = vshrl.u32 %v534, 7
        %v536 = vsub.s32 %v533, %v535
        %v537 = vrot.slane %v523, %v536
        %v538 = vcombine.high %v530, %v530
        %v539 = vcombine.high %v537, %v537
        %v541 = vunpack.c.l.s4 1966171168
        %v542 = vunpack.c.0.s8 %v541
        %v543 = vlaneseq
        %v544 = vshrl.u32 %v543, 7
        %v545 = vsub.s32 %v542, %v544
        %v546 = vrot.slane %v530, %v545
        %v548 = vunpack.c.l.s4 1966171168
        %v549 = vunpack.c.0.s8 %v548
        %v550 = vlaneseq
        %v551 = vshrl.u32 %v550, 7
        %v552 = vsub.s32 %v549, %v551
        %v553 = vrot.slane %v537, %v552
        %v555 = vunpack.c.l.s4 1966171168
        %v556 = vunpack.c.0.s8 %v555
        %v557 = vlaneseq
        %v558 = vshrl.u32 %v557, 7
        %v559 = vsub.s32 %v556, %v558
        %v560 = vrot.slane %v538, %v559
        %v562 = vunpack.c.l.s4 1966171168
        %v563 = vunpack.c.0.s8 %v562
        %v564 = vlaneseq
        %v565 = vshrl.u32 %v564, 7
        %v566 = vsub.s32 %v563, %v565
        %v567 = vrot.slane %v539, %v566
        %v568 = vcombine.high %v546, %v546
        %v569 = vcombine.high %v553, %v553
        %v570 = vcombine.high %v560, %v560
        %v571 = vcombine.high %v567, %v567
        %v572 = vcombine.high %v188, %v188
        %v574 = vunpack.c.l.s4 1966171168
        %v575 = vunpack.c.0.s8 %v574
        %v576 = vlaneseq
        %v577 = vshrl.u32 %v576, 7
        %v578 = vsub.s32 %v575, %v577
        %v579 = vrot.slane %v188, %v578
        %v581 = vunpack.c.l.s4 1966171168
        %v582 = vunpack.c.0.s8 %v581
        %v583 = vlaneseq
        %v584 = vshrl.u32 %v583, 7
        %v585 = vsub.s32 %v582, %v584
        %v586 = vrot.slane %v572, %v585
        %v587 = vcombine.high %v579, %v579
        %v588 = vcombine.high %v586, %v586
        %v590 = vunpack.c.l.s4 1966171168
        %v591 = vunpack.c.0.s8 %v590
        %v592 = vlaneseq
        %v593 = vshrl.u32 %v592, 7
        %v594 = vsub.s32 %v591, %v593
        %v595 = vrot.slane %v579, %v594
        %v597 = vunpack.c.l.s4 1966171168
        %v598 = vunpack.c.0.s8 %v597
        %v599 = vlaneseq
        %v600 = vshrl.u32 %v599, 7
        %v601 = vsub.s32 %v598, %v600
        %v602 = vrot.slane %v586, %v601
        %v604 = vunpack.c.l.s4 1966171168
        %v605 = vunpack.c.0.s8 %v604
        %v606 = vlaneseq
        %v607 = vshrl.u32 %v606, 7
        %v608 = vsub.s32 %v605, %v607
        %v609 = vrot.slane %v587, %v608
        %v611 = vunpack.c.l.s4 1966171168
        %v612 = vunpack.c.0.s8 %v611
        %v613 = vlaneseq
        %v614 = vshrl.u32 %v613, 7
        %v615 = vsub.s32 %v612, %v614
        %v616 = vrot.slane %v588, %v615
        %v617 = vcombine.high %v595, %v595
        %v618 = vcombine.high %v602, %v602
        %v619 = vcombine.high %v609, %v609
        %v620 = vcombine.high %v616, %v616
        %v621 = vlaneseq
        %v622 = vshrl.u32 %v621, 7
        %v623 = vsub.s32 0, %v622
        %v624 = vrot.slane %v448, %v623
        %v625 = vlaneseq
        %v626 = vshrl.u32 %v625, 7
        %v627 = vsub.s32 0, %v626
        %v628 = vrot.slane %v462, %v627
        %v629 = vlaneseq
        %v630 = vshrl.u32 %v629, 7
        %v631 = vsub.s32 0, %v630
        %v632 = vrot.slane %v470, %v631
        %v633 = vlaneseq
        %v634 = vshrl.u32 %v633, 7
        %v635 = vsub.s32 0, %v634
        %v636 = vrot.slane %v472, %v635
        %v637 = vlaneseq
        %v638 = vshrl.u32 %v637, 7
        %v639 = vsub.s32 0, %v638
        %v640 = vrot.slane %v455, %v639
        %v641 = vlaneseq
        %v642 = vshrl.u32 %v641, 7
        %v643 = vsub.s32 0, %v642
        %v644 = vrot.slane %v469, %v643
        %v645 = vlaneseq
        %v646 = vshrl.u32 %v645, 7
        %v647 = vsub.s32 0, %v646
        %v648 = vrot.slane %v471, %v647
        %v649 = vlaneseq
        %v650 = vshrl.u32 %v649, 7
        %v651 = vsub.s32 0, %v650
        %v652 = vrot.slane %v473, %v651
        %v653 = vlaneseq
        %v654 = vshrl.u32 %v653, 7
        %v655 = vsub.s32 0, %v654
        %v656 = vrot.slane %v497, %v655
        %v657 = vlaneseq
        %v658 = vshrl.u32 %v657, 7
        %v659 = vsub.s32 0, %v658
        %v660 = vrot.slane %v511, %v659
        %v661 = vlaneseq
        %v662 = vshrl.u32 %v661, 7
        %v663 = vsub.s32 0, %v662
        %v664 = vrot.slane %v519, %v663
        %v665 = vlaneseq
        %v666 = vshrl.u32 %v665, 7
        %v667 = vsub.s32 0, %v666
        %v668 = vrot.slane %v521, %v667
        %v669 = vlaneseq
        %v670 = vshrl.u32 %v669, 7
        %v671 = vsub.s32 0, %v670
        %v672 = vrot.slane %v504, %v671
        %v673 = vlaneseq
        %v674 = vshrl.u32 %v673, 7
        %v675 = vsub.s32 0, %v674
        %v676 = vrot.slane %v518, %v675
        %v677 = vlaneseq
        %v678 = vshrl.u32 %v677, 7
        %v679 = vsub.s32 0, %v678
        %v680 = vrot.slane %v520, %v679
        %v681 = vlaneseq
        %v682 = vshrl.u32 %v681, 7
        %v683 = vsub.s32 0, %v682
        %v684 = vrot.slane %v522, %v683
        %v685 = vlaneseq
        %v686 = vshrl.u32 %v685, 7
        %v687 = vsub.s32 0, %v686
        %v688 = vrot.slane %v546, %v687
        %v689 = vlaneseq
        %v690 = vshrl.u32 %v689, 7
        %v691 = vsub.s32 0, %v690
        %v692 = vrot.slane %v560, %v691
        %v693 = vlaneseq
        %v694 = vshrl.u32 %v693, 7
        %v695 = vsub.s32 0, %v694
        %v696 = vrot.slane %v568, %v695
        %v697 = vlaneseq
        %v698 = vshrl.u32 %v697, 7
        %v699 = vsub.s32 0, %v698
        %v700 = vrot.slane %v570, %v699
        %v701 = vlaneseq
        %v702 = vshrl.u32 %v701, 7
        %v703 = vsub.s32 0, %v702
        %v704 = vrot.slane %v553, %v703
        %v705 = vlaneseq
        %v706 = vshrl.u32 %v705, 7
        %v707 = vsub.s32 0, %v706
        %v708 = vrot.slane %v567, %v707
        %v709 = vlaneseq
        %v710 = vshrl.u32 %v709, 7
        %v711 = vsub.s32 0, %v710
        %v712 = vrot.slane %v569, %v711
        %v713 = vlaneseq
        %v714 = vshrl.u32 %v713, 7
        %v715 = vsub.s32 0, %v714
        %v716 = vrot.slane %v571, %v715
        %v717 = vlaneseq
        %v718 = vshrl.u32 %v717, 7
        %v719 = vsub.s32 0, %v718
        %v720 = vrot.slane %v595, %v719
        %v721 = vlaneseq
        %v722 = vshrl.u32 %v721, 7
        %v723 = vsub.s32 0, %v722
        %v724 = vrot.slane %v609, %v723
        %v725 = vlaneseq
        %v726 = vshrl.u32 %v725, 7
        %v727 = vsub.s32 0, %v726
        %v728 = vrot.slane %v617, %v727
        %v729 = vlaneseq
        %v730 = vshrl.u32 %v729, 7
        %v731 = vsub.s32 0, %v730
        %v732 = vrot.slane %v619, %v731
        %v733 = vlaneseq
        %v734 = vshrl.u32 %v733, 7
        %v735 = vsub.s32 0, %v734
        %v736 = vrot.slane %v602, %v735
        %v737 = vlaneseq
        %v738 = vshrl.u32 %v737, 7
        %v739 = vsub.s32 0, %v738
        %v740 = vrot.slane %v616, %v739
        %v741 = vlaneseq
        %v742 = vshrl.u32 %v741, 7
        %v743 = vsub.s32 0, %v742
        %v744 = vrot.slane %v618, %v743
        %v745 = vlaneseq
        %v746 = vshrl.u32 %v745, 7
        %v747 = vsub.s32 0, %v746
        %v748 = vrot.slane %v620, %v747
        %vm781 = vcmask 1040384
        %v782 = vsel %vm781, %v216, %v624
        %v783 = vsel %vm781, %v230, %v628
        %v784 = vsel %vm781, %v238, %v632
        %v785 = vsel %vm781, %v240, %v636
        %v786 = vsel %vm781, %v223, %v640
        %v787 = vsel %vm781, %v237, %v644
        %v788 = vsel %vm781, %v239, %v648
        %v789 = vsel %vm781, %v241, %v652
        %v790 = vsel %vm781, %v265, %v656
        %v791 = vsel %vm781, %v279, %v660
        %v792 = vsel %vm781, %v287, %v664
        %v793 = vsel %vm781, %v289, %v668
        %v794 = vsel %vm781, %v272, %v672
        %v795 = vsel %vm781, %v286, %v676
        %v796 = vsel %vm781, %v288, %v680
        %v797 = vsel %vm781, %v290, %v684
        %v798 = vsel %vm781, %v314, %v688
        %v799 = vsel %vm781, %v328, %v692
        %v800 = vsel %vm781, %v336, %v696
        %v801 = vsel %vm781, %v338, %v700
        %v802 = vsel %vm781, %v321, %v704
        %v803 = vsel %vm781, %v335, %v708
        %v804 = vsel %vm781, %v337, %v712
        %v805 = vsel %vm781, %v339, %v716
        %v806 = vsel %vm781, %v363, %v720
        %v807 = vsel %vm781, %v377, %v724
        %v808 = vsel %vm781, %v385, %v728
        %v809 = vsel %vm781, %v387, %v732
        %v810 = vsel %vm781, %v370, %v736
        %v811 = vsel %vm781, %v384, %v740
        %v812 = vsel %vm781, %v386, %v744
        %v813 = vsel %vm781, %v388, %v748
        %v846 = vcombine.low %v782, %v783
        %v847 = vcombine.low %v784, %v785
        %v849 = vunpack.c.l.s4 1983009808
        %v850 = vunpack.c.0.s8 %v849
        %v851 = vlaneseq
        %v852 = vshrl.u32 %v851, 7
        %v853 = vsub.s32 %v850, %v852
        %v854 = vrot.slane %v846, %v853
        %v856 = vunpack.c.l.s4 1983009808
        %v857 = vunpack.c.0.s8 %v856
        %v858 = vlaneseq
        %v859 = vshrl.u32 %v858, 7
        %v860 = vsub.s32 %v857, %v859
        %v861 = vrot.slane %v847, %v860
        %v862 = vcombine.low %v854, %v861
        %v863 = vcombine.low %v786, %v787
        %v864 = vcombine.low %v788, %v789
        %v866 = vunpack.c.l.s4 1983009808
        %v867 = vunpack.c.0.s8 %v866
        %v868 = vlaneseq
        %v869 = vshrl.u32 %v868, 7
        %v870 = vsub.s32 %v867, %v869
        %v871 = vrot.slane %v863, %v870
        %v873 = vunpack.c.l.s4 1983009808
        %v874 = vunpack.c.0.s8 %v873
        %v875 = vlaneseq
        %v876 = vshrl.u32 %v875, 7
        %v877 = vsub.s32 %v874, %v876
        %v878 = vrot.slane %v864, %v877
        %v879 = vcombine.low %v871, %v878
        %v880 = vcombine.low %v790, %v791
        %v881 = vcombine.low %v792, %v793
        %v883 = vunpack.c.l.s4 1983009808
        %v884 = vunpack.c.0.s8 %v883
        %v885 = vlaneseq
        %v886 = vshrl.u32 %v885, 7
        %v887 = vsub.s32 %v884, %v886
        %v888 = vrot.slane %v880, %v887
        %v890 = vunpack.c.l.s4 1983009808
        %v891 = vunpack.c.0.s8 %v890
        %v892 = vlaneseq
        %v893 = vshrl.u32 %v892, 7
        %v894 = vsub.s32 %v891, %v893
        %v895 = vrot.slane %v881, %v894
        %v896 = vcombine.low %v888, %v895
        %v897 = vcombine.low %v794, %v795
        %v898 = vcombine.low %v796, %v797
        %v900 = vunpack.c.l.s4 1983009808
        %v901 = vunpack.c.0.s8 %v900
        %v902 = vlaneseq
        %v903 = vshrl.u32 %v902, 7
        %v904 = vsub.s32 %v901, %v903
        %v905 = vrot.slane %v897, %v904
        %v907 = vunpack.c.l.s4 1983009808
        %v908 = vunpack.c.0.s8 %v907
        %v909 = vlaneseq
        %v910 = vshrl.u32 %v909, 7
        %v911 = vsub.s32 %v908, %v910
        %v912 = vrot.slane %v898, %v911
        %v913 = vcombine.low %v905, %v912
        %v914 = vcombine.low %v798, %v799
        %v915 = vcombine.low %v800, %v801
        %v917 = vunpack.c.l.s4 1983009808
        %v918 = vunpack.c.0.s8 %v917
        %v919 = vlaneseq
        %v920 = vshrl.u32 %v919, 7
        %v921 = vsub.s32 %v918, %v920
        %v922 = vrot.slane %v914, %v921
        %v924 = vunpack.c.l.s4 1983009808
        %v925 = vunpack.c.0.s8 %v924
        %v926 = vlaneseq
        %v927 = vshrl.u32 %v926, 7
        %v928 = vsub.s32 %v925, %v927
        %v929 = vrot.slane %v915, %v928
        %v930 = vcombine.low %v922, %v929
        %v931 = vcombine.low %v802, %v803
        %v932 = vcombine.low %v804, %v805
        %v934 = vunpack.c.l.s4 1983009808
        %v935 = vunpack.c.0.s8 %v934
        %v936 = vlaneseq
        %v937 = vshrl.u32 %v936, 7
        %v938 = vsub.s32 %v935, %v937
        %v939 = vrot.slane %v931, %v938
        %v941 = vunpack.c.l.s4 1983009808
        %v942 = vunpack.c.0.s8 %v941
        %v943 = vlaneseq
        %v944 = vshrl.u32 %v943, 7
        %v945 = vsub.s32 %v942, %v944
        %v946 = vrot.slane %v932, %v945
        %v947 = vcombine.low %v939, %v946
        %v948 = vcombine.low %v806, %v807
        %v949 = vcombine.low %v808, %v809
        %v951 = vunpack.c.l.s4 1983009808
        %v952 = vunpack.c.0.s8 %v951
        %v953 = vlaneseq
        %v954 = vshrl.u32 %v953, 7
        %v955 = vsub.s32 %v952, %v954
        %v956 = vrot.slane %v948, %v955
        %v958 = vunpack.c.l.s4 1983009808
        %v959 = vunpack.c.0.s8 %v958
        %v960 = vlaneseq
        %v961 = vshrl.u32 %v960, 7
        %v962 = vsub.s32 %v959, %v961
        %v963 = vrot.slane %v949, %v962
        %v964 = vcombine.low %v956, %v963
        %v965 = vcombine.low %v810, %v811
        %v966 = vcombine.low %v812, %v813
        %v968 = vunpack.c.l.s4 1983009808
        %v969 = vunpack.c.0.s8 %v968
        %v970 = vlaneseq
        %v971 = vshrl.u32 %v970, 7
        %v972 = vsub.s32 %v969, %v971
        %v973 = vrot.slane %v965, %v972
        %v975 = vunpack.c.l.s4 1983009808
        %v976 = vunpack.c.0.s8 %v975
        %v977 = vlaneseq
        %v978 = vshrl.u32 %v977, 7
        %v979 = vsub.s32 %v976, %v978
        %v980 = vrot.slane %v966, %v979
        %v981 = vcombine.low %v973, %v980
        %990 = vxpose.xlu0.b32.start [1/16] %v862, 128
        %991 = vxpose.xlu0.b32.cont [2/16] %v879, 128
        %992 = vxpose.xlu0.b32.cont [3/16] %v896, 128
        %993 = vxpose.xlu0.b32.cont [4/16] %v913, 128
        %994 = vxpose.xlu0.b32.cont [5/16] %v930, 128
        %995 = vxpose.xlu0.b32.cont [6/16] %v947, 128
        %996 = vxpose.xlu0.b32.cont [7/16] %v964, 128
        %997 = vxpose.xlu0.b32.cont [8/16] %v981, 128
        %998 = vxpose.xlu0.b32.cont [9/16] 0.0, 128
        %999 = vxpose.xlu0.b32.cont [10/16] 0.0, 128
        %1000 = vxpose.xlu0.b32.cont [11/16] 0.0, 128
        %1001 = vxpose.xlu0.b32.cont [12/16] 0.0, 128
        %1002 = vxpose.xlu0.b32.cont [13/16] 0.0, 128
        %1003 = vxpose.xlu0.b32.cont [14/16] 0.0, 128
        %1004 = vxpose.xlu0.b32.cont [15/16] 0.0, 128
        %1005 = vxpose.xlu0.b32.end [16/16] 0.0, 128
        %v1006 = vpop.trf.xlu0
        %v1007 = vpop.trf.xlu0
        %v1008 = vpop.trf.xlu0
        %v1009 = vpop.trf.xlu0
        %v1010 = vpop.trf.xlu0
        %v1011 = vpop.trf.xlu0
        %v1012 = vpop.trf.xlu0
        %v1013 = vpop.trf.xlu0
        %v1014 = vpop.trf.xlu0
        %v1015 = vpop.trf.xlu0
        %v1016 = vpop.trf.xlu0
        %v1017 = vpop.trf.xlu0
        %v1018 = vpop.trf.xlu0
        %v1019 = vpop.trf.xlu0
        %v1020 = vpop.trf.xlu0
        %v1021 = vpop.trf.xlu0
        %s1022 = scalar_lea.vmem %s159, 32 [#allocation2]
        %v1023 = vld [vmem:[%s1022] sm:$0xff]
        %v1024 = vld [vmem:[%s1022 + $0x8] sm:$0xff]
        %v1025 = vld [vmem:[%s1022 + $0x10] sm:$0xff]
        %v1026 = vld [vmem:[%s1022 + $0x18] sm:$0xff]
        %s1027 = scalar_lea.vmem %s159, 96 [#allocation2]
        %v1028 = vld [vmem:[%s1027] sm:$0xff]
        %v1029 = vld [vmem:[%s1027 + $0x8] sm:$0xff]
        %v1030 = vld [vmem:[%s1027 + $0x10] sm:$0xff]
        %v1031 = vld [vmem:[%s1027 + $0x18] sm:$0xff]
        %v1036 = vcombine.high %v1023, %v1023
        %v1038 = vunpack.c.l.s4 1966171168
        %v1039 = vunpack.c.0.s8 %v1038
        %v1040 = vlaneseq
        %v1041 = vshrl.u32 %v1040, 7
        %v1042 = vsub.s32 %v1039, %v1041
        %v1043 = vrot.slane %v1023, %v1042
        %v1045 = vunpack.c.l.s4 1966171168
        %v1046 = vunpack.c.0.s8 %v1045
        %v1047 = vlaneseq
        %v1048 = vshrl.u32 %v1047, 7
        %v1049 = vsub.s32 %v1046, %v1048
        %v1050 = vrot.slane %v1036, %v1049
        %v1051 = vcombine.high %v1043, %v1043
        %v1052 = vcombine.high %v1050, %v1050
        %v1054 = vunpack.c.l.s4 1966171168
        %v1055 = vunpack.c.0.s8 %v1054
        %v1056 = vlaneseq
        %v1057 = vshrl.u32 %v1056, 7
        %v1058 = vsub.s32 %v1055, %v1057
        %v1059 = vrot.slane %v1043, %v1058
        %v1061 = vunpack.c.l.s4 1966171168
        %v1062 = vunpack.c.0.s8 %v1061
        %v1063 = vlaneseq
        %v1064 = vshrl.u32 %v1063, 7
        %v1065 = vsub.s32 %v1062, %v1064
        %v1066 = vrot.slane %v1050, %v1065
        %v1068 = vunpack.c.l.s4 1966171168
        %v1069 = vunpack.c.0.s8 %v1068
        %v1070 = vlaneseq
        %v1071 = vshrl.u32 %v1070, 7
        %v1072 = vsub.s32 %v1069, %v1071
        %v1073 = vrot.slane %v1051, %v1072
        %v1075 = vunpack.c.l.s4 1966171168
        %v1076 = vunpack.c.0.s8 %v1075
        %v1077 = vlaneseq
        %v1078 = vshrl.u32 %v1077, 7
        %v1079 = vsub.s32 %v1076, %v1078
        %v1080 = vrot.slane %v1052, %v1079
        %v1081 = vcombine.high %v1059, %v1059
        %v1082 = vcombine.high %v1066, %v1066
        %v1083 = vcombine.high %v1073, %v1073
        %v1084 = vcombine.high %v1080, %v1080
        %v1085 = vcombine.high %v1024, %v1024
        %v1087 = vunpack.c.l.s4 1966171168
        %v1088 = vunpack.c.0.s8 %v1087
        %v1089 = vlaneseq
        %v1090 = vshrl.u32 %v1089, 7
        %v1091 = vsub.s32 %v1088, %v1090
        %v1092 = vrot.slane %v1024, %v1091
        %v1094 = vunpack.c.l.s4 1966171168
        %v1095 = vunpack.c.0.s8 %v1094
        %v1096 = vlaneseq
        %v1097 = vshrl.u32 %v1096, 7
        %v1098 = vsub.s32 %v1095, %v1097
        %v1099 = vrot.slane %v1085, %v1098
        %v1100 = vcombine.high %v1092, %v1092
        %v1101 = vcombine.high %v1099, %v1099
        %v1103 = vunpack.c.l.s4 1966171168
        %v1104 = vunpack.c.0.s8 %v1103
        %v1105 = vlaneseq
        %v1106 = vshrl.u32 %v1105, 7
        %v1107 = vsub.s32 %v1104, %v1106
        %v1108 = vrot.slane %v1092, %v1107
        %v1110 = vunpack.c.l.s4 1966171168
        %v1111 = vunpack.c.0.s8 %v1110
        %v1112 = vlaneseq
        %v1113 = vshrl.u32 %v1112, 7
        %v1114 = vsub.s32 %v1111, %v1113
        %v1115 = vrot.slane %v1099, %v1114
        %v1117 = vunpack.c.l.s4 1966171168
        %v1118 = vunpack.c.0.s8 %v1117
        %v1119 = vlaneseq
        %v1120 = vshrl.u32 %v1119, 7
        %v1121 = vsub.s32 %v1118, %v1120
        %v1122 = vrot.slane %v1100, %v1121
        %v1124 = vunpack.c.l.s4 1966171168
        %v1125 = vunpack.c.0.s8 %v1124
        %v1126 = vlaneseq
        %v1127 = vshrl.u32 %v1126, 7
        %v1128 = vsub.s32 %v1125, %v1127
        %v1129 = vrot.slane %v1101, %v1128
        %v1130 = vcombine.high %v1108, %v1108
        %v1131 = vcombine.high %v1115, %v1115
        %v1132 = vcombine.high %v1122, %v1122
        %v1133 = vcombine.high %v1129, %v1129
        %v1134 = vcombine.high %v1025, %v1025
        %v1136 = vunpack.c.l.s4 1966171168
        %v1137 = vunpack.c.0.s8 %v1136
        %v1138 = vlaneseq
        %v1139 = vshrl.u32 %v1138, 7
        %v1140 = vsub.s32 %v1137, %v1139
        %v1141 = vrot.slane %v1025, %v1140
        %v1143 = vunpack.c.l.s4 1966171168
        %v1144 = vunpack.c.0.s8 %v1143
        %v1145 = vlaneseq
        %v1146 = vshrl.u32 %v1145, 7
        %v1147 = vsub.s32 %v1144, %v1146
        %v1148 = vrot.slane %v1134, %v1147
        %v1149 = vcombine.high %v1141, %v1141
        %v1150 = vcombine.high %v1148, %v1148
        %v1152 = vunpack.c.l.s4 1966171168
        %v1153 = vunpack.c.0.s8 %v1152
        %v1154 = vlaneseq
        %v1155 = vshrl.u32 %v1154, 7
        %v1156 = vsub.s32 %v1153, %v1155
        %v1157 = vrot.slane %v1141, %v1156
        %v1159 = vunpack.c.l.s4 1966171168
        %v1160 = vunpack.c.0.s8 %v1159
        %v1161 = vlaneseq
        %v1162 = vshrl.u32 %v1161, 7
        %v1163 = vsub.s32 %v1160, %v1162
        %v1164 = vrot.slane %v1148, %v1163
        %v1166 = vunpack.c.l.s4 1966171168
        %v1167 = vunpack.c.0.s8 %v1166
        %v1168 = vlaneseq
        %v1169 = vshrl.u32 %v1168, 7
        %v1170 = vsub.s32 %v1167, %v1169
        %v1171 = vrot.slane %v1149, %v1170
        %v1173 = vunpack.c.l.s4 1966171168
        %v1174 = vunpack.c.0.s8 %v1173
        %v1175 = vlaneseq
        %v1176 = vshrl.u32 %v1175, 7
        %v1177 = vsub.s32 %v1174, %v1176
        %v1178 = vrot.slane %v1150, %v1177
        %v1179 = vcombine.high %v1157, %v1157
        %v1180 = vcombine.high %v1164, %v1164
        %v1181 = vcombine.high %v1171, %v1171
        %v1182 = vcombine.high %v1178, %v1178
        %v1183 = vcombine.high %v1026, %v1026
        %v1185 = vunpack.c.l.s4 1966171168
        %v1186 = vunpack.c.0.s8 %v1185
        %v1187 = vlaneseq
        %v1188 = vshrl.u32 %v1187, 7
        %v1189 = vsub.s32 %v1186, %v1188
        %v1190 = vrot.slane %v1026, %v1189
        %v1192 = vunpack.c.l.s4 1966171168
        %v1193 = vunpack.c.0.s8 %v1192
        %v1194 = vlaneseq
        %v1195 = vshrl.u32 %v1194, 7
        %v1196 = vsub.s32 %v1193, %v1195
        %v1197 = vrot.slane %v1183, %v1196
        %v1198 = vcombine.high %v1190, %v1190
        %v1199 = vcombine.high %v1197, %v1197
        %v1201 = vunpack.c.l.s4 1966171168
        %v1202 = vunpack.c.0.s8 %v1201
        %v1203 = vlaneseq
        %v1204 = vshrl.u32 %v1203, 7
        %v1205 = vsub.s32 %v1202, %v1204
        %v1206 = vrot.slane %v1190, %v1205
        %v1208 = vunpack.c.l.s4 1966171168
        %v1209 = vunpack.c.0.s8 %v1208
        %v1210 = vlaneseq
        %v1211 = vshrl.u32 %v1210, 7
        %v1212 = vsub.s32 %v1209, %v1211
        %v1213 = vrot.slane %v1197, %v1212
        %v1215 = vunpack.c.l.s4 1966171168
        %v1216 = vunpack.c.0.s8 %v1215
        %v1217 = vlaneseq
        %v1218 = vshrl.u32 %v1217, 7
        %v1219 = vsub.s32 %v1216, %v1218
        %v1220 = vrot.slane %v1198, %v1219
        %v1222 = vunpack.c.l.s4 1966171168
        %v1223 = vunpack.c.0.s8 %v1222
        %v1224 = vlaneseq
        %v1225 = vshrl.u32 %v1224, 7
        %v1226 = vsub.s32 %v1223, %v1225
        %v1227 = vrot.slane %v1199, %v1226
        %v1228 = vcombine.high %v1206, %v1206
        %v1229 = vcombine.high %v1213, %v1213
        %v1230 = vcombine.high %v1220, %v1220
        %v1231 = vcombine.high %v1227, %v1227
        %v1268 = vcombine.high %v1028, %v1028
        %v1270 = vunpack.c.l.s4 1966171168
        %v1271 = vunpack.c.0.s8 %v1270
        %v1272 = vlaneseq
        %v1273 = vshrl.u32 %v1272, 7
        %v1274 = vsub.s32 %v1271, %v1273
        %v1275 = vrot.slane %v1028, %v1274
        %v1277 = vunpack.c.l.s4 1966171168
        %v1278 = vunpack.c.0.s8 %v1277
        %v1279 = vlaneseq
        %v1280 = vshrl.u32 %v1279, 7
        %v1281 = vsub.s32 %v1278, %v1280
        %v1282 = vrot.slane %v1268, %v1281
        %v1283 = vcombine.high %v1275, %v1275
        %v1284 = vcombine.high %v1282, %v1282
        %v1286 = vunpack.c.l.s4 1966171168
        %v1287 = vunpack.c.0.s8 %v1286
        %v1288 = vlaneseq
        %v1289 = vshrl.u32 %v1288, 7
        %v1290 = vsub.s32 %v1287, %v1289
        %v1291 = vrot.slane %v1275, %v1290
        %v1293 = vunpack.c.l.s4 1966171168
        %v1294 = vunpack.c.0.s8 %v1293
        %v1295 = vlaneseq
        %v1296 = vshrl.u32 %v1295, 7
        %v1297 = vsub.s32 %v1294, %v1296
        %v1298 = vrot.slane %v1282, %v1297
        %v1300 = vunpack.c.l.s4 1966171168
        %v1301 = vunpack.c.0.s8 %v1300
        %v1302 = vlaneseq
        %v1303 = vshrl.u32 %v1302, 7
        %v1304 = vsub.s32 %v1301, %v1303
        %v1305 = vrot.slane %v1283, %v1304
        %v1307 = vunpack.c.l.s4 1966171168
        %v1308 = vunpack.c.0.s8 %v1307
        %v1309 = vlaneseq
        %v1310 = vshrl.u32 %v1309, 7
        %v1311 = vsub.s32 %v1308, %v1310
        %v1312 = vrot.slane %v1284, %v1311
        %v1313 = vcombine.high %v1291, %v1291
        %v1314 = vcombine.high %v1298, %v1298
        %v1315 = vcombine.high %v1305, %v1305
        %v1316 = vcombine.high %v1312, %v1312
        %v1317 = vcombine.high %v1029, %v1029
        %v1319 = vunpack.c.l.s4 1966171168
        %v1320 = vunpack.c.0.s8 %v1319
        %v1321 = vlaneseq
        %v1322 = vshrl.u32 %v1321, 7
        %v1323 = vsub.s32 %v1320, %v1322
        %v1324 = vrot.slane %v1029, %v1323
        %v1326 = vunpack.c.l.s4 1966171168
        %v1327 = vunpack.c.0.s8 %v1326
        %v1328 = vlaneseq
        %v1329 = vshrl.u32 %v1328, 7
        %v1330 = vsub.s32 %v1327, %v1329
        %v1331 = vrot.slane %v1317, %v1330
        %v1332 = vcombine.high %v1324, %v1324
        %v1333 = vcombine.high %v1331, %v1331
        %v1335 = vunpack.c.l.s4 1966171168
        %v1336 = vunpack.c.0.s8 %v1335
        %v1337 = vlaneseq
        %v1338 = vshrl.u32 %v1337, 7
        %v1339 = vsub.s32 %v1336, %v1338
        %v1340 = vrot.slane %v1324, %v1339
        %v1342 = vunpack.c.l.s4 1966171168
        %v1343 = vunpack.c.0.s8 %v1342
        %v1344 = vlaneseq
        %v1345 = vshrl.u32 %v1344, 7
        %v1346 = vsub.s32 %v1343, %v1345
        %v1347 = vrot.slane %v1331, %v1346
        %v1349 = vunpack.c.l.s4 1966171168
        %v1350 = vunpack.c.0.s8 %v1349
        %v1351 = vlaneseq
        %v1352 = vshrl.u32 %v1351, 7
        %v1353 = vsub.s32 %v1350, %v1352
        %v1354 = vrot.slane %v1332, %v1353
        %v1356 = vunpack.c.l.s4 1966171168
        %v1357 = vunpack.c.0.s8 %v1356
        %v1358 = vlaneseq
        %v1359 = vshrl.u32 %v1358, 7
        %v1360 = vsub.s32 %v1357, %v1359
        %v1361 = vrot.slane %v1333, %v1360
        %v1362 = vcombine.high %v1340, %v1340
        %v1363 = vcombine.high %v1347, %v1347
        %v1364 = vcombine.high %v1354, %v1354
        %v1365 = vcombine.high %v1361, %v1361
        %v1366 = vcombine.high %v1030, %v1030
        %v1368 = vunpack.c.l.s4 1966171168
        %v1369 = vunpack.c.0.s8 %v1368
        %v1370 = vlaneseq
        %v1371 = vshrl.u32 %v1370, 7
        %v1372 = vsub.s32 %v1369, %v1371
        %v1373 = vrot.slane %v1030, %v1372
        %v1375 = vunpack.c.l.s4 1966171168
        %v1376 = vunpack.c.0.s8 %v1375
        %v1377 = vlaneseq
        %v1378 = vshrl.u32 %v1377, 7
        %v1379 = vsub.s32 %v1376, %v1378
        %v1380 = vrot.slane %v1366, %v1379
        %v1381 = vcombine.high %v1373, %v1373
        %v1382 = vcombine.high %v1380, %v1380
        %v1384 = vunpack.c.l.s4 1966171168
        %v1385 = vunpack.c.0.s8 %v1384
        %v1386 = vlaneseq
        %v1387 = vshrl.u32 %v1386, 7
        %v1388 = vsub.s32 %v1385, %v1387
        %v1389 = vrot.slane %v1373, %v1388
        %v1391 = vunpack.c.l.s4 1966171168
        %v1392 = vunpack.c.0.s8 %v1391
        %v1393 = vlaneseq
        %v1394 = vshrl.u32 %v1393, 7
        %v1395 = vsub.s32 %v1392, %v1394
        %v1396 = vrot.slane %v1380, %v1395
        %v1398 = vunpack.c.l.s4 1966171168
        %v1399 = vunpack.c.0.s8 %v1398
        %v1400 = vlaneseq
        %v1401 = vshrl.u32 %v1400, 7
        %v1402 = vsub.s32 %v1399, %v1401
        %v1403 = vrot.slane %v1381, %v1402
        %v1405 = vunpack.c.l.s4 1966171168
        %v1406 = vunpack.c.0.s8 %v1405
        %v1407 = vlaneseq
        %v1408 = vshrl.u32 %v1407, 7
        %v1409 = vsub.s32 %v1406, %v1408
        %v1410 = vrot.slane %v1382, %v1409
        %v1411 = vcombine.high %v1389, %v1389
        %v1412 = vcombine.high %v1396, %v1396
        %v1413 = vcombine.high %v1403, %v1403
        %v1414 = vcombine.high %v1410, %v1410
        %v1415 = vcombine.high %v1031, %v1031
        %v1417 = vunpack.c.l.s4 1966171168
        %v1418 = vunpack.c.0.s8 %v1417
        %v1419 = vlaneseq
        %v1420 = vshrl.u32 %v1419, 7
        %v1421 = vsub.s32 %v1418, %v1420
        %v1422 = vrot.slane %v1031, %v1421
        %v1424 = vunpack.c.l.s4 1966171168
        %v1425 = vunpack.c.0.s8 %v1424
        %v1426 = vlaneseq
        %v1427 = vshrl.u32 %v1426, 7
        %v1428 = vsub.s32 %v1425, %v1427
        %v1429 = vrot.slane %v1415, %v1428
        %v1430 = vcombine.high %v1422, %v1422
        %v1431 = vcombine.high %v1429, %v1429
        %v1433 = vunpack.c.l.s4 1966171168
        %v1434 = vunpack.c.0.s8 %v1433
        %v1435 = vlaneseq
        %v1436 = vshrl.u32 %v1435, 7
        %v1437 = vsub.s32 %v1434, %v1436
        %v1438 = vrot.slane %v1422, %v1437
        %v1440 = vunpack.c.l.s4 1966171168
        %v1441 = vunpack.c.0.s8 %v1440
        %v1442 = vlaneseq
        %v1443 = vshrl.u32 %v1442, 7
        %v1444 = vsub.s32 %v1441, %v1443
        %v1445 = vrot.slane %v1429, %v1444
        %v1447 = vunpack.c.l.s4 1966171168
        %v1448 = vunpack.c.0.s8 %v1447
        %v1449 = vlaneseq
        %v1450 = vshrl.u32 %v1449, 7
        %v1451 = vsub.s32 %v1448, %v1450
        %v1452 = vrot.slane %v1430, %v1451
        %v1454 = vunpack.c.l.s4 1966171168
        %v1455 = vunpack.c.0.s8 %v1454
        %v1456 = vlaneseq
        %v1457 = vshrl.u32 %v1456, 7
        %v1458 = vsub.s32 %v1455, %v1457
        %v1459 = vrot.slane %v1431, %v1458
        %v1460 = vcombine.high %v1438, %v1438
        %v1461 = vcombine.high %v1445, %v1445
        %v1462 = vcombine.high %v1452, %v1452
        %v1463 = vcombine.high %v1459, %v1459
        %v1464 = vlaneseq
        %v1465 = vshrl.u32 %v1464, 7
        %v1466 = vsub.s32 0, %v1465
        %v1467 = vrot.slane %v1291, %v1466
        %v1468 = vlaneseq
        %v1469 = vshrl.u32 %v1468, 7
        %v1470 = vsub.s32 0, %v1469
        %v1471 = vrot.slane %v1305, %v1470
        %v1472 = vlaneseq
        %v1473 = vshrl.u32 %v1472, 7
        %v1474 = vsub.s32 0, %v1473
        %v1475 = vrot.slane %v1313, %v1474
        %v1476 = vlaneseq
        %v1477 = vshrl.u32 %v1476, 7
        %v1478 = vsub.s32 0, %v1477
        %v1479 = vrot.slane %v1315, %v1478
        %v1480 = vlaneseq
        %v1481 = vshrl.u32 %v1480, 7
        %v1482 = vsub.s32 0, %v1481
        %v1483 = vrot.slane %v1298, %v1482
        %v1484 = vlaneseq
        %v1485 = vshrl.u32 %v1484, 7
        %v1486 = vsub.s32 0, %v1485
        %v1487 = vrot.slane %v1312, %v1486
        %v1488 = vlaneseq
        %v1489 = vshrl.u32 %v1488, 7
        %v1490 = vsub.s32 0, %v1489
        %v1491 = vrot.slane %v1314, %v1490
        %v1492 = vlaneseq
        %v1493 = vshrl.u32 %v1492, 7
        %v1494 = vsub.s32 0, %v1493
        %v1495 = vrot.slane %v1316, %v1494
        %v1496 = vlaneseq
        %v1497 = vshrl.u32 %v1496, 7
        %v1498 = vsub.s32 0, %v1497
        %v1499 = vrot.slane %v1340, %v1498
        %v1500 = vlaneseq
        %v1501 = vshrl.u32 %v1500, 7
        %v1502 = vsub.s32 0, %v1501
        %v1503 = vrot.slane %v1354, %v1502
        %v1504 = vlaneseq
        %v1505 = vshrl.u32 %v1504, 7
        %v1506 = vsub.s32 0, %v1505
        %v1507 = vrot.slane %v1362, %v1506
        %v1508 = vlaneseq
        %v1509 = vshrl.u32 %v1508, 7
        %v1510 = vsub.s32 0, %v1509
        %v1511 = vrot.slane %v1364, %v1510
        %v1512 = vlaneseq
        %v1513 = vshrl.u32 %v1512, 7
        %v1514 = vsub.s32 0, %v1513
        %v1515 = vrot.slane %v1347, %v1514
        %v1516 = vlaneseq
        %v1517 = vshrl.u32 %v1516, 7
        %v1518 = vsub.s32 0, %v1517
        %v1519 = vrot.slane %v1361, %v1518
        %v1520 = vlaneseq
        %v1521 = vshrl.u32 %v1520, 7
        %v1522 = vsub.s32 0, %v1521
        %v1523 = vrot.slane %v1363, %v1522
        %v1524 = vlaneseq
        %v1525 = vshrl.u32 %v1524, 7
        %v1526 = vsub.s32 0, %v1525
        %v1527 = vrot.slane %v1365, %v1526
        %v1528 = vlaneseq
        %v1529 = vshrl.u32 %v1528, 7
        %v1530 = vsub.s32 0, %v1529
        %v1531 = vrot.slane %v1389, %v1530
        %v1532 = vlaneseq
        %v1533 = vshrl.u32 %v1532, 7
        %v1534 = vsub.s32 0, %v1533
        %v1535 = vrot.slane %v1403, %v1534
        %v1536 = vlaneseq
        %v1537 = vshrl.u32 %v1536, 7
        %v1538 = vsub.s32 0, %v1537
        %v1539 = vrot.slane %v1411, %v1538
        %v1540 = vlaneseq
        %v1541 = vshrl.u32 %v1540, 7
        %v1542 = vsub.s32 0, %v1541
        %v1543 = vrot.slane %v1413, %v1542
        %v1544 = vlaneseq
        %v1545 = vshrl.u32 %v1544, 7
        %v1546 = vsub.s32 0, %v1545
        %v1547 = vrot.slane %v1396, %v1546
        %v1548 = vlaneseq
        %v1549 = vshrl.u32 %v1548, 7
        %v1550 = vsub.s32 0, %v1549
        %v1551 = vrot.slane %v1410, %v1550
        %v1552 = vlaneseq
        %v1553 = vshrl.u32 %v1552, 7
        %v1554 = vsub.s32 0, %v1553
        %v1555 = vrot.slane %v1412, %v1554
        %v1556 = vlaneseq
        %v1557 = vshrl.u32 %v1556, 7
        %v1558 = vsub.s32 0, %v1557
        %v1559 = vrot.slane %v1414, %v1558
        %v1560 = vlaneseq
        %v1561 = vshrl.u32 %v1560, 7
        %v1562 = vsub.s32 0, %v1561
        %v1563 = vrot.slane %v1438, %v1562
        %v1564 = vlaneseq
        %v1565 = vshrl.u32 %v1564, 7
        %v1566 = vsub.s32 0, %v1565
        %v1567 = vrot.slane %v1452, %v1566
        %v1568 = vlaneseq
        %v1569 = vshrl.u32 %v1568, 7
        %v1570 = vsub.s32 0, %v1569
        %v1571 = vrot.slane %v1460, %v1570
        %v1572 = vlaneseq
        %v1573 = vshrl.u32 %v1572, 7
        %v1574 = vsub.s32 0, %v1573
        %v1575 = vrot.slane %v1462, %v1574
        %v1576 = vlaneseq
        %v1577 = vshrl.u32 %v1576, 7
        %v1578 = vsub.s32 0, %v1577
        %v1579 = vrot.slane %v1445, %v1578
        %v1580 = vlaneseq
        %v1581 = vshrl.u32 %v1580, 7
        %v1582 = vsub.s32 0, %v1581
        %v1583 = vrot.slane %v1459, %v1582
        %v1584 = vlaneseq
        %v1585 = vshrl.u32 %v1584, 7
        %v1586 = vsub.s32 0, %v1585
        %v1587 = vrot.slane %v1461, %v1586
        %v1588 = vlaneseq
        %v1589 = vshrl.u32 %v1588, 7
        %v1590 = vsub.s32 0, %v1589
        %v1591 = vrot.slane %v1463, %v1590
        %v1624 = vsel %vm781, %v1059, %v1467
        %v1625 = vsel %vm781, %v1073, %v1471
        %v1626 = vsel %vm781, %v1081, %v1475
        %v1627 = vsel %vm781, %v1083, %v1479
        %v1628 = vsel %vm781, %v1066, %v1483
        %v1629 = vsel %vm781, %v1080, %v1487
        %v1630 = vsel %vm781, %v1082, %v1491
        %v1631 = vsel %vm781, %v1084, %v1495
        %v1632 = vsel %vm781, %v1108, %v1499
        %v1633 = vsel %vm781, %v1122, %v1503
        %v1634 = vsel %vm781, %v1130, %v1507
        %v1635 = vsel %vm781, %v1132, %v1511
        %v1636 = vsel %vm781, %v1115, %v1515
        %v1637 = vsel %vm781, %v1129, %v1519
        %v1638 = vsel %vm781, %v1131, %v1523
        %v1639 = vsel %vm781, %v1133, %v1527
        %v1640 = vsel %vm781, %v1157, %v1531
        %v1641 = vsel %vm781, %v1171, %v1535
        %v1642 = vsel %vm781, %v1179, %v1539
        %v1643 = vsel %vm781, %v1181, %v1543
        %v1644 = vsel %vm781, %v1164, %v1547
        %v1645 = vsel %vm781, %v1178, %v1551
        %v1646 = vsel %vm781, %v1180, %v1555
        %v1647 = vsel %vm781, %v1182, %v1559
        %v1648 = vsel %vm781, %v1206, %v1563
        %v1649 = vsel %vm781, %v1220, %v1567
        %v1650 = vsel %vm781, %v1228, %v1571
        %v1651 = vsel %vm781, %v1230, %v1575
        %v1652 = vsel %vm781, %v1213, %v1579
        %v1653 = vsel %vm781, %v1227, %v1583
        %v1654 = vsel %vm781, %v1229, %v1587
        %v1655 = vsel %vm781, %v1231, %v1591
        %v1688 = vcombine.low %v1624, %v1625
        %v1689 = vcombine.low %v1626, %v1627
        %v1691 = vunpack.c.l.s4 1983009808
        %v1692 = vunpack.c.0.s8 %v1691
        %v1693 = vlaneseq
        %v1694 = vshrl.u32 %v1693, 7
        %v1695 = vsub.s32 %v1692, %v1694
        %v1696 = vrot.slane %v1688, %v1695
        %v1698 = vunpack.c.l.s4 1983009808
        %v1699 = vunpack.c.0.s8 %v1698
        %v1700 = vlaneseq
        %v1701 = vshrl.u32 %v1700, 7
        %v1702 = vsub.s32 %v1699, %v1701
        %v1703 = vrot.slane %v1689, %v1702
        %v1704 = vcombine.low %v1696, %v1703
        %v1705 = vcombine.low %v1628, %v1629
        %v1706 = vcombine.low %v1630, %v1631
        %v1708 = vunpack.c.l.s4 1983009808
        %v1709 = vunpack.c.0.s8 %v1708
        %v1710 = vlaneseq
        %v1711 = vshrl.u32 %v1710, 7
        %v1712 = vsub.s32 %v1709, %v1711
        %v1713 = vrot.slane %v1705, %v1712
        %v1715 = vunpack.c.l.s4 1983009808
        %v1716 = vunpack.c.0.s8 %v1715
        %v1717 = vlaneseq
        %v1718 = vshrl.u32 %v1717, 7
        %v1719 = vsub.s32 %v1716, %v1718
        %v1720 = vrot.slane %v1706, %v1719
        %v1721 = vcombine.low %v1713, %v1720
        %v1722 = vcombine.low %v1632, %v1633
        %v1723 = vcombine.low %v1634, %v1635
        %v1725 = vunpack.c.l.s4 1983009808
        %v1726 = vunpack.c.0.s8 %v1725
        %v1727 = vlaneseq
        %v1728 = vshrl.u32 %v1727, 7
        %v1729 = vsub.s32 %v1726, %v1728
        %v1730 = vrot.slane %v1722, %v1729
        %v1732 = vunpack.c.l.s4 1983009808
        %v1733 = vunpack.c.0.s8 %v1732
        %v1734 = vlaneseq
        %v1735 = vshrl.u32 %v1734, 7
        %v1736 = vsub.s32 %v1733, %v1735
        %v1737 = vrot.slane %v1723, %v1736
        %v1738 = vcombine.low %v1730, %v1737
        %v1739 = vcombine.low %v1636, %v1637
        %v1740 = vcombine.low %v1638, %v1639
        %v1742 = vunpack.c.l.s4 1983009808
        %v1743 = vunpack.c.0.s8 %v1742
        %v1744 = vlaneseq
        %v1745 = vshrl.u32 %v1744, 7
        %v1746 = vsub.s32 %v1743, %v1745
        %v1747 = vrot.slane %v1739, %v1746
        %v1749 = vunpack.c.l.s4 1983009808
        %v1750 = vunpack.c.0.s8 %v1749
        %v1751 = vlaneseq
        %v1752 = vshrl.u32 %v1751, 7
        %v1753 = vsub.s32 %v1750, %v1752
        %v1754 = vrot.slane %v1740, %v1753
        %v1755 = vcombine.low %v1747, %v1754
        %v1756 = vcombine.low %v1640, %v1641
        %v1757 = vcombine.low %v1642, %v1643
        %v1759 = vunpack.c.l.s4 1983009808
        %v1760 = vunpack.c.0.s8 %v1759
        %v1761 = vlaneseq
        %v1762 = vshrl.u32 %v1761, 7
        %v1763 = vsub.s32 %v1760, %v1762
        %v1764 = vrot.slane %v1756, %v1763
        %v1766 = vunpack.c.l.s4 1983009808
        %v1767 = vunpack.c.0.s8 %v1766
        %v1768 = vlaneseq
        %v1769 = vshrl.u32 %v1768, 7
        %v1770 = vsub.s32 %v1767, %v1769
        %v1771 = vrot.slane %v1757, %v1770
        %v1772 = vcombine.low %v1764, %v1771
        %v1773 = vcombine.low %v1644, %v1645
        %v1774 = vcombine.low %v1646, %v1647
        %v1776 = vunpack.c.l.s4 1983009808
        %v1777 = vunpack.c.0.s8 %v1776
        %v1778 = vlaneseq
        %v1779 = vshrl.u32 %v1778, 7
        %v1780 = vsub.s32 %v1777, %v1779
        %v1781 = vrot.slane %v1773, %v1780
        %v1783 = vunpack.c.l.s4 1983009808
        %v1784 = vunpack.c.0.s8 %v1783
        %v1785 = vlaneseq
        %v1786 = vshrl.u32 %v1785, 7
        %v1787 = vsub.s32 %v1784, %v1786
        %v1788 = vrot.slane %v1774, %v1787
        %v1789 = vcombine.low %v1781, %v1788
        %v1790 = vcombine.low %v1648, %v1649
        %v1791 = vcombine.low %v1650, %v1651
        %v1793 = vunpack.c.l.s4 1983009808
        %v1794 = vunpack.c.0.s8 %v1793
        %v1795 = vlaneseq
        %v1796 = vshrl.u32 %v1795, 7
        %v1797 = vsub.s32 %v1794, %v1796
        %v1798 = vrot.slane %v1790, %v1797
        %v1800 = vunpack.c.l.s4 1983009808
        %v1801 = vunpack.c.0.s8 %v1800
        %v1802 = vlaneseq
        %v1803 = vshrl.u32 %v1802, 7
        %v1804 = vsub.s32 %v1801, %v1803
        %v1805 = vrot.slane %v1791, %v1804
        %v1806 = vcombine.low %v1798, %v1805
        %v1807 = vcombine.low %v1652, %v1653
        %v1808 = vcombine.low %v1654, %v1655
        %v1810 = vunpack.c.l.s4 1983009808
        %v1811 = vunpack.c.0.s8 %v1810
        %v1812 = vlaneseq
        %v1813 = vshrl.u32 %v1812, 7
        %v1814 = vsub.s32 %v1811, %v1813
        %v1815 = vrot.slane %v1807, %v1814
        %v1817 = vunpack.c.l.s4 1983009808
        %v1818 = vunpack.c.0.s8 %v1817
        %v1819 = vlaneseq
        %v1820 = vshrl.u32 %v1819, 7
        %v1821 = vsub.s32 %v1818, %v1820
        %v1822 = vrot.slane %v1808, %v1821
        %v1823 = vcombine.low %v1815, %v1822
        %1832 = vxpose.xlu0.b32.start [1/16] %v1704, 128
        %1833 = vxpose.xlu0.b32.cont [2/16] %v1721, 128
        %1834 = vxpose.xlu0.b32.cont [3/16] %v1738, 128
        %1835 = vxpose.xlu0.b32.cont [4/16] %v1755, 128
        %1836 = vxpose.xlu0.b32.cont [5/16] %v1772, 128
        %1837 = vxpose.xlu0.b32.cont [6/16] %v1789, 128
        %1838 = vxpose.xlu0.b32.cont [7/16] %v1806, 128
        %1839 = vxpose.xlu0.b32.cont [8/16] %v1823, 128
        %1840 = vxpose.xlu0.b32.cont [9/16] 0.0, 128
        %1841 = vxpose.xlu0.b32.cont [10/16] 0.0, 128
        %1842 = vxpose.xlu0.b32.cont [11/16] 0.0, 128
        %1843 = vxpose.xlu0.b32.cont [12/16] 0.0, 128
        %1844 = vxpose.xlu0.b32.cont [13/16] 0.0, 128
        %1845 = vxpose.xlu0.b32.cont [14/16] 0.0, 128
        %1846 = vxpose.xlu0.b32.cont [15/16] 0.0, 128
        %1847 = vxpose.xlu0.b32.end [16/16] 0.0, 128
        %v1848 = vpop.trf.xlu0
        %v1849 = vpop.trf.xlu0
        %v1850 = vpop.trf.xlu0
        %v1851 = vpop.trf.xlu0
        %v1852 = vpop.trf.xlu0
        %v1853 = vpop.trf.xlu0
        %v1854 = vpop.trf.xlu0
        %v1855 = vpop.trf.xlu0
        %v1856 = vpop.trf.xlu0
        %v1857 = vpop.trf.xlu0
        %v1858 = vpop.trf.xlu0
        %v1859 = vpop.trf.xlu0
        %v1860 = vpop.trf.xlu0
        %v1861 = vpop.trf.xlu0
        %v1862 = vpop.trf.xlu0
        %v1863 = vpop.trf.xlu0
        %v1880 = vcombine.high %v1006, %v1006
        %v1882 = vunpack.c.l.s4 1966171168
        %v1883 = vunpack.c.0.s8 %v1882
        %v1884 = vlaneseq
        %v1885 = vshrl.u32 %v1884, 7
        %v1886 = vsub.s32 %v1883, %v1885
        %v1887 = vrot.slane %v1006, %v1886
        %v1889 = vunpack.c.l.s4 1966171168
        %v1890 = vunpack.c.0.s8 %v1889
        %v1891 = vlaneseq
        %v1892 = vshrl.u32 %v1891, 7
        %v1893 = vsub.s32 %v1890, %v1892
        %v1894 = vrot.slane %v1880, %v1893
        %v1895 = vcombine.high %v1887, %v1887
        %v1896 = vcombine.high %v1894, %v1894
        %v1898 = vunpack.c.l.s4 1966171168
        %v1899 = vunpack.c.0.s8 %v1898
        %v1900 = vlaneseq
        %v1901 = vshrl.u32 %v1900, 7
        %v1902 = vsub.s32 %v1899, %v1901
        %v1903 = vrot.slane %v1887, %v1902
        %v1905 = vunpack.c.l.s4 1966171168
        %v1906 = vunpack.c.0.s8 %v1905
        %v1907 = vlaneseq
        %v1908 = vshrl.u32 %v1907, 7
        %v1909 = vsub.s32 %v1906, %v1908
        %v1910 = vrot.slane %v1894, %v1909
        %v1912 = vunpack.c.l.s4 1966171168
        %v1913 = vunpack.c.0.s8 %v1912
        %v1914 = vlaneseq
        %v1915 = vshrl.u32 %v1914, 7
        %v1916 = vsub.s32 %v1913, %v1915
        %v1917 = vrot.slane %v1895, %v1916
        %v1919 = vunpack.c.l.s4 1966171168
        %v1920 = vunpack.c.0.s8 %v1919
        %v1921 = vlaneseq
        %v1922 = vshrl.u32 %v1921, 7
        %v1923 = vsub.s32 %v1920, %v1922
        %v1924 = vrot.slane %v1896, %v1923
        %v1925 = vcombine.high %v1903, %v1903
        %v1926 = vcombine.high %v1910, %v1910
        %v1927 = vcombine.high %v1917, %v1917
        %v1928 = vcombine.high %v1924, %v1924
        %v1929 = vcombine.high %v1007, %v1007
        %v1931 = vunpack.c.l.s4 1966171168
        %v1932 = vunpack.c.0.s8 %v1931
        %v1933 = vlaneseq
        %v1934 = vshrl.u32 %v1933, 7
        %v1935 = vsub.s32 %v1932, %v1934
        %v1936 = vrot.slane %v1007, %v1935
        %v1938 = vunpack.c.l.s4 1966171168
        %v1939 = vunpack.c.0.s8 %v1938
        %v1940 = vlaneseq
        %v1941 = vshrl.u32 %v1940, 7
        %v1942 = vsub.s32 %v1939, %v1941
        %v1943 = vrot.slane %v1929, %v1942
        %v1944 = vcombine.high %v1936, %v1936
        %v1945 = vcombine.high %v1943, %v1943
        %v1947 = vunpack.c.l.s4 1966171168
        %v1948 = vunpack.c.0.s8 %v1947
        %v1949 = vlaneseq
        %v1950 = vshrl.u32 %v1949, 7
        %v1951 = vsub.s32 %v1948, %v1950
        %v1952 = vrot.slane %v1936, %v1951
        %v1954 = vunpack.c.l.s4 1966171168
        %v1955 = vunpack.c.0.s8 %v1954
        %v1956 = vlaneseq
        %v1957 = vshrl.u32 %v1956, 7
        %v1958 = vsub.s32 %v1955, %v1957
        %v1959 = vrot.slane %v1943, %v1958
        %v1961 = vunpack.c.l.s4 1966171168
        %v1962 = vunpack.c.0.s8 %v1961
        %v1963 = vlaneseq
        %v1964 = vshrl.u32 %v1963, 7
        %v1965 = vsub.s32 %v1962, %v1964
        %v1966 = vrot.slane %v1944, %v1965
        %v1968 = vunpack.c.l.s4 1966171168
        %v1969 = vunpack.c.0.s8 %v1968
        %v1970 = vlaneseq
        %v1971 = vshrl.u32 %v1970, 7
        %v1972 = vsub.s32 %v1969, %v1971
        %v1973 = vrot.slane %v1945, %v1972
        %v1974 = vcombine.high %v1952, %v1952
        %v1975 = vcombine.high %v1959, %v1959
        %v1976 = vcombine.high %v1966, %v1966
        %v1977 = vcombine.high %v1973, %v1973
        %v1978 = vcombine.high %v1008, %v1008
        %v1980 = vunpack.c.l.s4 1966171168
        %v1981 = vunpack.c.0.s8 %v1980
        %v1982 = vlaneseq
        %v1983 = vshrl.u32 %v1982, 7
        %v1984 = vsub.s32 %v1981, %v1983
        %v1985 = vrot.slane %v1008, %v1984
        %v1987 = vunpack.c.l.s4 1966171168
        %v1988 = vunpack.c.0.s8 %v1987
        %v1989 = vlaneseq
        %v1990 = vshrl.u32 %v1989, 7
        %v1991 = vsub.s32 %v1988, %v1990
        %v1992 = vrot.slane %v1978, %v1991
        %v1993 = vcombine.high %v1985, %v1985
        %v1994 = vcombine.high %v1992, %v1992
        %v1996 = vunpack.c.l.s4 1966171168
        %v1997 = vunpack.c.0.s8 %v1996
        %v1998 = vlaneseq
        %v1999 = vshrl.u32 %v1998, 7
        %v2000 = vsub.s32 %v1997, %v1999
        %v2001 = vrot.slane %v1985, %v2000
        %v2003 = vunpack.c.l.s4 1966171168
        %v2004 = vunpack.c.0.s8 %v2003
        %v2005 = vlaneseq
        %v2006 = vshrl.u32 %v2005, 7
        %v2007 = vsub.s32 %v2004, %v2006
        %v2008 = vrot.slane %v1992, %v2007
        %v2010 = vunpack.c.l.s4 1966171168
        %v2011 = vunpack.c.0.s8 %v2010
        %v2012 = vlaneseq
        %v2013 = vshrl.u32 %v2012, 7
        %v2014 = vsub.s32 %v2011, %v2013
        %v2015 = vrot.slane %v1993, %v2014
        %v2017 = vunpack.c.l.s4 1966171168
        %v2018 = vunpack.c.0.s8 %v2017
        %v2019 = vlaneseq
        %v2020 = vshrl.u32 %v2019, 7
        %v2021 = vsub.s32 %v2018, %v2020
        %v2022 = vrot.slane %v1994, %v2021
        %v2023 = vcombine.high %v2001, %v2001
        %v2024 = vcombine.high %v2008, %v2008
        %v2025 = vcombine.high %v2015, %v2015
        %v2026 = vcombine.high %v2022, %v2022
        %v2027 = vcombine.high %v1009, %v1009
        %v2029 = vunpack.c.l.s4 1966171168
        %v2030 = vunpack.c.0.s8 %v2029
        %v2031 = vlaneseq
        %v2032 = vshrl.u32 %v2031, 7
        %v2033 = vsub.s32 %v2030, %v2032
        %v2034 = vrot.slane %v1009, %v2033
        %v2036 = vunpack.c.l.s4 1966171168
        %v2037 = vunpack.c.0.s8 %v2036
        %v2038 = vlaneseq
        %v2039 = vshrl.u32 %v2038, 7
        %v2040 = vsub.s32 %v2037, %v2039
        %v2041 = vrot.slane %v2027, %v2040
        %v2042 = vcombine.high %v2034, %v2034
        %v2043 = vcombine.high %v2041, %v2041
        %v2045 = vunpack.c.l.s4 1966171168
        %v2046 = vunpack.c.0.s8 %v2045
        %v2047 = vlaneseq
        %v2048 = vshrl.u32 %v2047, 7
        %v2049 = vsub.s32 %v2046, %v2048
        %v2050 = vrot.slane %v2034, %v2049
        %v2052 = vunpack.c.l.s4 1966171168
        %v2053 = vunpack.c.0.s8 %v2052
        %v2054 = vlaneseq
        %v2055 = vshrl.u32 %v2054, 7
        %v2056 = vsub.s32 %v2053, %v2055
        %v2057 = vrot.slane %v2041, %v2056
        %v2059 = vunpack.c.l.s4 1966171168
        %v2060 = vunpack.c.0.s8 %v2059
        %v2061 = vlaneseq
        %v2062 = vshrl.u32 %v2061, 7
        %v2063 = vsub.s32 %v2060, %v2062
        %v2064 = vrot.slane %v2042, %v2063
        %v2066 = vunpack.c.l.s4 1966171168
        %v2067 = vunpack.c.0.s8 %v2066
        %v2068 = vlaneseq
        %v2069 = vshrl.u32 %v2068, 7
        %v2070 = vsub.s32 %v2067, %v2069
        %v2071 = vrot.slane %v2043, %v2070
        %v2072 = vcombine.high %v2050, %v2050
        %v2073 = vcombine.high %v2057, %v2057
        %v2074 = vcombine.high %v2064, %v2064
        %v2075 = vcombine.high %v2071, %v2071
        %v2076 = vcombine.high %v1010, %v1010
        %v2078 = vunpack.c.l.s4 1966171168
        %v2079 = vunpack.c.0.s8 %v2078
        %v2080 = vlaneseq
        %v2081 = vshrl.u32 %v2080, 7
        %v2082 = vsub.s32 %v2079, %v2081
        %v2083 = vrot.slane %v1010, %v2082
        %v2085 = vunpack.c.l.s4 1966171168
        %v2086 = vunpack.c.0.s8 %v2085
        %v2087 = vlaneseq
        %v2088 = vshrl.u32 %v2087, 7
        %v2089 = vsub.s32 %v2086, %v2088
        %v2090 = vrot.slane %v2076, %v2089
        %v2091 = vcombine.high %v2083, %v2083
        %v2092 = vcombine.high %v2090, %v2090
        %v2094 = vunpack.c.l.s4 1966171168
        %v2095 = vunpack.c.0.s8 %v2094
        %v2096 = vlaneseq
        %v2097 = vshrl.u32 %v2096, 7
        %v2098 = vsub.s32 %v2095, %v2097
        %v2099 = vrot.slane %v2083, %v2098
        %v2101 = vunpack.c.l.s4 1966171168
        %v2102 = vunpack.c.0.s8 %v2101
        %v2103 = vlaneseq
        %v2104 = vshrl.u32 %v2103, 7
        %v2105 = vsub.s32 %v2102, %v2104
        %v2106 = vrot.slane %v2090, %v2105
        %v2108 = vunpack.c.l.s4 1966171168
        %v2109 = vunpack.c.0.s8 %v2108
        %v2110 = vlaneseq
        %v2111 = vshrl.u32 %v2110, 7
        %v2112 = vsub.s32 %v2109, %v2111
        %v2113 = vrot.slane %v2091, %v2112
        %v2115 = vunpack.c.l.s4 1966171168
        %v2116 = vunpack.c.0.s8 %v2115
        %v2117 = vlaneseq
        %v2118 = vshrl.u32 %v2117, 7
        %v2119 = vsub.s32 %v2116, %v2118
        %v2120 = vrot.slane %v2092, %v2119
        %v2121 = vcombine.high %v2099, %v2099
        %v2122 = vcombine.high %v2106, %v2106
        %v2123 = vcombine.high %v2113, %v2113
        %v2124 = vcombine.high %v2120, %v2120
        %v2125 = vcombine.high %v1011, %v1011
        %v2127 = vunpack.c.l.s4 1966171168
        %v2128 = vunpack.c.0.s8 %v2127
        %v2129 = vlaneseq
        %v2130 = vshrl.u32 %v2129, 7
        %v2131 = vsub.s32 %v2128, %v2130
        %v2132 = vrot.slane %v1011, %v2131
        %v2134 = vunpack.c.l.s4 1966171168
        %v2135 = vunpack.c.0.s8 %v2134
        %v2136 = vlaneseq
        %v2137 = vshrl.u32 %v2136, 7
        %v2138 = vsub.s32 %v2135, %v2137
        %v2139 = vrot.slane %v2125, %v2138
        %v2140 = vcombine.high %v2132, %v2132
        %v2141 = vcombine.high %v2139, %v2139
        %v2143 = vunpack.c.l.s4 1966171168
        %v2144 = vunpack.c.0.s8 %v2143
        %v2145 = vlaneseq
        %v2146 = vshrl.u32 %v2145, 7
        %v2147 = vsub.s32 %v2144, %v2146
        %v2148 = vrot.slane %v2132, %v2147
        %v2150 = vunpack.c.l.s4 1966171168
        %v2151 = vunpack.c.0.s8 %v2150
        %v2152 = vlaneseq
        %v2153 = vshrl.u32 %v2152, 7
        %v2154 = vsub.s32 %v2151, %v2153
        %v2155 = vrot.slane %v2139, %v2154
        %v2157 = vunpack.c.l.s4 1966171168
        %v2158 = vunpack.c.0.s8 %v2157
        %v2159 = vlaneseq
        %v2160 = vshrl.u32 %v2159, 7
        %v2161 = vsub.s32 %v2158, %v2160
        %v2162 = vrot.slane %v2140, %v2161
        %v2164 = vunpack.c.l.s4 1966171168
        %v2165 = vunpack.c.0.s8 %v2164
        %v2166 = vlaneseq
        %v2167 = vshrl.u32 %v2166, 7
        %v2168 = vsub.s32 %v2165, %v2167
        %v2169 = vrot.slane %v2141, %v2168
        %v2170 = vcombine.high %v2148, %v2148
        %v2171 = vcombine.high %v2155, %v2155
        %v2172 = vcombine.high %v2162, %v2162
        %v2173 = vcombine.high %v2169, %v2169
        %v2174 = vcombine.high %v1012, %v1012
        %v2176 = vunpack.c.l.s4 1966171168
        %v2177 = vunpack.c.0.s8 %v2176
        %v2178 = vlaneseq
        %v2179 = vshrl.u32 %v2178, 7
        %v2180 = vsub.s32 %v2177, %v2179
        %v2181 = vrot.slane %v1012, %v2180
        %v2183 = vunpack.c.l.s4 1966171168
        %v2184 = vunpack.c.0.s8 %v2183
        %v2185 = vlaneseq
        %v2186 = vshrl.u32 %v2185, 7
        %v2187 = vsub.s32 %v2184, %v2186
        %v2188 = vrot.slane %v2174, %v2187
        %v2189 = vcombine.high %v2181, %v2181
        %v2190 = vcombine.high %v2188, %v2188
        %v2192 = vunpack.c.l.s4 1966171168
        %v2193 = vunpack.c.0.s8 %v2192
        %v2194 = vlaneseq
        %v2195 = vshrl.u32 %v2194, 7
        %v2196 = vsub.s32 %v2193, %v2195
        %v2197 = vrot.slane %v2181, %v2196
        %v2199 = vunpack.c.l.s4 1966171168
        %v2200 = vunpack.c.0.s8 %v2199
        %v2201 = vlaneseq
        %v2202 = vshrl.u32 %v2201, 7
        %v2203 = vsub.s32 %v2200, %v2202
        %v2204 = vrot.slane %v2188, %v2203
        %v2206 = vunpack.c.l.s4 1966171168
        %v2207 = vunpack.c.0.s8 %v2206
        %v2208 = vlaneseq
        %v2209 = vshrl.u32 %v2208, 7
        %v2210 = vsub.s32 %v2207, %v2209
        %v2211 = vrot.slane %v2189, %v2210
        %v2213 = vunpack.c.l.s4 1966171168
        %v2214 = vunpack.c.0.s8 %v2213
        %v2215 = vlaneseq
        %v2216 = vshrl.u32 %v2215, 7
        %v2217 = vsub.s32 %v2214, %v2216
        %v2218 = vrot.slane %v2190, %v2217
        %v2219 = vcombine.high %v2197, %v2197
        %v2220 = vcombine.high %v2204, %v2204
        %v2221 = vcombine.high %v2211, %v2211
        %v2222 = vcombine.high %v2218, %v2218
        %v2223 = vcombine.high %v1013, %v1013
        %v2225 = vunpack.c.l.s4 1966171168
        %v2226 = vunpack.c.0.s8 %v2225
        %v2227 = vlaneseq
        %v2228 = vshrl.u32 %v2227, 7
        %v2229 = vsub.s32 %v2226, %v2228
        %v2230 = vrot.slane %v1013, %v2229
        %v2232 = vunpack.c.l.s4 1966171168
        %v2233 = vunpack.c.0.s8 %v2232
        %v2234 = vlaneseq
        %v2235 = vshrl.u32 %v2234, 7
        %v2236 = vsub.s32 %v2233, %v2235
        %v2237 = vrot.slane %v2223, %v2236
        %v2238 = vcombine.high %v2230, %v2230
        %v2239 = vcombine.high %v2237, %v2237
        %v2241 = vunpack.c.l.s4 1966171168
        %v2242 = vunpack.c.0.s8 %v2241
        %v2243 = vlaneseq
        %v2244 = vshrl.u32 %v2243, 7
        %v2245 = vsub.s32 %v2242, %v2244
        %v2246 = vrot.slane %v2230, %v2245
        %v2248 = vunpack.c.l.s4 1966171168
        %v2249 = vunpack.c.0.s8 %v2248
        %v2250 = vlaneseq
        %v2251 = vshrl.u32 %v2250, 7
        %v2252 = vsub.s32 %v2249, %v2251
        %v2253 = vrot.slane %v2237, %v2252
        %v2255 = vunpack.c.l.s4 1966171168
        %v2256 = vunpack.c.0.s8 %v2255
        %v2257 = vlaneseq
        %v2258 = vshrl.u32 %v2257, 7
        %v2259 = vsub.s32 %v2256, %v2258
        %v2260 = vrot.slane %v2238, %v2259
        %v2262 = vunpack.c.l.s4 1966171168
        %v2263 = vunpack.c.0.s8 %v2262
        %v2264 = vlaneseq
        %v2265 = vshrl.u32 %v2264, 7
        %v2266 = vsub.s32 %v2263, %v2265
        %v2267 = vrot.slane %v2239, %v2266
        %v2268 = vcombine.high %v2246, %v2246
        %v2269 = vcombine.high %v2253, %v2253
        %v2270 = vcombine.high %v2260, %v2260
        %v2271 = vcombine.high %v2267, %v2267
        %v2272 = vcombine.high %v1014, %v1014
        %v2274 = vunpack.c.l.s4 1966171168
        %v2275 = vunpack.c.0.s8 %v2274
        %v2276 = vlaneseq
        %v2277 = vshrl.u32 %v2276, 7
        %v2278 = vsub.s32 %v2275, %v2277
        %v2279 = vrot.slane %v1014, %v2278
        %v2281 = vunpack.c.l.s4 1966171168
        %v2282 = vunpack.c.0.s8 %v2281
        %v2283 = vlaneseq
        %v2284 = vshrl.u32 %v2283, 7
        %v2285 = vsub.s32 %v2282, %v2284
        %v2286 = vrot.slane %v2272, %v2285
        %v2287 = vcombine.high %v2279, %v2279
        %v2288 = vcombine.high %v2286, %v2286
        %v2290 = vunpack.c.l.s4 1966171168
        %v2291 = vunpack.c.0.s8 %v2290
        %v2292 = vlaneseq
        %v2293 = vshrl.u32 %v2292, 7
        %v2294 = vsub.s32 %v2291, %v2293
        %v2295 = vrot.slane %v2279, %v2294
        %v2297 = vunpack.c.l.s4 1966171168
        %v2298 = vunpack.c.0.s8 %v2297
        %v2299 = vlaneseq
        %v2300 = vshrl.u32 %v2299, 7
        %v2301 = vsub.s32 %v2298, %v2300
        %v2302 = vrot.slane %v2286, %v2301
        %v2304 = vunpack.c.l.s4 1966171168
        %v2305 = vunpack.c.0.s8 %v2304
        %v2306 = vlaneseq
        %v2307 = vshrl.u32 %v2306, 7
        %v2308 = vsub.s32 %v2305, %v2307
        %v2309 = vrot.slane %v2287, %v2308
        %v2311 = vunpack.c.l.s4 1966171168
        %v2312 = vunpack.c.0.s8 %v2311
        %v2313 = vlaneseq
        %v2314 = vshrl.u32 %v2313, 7
        %v2315 = vsub.s32 %v2312, %v2314
        %v2316 = vrot.slane %v2288, %v2315
        %v2317 = vcombine.high %v2295, %v2295
        %v2318 = vcombine.high %v2302, %v2302
        %v2319 = vcombine.high %v2309, %v2309
        %v2320 = vcombine.high %v2316, %v2316
        %v2321 = vcombine.high %v1015, %v1015
        %v2323 = vunpack.c.l.s4 1966171168
        %v2324 = vunpack.c.0.s8 %v2323
        %v2325 = vlaneseq
        %v2326 = vshrl.u32 %v2325, 7
        %v2327 = vsub.s32 %v2324, %v2326
        %v2328 = vrot.slane %v1015, %v2327
        %v2330 = vunpack.c.l.s4 1966171168
        %v2331 = vunpack.c.0.s8 %v2330
        %v2332 = vlaneseq
        %v2333 = vshrl.u32 %v2332, 7
        %v2334 = vsub.s32 %v2331, %v2333
        %v2335 = vrot.slane %v2321, %v2334
        %v2336 = vcombine.high %v2328, %v2328
        %v2337 = vcombine.high %v2335, %v2335
        %v2339 = vunpack.c.l.s4 1966171168
        %v2340 = vunpack.c.0.s8 %v2339
        %v2341 = vlaneseq
        %v2342 = vshrl.u32 %v2341, 7
        %v2343 = vsub.s32 %v2340, %v2342
        %v2344 = vrot.slane %v2328, %v2343
        %v2346 = vunpack.c.l.s4 1966171168
        %v2347 = vunpack.c.0.s8 %v2346
        %v2348 = vlaneseq
        %v2349 = vshrl.u32 %v2348, 7
        %v2350 = vsub.s32 %v2347, %v2349
        %v2351 = vrot.slane %v2335, %v2350
        %v2353 = vunpack.c.l.s4 1966171168
        %v2354 = vunpack.c.0.s8 %v2353
        %v2355 = vlaneseq
        %v2356 = vshrl.u32 %v2355, 7
        %v2357 = vsub.s32 %v2354, %v2356
        %v2358 = vrot.slane %v2336, %v2357
        %v2360 = vunpack.c.l.s4 1966171168
        %v2361 = vunpack.c.0.s8 %v2360
        %v2362 = vlaneseq
        %v2363 = vshrl.u32 %v2362, 7
        %v2364 = vsub.s32 %v2361, %v2363
        %v2365 = vrot.slane %v2337, %v2364
        %v2366 = vcombine.high %v2344, %v2344
        %v2367 = vcombine.high %v2351, %v2351
        %v2368 = vcombine.high %v2358, %v2358
        %v2369 = vcombine.high %v2365, %v2365
        %v2370 = vcombine.high %v1016, %v1016
        %v2372 = vunpack.c.l.s4 1966171168
        %v2373 = vunpack.c.0.s8 %v2372
        %v2374 = vlaneseq
        %v2375 = vshrl.u32 %v2374, 7
        %v2376 = vsub.s32 %v2373, %v2375
        %v2377 = vrot.slane %v1016, %v2376
        %v2379 = vunpack.c.l.s4 1966171168
        %v2380 = vunpack.c.0.s8 %v2379
        %v2381 = vlaneseq
        %v2382 = vshrl.u32 %v2381, 7
        %v2383 = vsub.s32 %v2380, %v2382
        %v2384 = vrot.slane %v2370, %v2383
        %v2385 = vcombine.high %v2377, %v2377
        %v2386 = vcombine.high %v2384, %v2384
        %v2388 = vunpack.c.l.s4 1966171168
        %v2389 = vunpack.c.0.s8 %v2388
        %v2390 = vlaneseq
        %v2391 = vshrl.u32 %v2390, 7
        %v2392 = vsub.s32 %v2389, %v2391
        %v2393 = vrot.slane %v2377, %v2392
        %v2395 = vunpack.c.l.s4 1966171168
        %v2396 = vunpack.c.0.s8 %v2395
        %v2397 = vlaneseq
        %v2398 = vshrl.u32 %v2397, 7
        %v2399 = vsub.s32 %v2396, %v2398
        %v2400 = vrot.slane %v2384, %v2399
        %v2402 = vunpack.c.l.s4 1966171168
        %v2403 = vunpack.c.0.s8 %v2402
        %v2404 = vlaneseq
        %v2405 = vshrl.u32 %v2404, 7
        %v2406 = vsub.s32 %v2403, %v2405
        %v2407 = vrot.slane %v2385, %v2406
        %v2409 = vunpack.c.l.s4 1966171168
        %v2410 = vunpack.c.0.s8 %v2409
        %v2411 = vlaneseq
        %v2412 = vshrl.u32 %v2411, 7
        %v2413 = vsub.s32 %v2410, %v2412
        %v2414 = vrot.slane %v2386, %v2413
        %v2415 = vcombine.high %v2393, %v2393
        %v2416 = vcombine.high %v2400, %v2400
        %v2417 = vcombine.high %v2407, %v2407
        %v2418 = vcombine.high %v2414, %v2414
        %v2419 = vcombine.high %v1017, %v1017
        %v2421 = vunpack.c.l.s4 1966171168
        %v2422 = vunpack.c.0.s8 %v2421
        %v2423 = vlaneseq
        %v2424 = vshrl.u32 %v2423, 7
        %v2425 = vsub.s32 %v2422, %v2424
        %v2426 = vrot.slane %v1017, %v2425
        %v2428 = vunpack.c.l.s4 1966171168
        %v2429 = vunpack.c.0.s8 %v2428
        %v2430 = vlaneseq
        %v2431 = vshrl.u32 %v2430, 7
        %v2432 = vsub.s32 %v2429, %v2431
        %v2433 = vrot.slane %v2419, %v2432
        %v2434 = vcombine.high %v2426, %v2426
        %v2435 = vcombine.high %v2433, %v2433
        %v2437 = vunpack.c.l.s4 1966171168
        %v2438 = vunpack.c.0.s8 %v2437
        %v2439 = vlaneseq
        %v2440 = vshrl.u32 %v2439, 7
        %v2441 = vsub.s32 %v2438, %v2440
        %v2442 = vrot.slane %v2426, %v2441
        %v2444 = vunpack.c.l.s4 1966171168
        %v2445 = vunpack.c.0.s8 %v2444
        %v2446 = vlaneseq
        %v2447 = vshrl.u32 %v2446, 7
        %v2448 = vsub.s32 %v2445, %v2447
        %v2449 = vrot.slane %v2433, %v2448
        %v2451 = vunpack.c.l.s4 1966171168
        %v2452 = vunpack.c.0.s8 %v2451
        %v2453 = vlaneseq
        %v2454 = vshrl.u32 %v2453, 7
        %v2455 = vsub.s32 %v2452, %v2454
        %v2456 = vrot.slane %v2434, %v2455
        %v2458 = vunpack.c.l.s4 1966171168
        %v2459 = vunpack.c.0.s8 %v2458
        %v2460 = vlaneseq
        %v2461 = vshrl.u32 %v2460, 7
        %v2462 = vsub.s32 %v2459, %v2461
        %v2463 = vrot.slane %v2435, %v2462
        %v2464 = vcombine.high %v2442, %v2442
        %v2465 = vcombine.high %v2449, %v2449
        %v2466 = vcombine.high %v2456, %v2456
        %v2467 = vcombine.high %v2463, %v2463
        %v2468 = vcombine.high %v1018, %v1018
        %v2470 = vunpack.c.l.s4 1966171168
        %v2471 = vunpack.c.0.s8 %v2470
        %v2472 = vlaneseq
        %v2473 = vshrl.u32 %v2472, 7
        %v2474 = vsub.s32 %v2471, %v2473
        %v2475 = vrot.slane %v1018, %v2474
        %v2477 = vunpack.c.l.s4 1966171168
        %v2478 = vunpack.c.0.s8 %v2477
        %v2479 = vlaneseq
        %v2480 = vshrl.u32 %v2479, 7
        %v2481 = vsub.s32 %v2478, %v2480
        %v2482 = vrot.slane %v2468, %v2481
        %v2483 = vcombine.high %v2475, %v2475
        %v2484 = vcombine.high %v2482, %v2482
        %v2486 = vunpack.c.l.s4 1966171168
        %v2487 = vunpack.c.0.s8 %v2486
        %v2488 = vlaneseq
        %v2489 = vshrl.u32 %v2488, 7
        %v2490 = vsub.s32 %v2487, %v2489
        %v2491 = vrot.slane %v2475, %v2490
        %v2493 = vunpack.c.l.s4 1966171168
        %v2494 = vunpack.c.0.s8 %v2493
        %v2495 = vlaneseq
        %v2496 = vshrl.u32 %v2495, 7
        %v2497 = vsub.s32 %v2494, %v2496
        %v2498 = vrot.slane %v2482, %v2497
        %v2500 = vunpack.c.l.s4 1966171168
        %v2501 = vunpack.c.0.s8 %v2500
        %v2502 = vlaneseq
        %v2503 = vshrl.u32 %v2502, 7
        %v2504 = vsub.s32 %v2501, %v2503
        %v2505 = vrot.slane %v2483, %v2504
        %v2507 = vunpack.c.l.s4 1966171168
        %v2508 = vunpack.c.0.s8 %v2507
        %v2509 = vlaneseq
        %v2510 = vshrl.u32 %v2509, 7
        %v2511 = vsub.s32 %v2508, %v2510
        %v2512 = vrot.slane %v2484, %v2511
        %v2513 = vcombine.high %v2491, %v2491
        %v2514 = vcombine.high %v2498, %v2498
        %v2515 = vcombine.high %v2505, %v2505
        %v2516 = vcombine.high %v2512, %v2512
        %v2517 = vcombine.high %v1019, %v1019
        %v2519 = vunpack.c.l.s4 1966171168
        %v2520 = vunpack.c.0.s8 %v2519
        %v2521 = vlaneseq
        %v2522 = vshrl.u32 %v2521, 7
        %v2523 = vsub.s32 %v2520, %v2522
        %v2524 = vrot.slane %v1019, %v2523
        %v2526 = vunpack.c.l.s4 1966171168
        %v2527 = vunpack.c.0.s8 %v2526
        %v2528 = vlaneseq
        %v2529 = vshrl.u32 %v2528, 7
        %v2530 = vsub.s32 %v2527, %v2529
        %v2531 = vrot.slane %v2517, %v2530
        %v2532 = vcombine.high %v2524, %v2524
        %v2533 = vcombine.high %v2531, %v2531
        %v2535 = vunpack.c.l.s4 1966171168
        %v2536 = vunpack.c.0.s8 %v2535
        %v2537 = vlaneseq
        %v2538 = vshrl.u32 %v2537, 7
        %v2539 = vsub.s32 %v2536, %v2538
        %v2540 = vrot.slane %v2524, %v2539
        %v2542 = vunpack.c.l.s4 1966171168
        %v2543 = vunpack.c.0.s8 %v2542
        %v2544 = vlaneseq
        %v2545 = vshrl.u32 %v2544, 7
        %v2546 = vsub.s32 %v2543, %v2545
        %v2547 = vrot.slane %v2531, %v2546
        %v2549 = vunpack.c.l.s4 1966171168
        %v2550 = vunpack.c.0.s8 %v2549
        %v2551 = vlaneseq
        %v2552 = vshrl.u32 %v2551, 7
        %v2553 = vsub.s32 %v2550, %v2552
        %v2554 = vrot.slane %v2532, %v2553
        %v2556 = vunpack.c.l.s4 1966171168
        %v2557 = vunpack.c.0.s8 %v2556
        %v2558 = vlaneseq
        %v2559 = vshrl.u32 %v2558, 7
        %v2560 = vsub.s32 %v2557, %v2559
        %v2561 = vrot.slane %v2533, %v2560
        %v2562 = vcombine.high %v2540, %v2540
        %v2563 = vcombine.high %v2547, %v2547
        %v2564 = vcombine.high %v2554, %v2554
        %v2565 = vcombine.high %v2561, %v2561
        %v2566 = vcombine.high %v1020, %v1020
        %v2568 = vunpack.c.l.s4 1966171168
        %v2569 = vunpack.c.0.s8 %v2568
        %v2570 = vlaneseq
        %v2571 = vshrl.u32 %v2570, 7
        %v2572 = vsub.s32 %v2569, %v2571
        %v2573 = vrot.slane %v1020, %v2572
        %v2575 = vunpack.c.l.s4 1966171168
        %v2576 = vunpack.c.0.s8 %v2575
        %v2577 = vlaneseq
        %v2578 = vshrl.u32 %v2577, 7
        %v2579 = vsub.s32 %v2576, %v2578
        %v2580 = vrot.slane %v2566, %v2579
        %v2581 = vcombine.high %v2573, %v2573
        %v2582 = vcombine.high %v2580, %v2580
        %v2584 = vunpack.c.l.s4 1966171168
        %v2585 = vunpack.c.0.s8 %v2584
        %v2586 = vlaneseq
        %v2587 = vshrl.u32 %v2586, 7
        %v2588 = vsub.s32 %v2585, %v2587
        %v2589 = vrot.slane %v2573, %v2588
        %v2591 = vunpack.c.l.s4 1966171168
        %v2592 = vunpack.c.0.s8 %v2591
        %v2593 = vlaneseq
        %v2594 = vshrl.u32 %v2593, 7
        %v2595 = vsub.s32 %v2592, %v2594
        %v2596 = vrot.slane %v2580, %v2595
        %v2598 = vunpack.c.l.s4 1966171168
        %v2599 = vunpack.c.0.s8 %v2598
        %v2600 = vlaneseq
        %v2601 = vshrl.u32 %v2600, 7
        %v2602 = vsub.s32 %v2599, %v2601
        %v2603 = vrot.slane %v2581, %v2602
        %v2605 = vunpack.c.l.s4 1966171168
        %v2606 = vunpack.c.0.s8 %v2605
        %v2607 = vlaneseq
        %v2608 = vshrl.u32 %v2607, 7
        %v2609 = vsub.s32 %v2606, %v2608
        %v2610 = vrot.slane %v2582, %v2609
        %v2611 = vcombine.high %v2589, %v2589
        %v2612 = vcombine.high %v2596, %v2596
        %v2613 = vcombine.high %v2603, %v2603
        %v2614 = vcombine.high %v2610, %v2610
        %v2615 = vcombine.high %v1021, %v1021
        %v2617 = vunpack.c.l.s4 1966171168
        %v2618 = vunpack.c.0.s8 %v2617
        %v2619 = vlaneseq
        %v2620 = vshrl.u32 %v2619, 7
        %v2621 = vsub.s32 %v2618, %v2620
        %v2622 = vrot.slane %v1021, %v2621
        %v2624 = vunpack.c.l.s4 1966171168
        %v2625 = vunpack.c.0.s8 %v2624
        %v2626 = vlaneseq
        %v2627 = vshrl.u32 %v2626, 7
        %v2628 = vsub.s32 %v2625, %v2627
        %v2629 = vrot.slane %v2615, %v2628
        %v2630 = vcombine.high %v2622, %v2622
        %v2631 = vcombine.high %v2629, %v2629
        %v2633 = vunpack.c.l.s4 1966171168
        %v2634 = vunpack.c.0.s8 %v2633
        %v2635 = vlaneseq
        %v2636 = vshrl.u32 %v2635, 7
        %v2637 = vsub.s32 %v2634, %v2636
        %v2638 = vrot.slane %v2622, %v2637
        %v2640 = vunpack.c.l.s4 1966171168
        %v2641 = vunpack.c.0.s8 %v2640
        %v2642 = vlaneseq
        %v2643 = vshrl.u32 %v2642, 7
        %v2644 = vsub.s32 %v2641, %v2643
        %v2645 = vrot.slane %v2629, %v2644
        %v2647 = vunpack.c.l.s4 1966171168
        %v2648 = vunpack.c.0.s8 %v2647
        %v2649 = vlaneseq
        %v2650 = vshrl.u32 %v2649, 7
        %v2651 = vsub.s32 %v2648, %v2650
        %v2652 = vrot.slane %v2630, %v2651
        %v2654 = vunpack.c.l.s4 1966171168
        %v2655 = vunpack.c.0.s8 %v2654
        %v2656 = vlaneseq
        %v2657 = vshrl.u32 %v2656, 7
        %v2658 = vsub.s32 %v2655, %v2657
        %v2659 = vrot.slane %v2631, %v2658
        %v2660 = vcombine.high %v2638, %v2638
        %v2661 = vcombine.high %v2645, %v2645
        %v2662 = vcombine.high %v2652, %v2652
        %v2663 = vcombine.high %v2659, %v2659
        %v2808 = vcombine.high %v1848, %v1848
        %v2810 = vunpack.c.l.s4 1966171168
        %v2811 = vunpack.c.0.s8 %v2810
        %v2812 = vlaneseq
        %v2813 = vshrl.u32 %v2812, 7
        %v2814 = vsub.s32 %v2811, %v2813
        %v2815 = vrot.slane %v1848, %v2814
        %v2817 = vunpack.c.l.s4 1966171168
        %v2818 = vunpack.c.0.s8 %v2817
        %v2819 = vlaneseq
        %v2820 = vshrl.u32 %v2819, 7
        %v2821 = vsub.s32 %v2818, %v2820
        %v2822 = vrot.slane %v2808, %v2821
        %v2823 = vcombine.high %v2815, %v2815
        %v2824 = vcombine.high %v2822, %v2822
        %v2826 = vunpack.c.l.s4 1966171168
        %v2827 = vunpack.c.0.s8 %v2826
        %v2828 = vlaneseq
        %v2829 = vshrl.u32 %v2828, 7
        %v2830 = vsub.s32 %v2827, %v2829
        %v2831 = vrot.slane %v2815, %v2830
        %v2833 = vunpack.c.l.s4 1966171168
        %v2834 = vunpack.c.0.s8 %v2833
        %v2835 = vlaneseq
        %v2836 = vshrl.u32 %v2835, 7
        %v2837 = vsub.s32 %v2834, %v2836
        %v2838 = vrot.slane %v2822, %v2837
        %v2840 = vunpack.c.l.s4 1966171168
        %v2841 = vunpack.c.0.s8 %v2840
        %v2842 = vlaneseq
        %v2843 = vshrl.u32 %v2842, 7
        %v2844 = vsub.s32 %v2841, %v2843
        %v2845 = vrot.slane %v2823, %v2844
        %v2847 = vunpack.c.l.s4 1966171168
        %v2848 = vunpack.c.0.s8 %v2847
        %v2849 = vlaneseq
        %v2850 = vshrl.u32 %v2849, 7
        %v2851 = vsub.s32 %v2848, %v2850
        %v2852 = vrot.slane %v2824, %v2851
        %v2853 = vcombine.high %v2831, %v2831
        %v2854 = vcombine.high %v2838, %v2838
        %v2855 = vcombine.high %v2845, %v2845
        %v2856 = vcombine.high %v2852, %v2852
        %v2857 = vcombine.high %v1849, %v1849
        %v2859 = vunpack.c.l.s4 1966171168
        %v2860 = vunpack.c.0.s8 %v2859
        %v2861 = vlaneseq
        %v2862 = vshrl.u32 %v2861, 7
        %v2863 = vsub.s32 %v2860, %v2862
        %v2864 = vrot.slane %v1849, %v2863
        %v2866 = vunpack.c.l.s4 1966171168
        %v2867 = vunpack.c.0.s8 %v2866
        %v2868 = vlaneseq
        %v2869 = vshrl.u32 %v2868, 7
        %v2870 = vsub.s32 %v2867, %v2869
        %v2871 = vrot.slane %v2857, %v2870
        %v2872 = vcombine.high %v2864, %v2864
        %v2873 = vcombine.high %v2871, %v2871
        %v2875 = vunpack.c.l.s4 1966171168
        %v2876 = vunpack.c.0.s8 %v2875
        %v2877 = vlaneseq
        %v2878 = vshrl.u32 %v2877, 7
        %v2879 = vsub.s32 %v2876, %v2878
        %v2880 = vrot.slane %v2864, %v2879
        %v2882 = vunpack.c.l.s4 1966171168
        %v2883 = vunpack.c.0.s8 %v2882
        %v2884 = vlaneseq
        %v2885 = vshrl.u32 %v2884, 7
        %v2886 = vsub.s32 %v2883, %v2885
        %v2887 = vrot.slane %v2871, %v2886
        %v2889 = vunpack.c.l.s4 1966171168
        %v2890 = vunpack.c.0.s8 %v2889
        %v2891 = vlaneseq
        %v2892 = vshrl.u32 %v2891, 7
        %v2893 = vsub.s32 %v2890, %v2892
        %v2894 = vrot.slane %v2872, %v2893
        %v2896 = vunpack.c.l.s4 1966171168
        %v2897 = vunpack.c.0.s8 %v2896
        %v2898 = vlaneseq
        %v2899 = vshrl.u32 %v2898, 7
        %v2900 = vsub.s32 %v2897, %v2899
        %v2901 = vrot.slane %v2873, %v2900
        %v2902 = vcombine.high %v2880, %v2880
        %v2903 = vcombine.high %v2887, %v2887
        %v2904 = vcombine.high %v2894, %v2894
        %v2905 = vcombine.high %v2901, %v2901
        %v2906 = vcombine.high %v1850, %v1850
        %v2908 = vunpack.c.l.s4 1966171168
        %v2909 = vunpack.c.0.s8 %v2908
        %v2910 = vlaneseq
        %v2911 = vshrl.u32 %v2910, 7
        %v2912 = vsub.s32 %v2909, %v2911
        %v2913 = vrot.slane %v1850, %v2912
        %v2915 = vunpack.c.l.s4 1966171168
        %v2916 = vunpack.c.0.s8 %v2915
        %v2917 = vlaneseq
        %v2918 = vshrl.u32 %v2917, 7
        %v2919 = vsub.s32 %v2916, %v2918
        %v2920 = vrot.slane %v2906, %v2919
        %v2921 = vcombine.high %v2913, %v2913
        %v2922 = vcombine.high %v2920, %v2920
        %v2924 = vunpack.c.l.s4 1966171168
        %v2925 = vunpack.c.0.s8 %v2924
        %v2926 = vlaneseq
        %v2927 = vshrl.u32 %v2926, 7
        %v2928 = vsub.s32 %v2925, %v2927
        %v2929 = vrot.slane %v2913, %v2928
        %v2931 = vunpack.c.l.s4 1966171168
        %v2932 = vunpack.c.0.s8 %v2931
        %v2933 = vlaneseq
        %v2934 = vshrl.u32 %v2933, 7
        %v2935 = vsub.s32 %v2932, %v2934
        %v2936 = vrot.slane %v2920, %v2935
        %v2938 = vunpack.c.l.s4 1966171168
        %v2939 = vunpack.c.0.s8 %v2938
        %v2940 = vlaneseq
        %v2941 = vshrl.u32 %v2940, 7
        %v2942 = vsub.s32 %v2939, %v2941
        %v2943 = vrot.slane %v2921, %v2942
        %v2945 = vunpack.c.l.s4 1966171168
        %v2946 = vunpack.c.0.s8 %v2945
        %v2947 = vlaneseq
        %v2948 = vshrl.u32 %v2947, 7
        %v2949 = vsub.s32 %v2946, %v2948
        %v2950 = vrot.slane %v2922, %v2949
        %v2951 = vcombine.high %v2929, %v2929
        %v2952 = vcombine.high %v2936, %v2936
        %v2953 = vcombine.high %v2943, %v2943
        %v2954 = vcombine.high %v2950, %v2950
        %v2955 = vcombine.high %v1851, %v1851
        %v2957 = vunpack.c.l.s4 1966171168
        %v2958 = vunpack.c.0.s8 %v2957
        %v2959 = vlaneseq
        %v2960 = vshrl.u32 %v2959, 7
        %v2961 = vsub.s32 %v2958, %v2960
        %v2962 = vrot.slane %v1851, %v2961
        %v2964 = vunpack.c.l.s4 1966171168
        %v2965 = vunpack.c.0.s8 %v2964
        %v2966 = vlaneseq
        %v2967 = vshrl.u32 %v2966, 7
        %v2968 = vsub.s32 %v2965, %v2967
        %v2969 = vrot.slane %v2955, %v2968
        %v2970 = vcombine.high %v2962, %v2962
        %v2971 = vcombine.high %v2969, %v2969
        %v2973 = vunpack.c.l.s4 1966171168
        %v2974 = vunpack.c.0.s8 %v2973
        %v2975 = vlaneseq
        %v2976 = vshrl.u32 %v2975, 7
        %v2977 = vsub.s32 %v2974, %v2976
        %v2978 = vrot.slane %v2962, %v2977
        %v2980 = vunpack.c.l.s4 1966171168
        %v2981 = vunpack.c.0.s8 %v2980
        %v2982 = vlaneseq
        %v2983 = vshrl.u32 %v2982, 7
        %v2984 = vsub.s32 %v2981, %v2983
        %v2985 = vrot.slane %v2969, %v2984
        %v2987 = vunpack.c.l.s4 1966171168
        %v2988 = vunpack.c.0.s8 %v2987
        %v2989 = vlaneseq
        %v2990 = vshrl.u32 %v2989, 7
        %v2991 = vsub.s32 %v2988, %v2990
        %v2992 = vrot.slane %v2970, %v2991
        %v2994 = vunpack.c.l.s4 1966171168
        %v2995 = vunpack.c.0.s8 %v2994
        %v2996 = vlaneseq
        %v2997 = vshrl.u32 %v2996, 7
        %v2998 = vsub.s32 %v2995, %v2997
        %v2999 = vrot.slane %v2971, %v2998
        %v3000 = vcombine.high %v2978, %v2978
        %v3001 = vcombine.high %v2985, %v2985
        %v3002 = vcombine.high %v2992, %v2992
        %v3003 = vcombine.high %v2999, %v2999
        %v3004 = vcombine.high %v1852, %v1852
        %v3006 = vunpack.c.l.s4 1966171168
        %v3007 = vunpack.c.0.s8 %v3006
        %v3008 = vlaneseq
        %v3009 = vshrl.u32 %v3008, 7
        %v3010 = vsub.s32 %v3007, %v3009
        %v3011 = vrot.slane %v1852, %v3010
        %v3013 = vunpack.c.l.s4 1966171168
        %v3014 = vunpack.c.0.s8 %v3013
        %v3015 = vlaneseq
        %v3016 = vshrl.u32 %v3015, 7
        %v3017 = vsub.s32 %v3014, %v3016
        %v3018 = vrot.slane %v3004, %v3017
        %v3019 = vcombine.high %v3011, %v3011
        %v3020 = vcombine.high %v3018, %v3018
        %v3022 = vunpack.c.l.s4 1966171168
        %v3023 = vunpack.c.0.s8 %v3022
        %v3024 = vlaneseq
        %v3025 = vshrl.u32 %v3024, 7
        %v3026 = vsub.s32 %v3023, %v3025
        %v3027 = vrot.slane %v3011, %v3026
        %v3029 = vunpack.c.l.s4 1966171168
        %v3030 = vunpack.c.0.s8 %v3029
        %v3031 = vlaneseq
        %v3032 = vshrl.u32 %v3031, 7
        %v3033 = vsub.s32 %v3030, %v3032
        %v3034 = vrot.slane %v3018, %v3033
        %v3036 = vunpack.c.l.s4 1966171168
        %v3037 = vunpack.c.0.s8 %v3036
        %v3038 = vlaneseq
        %v3039 = vshrl.u32 %v3038, 7
        %v3040 = vsub.s32 %v3037, %v3039
        %v3041 = vrot.slane %v3019, %v3040
        %v3043 = vunpack.c.l.s4 1966171168
        %v3044 = vunpack.c.0.s8 %v3043
        %v3045 = vlaneseq
        %v3046 = vshrl.u32 %v3045, 7
        %v3047 = vsub.s32 %v3044, %v3046
        %v3048 = vrot.slane %v3020, %v3047
        %v3049 = vcombine.high %v3027, %v3027
        %v3050 = vcombine.high %v3034, %v3034
        %v3051 = vcombine.high %v3041, %v3041
        %v3052 = vcombine.high %v3048, %v3048
        %v3053 = vcombine.high %v1853, %v1853
        %v3055 = vunpack.c.l.s4 1966171168
        %v3056 = vunpack.c.0.s8 %v3055
        %v3057 = vlaneseq
        %v3058 = vshrl.u32 %v3057, 7
        %v3059 = vsub.s32 %v3056, %v3058
        %v3060 = vrot.slane %v1853, %v3059
        %v3062 = vunpack.c.l.s4 1966171168
        %v3063 = vunpack.c.0.s8 %v3062
        %v3064 = vlaneseq
        %v3065 = vshrl.u32 %v3064, 7
        %v3066 = vsub.s32 %v3063, %v3065
        %v3067 = vrot.slane %v3053, %v3066
        %v3068 = vcombine.high %v3060, %v3060
        %v3069 = vcombine.high %v3067, %v3067
        %v3071 = vunpack.c.l.s4 1966171168
        %v3072 = vunpack.c.0.s8 %v3071
        %v3073 = vlaneseq
        %v3074 = vshrl.u32 %v3073, 7
        %v3075 = vsub.s32 %v3072, %v3074
        %v3076 = vrot.slane %v3060, %v3075
        %v3078 = vunpack.c.l.s4 1966171168
        %v3079 = vunpack.c.0.s8 %v3078
        %v3080 = vlaneseq
        %v3081 = vshrl.u32 %v3080, 7
        %v3082 = vsub.s32 %v3079, %v3081
        %v3083 = vrot.slane %v3067, %v3082
        %v3085 = vunpack.c.l.s4 1966171168
        %v3086 = vunpack.c.0.s8 %v3085
        %v3087 = vlaneseq
        %v3088 = vshrl.u32 %v3087, 7
        %v3089 = vsub.s32 %v3086, %v3088
        %v3090 = vrot.slane %v3068, %v3089
        %v3092 = vunpack.c.l.s4 1966171168
        %v3093 = vunpack.c.0.s8 %v3092
        %v3094 = vlaneseq
        %v3095 = vshrl.u32 %v3094, 7
        %v3096 = vsub.s32 %v3093, %v3095
        %v3097 = vrot.slane %v3069, %v3096
        %v3098 = vcombine.high %v3076, %v3076
        %v3099 = vcombine.high %v3083, %v3083
        %v3100 = vcombine.high %v3090, %v3090
        %v3101 = vcombine.high %v3097, %v3097
        %v3102 = vcombine.high %v1854, %v1854
        %v3104 = vunpack.c.l.s4 1966171168
        %v3105 = vunpack.c.0.s8 %v3104
        %v3106 = vlaneseq
        %v3107 = vshrl.u32 %v3106, 7
        %v3108 = vsub.s32 %v3105, %v3107
        %v3109 = vrot.slane %v1854, %v3108
        %v3111 = vunpack.c.l.s4 1966171168
        %v3112 = vunpack.c.0.s8 %v3111
        %v3113 = vlaneseq
        %v3114 = vshrl.u32 %v3113, 7
        %v3115 = vsub.s32 %v3112, %v3114
        %v3116 = vrot.slane %v3102, %v3115
        %v3117 = vcombine.high %v3109, %v3109
        %v3118 = vcombine.high %v3116, %v3116
        %v3120 = vunpack.c.l.s4 1966171168
        %v3121 = vunpack.c.0.s8 %v3120
        %v3122 = vlaneseq
        %v3123 = vshrl.u32 %v3122, 7
        %v3124 = vsub.s32 %v3121, %v3123
        %v3125 = vrot.slane %v3109, %v3124
        %v3127 = vunpack.c.l.s4 1966171168
        %v3128 = vunpack.c.0.s8 %v3127
        %v3129 = vlaneseq
        %v3130 = vshrl.u32 %v3129, 7
        %v3131 = vsub.s32 %v3128, %v3130
        %v3132 = vrot.slane %v3116, %v3131
        %v3134 = vunpack.c.l.s4 1966171168
        %v3135 = vunpack.c.0.s8 %v3134
        %v3136 = vlaneseq
        %v3137 = vshrl.u32 %v3136, 7
        %v3138 = vsub.s32 %v3135, %v3137
        %v3139 = vrot.slane %v3117, %v3138
        %v3141 = vunpack.c.l.s4 1966171168
        %v3142 = vunpack.c.0.s8 %v3141
        %v3143 = vlaneseq
        %v3144 = vshrl.u32 %v3143, 7
        %v3145 = vsub.s32 %v3142, %v3144
        %v3146 = vrot.slane %v3118, %v3145
        %v3147 = vcombine.high %v3125, %v3125
        %v3148 = vcombine.high %v3132, %v3132
        %v3149 = vcombine.high %v3139, %v3139
        %v3150 = vcombine.high %v3146, %v3146
        %v3151 = vcombine.high %v1855, %v1855
        %v3153 = vunpack.c.l.s4 1966171168
        %v3154 = vunpack.c.0.s8 %v3153
        %v3155 = vlaneseq
        %v3156 = vshrl.u32 %v3155, 7
        %v3157 = vsub.s32 %v3154, %v3156
        %v3158 = vrot.slane %v1855, %v3157
        %v3160 = vunpack.c.l.s4 1966171168
        %v3161 = vunpack.c.0.s8 %v3160
        %v3162 = vlaneseq
        %v3163 = vshrl.u32 %v3162, 7
        %v3164 = vsub.s32 %v3161, %v3163
        %v3165 = vrot.slane %v3151, %v3164
        %v3166 = vcombine.high %v3158, %v3158
        %v3167 = vcombine.high %v3165, %v3165
        %v3169 = vunpack.c.l.s4 1966171168
        %v3170 = vunpack.c.0.s8 %v3169
        %v3171 = vlaneseq
        %v3172 = vshrl.u32 %v3171, 7
        %v3173 = vsub.s32 %v3170, %v3172
        %v3174 = vrot.slane %v3158, %v3173
        %v3176 = vunpack.c.l.s4 1966171168
        %v3177 = vunpack.c.0.s8 %v3176
        %v3178 = vlaneseq
        %v3179 = vshrl.u32 %v3178, 7
        %v3180 = vsub.s32 %v3177, %v3179
        %v3181 = vrot.slane %v3165, %v3180
        %v3183 = vunpack.c.l.s4 1966171168
        %v3184 = vunpack.c.0.s8 %v3183
        %v3185 = vlaneseq
        %v3186 = vshrl.u32 %v3185, 7
        %v3187 = vsub.s32 %v3184, %v3186
        %v3188 = vrot.slane %v3166, %v3187
        %v3190 = vunpack.c.l.s4 1966171168
        %v3191 = vunpack.c.0.s8 %v3190
        %v3192 = vlaneseq
        %v3193 = vshrl.u32 %v3192, 7
        %v3194 = vsub.s32 %v3191, %v3193
        %v3195 = vrot.slane %v3167, %v3194
        %v3196 = vcombine.high %v3174, %v3174
        %v3197 = vcombine.high %v3181, %v3181
        %v3198 = vcombine.high %v3188, %v3188
        %v3199 = vcombine.high %v3195, %v3195
        %v3200 = vcombine.high %v1856, %v1856
        %v3202 = vunpack.c.l.s4 1966171168
        %v3203 = vunpack.c.0.s8 %v3202
        %v3204 = vlaneseq
        %v3205 = vshrl.u32 %v3204, 7
        %v3206 = vsub.s32 %v3203, %v3205
        %v3207 = vrot.slane %v1856, %v3206
        %v3209 = vunpack.c.l.s4 1966171168
        %v3210 = vunpack.c.0.s8 %v3209
        %v3211 = vlaneseq
        %v3212 = vshrl.u32 %v3211, 7
        %v3213 = vsub.s32 %v3210, %v3212
        %v3214 = vrot.slane %v3200, %v3213
        %v3215 = vcombine.high %v3207, %v3207
        %v3216 = vcombine.high %v3214, %v3214
        %v3218 = vunpack.c.l.s4 1966171168
        %v3219 = vunpack.c.0.s8 %v3218
        %v3220 = vlaneseq
        %v3221 = vshrl.u32 %v3220, 7
        %v3222 = vsub.s32 %v3219, %v3221
        %v3223 = vrot.slane %v3207, %v3222
        %v3225 = vunpack.c.l.s4 1966171168
        %v3226 = vunpack.c.0.s8 %v3225
        %v3227 = vlaneseq
        %v3228 = vshrl.u32 %v3227, 7
        %v3229 = vsub.s32 %v3226, %v3228
        %v3230 = vrot.slane %v3214, %v3229
        %v3232 = vunpack.c.l.s4 1966171168
        %v3233 = vunpack.c.0.s8 %v3232
        %v3234 = vlaneseq
        %v3235 = vshrl.u32 %v3234, 7
        %v3236 = vsub.s32 %v3233, %v3235
        %v3237 = vrot.slane %v3215, %v3236
        %v3239 = vunpack.c.l.s4 1966171168
        %v3240 = vunpack.c.0.s8 %v3239
        %v3241 = vlaneseq
        %v3242 = vshrl.u32 %v3241, 7
        %v3243 = vsub.s32 %v3240, %v3242
        %v3244 = vrot.slane %v3216, %v3243
        %v3245 = vcombine.high %v3223, %v3223
        %v3246 = vcombine.high %v3230, %v3230
        %v3247 = vcombine.high %v3237, %v3237
        %v3248 = vcombine.high %v3244, %v3244
        %v3249 = vcombine.high %v1857, %v1857
        %v3251 = vunpack.c.l.s4 1966171168
        %v3252 = vunpack.c.0.s8 %v3251
        %v3253 = vlaneseq
        %v3254 = vshrl.u32 %v3253, 7
        %v3255 = vsub.s32 %v3252, %v3254
        %v3256 = vrot.slane %v1857, %v3255
        %v3258 = vunpack.c.l.s4 1966171168
        %v3259 = vunpack.c.0.s8 %v3258
        %v3260 = vlaneseq
        %v3261 = vshrl.u32 %v3260, 7
        %v3262 = vsub.s32 %v3259, %v3261
        %v3263 = vrot.slane %v3249, %v3262
        %v3264 = vcombine.high %v3256, %v3256
        %v3265 = vcombine.high %v3263, %v3263
        %v3267 = vunpack.c.l.s4 1966171168
        %v3268 = vunpack.c.0.s8 %v3267
        %v3269 = vlaneseq
        %v3270 = vshrl.u32 %v3269, 7
        %v3271 = vsub.s32 %v3268, %v3270
        %v3272 = vrot.slane %v3256, %v3271
        %v3274 = vunpack.c.l.s4 1966171168
        %v3275 = vunpack.c.0.s8 %v3274
        %v3276 = vlaneseq
        %v3277 = vshrl.u32 %v3276, 7
        %v3278 = vsub.s32 %v3275, %v3277
        %v3279 = vrot.slane %v3263, %v3278
        %v3281 = vunpack.c.l.s4 1966171168
        %v3282 = vunpack.c.0.s8 %v3281
        %v3283 = vlaneseq
        %v3284 = vshrl.u32 %v3283, 7
        %v3285 = vsub.s32 %v3282, %v3284
        %v3286 = vrot.slane %v3264, %v3285
        %v3288 = vunpack.c.l.s4 1966171168
        %v3289 = vunpack.c.0.s8 %v3288
        %v3290 = vlaneseq
        %v3291 = vshrl.u32 %v3290, 7
        %v3292 = vsub.s32 %v3289, %v3291
        %v3293 = vrot.slane %v3265, %v3292
        %v3294 = vcombine.high %v3272, %v3272
        %v3295 = vcombine.high %v3279, %v3279
        %v3296 = vcombine.high %v3286, %v3286
        %v3297 = vcombine.high %v3293, %v3293
        %v3298 = vcombine.high %v1858, %v1858
        %v3300 = vunpack.c.l.s4 1966171168
        %v3301 = vunpack.c.0.s8 %v3300
        %v3302 = vlaneseq
        %v3303 = vshrl.u32 %v3302, 7
        %v3304 = vsub.s32 %v3301, %v3303
        %v3305 = vrot.slane %v1858, %v3304
        %v3307 = vunpack.c.l.s4 1966171168
        %v3308 = vunpack.c.0.s8 %v3307
        %v3309 = vlaneseq
        %v3310 = vshrl.u32 %v3309, 7
        %v3311 = vsub.s32 %v3308, %v3310
        %v3312 = vrot.slane %v3298, %v3311
        %v3313 = vcombine.high %v3305, %v3305
        %v3314 = vcombine.high %v3312, %v3312
        %v3316 = vunpack.c.l.s4 1966171168
        %v3317 = vunpack.c.0.s8 %v3316
        %v3318 = vlaneseq
        %v3319 = vshrl.u32 %v3318, 7
        %v3320 = vsub.s32 %v3317, %v3319
        %v3321 = vrot.slane %v3305, %v3320
        %v3323 = vunpack.c.l.s4 1966171168
        %v3324 = vunpack.c.0.s8 %v3323
        %v3325 = vlaneseq
        %v3326 = vshrl.u32 %v3325, 7
        %v3327 = vsub.s32 %v3324, %v3326
        %v3328 = vrot.slane %v3312, %v3327
        %v3330 = vunpack.c.l.s4 1966171168
        %v3331 = vunpack.c.0.s8 %v3330
        %v3332 = vlaneseq
        %v3333 = vshrl.u32 %v3332, 7
        %v3334 = vsub.s32 %v3331, %v3333
        %v3335 = vrot.slane %v3313, %v3334
        %v3337 = vunpack.c.l.s4 1966171168
        %v3338 = vunpack.c.0.s8 %v3337
        %v3339 = vlaneseq
        %v3340 = vshrl.u32 %v3339, 7
        %v3341 = vsub.s32 %v3338, %v3340
        %v3342 = vrot.slane %v3314, %v3341
        %v3343 = vcombine.high %v3321, %v3321
        %v3344 = vcombine.high %v3328, %v3328
        %v3345 = vcombine.high %v3335, %v3335
        %v3346 = vcombine.high %v3342, %v3342
        %v3347 = vcombine.high %v1859, %v1859
        %v3349 = vunpack.c.l.s4 1966171168
        %v3350 = vunpack.c.0.s8 %v3349
        %v3351 = vlaneseq
        %v3352 = vshrl.u32 %v3351, 7
        %v3353 = vsub.s32 %v3350, %v3352
        %v3354 = vrot.slane %v1859, %v3353
        %v3356 = vunpack.c.l.s4 1966171168
        %v3357 = vunpack.c.0.s8 %v3356
        %v3358 = vlaneseq
        %v3359 = vshrl.u32 %v3358, 7
        %v3360 = vsub.s32 %v3357, %v3359
        %v3361 = vrot.slane %v3347, %v3360
        %v3362 = vcombine.high %v3354, %v3354
        %v3363 = vcombine.high %v3361, %v3361
        %v3365 = vunpack.c.l.s4 1966171168
        %v3366 = vunpack.c.0.s8 %v3365
        %v3367 = vlaneseq
        %v3368 = vshrl.u32 %v3367, 7
        %v3369 = vsub.s32 %v3366, %v3368
        %v3370 = vrot.slane %v3354, %v3369
        %v3372 = vunpack.c.l.s4 1966171168
        %v3373 = vunpack.c.0.s8 %v3372
        %v3374 = vlaneseq
        %v3375 = vshrl.u32 %v3374, 7
        %v3376 = vsub.s32 %v3373, %v3375
        %v3377 = vrot.slane %v3361, %v3376
        %v3379 = vunpack.c.l.s4 1966171168
        %v3380 = vunpack.c.0.s8 %v3379
        %v3381 = vlaneseq
        %v3382 = vshrl.u32 %v3381, 7
        %v3383 = vsub.s32 %v3380, %v3382
        %v3384 = vrot.slane %v3362, %v3383
        %v3386 = vunpack.c.l.s4 1966171168
        %v3387 = vunpack.c.0.s8 %v3386
        %v3388 = vlaneseq
        %v3389 = vshrl.u32 %v3388, 7
        %v3390 = vsub.s32 %v3387, %v3389
        %v3391 = vrot.slane %v3363, %v3390
        %v3392 = vcombine.high %v3370, %v3370
        %v3393 = vcombine.high %v3377, %v3377
        %v3394 = vcombine.high %v3384, %v3384
        %v3395 = vcombine.high %v3391, %v3391
        %v3396 = vcombine.high %v1860, %v1860
        %v3398 = vunpack.c.l.s4 1966171168
        %v3399 = vunpack.c.0.s8 %v3398
        %v3400 = vlaneseq
        %v3401 = vshrl.u32 %v3400, 7
        %v3402 = vsub.s32 %v3399, %v3401
        %v3403 = vrot.slane %v1860, %v3402
        %v3405 = vunpack.c.l.s4 1966171168
        %v3406 = vunpack.c.0.s8 %v3405
        %v3407 = vlaneseq
        %v3408 = vshrl.u32 %v3407, 7
        %v3409 = vsub.s32 %v3406, %v3408
        %v3410 = vrot.slane %v3396, %v3409
        %v3411 = vcombine.high %v3403, %v3403
        %v3412 = vcombine.high %v3410, %v3410
        %v3414 = vunpack.c.l.s4 1966171168
        %v3415 = vunpack.c.0.s8 %v3414
        %v3416 = vlaneseq
        %v3417 = vshrl.u32 %v3416, 7
        %v3418 = vsub.s32 %v3415, %v3417
        %v3419 = vrot.slane %v3403, %v3418
        %v3421 = vunpack.c.l.s4 1966171168
        %v3422 = vunpack.c.0.s8 %v3421
        %v3423 = vlaneseq
        %v3424 = vshrl.u32 %v3423, 7
        %v3425 = vsub.s32 %v3422, %v3424
        %v3426 = vrot.slane %v3410, %v3425
        %v3428 = vunpack.c.l.s4 1966171168
        %v3429 = vunpack.c.0.s8 %v3428
        %v3430 = vlaneseq
        %v3431 = vshrl.u32 %v3430, 7
        %v3432 = vsub.s32 %v3429, %v3431
        %v3433 = vrot.slane %v3411, %v3432
        %v3435 = vunpack.c.l.s4 1966171168
        %v3436 = vunpack.c.0.s8 %v3435
        %v3437 = vlaneseq
        %v3438 = vshrl.u32 %v3437, 7
        %v3439 = vsub.s32 %v3436, %v3438
        %v3440 = vrot.slane %v3412, %v3439
        %v3441 = vcombine.high %v3419, %v3419
        %v3442 = vcombine.high %v3426, %v3426
        %v3443 = vcombine.high %v3433, %v3433
        %v3444 = vcombine.high %v3440, %v3440
        %v3445 = vcombine.high %v1861, %v1861
        %v3447 = vunpack.c.l.s4 1966171168
        %v3448 = vunpack.c.0.s8 %v3447
        %v3449 = vlaneseq
        %v3450 = vshrl.u32 %v3449, 7
        %v3451 = vsub.s32 %v3448, %v3450
        %v3452 = vrot.slane %v1861, %v3451
        %v3454 = vunpack.c.l.s4 1966171168
        %v3455 = vunpack.c.0.s8 %v3454
        %v3456 = vlaneseq
        %v3457 = vshrl.u32 %v3456, 7
        %v3458 = vsub.s32 %v3455, %v3457
        %v3459 = vrot.slane %v3445, %v3458
        %v3460 = vcombine.high %v3452, %v3452
        %v3461 = vcombine.high %v3459, %v3459
        %v3463 = vunpack.c.l.s4 1966171168
        %v3464 = vunpack.c.0.s8 %v3463
        %v3465 = vlaneseq
        %v3466 = vshrl.u32 %v3465, 7
        %v3467 = vsub.s32 %v3464, %v3466
        %v3468 = vrot.slane %v3452, %v3467
        %v3470 = vunpack.c.l.s4 1966171168
        %v3471 = vunpack.c.0.s8 %v3470
        %v3472 = vlaneseq
        %v3473 = vshrl.u32 %v3472, 7
        %v3474 = vsub.s32 %v3471, %v3473
        %v3475 = vrot.slane %v3459, %v3474
        %v3477 = vunpack.c.l.s4 1966171168
        %v3478 = vunpack.c.0.s8 %v3477
        %v3479 = vlaneseq
        %v3480 = vshrl.u32 %v3479, 7
        %v3481 = vsub.s32 %v3478, %v3480
        %v3482 = vrot.slane %v3460, %v3481
        %v3484 = vunpack.c.l.s4 1966171168
        %v3485 = vunpack.c.0.s8 %v3484
        %v3486 = vlaneseq
        %v3487 = vshrl.u32 %v3486, 7
        %v3488 = vsub.s32 %v3485, %v3487
        %v3489 = vrot.slane %v3461, %v3488
        %v3490 = vcombine.high %v3468, %v3468
        %v3491 = vcombine.high %v3475, %v3475
        %v3492 = vcombine.high %v3482, %v3482
        %v3493 = vcombine.high %v3489, %v3489
        %v3494 = vcombine.high %v1862, %v1862
        %v3496 = vunpack.c.l.s4 1966171168
        %v3497 = vunpack.c.0.s8 %v3496
        %v3498 = vlaneseq
        %v3499 = vshrl.u32 %v3498, 7
        %v3500 = vsub.s32 %v3497, %v3499
        %v3501 = vrot.slane %v1862, %v3500
        %v3503 = vunpack.c.l.s4 1966171168
        %v3504 = vunpack.c.0.s8 %v3503
        %v3505 = vlaneseq
        %v3506 = vshrl.u32 %v3505, 7
        %v3507 = vsub.s32 %v3504, %v3506
        %v3508 = vrot.slane %v3494, %v3507
        %v3509 = vcombine.high %v3501, %v3501
        %v3510 = vcombine.high %v3508, %v3508
        %v3512 = vunpack.c.l.s4 1966171168
        %v3513 = vunpack.c.0.s8 %v3512
        %v3514 = vlaneseq
        %v3515 = vshrl.u32 %v3514, 7
        %v3516 = vsub.s32 %v3513, %v3515
        %v3517 = vrot.slane %v3501, %v3516
        %v3519 = vunpack.c.l.s4 1966171168
        %v3520 = vunpack.c.0.s8 %v3519
        %v3521 = vlaneseq
        %v3522 = vshrl.u32 %v3521, 7
        %v3523 = vsub.s32 %v3520, %v3522
        %v3524 = vrot.slane %v3508, %v3523
        %v3526 = vunpack.c.l.s4 1966171168
        %v3527 = vunpack.c.0.s8 %v3526
        %v3528 = vlaneseq
        %v3529 = vshrl.u32 %v3528, 7
        %v3530 = vsub.s32 %v3527, %v3529
        %v3531 = vrot.slane %v3509, %v3530
        %v3533 = vunpack.c.l.s4 1966171168
        %v3534 = vunpack.c.0.s8 %v3533
        %v3535 = vlaneseq
        %v3536 = vshrl.u32 %v3535, 7
        %v3537 = vsub.s32 %v3534, %v3536
        %v3538 = vrot.slane %v3510, %v3537
        %v3539 = vcombine.high %v3517, %v3517
        %v3540 = vcombine.high %v3524, %v3524
        %v3541 = vcombine.high %v3531, %v3531
        %v3542 = vcombine.high %v3538, %v3538
        %v3543 = vcombine.high %v1863, %v1863
        %v3545 = vunpack.c.l.s4 1966171168
        %v3546 = vunpack.c.0.s8 %v3545
        %v3547 = vlaneseq
        %v3548 = vshrl.u32 %v3547, 7
        %v3549 = vsub.s32 %v3546, %v3548
        %v3550 = vrot.slane %v1863, %v3549
        %v3552 = vunpack.c.l.s4 1966171168
        %v3553 = vunpack.c.0.s8 %v3552
        %v3554 = vlaneseq
        %v3555 = vshrl.u32 %v3554, 7
        %v3556 = vsub.s32 %v3553, %v3555
        %v3557 = vrot.slane %v3543, %v3556
        %v3558 = vcombine.high %v3550, %v3550
        %v3559 = vcombine.high %v3557, %v3557
        %v3561 = vunpack.c.l.s4 1966171168
        %v3562 = vunpack.c.0.s8 %v3561
        %v3563 = vlaneseq
        %v3564 = vshrl.u32 %v3563, 7
        %v3565 = vsub.s32 %v3562, %v3564
        %v3566 = vrot.slane %v3550, %v3565
        %v3568 = vunpack.c.l.s4 1966171168
        %v3569 = vunpack.c.0.s8 %v3568
        %v3570 = vlaneseq
        %v3571 = vshrl.u32 %v3570, 7
        %v3572 = vsub.s32 %v3569, %v3571
        %v3573 = vrot.slane %v3557, %v3572
        %v3575 = vunpack.c.l.s4 1966171168
        %v3576 = vunpack.c.0.s8 %v3575
        %v3577 = vlaneseq
        %v3578 = vshrl.u32 %v3577, 7
        %v3579 = vsub.s32 %v3576, %v3578
        %v3580 = vrot.slane %v3558, %v3579
        %v3582 = vunpack.c.l.s4 1966171168
        %v3583 = vunpack.c.0.s8 %v3582
        %v3584 = vlaneseq
        %v3585 = vshrl.u32 %v3584, 7
        %v3586 = vsub.s32 %v3583, %v3585
        %v3587 = vrot.slane %v3559, %v3586
        %v3588 = vcombine.high %v3566, %v3566
        %v3589 = vcombine.high %v3573, %v3573
        %v3590 = vcombine.high %v3580, %v3580
        %v3591 = vcombine.high %v3587, %v3587
        %v3592 = vlaneseq
        %v3593 = vshrl.u32 %v3592, 7
        %v3594 = vsub.s32 0, %v3593
        %v3595 = vrot.slane %v2831, %v3594
        %v3596 = vlaneseq
        %v3597 = vshrl.u32 %v3596, 7
        %v3598 = vsub.s32 0, %v3597
        %v3599 = vrot.slane %v2845, %v3598
        %v3600 = vlaneseq
        %v3601 = vshrl.u32 %v3600, 7
        %v3602 = vsub.s32 0, %v3601
        %v3603 = vrot.slane %v2853, %v3602
        %v3604 = vlaneseq
        %v3605 = vshrl.u32 %v3604, 7
        %v3606 = vsub.s32 0, %v3605
        %v3607 = vrot.slane %v2855, %v3606
        %v3608 = vlaneseq
        %v3609 = vshrl.u32 %v3608, 7
        %v3610 = vsub.s32 0, %v3609
        %v3611 = vrot.slane %v2838, %v3610
        %v3612 = vlaneseq
        %v3613 = vshrl.u32 %v3612, 7
        %v3614 = vsub.s32 0, %v3613
        %v3615 = vrot.slane %v2852, %v3614
        %v3616 = vlaneseq
        %v3617 = vshrl.u32 %v3616, 7
        %v3618 = vsub.s32 0, %v3617
        %v3619 = vrot.slane %v2854, %v3618
        %v3620 = vlaneseq
        %v3621 = vshrl.u32 %v3620, 7
        %v3622 = vsub.s32 0, %v3621
        %v3623 = vrot.slane %v2856, %v3622
        %v3624 = vlaneseq
        %v3625 = vshrl.u32 %v3624, 7
        %v3626 = vsub.s32 0, %v3625
        %v3627 = vrot.slane %v2880, %v3626
        %v3628 = vlaneseq
        %v3629 = vshrl.u32 %v3628, 7
        %v3630 = vsub.s32 0, %v3629
        %v3631 = vrot.slane %v2894, %v3630
        %v3632 = vlaneseq
        %v3633 = vshrl.u32 %v3632, 7
        %v3634 = vsub.s32 0, %v3633
        %v3635 = vrot.slane %v2902, %v3634
        %v3636 = vlaneseq
        %v3637 = vshrl.u32 %v3636, 7
        %v3638 = vsub.s32 0, %v3637
        %v3639 = vrot.slane %v2904, %v3638
        %v3640 = vlaneseq
        %v3641 = vshrl.u32 %v3640, 7
        %v3642 = vsub.s32 0, %v3641
        %v3643 = vrot.slane %v2887, %v3642
        %v3644 = vlaneseq
        %v3645 = vshrl.u32 %v3644, 7
        %v3646 = vsub.s32 0, %v3645
        %v3647 = vrot.slane %v2901, %v3646
        %v3648 = vlaneseq
        %v3649 = vshrl.u32 %v3648, 7
        %v3650 = vsub.s32 0, %v3649
        %v3651 = vrot.slane %v2903, %v3650
        %v3652 = vlaneseq
        %v3653 = vshrl.u32 %v3652, 7
        %v3654 = vsub.s32 0, %v3653
        %v3655 = vrot.slane %v2905, %v3654
        %v3656 = vlaneseq
        %v3657 = vshrl.u32 %v3656, 7
        %v3658 = vsub.s32 0, %v3657
        %v3659 = vrot.slane %v2929, %v3658
        %v3660 = vlaneseq
        %v3661 = vshrl.u32 %v3660, 7
        %v3662 = vsub.s32 0, %v3661
        %v3663 = vrot.slane %v2943, %v3662
        %v3664 = vlaneseq
        %v3665 = vshrl.u32 %v3664, 7
        %v3666 = vsub.s32 0, %v3665
        %v3667 = vrot.slane %v2951, %v3666
        %v3668 = vlaneseq
        %v3669 = vshrl.u32 %v3668, 7
        %v3670 = vsub.s32 0, %v3669
        %v3671 = vrot.slane %v2953, %v3670
        %v3672 = vlaneseq
        %v3673 = vshrl.u32 %v3672, 7
        %v3674 = vsub.s32 0, %v3673
        %v3675 = vrot.slane %v2936, %v3674
        %v3676 = vlaneseq
        %v3677 = vshrl.u32 %v3676, 7
        %v3678 = vsub.s32 0, %v3677
        %v3679 = vrot.slane %v2950, %v3678
        %v3680 = vlaneseq
        %v3681 = vshrl.u32 %v3680, 7
        %v3682 = vsub.s32 0, %v3681
        %v3683 = vrot.slane %v2952, %v3682
        %v3684 = vlaneseq
        %v3685 = vshrl.u32 %v3684, 7
        %v3686 = vsub.s32 0, %v3685
        %v3687 = vrot.slane %v2954, %v3686
        %v3688 = vlaneseq
        %v3689 = vshrl.u32 %v3688, 7
        %v3690 = vsub.s32 0, %v3689
        %v3691 = vrot.slane %v2978, %v3690
        %v3692 = vlaneseq
        %v3693 = vshrl.u32 %v3692, 7
        %v3694 = vsub.s32 0, %v3693
        %v3695 = vrot.slane %v2992, %v3694
        %v3696 = vlaneseq
        %v3697 = vshrl.u32 %v3696, 7
        %v3698 = vsub.s32 0, %v3697
        %v3699 = vrot.slane %v3000, %v3698
        %v3700 = vlaneseq
        %v3701 = vshrl.u32 %v3700, 7
        %v3702 = vsub.s32 0, %v3701
        %v3703 = vrot.slane %v3002, %v3702
        %v3704 = vlaneseq
        %v3705 = vshrl.u32 %v3704, 7
        %v3706 = vsub.s32 0, %v3705
        %v3707 = vrot.slane %v2985, %v3706
        %v3708 = vlaneseq
        %v3709 = vshrl.u32 %v3708, 7
        %v3710 = vsub.s32 0, %v3709
        %v3711 = vrot.slane %v2999, %v3710
        %v3712 = vlaneseq
        %v3713 = vshrl.u32 %v3712, 7
        %v3714 = vsub.s32 0, %v3713
        %v3715 = vrot.slane %v3001, %v3714
        %v3716 = vlaneseq
        %v3717 = vshrl.u32 %v3716, 7
        %v3718 = vsub.s32 0, %v3717
        %v3719 = vrot.slane %v3003, %v3718
        %v3720 = vlaneseq
        %v3721 = vshrl.u32 %v3720, 7
        %v3722 = vsub.s32 0, %v3721
        %v3723 = vrot.slane %v3027, %v3722
        %v3724 = vlaneseq
        %v3725 = vshrl.u32 %v3724, 7
        %v3726 = vsub.s32 0, %v3725
        %v3727 = vrot.slane %v3041, %v3726
        %v3728 = vlaneseq
        %v3729 = vshrl.u32 %v3728, 7
        %v3730 = vsub.s32 0, %v3729
        %v3731 = vrot.slane %v3049, %v3730
        %v3732 = vlaneseq
        %v3733 = vshrl.u32 %v3732, 7
        %v3734 = vsub.s32 0, %v3733
        %v3735 = vrot.slane %v3051, %v3734
        %v3736 = vlaneseq
        %v3737 = vshrl.u32 %v3736, 7
        %v3738 = vsub.s32 0, %v3737
        %v3739 = vrot.slane %v3034, %v3738
        %v3740 = vlaneseq
        %v3741 = vshrl.u32 %v3740, 7
        %v3742 = vsub.s32 0, %v3741
        %v3743 = vrot.slane %v3048, %v3742
        %v3744 = vlaneseq
        %v3745 = vshrl.u32 %v3744, 7
        %v3746 = vsub.s32 0, %v3745
        %v3747 = vrot.slane %v3050, %v3746
        %v3748 = vlaneseq
        %v3749 = vshrl.u32 %v3748, 7
        %v3750 = vsub.s32 0, %v3749
        %v3751 = vrot.slane %v3052, %v3750
        %v3752 = vlaneseq
        %v3753 = vshrl.u32 %v3752, 7
        %v3754 = vsub.s32 0, %v3753
        %v3755 = vrot.slane %v3076, %v3754
        %v3756 = vlaneseq
        %v3757 = vshrl.u32 %v3756, 7
        %v3758 = vsub.s32 0, %v3757
        %v3759 = vrot.slane %v3090, %v3758
        %v3760 = vlaneseq
        %v3761 = vshrl.u32 %v3760, 7
        %v3762 = vsub.s32 0, %v3761
        %v3763 = vrot.slane %v3098, %v3762
        %v3764 = vlaneseq
        %v3765 = vshrl.u32 %v3764, 7
        %v3766 = vsub.s32 0, %v3765
        %v3767 = vrot.slane %v3100, %v3766
        %v3768 = vlaneseq
        %v3769 = vshrl.u32 %v3768, 7
        %v3770 = vsub.s32 0, %v3769
        %v3771 = vrot.slane %v3083, %v3770
        %v3772 = vlaneseq
        %v3773 = vshrl.u32 %v3772, 7
        %v3774 = vsub.s32 0, %v3773
        %v3775 = vrot.slane %v3097, %v3774
        %v3776 = vlaneseq
        %v3777 = vshrl.u32 %v3776, 7
        %v3778 = vsub.s32 0, %v3777
        %v3779 = vrot.slane %v3099, %v3778
        %v3780 = vlaneseq
        %v3781 = vshrl.u32 %v3780, 7
        %v3782 = vsub.s32 0, %v3781
        %v3783 = vrot.slane %v3101, %v3782
        %v3784 = vlaneseq
        %v3785 = vshrl.u32 %v3784, 7
        %v3786 = vsub.s32 0, %v3785
        %v3787 = vrot.slane %v3125, %v3786
        %v3788 = vlaneseq
        %v3789 = vshrl.u32 %v3788, 7
        %v3790 = vsub.s32 0, %v3789
        %v3791 = vrot.slane %v3139, %v3790
        %v3792 = vlaneseq
        %v3793 = vshrl.u32 %v3792, 7
        %v3794 = vsub.s32 0, %v3793
        %v3795 = vrot.slane %v3147, %v3794
        %v3796 = vlaneseq
        %v3797 = vshrl.u32 %v3796, 7
        %v3798 = vsub.s32 0, %v3797
        %v3799 = vrot.slane %v3149, %v3798
        %v3800 = vlaneseq
        %v3801 = vshrl.u32 %v3800, 7
        %v3802 = vsub.s32 0, %v3801
        %v3803 = vrot.slane %v3132, %v3802
        %v3804 = vlaneseq
        %v3805 = vshrl.u32 %v3804, 7
        %v3806 = vsub.s32 0, %v3805
        %v3807 = vrot.slane %v3146, %v3806
        %v3808 = vlaneseq
        %v3809 = vshrl.u32 %v3808, 7
        %v3810 = vsub.s32 0, %v3809
        %v3811 = vrot.slane %v3148, %v3810
        %v3812 = vlaneseq
        %v3813 = vshrl.u32 %v3812, 7
        %v3814 = vsub.s32 0, %v3813
        %v3815 = vrot.slane %v3150, %v3814
        %v3816 = vlaneseq
        %v3817 = vshrl.u32 %v3816, 7
        %v3818 = vsub.s32 0, %v3817
        %v3819 = vrot.slane %v3174, %v3818
        %v3820 = vlaneseq
        %v3821 = vshrl.u32 %v3820, 7
        %v3822 = vsub.s32 0, %v3821
        %v3823 = vrot.slane %v3188, %v3822
        %v3824 = vlaneseq
        %v3825 = vshrl.u32 %v3824, 7
        %v3826 = vsub.s32 0, %v3825
        %v3827 = vrot.slane %v3196, %v3826
        %v3828 = vlaneseq
        %v3829 = vshrl.u32 %v3828, 7
        %v3830 = vsub.s32 0, %v3829
        %v3831 = vrot.slane %v3198, %v3830
        %v3832 = vlaneseq
        %v3833 = vshrl.u32 %v3832, 7
        %v3834 = vsub.s32 0, %v3833
        %v3835 = vrot.slane %v3181, %v3834
        %v3836 = vlaneseq
        %v3837 = vshrl.u32 %v3836, 7
        %v3838 = vsub.s32 0, %v3837
        %v3839 = vrot.slane %v3195, %v3838
        %v3840 = vlaneseq
        %v3841 = vshrl.u32 %v3840, 7
        %v3842 = vsub.s32 0, %v3841
        %v3843 = vrot.slane %v3197, %v3842
        %v3844 = vlaneseq
        %v3845 = vshrl.u32 %v3844, 7
        %v3846 = vsub.s32 0, %v3845
        %v3847 = vrot.slane %v3199, %v3846
        %v3848 = vlaneseq
        %v3849 = vshrl.u32 %v3848, 7
        %v3850 = vsub.s32 0, %v3849
        %v3851 = vrot.slane %v3223, %v3850
        %v3852 = vlaneseq
        %v3853 = vshrl.u32 %v3852, 7
        %v3854 = vsub.s32 0, %v3853
        %v3855 = vrot.slane %v3237, %v3854
        %v3856 = vlaneseq
        %v3857 = vshrl.u32 %v3856, 7
        %v3858 = vsub.s32 0, %v3857
        %v3859 = vrot.slane %v3245, %v3858
        %v3860 = vlaneseq
        %v3861 = vshrl.u32 %v3860, 7
        %v3862 = vsub.s32 0, %v3861
        %v3863 = vrot.slane %v3247, %v3862
        %v3864 = vlaneseq
        %v3865 = vshrl.u32 %v3864, 7
        %v3866 = vsub.s32 0, %v3865
        %v3867 = vrot.slane %v3230, %v3866
        %v3868 = vlaneseq
        %v3869 = vshrl.u32 %v3868, 7
        %v3870 = vsub.s32 0, %v3869
        %v3871 = vrot.slane %v3244, %v3870
        %v3872 = vlaneseq
        %v3873 = vshrl.u32 %v3872, 7
        %v3874 = vsub.s32 0, %v3873
        %v3875 = vrot.slane %v3246, %v3874
        %v3876 = vlaneseq
        %v3877 = vshrl.u32 %v3876, 7
        %v3878 = vsub.s32 0, %v3877
        %v3879 = vrot.slane %v3248, %v3878
        %v3880 = vlaneseq
        %v3881 = vshrl.u32 %v3880, 7
        %v3882 = vsub.s32 0, %v3881
        %v3883 = vrot.slane %v3272, %v3882
        %v3884 = vlaneseq
        %v3885 = vshrl.u32 %v3884, 7
        %v3886 = vsub.s32 0, %v3885
        %v3887 = vrot.slane %v3286, %v3886
        %v3888 = vlaneseq
        %v3889 = vshrl.u32 %v3888, 7
        %v3890 = vsub.s32 0, %v3889
        %v3891 = vrot.slane %v3294, %v3890
        %v3892 = vlaneseq
        %v3893 = vshrl.u32 %v3892, 7
        %v3894 = vsub.s32 0, %v3893
        %v3895 = vrot.slane %v3296, %v3894
        %v3896 = vlaneseq
        %v3897 = vshrl.u32 %v3896, 7
        %v3898 = vsub.s32 0, %v3897
        %v3899 = vrot.slane %v3279, %v3898
        %v3900 = vlaneseq
        %v3901 = vshrl.u32 %v3900, 7
        %v3902 = vsub.s32 0, %v3901
        %v3903 = vrot.slane %v3293, %v3902
        %v3904 = vlaneseq
        %v3905 = vshrl.u32 %v3904, 7
        %v3906 = vsub.s32 0, %v3905
        %v3907 = vrot.slane %v3295, %v3906
        %v3908 = vlaneseq
        %v3909 = vshrl.u32 %v3908, 7
        %v3910 = vsub.s32 0, %v3909
        %v3911 = vrot.slane %v3297, %v3910
        %v3912 = vlaneseq
        %v3913 = vshrl.u32 %v3912, 7
        %v3914 = vsub.s32 0, %v3913
        %v3915 = vrot.slane %v3321, %v3914
        %v3916 = vlaneseq
        %v3917 = vshrl.u32 %v3916, 7
        %v3918 = vsub.s32 0, %v3917
        %v3919 = vrot.slane %v3335, %v3918
        %v3920 = vlaneseq
        %v3921 = vshrl.u32 %v3920, 7
        %v3922 = vsub.s32 0, %v3921
        %v3923 = vrot.slane %v3343, %v3922
        %v3924 = vlaneseq
        %v3925 = vshrl.u32 %v3924, 7
        %v3926 = vsub.s32 0, %v3925
        %v3927 = vrot.slane %v3345, %v3926
        %v3928 = vlaneseq
        %v3929 = vshrl.u32 %v3928, 7
        %v3930 = vsub.s32 0, %v3929
        %v3931 = vrot.slane %v3328, %v3930
        %v3932 = vlaneseq
        %v3933 = vshrl.u32 %v3932, 7
        %v3934 = vsub.s32 0, %v3933
        %v3935 = vrot.slane %v3342, %v3934
        %v3936 = vlaneseq
        %v3937 = vshrl.u32 %v3936, 7
        %v3938 = vsub.s32 0, %v3937
        %v3939 = vrot.slane %v3344, %v3938
        %v3940 = vlaneseq
        %v3941 = vshrl.u32 %v3940, 7
        %v3942 = vsub.s32 0, %v3941
        %v3943 = vrot.slane %v3346, %v3942
        %v3944 = vlaneseq
        %v3945 = vshrl.u32 %v3944, 7
        %v3946 = vsub.s32 0, %v3945
        %v3947 = vrot.slane %v3370, %v3946
        %v3948 = vlaneseq
        %v3949 = vshrl.u32 %v3948, 7
        %v3950 = vsub.s32 0, %v3949
        %v3951 = vrot.slane %v3384, %v3950
        %v3952 = vlaneseq
        %v3953 = vshrl.u32 %v3952, 7
        %v3954 = vsub.s32 0, %v3953
        %v3955 = vrot.slane %v3392, %v3954
        %v3956 = vlaneseq
        %v3957 = vshrl.u32 %v3956, 7
        %v3958 = vsub.s32 0, %v3957
        %v3959 = vrot.slane %v3394, %v3958
        %v3960 = vlaneseq
        %v3961 = vshrl.u32 %v3960, 7
        %v3962 = vsub.s32 0, %v3961
        %v3963 = vrot.slane %v3377, %v3962
        %v3964 = vlaneseq
        %v3965 = vshrl.u32 %v3964, 7
        %v3966 = vsub.s32 0, %v3965
        %v3967 = vrot.slane %v3391, %v3966
        %v3968 = vlaneseq
        %v3969 = vshrl.u32 %v3968, 7
        %v3970 = vsub.s32 0, %v3969
        %v3971 = vrot.slane %v3393, %v3970
        %v3972 = vlaneseq
        %v3973 = vshrl.u32 %v3972, 7
        %v3974 = vsub.s32 0, %v3973
        %v3975 = vrot.slane %v3395, %v3974
        %v3976 = vlaneseq
        %v3977 = vshrl.u32 %v3976, 7
        %v3978 = vsub.s32 0, %v3977
        %v3979 = vrot.slane %v3419, %v3978
        %v3980 = vlaneseq
        %v3981 = vshrl.u32 %v3980, 7
        %v3982 = vsub.s32 0, %v3981
        %v3983 = vrot.slane %v3433, %v3982
        %v3984 = vlaneseq
        %v3985 = vshrl.u32 %v3984, 7
        %v3986 = vsub.s32 0, %v3985
        %v3987 = vrot.slane %v3441, %v3986
        %v3988 = vlaneseq
        %v3989 = vshrl.u32 %v3988, 7
        %v3990 = vsub.s32 0, %v3989
        %v3991 = vrot.slane %v3443, %v3990
        %v3992 = vlaneseq
        %v3993 = vshrl.u32 %v3992, 7
        %v3994 = vsub.s32 0, %v3993
        %v3995 = vrot.slane %v3426, %v3994
        %v3996 = vlaneseq
        %v3997 = vshrl.u32 %v3996, 7
        %v3998 = vsub.s32 0, %v3997
        %v3999 = vrot.slane %v3440, %v3998
        %v4000 = vlaneseq
        %v4001 = vshrl.u32 %v4000, 7
        %v4002 = vsub.s32 0, %v4001
        %v4003 = vrot.slane %v3442, %v4002
        %v4004 = vlaneseq
        %v4005 = vshrl.u32 %v4004, 7
        %v4006 = vsub.s32 0, %v4005
        %v4007 = vrot.slane %v3444, %v4006
        %v4008 = vlaneseq
        %v4009 = vshrl.u32 %v4008, 7
        %v4010 = vsub.s32 0, %v4009
        %v4011 = vrot.slane %v3468, %v4010
        %v4012 = vlaneseq
        %v4013 = vshrl.u32 %v4012, 7
        %v4014 = vsub.s32 0, %v4013
        %v4015 = vrot.slane %v3482, %v4014
        %v4016 = vlaneseq
        %v4017 = vshrl.u32 %v4016, 7
        %v4018 = vsub.s32 0, %v4017
        %v4019 = vrot.slane %v3490, %v4018
        %v4020 = vlaneseq
        %v4021 = vshrl.u32 %v4020, 7
        %v4022 = vsub.s32 0, %v4021
        %v4023 = vrot.slane %v3492, %v4022
        %v4024 = vlaneseq
        %v4025 = vshrl.u32 %v4024, 7
        %v4026 = vsub.s32 0, %v4025
        %v4027 = vrot.slane %v3475, %v4026
        %v4028 = vlaneseq
        %v4029 = vshrl.u32 %v4028, 7
        %v4030 = vsub.s32 0, %v4029
        %v4031 = vrot.slane %v3489, %v4030
        %v4032 = vlaneseq
        %v4033 = vshrl.u32 %v4032, 7
        %v4034 = vsub.s32 0, %v4033
        %v4035 = vrot.slane %v3491, %v4034
        %v4036 = vlaneseq
        %v4037 = vshrl.u32 %v4036, 7
        %v4038 = vsub.s32 0, %v4037
        %v4039 = vrot.slane %v3493, %v4038
        %v4040 = vlaneseq
        %v4041 = vshrl.u32 %v4040, 7
        %v4042 = vsub.s32 0, %v4041
        %v4043 = vrot.slane %v3517, %v4042
        %v4044 = vlaneseq
        %v4045 = vshrl.u32 %v4044, 7
        %v4046 = vsub.s32 0, %v4045
        %v4047 = vrot.slane %v3531, %v4046
        %v4048 = vlaneseq
        %v4049 = vshrl.u32 %v4048, 7
        %v4050 = vsub.s32 0, %v4049
        %v4051 = vrot.slane %v3539, %v4050
        %v4052 = vlaneseq
        %v4053 = vshrl.u32 %v4052, 7
        %v4054 = vsub.s32 0, %v4053
        %v4055 = vrot.slane %v3541, %v4054
        %v4056 = vlaneseq
        %v4057 = vshrl.u32 %v4056, 7
        %v4058 = vsub.s32 0, %v4057
        %v4059 = vrot.slane %v3524, %v4058
        %v4060 = vlaneseq
        %v4061 = vshrl.u32 %v4060, 7
        %v4062 = vsub.s32 0, %v4061
        %v4063 = vrot.slane %v3538, %v4062
        %v4064 = vlaneseq
        %v4065 = vshrl.u32 %v4064, 7
        %v4066 = vsub.s32 0, %v4065
        %v4067 = vrot.slane %v3540, %v4066
        %v4068 = vlaneseq
        %v4069 = vshrl.u32 %v4068, 7
        %v4070 = vsub.s32 0, %v4069
        %v4071 = vrot.slane %v3542, %v4070
        %v4072 = vlaneseq
        %v4073 = vshrl.u32 %v4072, 7
        %v4074 = vsub.s32 0, %v4073
        %v4075 = vrot.slane %v3566, %v4074
        %v4076 = vlaneseq
        %v4077 = vshrl.u32 %v4076, 7
        %v4078 = vsub.s32 0, %v4077
        %v4079 = vrot.slane %v3580, %v4078
        %v4080 = vlaneseq
        %v4081 = vshrl.u32 %v4080, 7
        %v4082 = vsub.s32 0, %v4081
        %v4083 = vrot.slane %v3588, %v4082
        %v4084 = vlaneseq
        %v4085 = vshrl.u32 %v4084, 7
        %v4086 = vsub.s32 0, %v4085
        %v4087 = vrot.slane %v3590, %v4086
        %v4088 = vlaneseq
        %v4089 = vshrl.u32 %v4088, 7
        %v4090 = vsub.s32 0, %v4089
        %v4091 = vrot.slane %v3573, %v4090
        %v4092 = vlaneseq
        %v4093 = vshrl.u32 %v4092, 7
        %v4094 = vsub.s32 0, %v4093
        %v4095 = vrot.slane %v3587, %v4094
        %v4096 = vlaneseq
        %v4097 = vshrl.u32 %v4096, 7
        %v4098 = vsub.s32 0, %v4097
        %v4099 = vrot.slane %v3589, %v4098
        %v4100 = vlaneseq
        %v4101 = vshrl.u32 %v4100, 7
        %v4102 = vsub.s32 0, %v4101
        %v4103 = vrot.slane %v3591, %v4102
        %v4232 = vsel %vm781, %v1903, %v3595
        %v4233 = vsel %vm781, %v1917, %v3599
        %v4234 = vsel %vm781, %v1925, %v3603
        %v4235 = vsel %vm781, %v1927, %v3607
        %v4236 = vsel %vm781, %v1910, %v3611
        %v4237 = vsel %vm781, %v1924, %v3615
        %v4238 = vsel %vm781, %v1926, %v3619
        %v4239 = vsel %vm781, %v1928, %v3623
        %v4240 = vsel %vm781, %v1952, %v3627
        %v4241 = vsel %vm781, %v1966, %v3631
        %v4242 = vsel %vm781, %v1974, %v3635
        %v4243 = vsel %vm781, %v1976, %v3639
        %v4244 = vsel %vm781, %v1959, %v3643
        %v4245 = vsel %vm781, %v1973, %v3647
        %v4246 = vsel %vm781, %v1975, %v3651
        %v4247 = vsel %vm781, %v1977, %v3655
        %v4248 = vsel %vm781, %v2001, %v3659
        %v4249 = vsel %vm781, %v2015, %v3663
        %v4250 = vsel %vm781, %v2023, %v3667
        %v4251 = vsel %vm781, %v2025, %v3671
        %v4252 = vsel %vm781, %v2008, %v3675
        %v4253 = vsel %vm781, %v2022, %v3679
        %v4254 = vsel %vm781, %v2024, %v3683
        %v4255 = vsel %vm781, %v2026, %v3687
        %v4256 = vsel %vm781, %v2050, %v3691
        %v4257 = vsel %vm781, %v2064, %v3695
        %v4258 = vsel %vm781, %v2072, %v3699
        %v4259 = vsel %vm781, %v2074, %v3703
        %v4260 = vsel %vm781, %v2057, %v3707
        %v4261 = vsel %vm781, %v2071, %v3711
        %v4262 = vsel %vm781, %v2073, %v3715
        %v4263 = vsel %vm781, %v2075, %v3719
        %v4264 = vsel %vm781, %v2099, %v3723
        %v4265 = vsel %vm781, %v2113, %v3727
        %v4266 = vsel %vm781, %v2121, %v3731
        %v4267 = vsel %vm781, %v2123, %v3735
        %v4268 = vsel %vm781, %v2106, %v3739
        %v4269 = vsel %vm781, %v2120, %v3743
        %v4270 = vsel %vm781, %v2122, %v3747
        %v4271 = vsel %vm781, %v2124, %v3751
        %v4272 = vsel %vm781, %v2148, %v3755
        %v4273 = vsel %vm781, %v2162, %v3759
        %v4274 = vsel %vm781, %v2170, %v3763
        %v4275 = vsel %vm781, %v2172, %v3767
        %v4276 = vsel %vm781, %v2155, %v3771
        %v4277 = vsel %vm781, %v2169, %v3775
        %v4278 = vsel %vm781, %v2171, %v3779
        %v4279 = vsel %vm781, %v2173, %v3783
        %v4280 = vsel %vm781, %v2197, %v3787
        %v4281 = vsel %vm781, %v2211, %v3791
        %v4282 = vsel %vm781, %v2219, %v3795
        %v4283 = vsel %vm781, %v2221, %v3799
        %v4284 = vsel %vm781, %v2204, %v3803
        %v4285 = vsel %vm781, %v2218, %v3807
        %v4286 = vsel %vm781, %v2220, %v3811
        %v4287 = vsel %vm781, %v2222, %v3815
        %v4288 = vsel %vm781, %v2246, %v3819
        %v4289 = vsel %vm781, %v2260, %v3823
        %v4290 = vsel %vm781, %v2268, %v3827
        %v4291 = vsel %vm781, %v2270, %v3831
        %v4292 = vsel %vm781, %v2253, %v3835
        %v4293 = vsel %vm781, %v2267, %v3839
        %v4294 = vsel %vm781, %v2269, %v3843
        %v4295 = vsel %vm781, %v2271, %v3847
        %v4296 = vsel %vm781, %v2295, %v3851
        %v4297 = vsel %vm781, %v2309, %v3855
        %v4298 = vsel %vm781, %v2317, %v3859
        %v4299 = vsel %vm781, %v2319, %v3863
        %v4300 = vsel %vm781, %v2302, %v3867
        %v4301 = vsel %vm781, %v2316, %v3871
        %v4302 = vsel %vm781, %v2318, %v3875
        %v4303 = vsel %vm781, %v2320, %v3879
        %v4304 = vsel %vm781, %v2344, %v3883
        %v4305 = vsel %vm781, %v2358, %v3887
        %v4306 = vsel %vm781, %v2366, %v3891
        %v4307 = vsel %vm781, %v2368, %v3895
        %v4308 = vsel %vm781, %v2351, %v3899
        %v4309 = vsel %vm781, %v2365, %v3903
        %v4310 = vsel %vm781, %v2367, %v3907
        %v4311 = vsel %vm781, %v2369, %v3911
        %v4312 = vsel %vm781, %v2393, %v3915
        %v4313 = vsel %vm781, %v2407, %v3919
        %v4314 = vsel %vm781, %v2415, %v3923
        %v4315 = vsel %vm781, %v2417, %v3927
        %v4316 = vsel %vm781, %v2400, %v3931
        %v4317 = vsel %vm781, %v2414, %v3935
        %v4318 = vsel %vm781, %v2416, %v3939
        %v4319 = vsel %vm781, %v2418, %v3943
        %v4320 = vsel %vm781, %v2442, %v3947
        %v4321 = vsel %vm781, %v2456, %v3951
        %v4322 = vsel %vm781, %v2464, %v3955
        %v4323 = vsel %vm781, %v2466, %v3959
        %v4324 = vsel %vm781, %v2449, %v3963
        %v4325 = vsel %vm781, %v2463, %v3967
        %v4326 = vsel %vm781, %v2465, %v3971
        %v4327 = vsel %vm781, %v2467, %v3975
        %v4328 = vsel %vm781, %v2491, %v3979
        %v4329 = vsel %vm781, %v2505, %v3983
        %v4330 = vsel %vm781, %v2513, %v3987
        %v4331 = vsel %vm781, %v2515, %v3991
        %v4332 = vsel %vm781, %v2498, %v3995
        %v4333 = vsel %vm781, %v2512, %v3999
        %v4334 = vsel %vm781, %v2514, %v4003
        %v4335 = vsel %vm781, %v2516, %v4007
        %v4336 = vsel %vm781, %v2540, %v4011
        %v4337 = vsel %vm781, %v2554, %v4015
        %v4338 = vsel %vm781, %v2562, %v4019
        %v4339 = vsel %vm781, %v2564, %v4023
        %v4340 = vsel %vm781, %v2547, %v4027
        %v4341 = vsel %vm781, %v2561, %v4031
        %v4342 = vsel %vm781, %v2563, %v4035
        %v4343 = vsel %vm781, %v2565, %v4039
        %v4344 = vsel %vm781, %v2589, %v4043
        %v4345 = vsel %vm781, %v2603, %v4047
        %v4346 = vsel %vm781, %v2611, %v4051
        %v4347 = vsel %vm781, %v2613, %v4055
        %v4348 = vsel %vm781, %v2596, %v4059
        %v4349 = vsel %vm781, %v2610, %v4063
        %v4350 = vsel %vm781, %v2612, %v4067
        %v4351 = vsel %vm781, %v2614, %v4071
        %v4352 = vsel %vm781, %v2638, %v4075
        %v4353 = vsel %vm781, %v2652, %v4079
        %v4354 = vsel %vm781, %v2660, %v4083
        %v4355 = vsel %vm781, %v2662, %v4087
        %v4356 = vsel %vm781, %v2645, %v4091
        %v4357 = vsel %vm781, %v2659, %v4095
        %v4358 = vsel %vm781, %v2661, %v4099
        %v4359 = vsel %vm781, %v2663, %v4103
        %v4488 = vcombine.low %v4232, %v4233
        %v4489 = vcombine.low %v4234, %v4235
        %v4491 = vunpack.c.l.s4 1983009808
        %v4492 = vunpack.c.0.s8 %v4491
        %v4493 = vlaneseq
        %v4494 = vshrl.u32 %v4493, 7
        %v4495 = vsub.s32 %v4492, %v4494
        %v4496 = vrot.slane %v4488, %v4495
        %v4498 = vunpack.c.l.s4 1983009808
        %v4499 = vunpack.c.0.s8 %v4498
        %v4500 = vlaneseq
        %v4501 = vshrl.u32 %v4500, 7
        %v4502 = vsub.s32 %v4499, %v4501
        %v4503 = vrot.slane %v4489, %v4502
        %v4504 = vcombine.low %v4496, %v4503
        %v4505 = vcombine.low %v4236, %v4237
        %v4506 = vcombine.low %v4238, %v4239
        %v4508 = vunpack.c.l.s4 1983009808
        %v4509 = vunpack.c.0.s8 %v4508
        %v4510 = vlaneseq
        %v4511 = vshrl.u32 %v4510, 7
        %v4512 = vsub.s32 %v4509, %v4511
        %v4513 = vrot.slane %v4505, %v4512
        %v4515 = vunpack.c.l.s4 1983009808
        %v4516 = vunpack.c.0.s8 %v4515
        %v4517 = vlaneseq
        %v4518 = vshrl.u32 %v4517, 7
        %v4519 = vsub.s32 %v4516, %v4518
        %v4520 = vrot.slane %v4506, %v4519
        %v4521 = vcombine.low %v4513, %v4520
        %v4522 = vcombine.low %v4240, %v4241
        %v4523 = vcombine.low %v4242, %v4243
        %v4525 = vunpack.c.l.s4 1983009808
        %v4526 = vunpack.c.0.s8 %v4525
        %v4527 = vlaneseq
        %v4528 = vshrl.u32 %v4527, 7
        %v4529 = vsub.s32 %v4526, %v4528
        %v4530 = vrot.slane %v4522, %v4529
        %v4532 = vunpack.c.l.s4 1983009808
        %v4533 = vunpack.c.0.s8 %v4532
        %v4534 = vlaneseq
        %v4535 = vshrl.u32 %v4534, 7
        %v4536 = vsub.s32 %v4533, %v4535
        %v4537 = vrot.slane %v4523, %v4536
        %v4538 = vcombine.low %v4530, %v4537
        %v4539 = vcombine.low %v4244, %v4245
        %v4540 = vcombine.low %v4246, %v4247
        %v4542 = vunpack.c.l.s4 1983009808
        %v4543 = vunpack.c.0.s8 %v4542
        %v4544 = vlaneseq
        %v4545 = vshrl.u32 %v4544, 7
        %v4546 = vsub.s32 %v4543, %v4545
        %v4547 = vrot.slane %v4539, %v4546
        %v4549 = vunpack.c.l.s4 1983009808
        %v4550 = vunpack.c.0.s8 %v4549
        %v4551 = vlaneseq
        %v4552 = vshrl.u32 %v4551, 7
        %v4553 = vsub.s32 %v4550, %v4552
        %v4554 = vrot.slane %v4540, %v4553
        %v4555 = vcombine.low %v4547, %v4554
        %v4556 = vcombine.low %v4248, %v4249
        %v4557 = vcombine.low %v4250, %v4251
        %v4559 = vunpack.c.l.s4 1983009808
        %v4560 = vunpack.c.0.s8 %v4559
        %v4561 = vlaneseq
        %v4562 = vshrl.u32 %v4561, 7
        %v4563 = vsub.s32 %v4560, %v4562
        %v4564 = vrot.slane %v4556, %v4563
        %v4566 = vunpack.c.l.s4 1983009808
        %v4567 = vunpack.c.0.s8 %v4566
        %v4568 = vlaneseq
        %v4569 = vshrl.u32 %v4568, 7
        %v4570 = vsub.s32 %v4567, %v4569
        %v4571 = vrot.slane %v4557, %v4570
        %v4572 = vcombine.low %v4564, %v4571
        %v4573 = vcombine.low %v4252, %v4253
        %v4574 = vcombine.low %v4254, %v4255
        %v4576 = vunpack.c.l.s4 1983009808
        %v4577 = vunpack.c.0.s8 %v4576
        %v4578 = vlaneseq
        %v4579 = vshrl.u32 %v4578, 7
        %v4580 = vsub.s32 %v4577, %v4579
        %v4581 = vrot.slane %v4573, %v4580
        %v4583 = vunpack.c.l.s4 1983009808
        %v4584 = vunpack.c.0.s8 %v4583
        %v4585 = vlaneseq
        %v4586 = vshrl.u32 %v4585, 7
        %v4587 = vsub.s32 %v4584, %v4586
        %v4588 = vrot.slane %v4574, %v4587
        %v4589 = vcombine.low %v4581, %v4588
        %v4590 = vcombine.low %v4256, %v4257
        %v4591 = vcombine.low %v4258, %v4259
        %v4593 = vunpack.c.l.s4 1983009808
        %v4594 = vunpack.c.0.s8 %v4593
        %v4595 = vlaneseq
        %v4596 = vshrl.u32 %v4595, 7
        %v4597 = vsub.s32 %v4594, %v4596
        %v4598 = vrot.slane %v4590, %v4597
        %v4600 = vunpack.c.l.s4 1983009808
        %v4601 = vunpack.c.0.s8 %v4600
        %v4602 = vlaneseq
        %v4603 = vshrl.u32 %v4602, 7
        %v4604 = vsub.s32 %v4601, %v4603
        %v4605 = vrot.slane %v4591, %v4604
        %v4606 = vcombine.low %v4598, %v4605
        %v4607 = vcombine.low %v4260, %v4261
        %v4608 = vcombine.low %v4262, %v4263
        %v4610 = vunpack.c.l.s4 1983009808
        %v4611 = vunpack.c.0.s8 %v4610
        %v4612 = vlaneseq
        %v4613 = vshrl.u32 %v4612, 7
        %v4614 = vsub.s32 %v4611, %v4613
        %v4615 = vrot.slane %v4607, %v4614
        %v4617 = vunpack.c.l.s4 1983009808
        %v4618 = vunpack.c.0.s8 %v4617
        %v4619 = vlaneseq
        %v4620 = vshrl.u32 %v4619, 7
        %v4621 = vsub.s32 %v4618, %v4620
        %v4622 = vrot.slane %v4608, %v4621
        %v4623 = vcombine.low %v4615, %v4622
        %v4624 = vcombine.low %v4264, %v4265
        %v4625 = vcombine.low %v4266, %v4267
        %v4627 = vunpack.c.l.s4 1983009808
        %v4628 = vunpack.c.0.s8 %v4627
        %v4629 = vlaneseq
        %v4630 = vshrl.u32 %v4629, 7
        %v4631 = vsub.s32 %v4628, %v4630
        %v4632 = vrot.slane %v4624, %v4631
        %v4634 = vunpack.c.l.s4 1983009808
        %v4635 = vunpack.c.0.s8 %v4634
        %v4636 = vlaneseq
        %v4637 = vshrl.u32 %v4636, 7
        %v4638 = vsub.s32 %v4635, %v4637
        %v4639 = vrot.slane %v4625, %v4638
        %v4640 = vcombine.low %v4632, %v4639
        %v4641 = vcombine.low %v4268, %v4269
        %v4642 = vcombine.low %v4270, %v4271
        %v4644 = vunpack.c.l.s4 1983009808
        %v4645 = vunpack.c.0.s8 %v4644
        %v4646 = vlaneseq
        %v4647 = vshrl.u32 %v4646, 7
        %v4648 = vsub.s32 %v4645, %v4647
        %v4649 = vrot.slane %v4641, %v4648
        %v4651 = vunpack.c.l.s4 1983009808
        %v4652 = vunpack.c.0.s8 %v4651
        %v4653 = vlaneseq
        %v4654 = vshrl.u32 %v4653, 7
        %v4655 = vsub.s32 %v4652, %v4654
        %v4656 = vrot.slane %v4642, %v4655
        %v4657 = vcombine.low %v4649, %v4656
        %v4658 = vcombine.low %v4272, %v4273
        %v4659 = vcombine.low %v4274, %v4275
        %v4661 = vunpack.c.l.s4 1983009808
        %v4662 = vunpack.c.0.s8 %v4661
        %v4663 = vlaneseq
        %v4664 = vshrl.u32 %v4663, 7
        %v4665 = vsub.s32 %v4662, %v4664
        %v4666 = vrot.slane %v4658, %v4665
        %v4668 = vunpack.c.l.s4 1983009808
        %v4669 = vunpack.c.0.s8 %v4668
        %v4670 = vlaneseq
        %v4671 = vshrl.u32 %v4670, 7
        %v4672 = vsub.s32 %v4669, %v4671
        %v4673 = vrot.slane %v4659, %v4672
        %v4674 = vcombine.low %v4666, %v4673
        %v4675 = vcombine.low %v4276, %v4277
        %v4676 = vcombine.low %v4278, %v4279
        %v4678 = vunpack.c.l.s4 1983009808
        %v4679 = vunpack.c.0.s8 %v4678
        %v4680 = vlaneseq
        %v4681 = vshrl.u32 %v4680, 7
        %v4682 = vsub.s32 %v4679, %v4681
        %v4683 = vrot.slane %v4675, %v4682
        %v4685 = vunpack.c.l.s4 1983009808
        %v4686 = vunpack.c.0.s8 %v4685
        %v4687 = vlaneseq
        %v4688 = vshrl.u32 %v4687, 7
        %v4689 = vsub.s32 %v4686, %v4688
        %v4690 = vrot.slane %v4676, %v4689
        %v4691 = vcombine.low %v4683, %v4690
        %v4692 = vcombine.low %v4280, %v4281
        %v4693 = vcombine.low %v4282, %v4283
        %v4695 = vunpack.c.l.s4 1983009808
        %v4696 = vunpack.c.0.s8 %v4695
        %v4697 = vlaneseq
        %v4698 = vshrl.u32 %v4697, 7
        %v4699 = vsub.s32 %v4696, %v4698
        %v4700 = vrot.slane %v4692, %v4699
        %v4702 = vunpack.c.l.s4 1983009808
        %v4703 = vunpack.c.0.s8 %v4702
        %v4704 = vlaneseq
        %v4705 = vshrl.u32 %v4704, 7
        %v4706 = vsub.s32 %v4703, %v4705
        %v4707 = vrot.slane %v4693, %v4706
        %v4708 = vcombine.low %v4700, %v4707
        %v4709 = vcombine.low %v4284, %v4285
        %v4710 = vcombine.low %v4286, %v4287
        %v4712 = vunpack.c.l.s4 1983009808
        %v4713 = vunpack.c.0.s8 %v4712
        %v4714 = vlaneseq
        %v4715 = vshrl.u32 %v4714, 7
        %v4716 = vsub.s32 %v4713, %v4715
        %v4717 = vrot.slane %v4709, %v4716
        %v4719 = vunpack.c.l.s4 1983009808
        %v4720 = vunpack.c.0.s8 %v4719
        %v4721 = vlaneseq
        %v4722 = vshrl.u32 %v4721, 7
        %v4723 = vsub.s32 %v4720, %v4722
        %v4724 = vrot.slane %v4710, %v4723
        %v4725 = vcombine.low %v4717, %v4724
        %v4726 = vcombine.low %v4288, %v4289
        %v4727 = vcombine.low %v4290, %v4291
        %v4729 = vunpack.c.l.s4 1983009808
        %v4730 = vunpack.c.0.s8 %v4729
        %v4731 = vlaneseq
        %v4732 = vshrl.u32 %v4731, 7
        %v4733 = vsub.s32 %v4730, %v4732
        %v4734 = vrot.slane %v4726, %v4733
        %v4736 = vunpack.c.l.s4 1983009808
        %v4737 = vunpack.c.0.s8 %v4736
        %v4738 = vlaneseq
        %v4739 = vshrl.u32 %v4738, 7
        %v4740 = vsub.s32 %v4737, %v4739
        %v4741 = vrot.slane %v4727, %v4740
        %v4742 = vcombine.low %v4734, %v4741
        %v4743 = vcombine.low %v4292, %v4293
        %v4744 = vcombine.low %v4294, %v4295
        %v4746 = vunpack.c.l.s4 1983009808
        %v4747 = vunpack.c.0.s8 %v4746
        %v4748 = vlaneseq
        %v4749 = vshrl.u32 %v4748, 7
        %v4750 = vsub.s32 %v4747, %v4749
        %v4751 = vrot.slane %v4743, %v4750
        %v4753 = vunpack.c.l.s4 1983009808
        %v4754 = vunpack.c.0.s8 %v4753
        %v4755 = vlaneseq
        %v4756 = vshrl.u32 %v4755, 7
        %v4757 = vsub.s32 %v4754, %v4756
        %v4758 = vrot.slane %v4744, %v4757
        %v4759 = vcombine.low %v4751, %v4758
        %v4760 = vcombine.low %v4296, %v4297
        %v4761 = vcombine.low %v4298, %v4299
        %v4763 = vunpack.c.l.s4 1983009808
        %v4764 = vunpack.c.0.s8 %v4763
        %v4765 = vlaneseq
        %v4766 = vshrl.u32 %v4765, 7
        %v4767 = vsub.s32 %v4764, %v4766
        %v4768 = vrot.slane %v4760, %v4767
        %v4770 = vunpack.c.l.s4 1983009808
        %v4771 = vunpack.c.0.s8 %v4770
        %v4772 = vlaneseq
        %v4773 = vshrl.u32 %v4772, 7
        %v4774 = vsub.s32 %v4771, %v4773
        %v4775 = vrot.slane %v4761, %v4774
        %v4776 = vcombine.low %v4768, %v4775
        %v4777 = vcombine.low %v4300, %v4301
        %v4778 = vcombine.low %v4302, %v4303
        %v4780 = vunpack.c.l.s4 1983009808
        %v4781 = vunpack.c.0.s8 %v4780
        %v4782 = vlaneseq
        %v4783 = vshrl.u32 %v4782, 7
        %v4784 = vsub.s32 %v4781, %v4783
        %v4785 = vrot.slane %v4777, %v4784
        %v4787 = vunpack.c.l.s4 1983009808
        %v4788 = vunpack.c.0.s8 %v4787
        %v4789 = vlaneseq
        %v4790 = vshrl.u32 %v4789, 7
        %v4791 = vsub.s32 %v4788, %v4790
        %v4792 = vrot.slane %v4778, %v4791
        %v4793 = vcombine.low %v4785, %v4792
        %v4794 = vcombine.low %v4304, %v4305
        %v4795 = vcombine.low %v4306, %v4307
        %v4797 = vunpack.c.l.s4 1983009808
        %v4798 = vunpack.c.0.s8 %v4797
        %v4799 = vlaneseq
        %v4800 = vshrl.u32 %v4799, 7
        %v4801 = vsub.s32 %v4798, %v4800
        %v4802 = vrot.slane %v4794, %v4801
        %v4804 = vunpack.c.l.s4 1983009808
        %v4805 = vunpack.c.0.s8 %v4804
        %v4806 = vlaneseq
        %v4807 = vshrl.u32 %v4806, 7
        %v4808 = vsub.s32 %v4805, %v4807
        %v4809 = vrot.slane %v4795, %v4808
        %v4810 = vcombine.low %v4802, %v4809
        %v4811 = vcombine.low %v4308, %v4309
        %v4812 = vcombine.low %v4310, %v4311
        %v4814 = vunpack.c.l.s4 1983009808
        %v4815 = vunpack.c.0.s8 %v4814
        %v4816 = vlaneseq
        %v4817 = vshrl.u32 %v4816, 7
        %v4818 = vsub.s32 %v4815, %v4817
        %v4819 = vrot.slane %v4811, %v4818
        %v4821 = vunpack.c.l.s4 1983009808
        %v4822 = vunpack.c.0.s8 %v4821
        %v4823 = vlaneseq
        %v4824 = vshrl.u32 %v4823, 7
        %v4825 = vsub.s32 %v4822, %v4824
        %v4826 = vrot.slane %v4812, %v4825
        %v4827 = vcombine.low %v4819, %v4826
        %v4828 = vcombine.low %v4312, %v4313
        %v4829 = vcombine.low %v4314, %v4315
        %v4831 = vunpack.c.l.s4 1983009808
        %v4832 = vunpack.c.0.s8 %v4831
        %v4833 = vlaneseq
        %v4834 = vshrl.u32 %v4833, 7
        %v4835 = vsub.s32 %v4832, %v4834
        %v4836 = vrot.slane %v4828, %v4835
        %v4838 = vunpack.c.l.s4 1983009808
        %v4839 = vunpack.c.0.s8 %v4838
        %v4840 = vlaneseq
        %v4841 = vshrl.u32 %v4840, 7
        %v4842 = vsub.s32 %v4839, %v4841
        %v4843 = vrot.slane %v4829, %v4842
        %v4844 = vcombine.low %v4836, %v4843
        %v4845 = vcombine.low %v4316, %v4317
        %v4846 = vcombine.low %v4318, %v4319
        %v4848 = vunpack.c.l.s4 1983009808
        %v4849 = vunpack.c.0.s8 %v4848
        %v4850 = vlaneseq
        %v4851 = vshrl.u32 %v4850, 7
        %v4852 = vsub.s32 %v4849, %v4851
        %v4853 = vrot.slane %v4845, %v4852
        %v4855 = vunpack.c.l.s4 1983009808
        %v4856 = vunpack.c.0.s8 %v4855
        %v4857 = vlaneseq
        %v4858 = vshrl.u32 %v4857, 7
        %v4859 = vsub.s32 %v4856, %v4858
        %v4860 = vrot.slane %v4846, %v4859
        %v4861 = vcombine.low %v4853, %v4860
        %v4862 = vcombine.low %v4320, %v4321
        %v4863 = vcombine.low %v4322, %v4323
        %v4865 = vunpack.c.l.s4 1983009808
        %v4866 = vunpack.c.0.s8 %v4865
        %v4867 = vlaneseq
        %v4868 = vshrl.u32 %v4867, 7
        %v4869 = vsub.s32 %v4866, %v4868
        %v4870 = vrot.slane %v4862, %v4869
        %v4872 = vunpack.c.l.s4 1983009808
        %v4873 = vunpack.c.0.s8 %v4872
        %v4874 = vlaneseq
        %v4875 = vshrl.u32 %v4874, 7
        %v4876 = vsub.s32 %v4873, %v4875
        %v4877 = vrot.slane %v4863, %v4876
        %v4878 = vcombine.low %v4870, %v4877
        %v4879 = vcombine.low %v4324, %v4325
        %v4880 = vcombine.low %v4326, %v4327
        %v4882 = vunpack.c.l.s4 1983009808
        %v4883 = vunpack.c.0.s8 %v4882
        %v4884 = vlaneseq
        %v4885 = vshrl.u32 %v4884, 7
        %v4886 = vsub.s32 %v4883, %v4885
        %v4887 = vrot.slane %v4879, %v4886
        %v4889 = vunpack.c.l.s4 1983009808
        %v4890 = vunpack.c.0.s8 %v4889
        %v4891 = vlaneseq
        %v4892 = vshrl.u32 %v4891, 7
        %v4893 = vsub.s32 %v4890, %v4892
        %v4894 = vrot.slane %v4880, %v4893
        %v4895 = vcombine.low %v4887, %v4894
        %v4896 = vcombine.low %v4328, %v4329
        %v4897 = vcombine.low %v4330, %v4331
        %v4899 = vunpack.c.l.s4 1983009808
        %v4900 = vunpack.c.0.s8 %v4899
        %v4901 = vlaneseq
        %v4902 = vshrl.u32 %v4901, 7
        %v4903 = vsub.s32 %v4900, %v4902
        %v4904 = vrot.slane %v4896, %v4903
        %v4906 = vunpack.c.l.s4 1983009808
        %v4907 = vunpack.c.0.s8 %v4906
        %v4908 = vlaneseq
        %v4909 = vshrl.u32 %v4908, 7
        %v4910 = vsub.s32 %v4907, %v4909
        %v4911 = vrot.slane %v4897, %v4910
        %v4912 = vcombine.low %v4904, %v4911
        %v4913 = vcombine.low %v4332, %v4333
        %v4914 = vcombine.low %v4334, %v4335
        %v4916 = vunpack.c.l.s4 1983009808
        %v4917 = vunpack.c.0.s8 %v4916
        %v4918 = vlaneseq
        %v4919 = vshrl.u32 %v4918, 7
        %v4920 = vsub.s32 %v4917, %v4919
        %v4921 = vrot.slane %v4913, %v4920
        %v4923 = vunpack.c.l.s4 1983009808
        %v4924 = vunpack.c.0.s8 %v4923
        %v4925 = vlaneseq
        %v4926 = vshrl.u32 %v4925, 7
        %v4927 = vsub.s32 %v4924, %v4926
        %v4928 = vrot.slane %v4914, %v4927
        %v4929 = vcombine.low %v4921, %v4928
        %v4930 = vcombine.low %v4336, %v4337
        %v4931 = vcombine.low %v4338, %v4339
        %v4933 = vunpack.c.l.s4 1983009808
        %v4934 = vunpack.c.0.s8 %v4933
        %v4935 = vlaneseq
        %v4936 = vshrl.u32 %v4935, 7
        %v4937 = vsub.s32 %v4934, %v4936
        %v4938 = vrot.slane %v4930, %v4937
        %v4940 = vunpack.c.l.s4 1983009808
        %v4941 = vunpack.c.0.s8 %v4940
        %v4942 = vlaneseq
        %v4943 = vshrl.u32 %v4942, 7
        %v4944 = vsub.s32 %v4941, %v4943
        %v4945 = vrot.slane %v4931, %v4944
        %v4946 = vcombine.low %v4938, %v4945
        %v4947 = vcombine.low %v4340, %v4341
        %v4948 = vcombine.low %v4342, %v4343
        %v4950 = vunpack.c.l.s4 1983009808
        %v4951 = vunpack.c.0.s8 %v4950
        %v4952 = vlaneseq
        %v4953 = vshrl.u32 %v4952, 7
        %v4954 = vsub.s32 %v4951, %v4953
        %v4955 = vrot.slane %v4947, %v4954
        %v4957 = vunpack.c.l.s4 1983009808
        %v4958 = vunpack.c.0.s8 %v4957
        %v4959 = vlaneseq
        %v4960 = vshrl.u32 %v4959, 7
        %v4961 = vsub.s32 %v4958, %v4960
        %v4962 = vrot.slane %v4948, %v4961
        %v4963 = vcombine.low %v4955, %v4962
        %v4964 = vcombine.low %v4344, %v4345
        %v4965 = vcombine.low %v4346, %v4347
        %v4967 = vunpack.c.l.s4 1983009808
        %v4968 = vunpack.c.0.s8 %v4967
        %v4969 = vlaneseq
        %v4970 = vshrl.u32 %v4969, 7
        %v4971 = vsub.s32 %v4968, %v4970
        %v4972 = vrot.slane %v4964, %v4971
        %v4974 = vunpack.c.l.s4 1983009808
        %v4975 = vunpack.c.0.s8 %v4974
        %v4976 = vlaneseq
        %v4977 = vshrl.u32 %v4976, 7
        %v4978 = vsub.s32 %v4975, %v4977
        %v4979 = vrot.slane %v4965, %v4978
        %v4980 = vcombine.low %v4972, %v4979
        %v4981 = vcombine.low %v4348, %v4349
        %v4982 = vcombine.low %v4350, %v4351
        %v4984 = vunpack.c.l.s4 1983009808
        %v4985 = vunpack.c.0.s8 %v4984
        %v4986 = vlaneseq
        %v4987 = vshrl.u32 %v4986, 7
        %v4988 = vsub.s32 %v4985, %v4987
        %v4989 = vrot.slane %v4981, %v4988
        %v4991 = vunpack.c.l.s4 1983009808
        %v4992 = vunpack.c.0.s8 %v4991
        %v4993 = vlaneseq
        %v4994 = vshrl.u32 %v4993, 7
        %v4995 = vsub.s32 %v4992, %v4994
        %v4996 = vrot.slane %v4982, %v4995
        %v4997 = vcombine.low %v4989, %v4996
        %v4998 = vcombine.low %v4352, %v4353
        %v4999 = vcombine.low %v4354, %v4355
        %v5001 = vunpack.c.l.s4 1983009808
        %v5002 = vunpack.c.0.s8 %v5001
        %v5003 = vlaneseq
        %v5004 = vshrl.u32 %v5003, 7
        %v5005 = vsub.s32 %v5002, %v5004
        %v5006 = vrot.slane %v4998, %v5005
        %v5008 = vunpack.c.l.s4 1983009808
        %v5009 = vunpack.c.0.s8 %v5008
        %v5010 = vlaneseq
        %v5011 = vshrl.u32 %v5010, 7
        %v5012 = vsub.s32 %v5009, %v5011
        %v5013 = vrot.slane %v4999, %v5012
        %v5014 = vcombine.low %v5006, %v5013
        %v5015 = vcombine.low %v4356, %v4357
        %v5016 = vcombine.low %v4358, %v4359
        %v5018 = vunpack.c.l.s4 1983009808
        %v5019 = vunpack.c.0.s8 %v5018
        %v5020 = vlaneseq
        %v5021 = vshrl.u32 %v5020, 7
        %v5022 = vsub.s32 %v5019, %v5021
        %v5023 = vrot.slane %v5015, %v5022
        %v5025 = vunpack.c.l.s4 1983009808
        %v5026 = vunpack.c.0.s8 %v5025
        %v5027 = vlaneseq
        %v5028 = vshrl.u32 %v5027, 7
        %v5029 = vsub.s32 %v5026, %v5028
        %v5030 = vrot.slane %v5016, %v5029
        %v5031 = vcombine.low %v5023, %v5030
        %5064 = vxpose.xlu0.b32.start [1/16] %v4504, 128
        %5065 = vxpose.xlu0.b32.cont [2/16] %v4521, 128
        %5066 = vxpose.xlu0.b32.cont [3/16] %v4538, 128
        %5067 = vxpose.xlu0.b32.cont [4/16] %v4555, 128
        %5068 = vxpose.xlu0.b32.cont [5/16] %v4572, 128
        %5069 = vxpose.xlu0.b32.cont [6/16] %v4589, 128
        %5070 = vxpose.xlu0.b32.cont [7/16] %v4606, 128
        %5071 = vxpose.xlu0.b32.cont [8/16] %v4623, 128
        %5072 = vxpose.xlu0.b32.cont [9/16] %v4640, 128
        %5073 = vxpose.xlu0.b32.cont [10/16] %v4657, 128
        %5074 = vxpose.xlu0.b32.cont [11/16] %v4674, 128
        %5075 = vxpose.xlu0.b32.cont [12/16] %v4691, 128
        %5076 = vxpose.xlu0.b32.cont [13/16] %v4708, 128
        %5077 = vxpose.xlu0.b32.cont [14/16] %v4725, 128
        %5078 = vxpose.xlu0.b32.cont [15/16] %v4742, 128
        %5079 = vxpose.xlu0.b32.end [16/16] %v4759, 128
        %v5080 = vpop.trf.xlu0
        %v5081 = vpop.trf.xlu0
        %v5082 = vpop.trf.xlu0
        %v5083 = vpop.trf.xlu0
        %v5084 = vpop.trf.xlu0
        %v5085 = vpop.trf.xlu0
        %v5086 = vpop.trf.xlu0
        %v5087 = vpop.trf.xlu0
        %v5088 = vpop.trf.xlu0
        %v5089 = vpop.trf.xlu0
        %v5090 = vpop.trf.xlu0
        %v5091 = vpop.trf.xlu0
        %v5092 = vpop.trf.xlu0
        %v5093 = vpop.trf.xlu0
        %v5094 = vpop.trf.xlu0
        %v5095 = vpop.trf.xlu0
        %5096 = vxpose.xlu0.b32.start [1/16] %v4776, 128
        %5097 = vxpose.xlu0.b32.cont [2/16] %v4793, 128
        %5098 = vxpose.xlu0.b32.cont [3/16] %v4810, 128
        %5099 = vxpose.xlu0.b32.cont [4/16] %v4827, 128
        %5100 = vxpose.xlu0.b32.cont [5/16] %v4844, 128
        %5101 = vxpose.xlu0.b32.cont [6/16] %v4861, 128
        %5102 = vxpose.xlu0.b32.cont [7/16] %v4878, 128
        %5103 = vxpose.xlu0.b32.cont [8/16] %v4895, 128
        %5104 = vxpose.xlu0.b32.cont [9/16] %v4912, 128
        %5105 = vxpose.xlu0.b32.cont [10/16] %v4929, 128
        %5106 = vxpose.xlu0.b32.cont [11/16] %v4946, 128
        %5107 = vxpose.xlu0.b32.cont [12/16] %v4963, 128
        %5108 = vxpose.xlu0.b32.cont [13/16] %v4980, 128
        %5109 = vxpose.xlu0.b32.cont [14/16] %v4997, 128
        %5110 = vxpose.xlu0.b32.cont [15/16] %v5014, 128
        %5111 = vxpose.xlu0.b32.end [16/16] %v5031, 128
        %v5112 = vpop.trf.xlu0
        %v5113 = vpop.trf.xlu0
        %v5114 = vpop.trf.xlu0
        %v5115 = vpop.trf.xlu0
        %v5116 = vpop.trf.xlu0
        %v5117 = vpop.trf.xlu0
        %v5118 = vpop.trf.xlu0
        %v5119 = vpop.trf.xlu0
        %v5120 = vpop.trf.xlu0
        %v5121 = vpop.trf.xlu0
        %v5122 = vpop.trf.xlu0
        %v5123 = vpop.trf.xlu0
        %v5124 = vpop.trf.xlu0
        %v5125 = vpop.trf.xlu0
        %v5126 = vpop.trf.xlu0
        %v5127 = vpop.trf.xlu0
        %5128 = vst [vmem:[%s177] sm:$0xff] %v5080
        %5129 = vst [vmem:[%s177 + $0x8] sm:$0xff] %v5112
        %5130 = vst [vmem:[%s177 + $0x10] sm:$0xff] %v5081
        %5131 = vst [vmem:[%s177 + $0x18] sm:$0xff] %v5113
        %5132 = vst [vmem:[%s177 + $0x40] sm:$0xff] %v5082
        %5133 = vst [vmem:[%s177 + $0x48] sm:$0xff] %v5114
        %5134 = vst [vmem:[%s177 + $0x50] sm:$0xff] %v5083
        %5135 = vst [vmem:[%s177 + $0x58] sm:$0xff] %v5115
        %5136 = vst [vmem:[%s177 + $0x80] sm:$0xff] %v5084
        %5137 = vst [vmem:[%s177 + $0x88] sm:$0xff] %v5116
        %5138 = vst [vmem:[%s177 + $0x90] sm:$0xff] %v5085
        %5139 = vst [vmem:[%s177 + $0x98] sm:$0xff] %v5117
        %5140 = vst [vmem:[%s177 + $0xc0] sm:$0xff] %v5086
        %5141 = vst [vmem:[%s177 + $0xc8] sm:$0xff] %v5118
        %5142 = vst [vmem:[%s177 + $0xd0] sm:$0xff] %v5087
        %5143 = vst [vmem:[%s177 + $0xd8] sm:$0xff] %v5119
        %s5144 = scalar_lea.vmem %s159, 128 [#allocation2]
        %v5145 = vld [vmem:[%s5144] sm:$0xff]
        %v5146 = vld [vmem:[%s5144 + $0x8] sm:$0xff]
        %v5147 = vld [vmem:[%s5144 + $0x10] sm:$0xff]
        %v5148 = vld [vmem:[%s5144 + $0x18] sm:$0xff]
        %s5149 = scalar_lea.vmem %s159, 192 [#allocation2]
        %v5150 = vld [vmem:[%s5149] sm:$0xff]
        %v5151 = vld [vmem:[%s5149 + $0x8] sm:$0xff]
        %v5152 = vld [vmem:[%s5149 + $0x10] sm:$0xff]
        %v5153 = vld [vmem:[%s5149 + $0x18] sm:$0xff]
        %v5158 = vcombine.high %v5145, %v5145
        %v5160 = vunpack.c.l.s4 1966171168
        %v5161 = vunpack.c.0.s8 %v5160
        %v5162 = vlaneseq
        %v5163 = vshrl.u32 %v5162, 7
        %v5164 = vsub.s32 %v5161, %v5163
        %v5165 = vrot.slane %v5145, %v5164
        %v5167 = vunpack.c.l.s4 1966171168
        %v5168 = vunpack.c.0.s8 %v5167
        %v5169 = vlaneseq
        %v5170 = vshrl.u32 %v5169, 7
        %v5171 = vsub.s32 %v5168, %v5170
        %v5172 = vrot.slane %v5158, %v5171
        %v5173 = vcombine.high %v5165, %v5165
        %v5174 = vcombine.high %v5172, %v5172
        %v5176 = vunpack.c.l.s4 1966171168
        %v5177 = vunpack.c.0.s8 %v5176
        %v5178 = vlaneseq
        %v5179 = vshrl.u32 %v5178, 7
        %v5180 = vsub.s32 %v5177, %v5179
        %v5181 = vrot.slane %v5165, %v5180
        %v5183 = vunpack.c.l.s4 1966171168
        %v5184 = vunpack.c.0.s8 %v5183
        %v5185 = vlaneseq
        %v5186 = vshrl.u32 %v5185, 7
        %v5187 = vsub.s32 %v5184, %v5186
        %v5188 = vrot.slane %v5172, %v5187
        %v5190 = vunpack.c.l.s4 1966171168
        %v5191 = vunpack.c.0.s8 %v5190
        %v5192 = vlaneseq
        %v5193 = vshrl.u32 %v5192, 7
        %v5194 = vsub.s32 %v5191, %v5193
        %v5195 = vrot.slane %v5173, %v5194
        %v5197 = vunpack.c.l.s4 1966171168
        %v5198 = vunpack.c.0.s8 %v5197
        %v5199 = vlaneseq
        %v5200 = vshrl.u32 %v5199, 7
        %v5201 = vsub.s32 %v5198, %v5200
        %v5202 = vrot.slane %v5174, %v5201
        %v5203 = vcombine.high %v5181, %v5181
        %v5204 = vcombine.high %v5188, %v5188
        %v5205 = vcombine.high %v5195, %v5195
        %v5206 = vcombine.high %v5202, %v5202
        %v5207 = vcombine.high %v5146, %v5146
        %v5209 = vunpack.c.l.s4 1966171168
        %v5210 = vunpack.c.0.s8 %v5209
        %v5211 = vlaneseq
        %v5212 = vshrl.u32 %v5211, 7
        %v5213 = vsub.s32 %v5210, %v5212
        %v5214 = vrot.slane %v5146, %v5213
        %v5216 = vunpack.c.l.s4 1966171168
        %v5217 = vunpack.c.0.s8 %v5216
        %v5218 = vlaneseq
        %v5219 = vshrl.u32 %v5218, 7
        %v5220 = vsub.s32 %v5217, %v5219
        %v5221 = vrot.slane %v5207, %v5220
        %v5222 = vcombine.high %v5214, %v5214
        %v5223 = vcombine.high %v5221, %v5221
        %v5225 = vunpack.c.l.s4 1966171168
        %v5226 = vunpack.c.0.s8 %v5225
        %v5227 = vlaneseq
        %v5228 = vshrl.u32 %v5227, 7
        %v5229 = vsub.s32 %v5226, %v5228
        %v5230 = vrot.slane %v5214, %v5229
        %v5232 = vunpack.c.l.s4 1966171168
        %v5233 = vunpack.c.0.s8 %v5232
        %v5234 = vlaneseq
        %v5235 = vshrl.u32 %v5234, 7
        %v5236 = vsub.s32 %v5233, %v5235
        %v5237 = vrot.slane %v5221, %v5236
        %v5239 = vunpack.c.l.s4 1966171168
        %v5240 = vunpack.c.0.s8 %v5239
        %v5241 = vlaneseq
        %v5242 = vshrl.u32 %v5241, 7
        %v5243 = vsub.s32 %v5240, %v5242
        %v5244 = vrot.slane %v5222, %v5243
        %v5246 = vunpack.c.l.s4 1966171168
        %v5247 = vunpack.c.0.s8 %v5246
        %v5248 = vlaneseq
        %v5249 = vshrl.u32 %v5248, 7
        %v5250 = vsub.s32 %v5247, %v5249
        %v5251 = vrot.slane %v5223, %v5250
        %v5252 = vcombine.high %v5230, %v5230
        %v5253 = vcombine.high %v5237, %v5237
        %v5254 = vcombine.high %v5244, %v5244
        %v5255 = vcombine.high %v5251, %v5251
        %v5256 = vcombine.high %v5147, %v5147
        %v5258 = vunpack.c.l.s4 1966171168
        %v5259 = vunpack.c.0.s8 %v5258
        %v5260 = vlaneseq
        %v5261 = vshrl.u32 %v5260, 7
        %v5262 = vsub.s32 %v5259, %v5261
        %v5263 = vrot.slane %v5147, %v5262
        %v5265 = vunpack.c.l.s4 1966171168
        %v5266 = vunpack.c.0.s8 %v5265
        %v5267 = vlaneseq
        %v5268 = vshrl.u32 %v5267, 7
        %v5269 = vsub.s32 %v5266, %v5268
        %v5270 = vrot.slane %v5256, %v5269
        %v5271 = vcombine.high %v5263, %v5263
        %v5272 = vcombine.high %v5270, %v5270
        %v5274 = vunpack.c.l.s4 1966171168
        %v5275 = vunpack.c.0.s8 %v5274
        %v5276 = vlaneseq
        %v5277 = vshrl.u32 %v5276, 7
        %v5278 = vsub.s32 %v5275, %v5277
        %v5279 = vrot.slane %v5263, %v5278
        %v5281 = vunpack.c.l.s4 1966171168
        %v5282 = vunpack.c.0.s8 %v5281
        %v5283 = vlaneseq
        %v5284 = vshrl.u32 %v5283, 7
        %v5285 = vsub.s32 %v5282, %v5284
        %v5286 = vrot.slane %v5270, %v5285
        %v5288 = vunpack.c.l.s4 1966171168
        %v5289 = vunpack.c.0.s8 %v5288
        %v5290 = vlaneseq
        %v5291 = vshrl.u32 %v5290, 7
        %v5292 = vsub.s32 %v5289, %v5291
        %v5293 = vrot.slane %v5271, %v5292
        %v5295 = vunpack.c.l.s4 1966171168
        %v5296 = vunpack.c.0.s8 %v5295
        %v5297 = vlaneseq
        %v5298 = vshrl.u32 %v5297, 7
        %v5299 = vsub.s32 %v5296, %v5298
        %v5300 = vrot.slane %v5272, %v5299
        %v5301 = vcombine.high %v5279, %v5279
        %v5302 = vcombine.high %v5286, %v5286
        %v5303 = vcombine.high %v5293, %v5293
        %v5304 = vcombine.high %v5300, %v5300
        %v5305 = vcombine.high %v5148, %v5148
        %v5307 = vunpack.c.l.s4 1966171168
        %v5308 = vunpack.c.0.s8 %v5307
        %v5309 = vlaneseq
        %v5310 = vshrl.u32 %v5309, 7
        %v5311 = vsub.s32 %v5308, %v5310
        %v5312 = vrot.slane %v5148, %v5311
        %v5314 = vunpack.c.l.s4 1966171168
        %v5315 = vunpack.c.0.s8 %v5314
        %v5316 = vlaneseq
        %v5317 = vshrl.u32 %v5316, 7
        %v5318 = vsub.s32 %v5315, %v5317
        %v5319 = vrot.slane %v5305, %v5318
        %v5320 = vcombine.high %v5312, %v5312
        %v5321 = vcombine.high %v5319, %v5319
        %v5323 = vunpack.c.l.s4 1966171168
        %v5324 = vunpack.c.0.s8 %v5323
        %v5325 = vlaneseq
        %v5326 = vshrl.u32 %v5325, 7
        %v5327 = vsub.s32 %v5324, %v5326
        %v5328 = vrot.slane %v5312, %v5327
        %v5330 = vunpack.c.l.s4 1966171168
        %v5331 = vunpack.c.0.s8 %v5330
        %v5332 = vlaneseq
        %v5333 = vshrl.u32 %v5332, 7
        %v5334 = vsub.s32 %v5331, %v5333
        %v5335 = vrot.slane %v5319, %v5334
        %v5337 = vunpack.c.l.s4 1966171168
        %v5338 = vunpack.c.0.s8 %v5337
        %v5339 = vlaneseq
        %v5340 = vshrl.u32 %v5339, 7
        %v5341 = vsub.s32 %v5338, %v5340
        %v5342 = vrot.slane %v5320, %v5341
        %v5344 = vunpack.c.l.s4 1966171168
        %v5345 = vunpack.c.0.s8 %v5344
        %v5346 = vlaneseq
        %v5347 = vshrl.u32 %v5346, 7
        %v5348 = vsub.s32 %v5345, %v5347
        %v5349 = vrot.slane %v5321, %v5348
        %v5350 = vcombine.high %v5328, %v5328
        %v5351 = vcombine.high %v5335, %v5335
        %v5352 = vcombine.high %v5342, %v5342
        %v5353 = vcombine.high %v5349, %v5349
        %v5390 = vcombine.high %v5150, %v5150
        %v5392 = vunpack.c.l.s4 1966171168
        %v5393 = vunpack.c.0.s8 %v5392
        %v5394 = vlaneseq
        %v5395 = vshrl.u32 %v5394, 7
        %v5396 = vsub.s32 %v5393, %v5395
        %v5397 = vrot.slane %v5150, %v5396
        %v5399 = vunpack.c.l.s4 1966171168
        %v5400 = vunpack.c.0.s8 %v5399
        %v5401 = vlaneseq
        %v5402 = vshrl.u32 %v5401, 7
        %v5403 = vsub.s32 %v5400, %v5402
        %v5404 = vrot.slane %v5390, %v5403
        %v5405 = vcombine.high %v5397, %v5397
        %v5406 = vcombine.high %v5404, %v5404
        %v5408 = vunpack.c.l.s4 1966171168
        %v5409 = vunpack.c.0.s8 %v5408
        %v5410 = vlaneseq
        %v5411 = vshrl.u32 %v5410, 7
        %v5412 = vsub.s32 %v5409, %v5411
        %v5413 = vrot.slane %v5397, %v5412
        %v5415 = vunpack.c.l.s4 1966171168
        %v5416 = vunpack.c.0.s8 %v5415
        %v5417 = vlaneseq
        %v5418 = vshrl.u32 %v5417, 7
        %v5419 = vsub.s32 %v5416, %v5418
        %v5420 = vrot.slane %v5404, %v5419
        %v5422 = vunpack.c.l.s4 1966171168
        %v5423 = vunpack.c.0.s8 %v5422
        %v5424 = vlaneseq
        %v5425 = vshrl.u32 %v5424, 7
        %v5426 = vsub.s32 %v5423, %v5425
        %v5427 = vrot.slane %v5405, %v5426
        %v5429 = vunpack.c.l.s4 1966171168
        %v5430 = vunpack.c.0.s8 %v5429
        %v5431 = vlaneseq
        %v5432 = vshrl.u32 %v5431, 7
        %v5433 = vsub.s32 %v5430, %v5432
        %v5434 = vrot.slane %v5406, %v5433
        %v5435 = vcombine.high %v5413, %v5413
        %v5436 = vcombine.high %v5420, %v5420
        %v5437 = vcombine.high %v5427, %v5427
        %v5438 = vcombine.high %v5434, %v5434
        %v5439 = vcombine.high %v5151, %v5151
        %v5441 = vunpack.c.l.s4 1966171168
        %v5442 = vunpack.c.0.s8 %v5441
        %v5443 = vlaneseq
        %v5444 = vshrl.u32 %v5443, 7
        %v5445 = vsub.s32 %v5442, %v5444
        %v5446 = vrot.slane %v5151, %v5445
        %v5448 = vunpack.c.l.s4 1966171168
        %v5449 = vunpack.c.0.s8 %v5448
        %v5450 = vlaneseq
        %v5451 = vshrl.u32 %v5450, 7
        %v5452 = vsub.s32 %v5449, %v5451
        %v5453 = vrot.slane %v5439, %v5452
        %v5454 = vcombine.high %v5446, %v5446
        %v5455 = vcombine.high %v5453, %v5453
        %v5457 = vunpack.c.l.s4 1966171168
        %v5458 = vunpack.c.0.s8 %v5457
        %v5459 = vlaneseq
        %v5460 = vshrl.u32 %v5459, 7
        %v5461 = vsub.s32 %v5458, %v5460
        %v5462 = vrot.slane %v5446, %v5461
        %v5464 = vunpack.c.l.s4 1966171168
        %v5465 = vunpack.c.0.s8 %v5464
        %v5466 = vlaneseq
        %v5467 = vshrl.u32 %v5466, 7
        %v5468 = vsub.s32 %v5465, %v5467
        %v5469 = vrot.slane %v5453, %v5468
        %v5471 = vunpack.c.l.s4 1966171168
        %v5472 = vunpack.c.0.s8 %v5471
        %v5473 = vlaneseq
        %v5474 = vshrl.u32 %v5473, 7
        %v5475 = vsub.s32 %v5472, %v5474
        %v5476 = vrot.slane %v5454, %v5475
        %v5478 = vunpack.c.l.s4 1966171168
        %v5479 = vunpack.c.0.s8 %v5478
        %v5480 = vlaneseq
        %v5481 = vshrl.u32 %v5480, 7
        %v5482 = vsub.s32 %v5479, %v5481
        %v5483 = vrot.slane %v5455, %v5482
        %v5484 = vcombine.high %v5462, %v5462
        %v5485 = vcombine.high %v5469, %v5469
        %v5486 = vcombine.high %v5476, %v5476
        %v5487 = vcombine.high %v5483, %v5483
        %v5488 = vcombine.high %v5152, %v5152
        %v5490 = vunpack.c.l.s4 1966171168
        %v5491 = vunpack.c.0.s8 %v5490
        %v5492 = vlaneseq
        %v5493 = vshrl.u32 %v5492, 7
        %v5494 = vsub.s32 %v5491, %v5493
        %v5495 = vrot.slane %v5152, %v5494
        %v5497 = vunpack.c.l.s4 1966171168
        %v5498 = vunpack.c.0.s8 %v5497
        %v5499 = vlaneseq
        %v5500 = vshrl.u32 %v5499, 7
        %v5501 = vsub.s32 %v5498, %v5500
        %v5502 = vrot.slane %v5488, %v5501
        %v5503 = vcombine.high %v5495, %v5495
        %v5504 = vcombine.high %v5502, %v5502
        %v5506 = vunpack.c.l.s4 1966171168
        %v5507 = vunpack.c.0.s8 %v5506
        %v5508 = vlaneseq
        %v5509 = vshrl.u32 %v5508, 7
        %v5510 = vsub.s32 %v5507, %v5509
        %v5511 = vrot.slane %v5495, %v5510
        %v5513 = vunpack.c.l.s4 1966171168
        %v5514 = vunpack.c.0.s8 %v5513
        %v5515 = vlaneseq
        %v5516 = vshrl.u32 %v5515, 7
        %v5517 = vsub.s32 %v5514, %v5516
        %v5518 = vrot.slane %v5502, %v5517
        %v5520 = vunpack.c.l.s4 1966171168
        %v5521 = vunpack.c.0.s8 %v5520
        %v5522 = vlaneseq
        %v5523 = vshrl.u32 %v5522, 7
        %v5524 = vsub.s32 %v5521, %v5523
        %v5525 = vrot.slane %v5503, %v5524
        %v5527 = vunpack.c.l.s4 1966171168
        %v5528 = vunpack.c.0.s8 %v5527
        %v5529 = vlaneseq
        %v5530 = vshrl.u32 %v5529, 7
        %v5531 = vsub.s32 %v5528, %v5530
        %v5532 = vrot.slane %v5504, %v5531
        %v5533 = vcombine.high %v5511, %v5511
        %v5534 = vcombine.high %v5518, %v5518
        %v5535 = vcombine.high %v5525, %v5525
        %v5536 = vcombine.high %v5532, %v5532
        %v5537 = vcombine.high %v5153, %v5153
        %v5539 = vunpack.c.l.s4 1966171168
        %v5540 = vunpack.c.0.s8 %v5539
        %v5541 = vlaneseq
        %v5542 = vshrl.u32 %v5541, 7
        %v5543 = vsub.s32 %v5540, %v5542
        %v5544 = vrot.slane %v5153, %v5543
        %v5546 = vunpack.c.l.s4 1966171168
        %v5547 = vunpack.c.0.s8 %v5546
        %v5548 = vlaneseq
        %v5549 = vshrl.u32 %v5548, 7
        %v5550 = vsub.s32 %v5547, %v5549
        %v5551 = vrot.slane %v5537, %v5550
        %v5552 = vcombine.high %v5544, %v5544
        %v5553 = vcombine.high %v5551, %v5551
        %v5555 = vunpack.c.l.s4 1966171168
        %v5556 = vunpack.c.0.s8 %v5555
        %v5557 = vlaneseq
        %v5558 = vshrl.u32 %v5557, 7
        %v5559 = vsub.s32 %v5556, %v5558
        %v5560 = vrot.slane %v5544, %v5559
        %v5562 = vunpack.c.l.s4 1966171168
        %v5563 = vunpack.c.0.s8 %v5562
        %v5564 = vlaneseq
        %v5565 = vshrl.u32 %v5564, 7
        %v5566 = vsub.s32 %v5563, %v5565
        %v5567 = vrot.slane %v5551, %v5566
        %v5569 = vunpack.c.l.s4 1966171168
        %v5570 = vunpack.c.0.s8 %v5569
        %v5571 = vlaneseq
        %v5572 = vshrl.u32 %v5571, 7
        %v5573 = vsub.s32 %v5570, %v5572
        %v5574 = vrot.slane %v5552, %v5573
        %v5576 = vunpack.c.l.s4 1966171168
        %v5577 = vunpack.c.0.s8 %v5576
        %v5578 = vlaneseq
        %v5579 = vshrl.u32 %v5578, 7
        %v5580 = vsub.s32 %v5577, %v5579
        %v5581 = vrot.slane %v5553, %v5580
        %v5582 = vcombine.high %v5560, %v5560
        %v5583 = vcombine.high %v5567, %v5567
        %v5584 = vcombine.high %v5574, %v5574
        %v5585 = vcombine.high %v5581, %v5581
        %v5586 = vlaneseq
        %v5587 = vshrl.u32 %v5586, 7
        %v5588 = vsub.s32 0, %v5587
        %v5589 = vrot.slane %v5413, %v5588
        %v5590 = vlaneseq
        %v5591 = vshrl.u32 %v5590, 7
        %v5592 = vsub.s32 0, %v5591
        %v5593 = vrot.slane %v5427, %v5592
        %v5594 = vlaneseq
        %v5595 = vshrl.u32 %v5594, 7
        %v5596 = vsub.s32 0, %v5595
        %v5597 = vrot.slane %v5435, %v5596
        %v5598 = vlaneseq
        %v5599 = vshrl.u32 %v5598, 7
        %v5600 = vsub.s32 0, %v5599
        %v5601 = vrot.slane %v5437, %v5600
        %v5602 = vlaneseq
        %v5603 = vshrl.u32 %v5602, 7
        %v5604 = vsub.s32 0, %v5603
        %v5605 = vrot.slane %v5420, %v5604
        %v5606 = vlaneseq
        %v5607 = vshrl.u32 %v5606, 7
        %v5608 = vsub.s32 0, %v5607
        %v5609 = vrot.slane %v5434, %v5608
        %v5610 = vlaneseq
        %v5611 = vshrl.u32 %v5610, 7
        %v5612 = vsub.s32 0, %v5611
        %v5613 = vrot.slane %v5436, %v5612
        %v5614 = vlaneseq
        %v5615 = vshrl.u32 %v5614, 7
        %v5616 = vsub.s32 0, %v5615
        %v5617 = vrot.slane %v5438, %v5616
        %v5618 = vlaneseq
        %v5619 = vshrl.u32 %v5618, 7
        %v5620 = vsub.s32 0, %v5619
        %v5621 = vrot.slane %v5462, %v5620
        %v5622 = vlaneseq
        %v5623 = vshrl.u32 %v5622, 7
        %v5624 = vsub.s32 0, %v5623
        %v5625 = vrot.slane %v5476, %v5624
        %v5626 = vlaneseq
        %v5627 = vshrl.u32 %v5626, 7
        %v5628 = vsub.s32 0, %v5627
        %v5629 = vrot.slane %v5484, %v5628
        %v5630 = vlaneseq
        %v5631 = vshrl.u32 %v5630, 7
        %v5632 = vsub.s32 0, %v5631
        %v5633 = vrot.slane %v5486, %v5632
        %v5634 = vlaneseq
        %v5635 = vshrl.u32 %v5634, 7
        %v5636 = vsub.s32 0, %v5635
        %v5637 = vrot.slane %v5469, %v5636
        %v5638 = vlaneseq
        %v5639 = vshrl.u32 %v5638, 7
        %v5640 = vsub.s32 0, %v5639
        %v5641 = vrot.slane %v5483, %v5640
        %v5642 = vlaneseq
        %v5643 = vshrl.u32 %v5642, 7
        %v5644 = vsub.s32 0, %v5643
        %v5645 = vrot.slane %v5485, %v5644
        %v5646 = vlaneseq
        %v5647 = vshrl.u32 %v5646, 7
        %v5648 = vsub.s32 0, %v5647
        %v5649 = vrot.slane %v5487, %v5648
        %v5650 = vlaneseq
        %v5651 = vshrl.u32 %v5650, 7
        %v5652 = vsub.s32 0, %v5651
        %v5653 = vrot.slane %v5511, %v5652
        %v5654 = vlaneseq
        %v5655 = vshrl.u32 %v5654, 7
        %v5656 = vsub.s32 0, %v5655
        %v5657 = vrot.slane %v5525, %v5656
        %v5658 = vlaneseq
        %v5659 = vshrl.u32 %v5658, 7
        %v5660 = vsub.s32 0, %v5659
        %v5661 = vrot.slane %v5533, %v5660
        %v5662 = vlaneseq
        %v5663 = vshrl.u32 %v5662, 7
        %v5664 = vsub.s32 0, %v5663
        %v5665 = vrot.slane %v5535, %v5664
        %v5666 = vlaneseq
        %v5667 = vshrl.u32 %v5666, 7
        %v5668 = vsub.s32 0, %v5667
        %v5669 = vrot.slane %v5518, %v5668
        %v5670 = vlaneseq
        %v5671 = vshrl.u32 %v5670, 7
        %v5672 = vsub.s32 0, %v5671
        %v5673 = vrot.slane %v5532, %v5672
        %v5674 = vlaneseq
        %v5675 = vshrl.u32 %v5674, 7
        %v5676 = vsub.s32 0, %v5675
        %v5677 = vrot.slane %v5534, %v5676
        %v5678 = vlaneseq
        %v5679 = vshrl.u32 %v5678, 7
        %v5680 = vsub.s32 0, %v5679
        %v5681 = vrot.slane %v5536, %v5680
        %v5682 = vlaneseq
        %v5683 = vshrl.u32 %v5682, 7
        %v5684 = vsub.s32 0, %v5683
        %v5685 = vrot.slane %v5560, %v5684
        %v5686 = vlaneseq
        %v5687 = vshrl.u32 %v5686, 7
        %v5688 = vsub.s32 0, %v5687
        %v5689 = vrot.slane %v5574, %v5688
        %v5690 = vlaneseq
        %v5691 = vshrl.u32 %v5690, 7
        %v5692 = vsub.s32 0, %v5691
        %v5693 = vrot.slane %v5582, %v5692
        %v5694 = vlaneseq
        %v5695 = vshrl.u32 %v5694, 7
        %v5696 = vsub.s32 0, %v5695
        %v5697 = vrot.slane %v5584, %v5696
        %v5698 = vlaneseq
        %v5699 = vshrl.u32 %v5698, 7
        %v5700 = vsub.s32 0, %v5699
        %v5701 = vrot.slane %v5567, %v5700
        %v5702 = vlaneseq
        %v5703 = vshrl.u32 %v5702, 7
        %v5704 = vsub.s32 0, %v5703
        %v5705 = vrot.slane %v5581, %v5704
        %v5706 = vlaneseq
        %v5707 = vshrl.u32 %v5706, 7
        %v5708 = vsub.s32 0, %v5707
        %v5709 = vrot.slane %v5583, %v5708
        %v5710 = vlaneseq
        %v5711 = vshrl.u32 %v5710, 7
        %v5712 = vsub.s32 0, %v5711
        %v5713 = vrot.slane %v5585, %v5712
        %v5746 = vsel %vm781, %v5181, %v5589
        %v5747 = vsel %vm781, %v5195, %v5593
        %v5748 = vsel %vm781, %v5203, %v5597
        %v5749 = vsel %vm781, %v5205, %v5601
        %v5750 = vsel %vm781, %v5188, %v5605
        %v5751 = vsel %vm781, %v5202, %v5609
        %v5752 = vsel %vm781, %v5204, %v5613
        %v5753 = vsel %vm781, %v5206, %v5617
        %v5754 = vsel %vm781, %v5230, %v5621
        %v5755 = vsel %vm781, %v5244, %v5625
        %v5756 = vsel %vm781, %v5252, %v5629
        %v5757 = vsel %vm781, %v5254, %v5633
        %v5758 = vsel %vm781, %v5237, %v5637
        %v5759 = vsel %vm781, %v5251, %v5641
        %v5760 = vsel %vm781, %v5253, %v5645
        %v5761 = vsel %vm781, %v5255, %v5649
        %v5762 = vsel %vm781, %v5279, %v5653
        %v5763 = vsel %vm781, %v5293, %v5657
        %v5764 = vsel %vm781, %v5301, %v5661
        %v5765 = vsel %vm781, %v5303, %v5665
        %v5766 = vsel %vm781, %v5286, %v5669
        %v5767 = vsel %vm781, %v5300, %v5673
        %v5768 = vsel %vm781, %v5302, %v5677
        %v5769 = vsel %vm781, %v5304, %v5681
        %v5770 = vsel %vm781, %v5328, %v5685
        %v5771 = vsel %vm781, %v5342, %v5689
        %v5772 = vsel %vm781, %v5350, %v5693
        %v5773 = vsel %vm781, %v5352, %v5697
        %v5774 = vsel %vm781, %v5335, %v5701
        %v5775 = vsel %vm781, %v5349, %v5705
        %v5776 = vsel %vm781, %v5351, %v5709
        %v5777 = vsel %vm781, %v5353, %v5713
        %v5810 = vcombine.low %v5746, %v5747
        %v5811 = vcombine.low %v5748, %v5749
        %v5813 = vunpack.c.l.s4 1983009808
        %v5814 = vunpack.c.0.s8 %v5813
        %v5815 = vlaneseq
        %v5816 = vshrl.u32 %v5815, 7
        %v5817 = vsub.s32 %v5814, %v5816
        %v5818 = vrot.slane %v5810, %v5817
        %v5820 = vunpack.c.l.s4 1983009808
        %v5821 = vunpack.c.0.s8 %v5820
        %v5822 = vlaneseq
        %v5823 = vshrl.u32 %v5822, 7
        %v5824 = vsub.s32 %v5821, %v5823
        %v5825 = vrot.slane %v5811, %v5824
        %v5826 = vcombine.low %v5818, %v5825
        %v5827 = vcombine.low %v5750, %v5751
        %v5828 = vcombine.low %v5752, %v5753
        %v5830 = vunpack.c.l.s4 1983009808
        %v5831 = vunpack.c.0.s8 %v5830
        %v5832 = vlaneseq
        %v5833 = vshrl.u32 %v5832, 7
        %v5834 = vsub.s32 %v5831, %v5833
        %v5835 = vrot.slane %v5827, %v5834
        %v5837 = vunpack.c.l.s4 1983009808
        %v5838 = vunpack.c.0.s8 %v5837
        %v5839 = vlaneseq
        %v5840 = vshrl.u32 %v5839, 7
        %v5841 = vsub.s32 %v5838, %v5840
        %v5842 = vrot.slane %v5828, %v5841
        %v5843 = vcombine.low %v5835, %v5842
        %v5844 = vcombine.low %v5754, %v5755
        %v5845 = vcombine.low %v5756, %v5757
        %v5847 = vunpack.c.l.s4 1983009808
        %v5848 = vunpack.c.0.s8 %v5847
        %v5849 = vlaneseq
        %v5850 = vshrl.u32 %v5849, 7
        %v5851 = vsub.s32 %v5848, %v5850
        %v5852 = vrot.slane %v5844, %v5851
        %v5854 = vunpack.c.l.s4 1983009808
        %v5855 = vunpack.c.0.s8 %v5854
        %v5856 = vlaneseq
        %v5857 = vshrl.u32 %v5856, 7
        %v5858 = vsub.s32 %v5855, %v5857
        %v5859 = vrot.slane %v5845, %v5858
        %v5860 = vcombine.low %v5852, %v5859
        %v5861 = vcombine.low %v5758, %v5759
        %v5862 = vcombine.low %v5760, %v5761
        %v5864 = vunpack.c.l.s4 1983009808
        %v5865 = vunpack.c.0.s8 %v5864
        %v5866 = vlaneseq
        %v5867 = vshrl.u32 %v5866, 7
        %v5868 = vsub.s32 %v5865, %v5867
        %v5869 = vrot.slane %v5861, %v5868
        %v5871 = vunpack.c.l.s4 1983009808
        %v5872 = vunpack.c.0.s8 %v5871
        %v5873 = vlaneseq
        %v5874 = vshrl.u32 %v5873, 7
        %v5875 = vsub.s32 %v5872, %v5874
        %v5876 = vrot.slane %v5862, %v5875
        %v5877 = vcombine.low %v5869, %v5876
        %v5878 = vcombine.low %v5762, %v5763
        %v5879 = vcombine.low %v5764, %v5765
        %v5881 = vunpack.c.l.s4 1983009808
        %v5882 = vunpack.c.0.s8 %v5881
        %v5883 = vlaneseq
        %v5884 = vshrl.u32 %v5883, 7
        %v5885 = vsub.s32 %v5882, %v5884
        %v5886 = vrot.slane %v5878, %v5885
        %v5888 = vunpack.c.l.s4 1983009808
        %v5889 = vunpack.c.0.s8 %v5888
        %v5890 = vlaneseq
        %v5891 = vshrl.u32 %v5890, 7
        %v5892 = vsub.s32 %v5889, %v5891
        %v5893 = vrot.slane %v5879, %v5892
        %v5894 = vcombine.low %v5886, %v5893
        %v5895 = vcombine.low %v5766, %v5767
        %v5896 = vcombine.low %v5768, %v5769
        %v5898 = vunpack.c.l.s4 1983009808
        %v5899 = vunpack.c.0.s8 %v5898
        %v5900 = vlaneseq
        %v5901 = vshrl.u32 %v5900, 7
        %v5902 = vsub.s32 %v5899, %v5901
        %v5903 = vrot.slane %v5895, %v5902
        %v5905 = vunpack.c.l.s4 1983009808
        %v5906 = vunpack.c.0.s8 %v5905
        %v5907 = vlaneseq
        %v5908 = vshrl.u32 %v5907, 7
        %v5909 = vsub.s32 %v5906, %v5908
        %v5910 = vrot.slane %v5896, %v5909
        %v5911 = vcombine.low %v5903, %v5910
        %v5912 = vcombine.low %v5770, %v5771
        %v5913 = vcombine.low %v5772, %v5773
        %v5915 = vunpack.c.l.s4 1983009808
        %v5916 = vunpack.c.0.s8 %v5915
        %v5917 = vlaneseq
        %v5918 = vshrl.u32 %v5917, 7
        %v5919 = vsub.s32 %v5916, %v5918
        %v5920 = vrot.slane %v5912, %v5919
        %v5922 = vunpack.c.l.s4 1983009808
        %v5923 = vunpack.c.0.s8 %v5922
        %v5924 = vlaneseq
        %v5925 = vshrl.u32 %v5924, 7
        %v5926 = vsub.s32 %v5923, %v5925
        %v5927 = vrot.slane %v5913, %v5926
        %v5928 = vcombine.low %v5920, %v5927
        %v5929 = vcombine.low %v5774, %v5775
        %v5930 = vcombine.low %v5776, %v5777
        %v5932 = vunpack.c.l.s4 1983009808
        %v5933 = vunpack.c.0.s8 %v5932
        %v5934 = vlaneseq
        %v5935 = vshrl.u32 %v5934, 7
        %v5936 = vsub.s32 %v5933, %v5935
        %v5937 = vrot.slane %v5929, %v5936
        %v5939 = vunpack.c.l.s4 1983009808
        %v5940 = vunpack.c.0.s8 %v5939
        %v5941 = vlaneseq
        %v5942 = vshrl.u32 %v5941, 7
        %v5943 = vsub.s32 %v5940, %v5942
        %v5944 = vrot.slane %v5930, %v5943
        %v5945 = vcombine.low %v5937, %v5944
        %5954 = vxpose.xlu0.b32.start [1/16] %v5826, 128
        %5955 = vxpose.xlu0.b32.cont [2/16] %v5843, 128
        %5956 = vxpose.xlu0.b32.cont [3/16] %v5860, 128
        %5957 = vxpose.xlu0.b32.cont [4/16] %v5877, 128
        %5958 = vxpose.xlu0.b32.cont [5/16] %v5894, 128
        %5959 = vxpose.xlu0.b32.cont [6/16] %v5911, 128
        %5960 = vxpose.xlu0.b32.cont [7/16] %v5928, 128
        %5961 = vxpose.xlu0.b32.cont [8/16] %v5945, 128
        %5962 = vxpose.xlu0.b32.cont [9/16] 0.0, 128
        %5963 = vxpose.xlu0.b32.cont [10/16] 0.0, 128
        %5964 = vxpose.xlu0.b32.cont [11/16] 0.0, 128
        %5965 = vxpose.xlu0.b32.cont [12/16] 0.0, 128
        %5966 = vxpose.xlu0.b32.cont [13/16] 0.0, 128
        %5967 = vxpose.xlu0.b32.cont [14/16] 0.0, 128
        %5968 = vxpose.xlu0.b32.cont [15/16] 0.0, 128
        %5969 = vxpose.xlu0.b32.end [16/16] 0.0, 128
        %v5970 = vpop.trf.xlu0
        %v5971 = vpop.trf.xlu0
        %v5972 = vpop.trf.xlu0
        %v5973 = vpop.trf.xlu0
        %v5974 = vpop.trf.xlu0
        %v5975 = vpop.trf.xlu0
        %v5976 = vpop.trf.xlu0
        %v5977 = vpop.trf.xlu0
        %v5978 = vpop.trf.xlu0
        %v5979 = vpop.trf.xlu0
        %v5980 = vpop.trf.xlu0
        %v5981 = vpop.trf.xlu0
        %v5982 = vpop.trf.xlu0
        %v5983 = vpop.trf.xlu0
        %v5984 = vpop.trf.xlu0
        %v5985 = vpop.trf.xlu0
        %s5986 = scalar_lea.vmem %s159, 160 [#allocation2]
        %v5987 = vld [vmem:[%s5986] sm:$0xff]
        %v5988 = vld [vmem:[%s5986 + $0x8] sm:$0xff]
        %v5989 = vld [vmem:[%s5986 + $0x10] sm:$0xff]
        %v5990 = vld [vmem:[%s5986 + $0x18] sm:$0xff]
        %s5991 = scalar_lea.vmem %s159, 224 [#allocation2]
        %v5992 = vld [vmem:[%s5991] sm:$0xff]
        %v5993 = vld [vmem:[%s5991 + $0x8] sm:$0xff]
        %v5994 = vld [vmem:[%s5991 + $0x10] sm:$0xff]
        %v5995 = vld [vmem:[%s5991 + $0x18] sm:$0xff]
        %v6000 = vcombine.high %v5987, %v5987
        %v6002 = vunpack.c.l.s4 1966171168
        %v6003 = vunpack.c.0.s8 %v6002
        %v6004 = vlaneseq
        %v6005 = vshrl.u32 %v6004, 7
        %v6006 = vsub.s32 %v6003, %v6005
        %v6007 = vrot.slane %v5987, %v6006
        %v6009 = vunpack.c.l.s4 1966171168
        %v6010 = vunpack.c.0.s8 %v6009
        %v6011 = vlaneseq
        %v6012 = vshrl.u32 %v6011, 7
        %v6013 = vsub.s32 %v6010, %v6012
        %v6014 = vrot.slane %v6000, %v6013
        %v6015 = vcombine.high %v6007, %v6007
        %v6016 = vcombine.high %v6014, %v6014
        %v6018 = vunpack.c.l.s4 1966171168
        %v6019 = vunpack.c.0.s8 %v6018
        %v6020 = vlaneseq
        %v6021 = vshrl.u32 %v6020, 7
        %v6022 = vsub.s32 %v6019, %v6021
        %v6023 = vrot.slane %v6007, %v6022
        %v6025 = vunpack.c.l.s4 1966171168
        %v6026 = vunpack.c.0.s8 %v6025
        %v6027 = vlaneseq
        %v6028 = vshrl.u32 %v6027, 7
        %v6029 = vsub.s32 %v6026, %v6028
        %v6030 = vrot.slane %v6014, %v6029
        %v6032 = vunpack.c.l.s4 1966171168
        %v6033 = vunpack.c.0.s8 %v6032
        %v6034 = vlaneseq
        %v6035 = vshrl.u32 %v6034, 7
        %v6036 = vsub.s32 %v6033, %v6035
        %v6037 = vrot.slane %v6015, %v6036
        %v6039 = vunpack.c.l.s4 1966171168
        %v6040 = vunpack.c.0.s8 %v6039
        %v6041 = vlaneseq
        %v6042 = vshrl.u32 %v6041, 7
        %v6043 = vsub.s32 %v6040, %v6042
        %v6044 = vrot.slane %v6016, %v6043
        %v6045 = vcombine.high %v6023, %v6023
        %v6046 = vcombine.high %v6030, %v6030
        %v6047 = vcombine.high %v6037, %v6037
        %v6048 = vcombine.high %v6044, %v6044
        %v6049 = vcombine.high %v5988, %v5988
        %v6051 = vunpack.c.l.s4 1966171168
        %v6052 = vunpack.c.0.s8 %v6051
        %v6053 = vlaneseq
        %v6054 = vshrl.u32 %v6053, 7
        %v6055 = vsub.s32 %v6052, %v6054
        %v6056 = vrot.slane %v5988, %v6055
        %v6058 = vunpack.c.l.s4 1966171168
        %v6059 = vunpack.c.0.s8 %v6058
        %v6060 = vlaneseq
        %v6061 = vshrl.u32 %v6060, 7
        %v6062 = vsub.s32 %v6059, %v6061
        %v6063 = vrot.slane %v6049, %v6062
        %v6064 = vcombine.high %v6056, %v6056
        %v6065 = vcombine.high %v6063, %v6063
        %v6067 = vunpack.c.l.s4 1966171168
        %v6068 = vunpack.c.0.s8 %v6067
        %v6069 = vlaneseq
        %v6070 = vshrl.u32 %v6069, 7
        %v6071 = vsub.s32 %v6068, %v6070
        %v6072 = vrot.slane %v6056, %v6071
        %v6074 = vunpack.c.l.s4 1966171168
        %v6075 = vunpack.c.0.s8 %v6074
        %v6076 = vlaneseq
        %v6077 = vshrl.u32 %v6076, 7
        %v6078 = vsub.s32 %v6075, %v6077
        %v6079 = vrot.slane %v6063, %v6078
        %v6081 = vunpack.c.l.s4 1966171168
        %v6082 = vunpack.c.0.s8 %v6081
        %v6083 = vlaneseq
        %v6084 = vshrl.u32 %v6083, 7
        %v6085 = vsub.s32 %v6082, %v6084
        %v6086 = vrot.slane %v6064, %v6085
        %v6088 = vunpack.c.l.s4 1966171168
        %v6089 = vunpack.c.0.s8 %v6088
        %v6090 = vlaneseq
        %v6091 = vshrl.u32 %v6090, 7
        %v6092 = vsub.s32 %v6089, %v6091
        %v6093 = vrot.slane %v6065, %v6092
        %v6094 = vcombine.high %v6072, %v6072
        %v6095 = vcombine.high %v6079, %v6079
        %v6096 = vcombine.high %v6086, %v6086
        %v6097 = vcombine.high %v6093, %v6093
        %v6098 = vcombine.high %v5989, %v5989
        %v6100 = vunpack.c.l.s4 1966171168
        %v6101 = vunpack.c.0.s8 %v6100
        %v6102 = vlaneseq
        %v6103 = vshrl.u32 %v6102, 7
        %v6104 = vsub.s32 %v6101, %v6103
        %v6105 = vrot.slane %v5989, %v6104
        %v6107 = vunpack.c.l.s4 1966171168
        %v6108 = vunpack.c.0.s8 %v6107
        %v6109 = vlaneseq
        %v6110 = vshrl.u32 %v6109, 7
        %v6111 = vsub.s32 %v6108, %v6110
        %v6112 = vrot.slane %v6098, %v6111
        %v6113 = vcombine.high %v6105, %v6105
        %v6114 = vcombine.high %v6112, %v6112
        %v6116 = vunpack.c.l.s4 1966171168
        %v6117 = vunpack.c.0.s8 %v6116
        %v6118 = vlaneseq
        %v6119 = vshrl.u32 %v6118, 7
        %v6120 = vsub.s32 %v6117, %v6119
        %v6121 = vrot.slane %v6105, %v6120
        %v6123 = vunpack.c.l.s4 1966171168
        %v6124 = vunpack.c.0.s8 %v6123
        %v6125 = vlaneseq
        %v6126 = vshrl.u32 %v6125, 7
        %v6127 = vsub.s32 %v6124, %v6126
        %v6128 = vrot.slane %v6112, %v6127
        %v6130 = vunpack.c.l.s4 1966171168
        %v6131 = vunpack.c.0.s8 %v6130
        %v6132 = vlaneseq
        %v6133 = vshrl.u32 %v6132, 7
        %v6134 = vsub.s32 %v6131, %v6133
        %v6135 = vrot.slane %v6113, %v6134
        %v6137 = vunpack.c.l.s4 1966171168
        %v6138 = vunpack.c.0.s8 %v6137
        %v6139 = vlaneseq
        %v6140 = vshrl.u32 %v6139, 7
        %v6141 = vsub.s32 %v6138, %v6140
        %v6142 = vrot.slane %v6114, %v6141
        %v6143 = vcombine.high %v6121, %v6121
        %v6144 = vcombine.high %v6128, %v6128
        %v6145 = vcombine.high %v6135, %v6135
        %v6146 = vcombine.high %v6142, %v6142
        %v6147 = vcombine.high %v5990, %v5990
        %v6149 = vunpack.c.l.s4 1966171168
        %v6150 = vunpack.c.0.s8 %v6149
        %v6151 = vlaneseq
        %v6152 = vshrl.u32 %v6151, 7
        %v6153 = vsub.s32 %v6150, %v6152
        %v6154 = vrot.slane %v5990, %v6153
        %v6156 = vunpack.c.l.s4 1966171168
        %v6157 = vunpack.c.0.s8 %v6156
        %v6158 = vlaneseq
        %v6159 = vshrl.u32 %v6158, 7
        %v6160 = vsub.s32 %v6157, %v6159
        %v6161 = vrot.slane %v6147, %v6160
        %v6162 = vcombine.high %v6154, %v6154
        %v6163 = vcombine.high %v6161, %v6161
        %v6165 = vunpack.c.l.s4 1966171168
        %v6166 = vunpack.c.0.s8 %v6165
        %v6167 = vlaneseq
        %v6168 = vshrl.u32 %v6167, 7
        %v6169 = vsub.s32 %v6166, %v6168
        %v6170 = vrot.slane %v6154, %v6169
        %v6172 = vunpack.c.l.s4 1966171168
        %v6173 = vunpack.c.0.s8 %v6172
        %v6174 = vlaneseq
        %v6175 = vshrl.u32 %v6174, 7
        %v6176 = vsub.s32 %v6173, %v6175
        %v6177 = vrot.slane %v6161, %v6176
        %v6179 = vunpack.c.l.s4 1966171168
        %v6180 = vunpack.c.0.s8 %v6179
        %v6181 = vlaneseq
        %v6182 = vshrl.u32 %v6181, 7
        %v6183 = vsub.s32 %v6180, %v6182
        %v6184 = vrot.slane %v6162, %v6183
        %v6186 = vunpack.c.l.s4 1966171168
        %v6187 = vunpack.c.0.s8 %v6186
        %v6188 = vlaneseq
        %v6189 = vshrl.u32 %v6188, 7
        %v6190 = vsub.s32 %v6187, %v6189
        %v6191 = vrot.slane %v6163, %v6190
        %v6192 = vcombine.high %v6170, %v6170
        %v6193 = vcombine.high %v6177, %v6177
        %v6194 = vcombine.high %v6184, %v6184
        %v6195 = vcombine.high %v6191, %v6191
        %v6232 = vcombine.high %v5992, %v5992
        %v6234 = vunpack.c.l.s4 1966171168
        %v6235 = vunpack.c.0.s8 %v6234
        %v6236 = vlaneseq
        %v6237 = vshrl.u32 %v6236, 7
        %v6238 = vsub.s32 %v6235, %v6237
        %v6239 = vrot.slane %v5992, %v6238
        %v6241 = vunpack.c.l.s4 1966171168
        %v6242 = vunpack.c.0.s8 %v6241
        %v6243 = vlaneseq
        %v6244 = vshrl.u32 %v6243, 7
        %v6245 = vsub.s32 %v6242, %v6244
        %v6246 = vrot.slane %v6232, %v6245
        %v6247 = vcombine.high %v6239, %v6239
        %v6248 = vcombine.high %v6246, %v6246
        %v6250 = vunpack.c.l.s4 1966171168
        %v6251 = vunpack.c.0.s8 %v6250
        %v6252 = vlaneseq
        %v6253 = vshrl.u32 %v6252, 7
        %v6254 = vsub.s32 %v6251, %v6253
        %v6255 = vrot.slane %v6239, %v6254
        %v6257 = vunpack.c.l.s4 1966171168
        %v6258 = vunpack.c.0.s8 %v6257
        %v6259 = vlaneseq
        %v6260 = vshrl.u32 %v6259, 7
        %v6261 = vsub.s32 %v6258, %v6260
        %v6262 = vrot.slane %v6246, %v6261
        %v6264 = vunpack.c.l.s4 1966171168
        %v6265 = vunpack.c.0.s8 %v6264
        %v6266 = vlaneseq
        %v6267 = vshrl.u32 %v6266, 7
        %v6268 = vsub.s32 %v6265, %v6267
        %v6269 = vrot.slane %v6247, %v6268
        %v6271 = vunpack.c.l.s4 1966171168
        %v6272 = vunpack.c.0.s8 %v6271
        %v6273 = vlaneseq
        %v6274 = vshrl.u32 %v6273, 7
        %v6275 = vsub.s32 %v6272, %v6274
        %v6276 = vrot.slane %v6248, %v6275
        %v6277 = vcombine.high %v6255, %v6255
        %v6278 = vcombine.high %v6262, %v6262
        %v6279 = vcombine.high %v6269, %v6269
        %v6280 = vcombine.high %v6276, %v6276
        %v6281 = vcombine.high %v5993, %v5993
        %v6283 = vunpack.c.l.s4 1966171168
        %v6284 = vunpack.c.0.s8 %v6283
        %v6285 = vlaneseq
        %v6286 = vshrl.u32 %v6285, 7
        %v6287 = vsub.s32 %v6284, %v6286
        %v6288 = vrot.slane %v5993, %v6287
        %v6290 = vunpack.c.l.s4 1966171168
        %v6291 = vunpack.c.0.s8 %v6290
        %v6292 = vlaneseq
        %v6293 = vshrl.u32 %v6292, 7
        %v6294 = vsub.s32 %v6291, %v6293
        %v6295 = vrot.slane %v6281, %v6294
        %v6296 = vcombine.high %v6288, %v6288
        %v6297 = vcombine.high %v6295, %v6295
        %v6299 = vunpack.c.l.s4 1966171168
        %v6300 = vunpack.c.0.s8 %v6299
        %v6301 = vlaneseq
        %v6302 = vshrl.u32 %v6301, 7
        %v6303 = vsub.s32 %v6300, %v6302
        %v6304 = vrot.slane %v6288, %v6303
        %v6306 = vunpack.c.l.s4 1966171168
        %v6307 = vunpack.c.0.s8 %v6306
        %v6308 = vlaneseq
        %v6309 = vshrl.u32 %v6308, 7
        %v6310 = vsub.s32 %v6307, %v6309
        %v6311 = vrot.slane %v6295, %v6310
        %v6313 = vunpack.c.l.s4 1966171168
        %v6314 = vunpack.c.0.s8 %v6313
        %v6315 = vlaneseq
        %v6316 = vshrl.u32 %v6315, 7
        %v6317 = vsub.s32 %v6314, %v6316
        %v6318 = vrot.slane %v6296, %v6317
        %v6320 = vunpack.c.l.s4 1966171168
        %v6321 = vunpack.c.0.s8 %v6320
        %v6322 = vlaneseq
        %v6323 = vshrl.u32 %v6322, 7
        %v6324 = vsub.s32 %v6321, %v6323
        %v6325 = vrot.slane %v6297, %v6324
        %v6326 = vcombine.high %v6304, %v6304
        %v6327 = vcombine.high %v6311, %v6311
        %v6328 = vcombine.high %v6318, %v6318
        %v6329 = vcombine.high %v6325, %v6325
        %v6330 = vcombine.high %v5994, %v5994
        %v6332 = vunpack.c.l.s4 1966171168
        %v6333 = vunpack.c.0.s8 %v6332
        %v6334 = vlaneseq
        %v6335 = vshrl.u32 %v6334, 7
        %v6336 = vsub.s32 %v6333, %v6335
        %v6337 = vrot.slane %v5994, %v6336
        %v6339 = vunpack.c.l.s4 1966171168
        %v6340 = vunpack.c.0.s8 %v6339
        %v6341 = vlaneseq
        %v6342 = vshrl.u32 %v6341, 7
        %v6343 = vsub.s32 %v6340, %v6342
        %v6344 = vrot.slane %v6330, %v6343
        %v6345 = vcombine.high %v6337, %v6337
        %v6346 = vcombine.high %v6344, %v6344
        %v6348 = vunpack.c.l.s4 1966171168
        %v6349 = vunpack.c.0.s8 %v6348
        %v6350 = vlaneseq
        %v6351 = vshrl.u32 %v6350, 7
        %v6352 = vsub.s32 %v6349, %v6351
        %v6353 = vrot.slane %v6337, %v6352
        %v6355 = vunpack.c.l.s4 1966171168
        %v6356 = vunpack.c.0.s8 %v6355
        %v6357 = vlaneseq
        %v6358 = vshrl.u32 %v6357, 7
        %v6359 = vsub.s32 %v6356, %v6358
        %v6360 = vrot.slane %v6344, %v6359
        %v6362 = vunpack.c.l.s4 1966171168
        %v6363 = vunpack.c.0.s8 %v6362
        %v6364 = vlaneseq
        %v6365 = vshrl.u32 %v6364, 7
        %v6366 = vsub.s32 %v6363, %v6365
        %v6367 = vrot.slane %v6345, %v6366
        %v6369 = vunpack.c.l.s4 1966171168
        %v6370 = vunpack.c.0.s8 %v6369
        %v6371 = vlaneseq
        %v6372 = vshrl.u32 %v6371, 7
        %v6373 = vsub.s32 %v6370, %v6372
        %v6374 = vrot.slane %v6346, %v6373
        %v6375 = vcombine.high %v6353, %v6353
        %v6376 = vcombine.high %v6360, %v6360
        %v6377 = vcombine.high %v6367, %v6367
        %v6378 = vcombine.high %v6374, %v6374
        %v6379 = vcombine.high %v5995, %v5995
        %v6381 = vunpack.c.l.s4 1966171168
        %v6382 = vunpack.c.0.s8 %v6381
        %v6383 = vlaneseq
        %v6384 = vshrl.u32 %v6383, 7
        %v6385 = vsub.s32 %v6382, %v6384
        %v6386 = vrot.slane %v5995, %v6385
        %v6388 = vunpack.c.l.s4 1966171168
        %v6389 = vunpack.c.0.s8 %v6388
        %v6390 = vlaneseq
        %v6391 = vshrl.u32 %v6390, 7
        %v6392 = vsub.s32 %v6389, %v6391
        %v6393 = vrot.slane %v6379, %v6392
        %v6394 = vcombine.high %v6386, %v6386
        %v6395 = vcombine.high %v6393, %v6393
        %v6397 = vunpack.c.l.s4 1966171168
        %v6398 = vunpack.c.0.s8 %v6397
        %v6399 = vlaneseq
        %v6400 = vshrl.u32 %v6399, 7
        %v6401 = vsub.s32 %v6398, %v6400
        %v6402 = vrot.slane %v6386, %v6401
        %v6404 = vunpack.c.l.s4 1966171168
        %v6405 = vunpack.c.0.s8 %v6404
        %v6406 = vlaneseq
        %v6407 = vshrl.u32 %v6406, 7
        %v6408 = vsub.s32 %v6405, %v6407
        %v6409 = vrot.slane %v6393, %v6408
        %v6411 = vunpack.c.l.s4 1966171168
        %v6412 = vunpack.c.0.s8 %v6411
        %v6413 = vlaneseq
        %v6414 = vshrl.u32 %v6413, 7
        %v6415 = vsub.s32 %v6412, %v6414
        %v6416 = vrot.slane %v6394, %v6415
        %v6418 = vunpack.c.l.s4 1966171168
        %v6419 = vunpack.c.0.s8 %v6418
        %v6420 = vlaneseq
        %v6421 = vshrl.u32 %v6420, 7
        %v6422 = vsub.s32 %v6419, %v6421
        %v6423 = vrot.slane %v6395, %v6422
        %v6424 = vcombine.high %v6402, %v6402
        %v6425 = vcombine.high %v6409, %v6409
        %v6426 = vcombine.high %v6416, %v6416
        %v6427 = vcombine.high %v6423, %v6423
        %v6428 = vlaneseq
        %v6429 = vshrl.u32 %v6428, 7
        %v6430 = vsub.s32 0, %v6429
        %v6431 = vrot.slane %v6255, %v6430
        %v6432 = vlaneseq
        %v6433 = vshrl.u32 %v6432, 7
        %v6434 = vsub.s32 0, %v6433
        %v6435 = vrot.slane %v6269, %v6434
        %v6436 = vlaneseq
        %v6437 = vshrl.u32 %v6436, 7
        %v6438 = vsub.s32 0, %v6437
        %v6439 = vrot.slane %v6277, %v6438
        %v6440 = vlaneseq
        %v6441 = vshrl.u32 %v6440, 7
        %v6442 = vsub.s32 0, %v6441
        %v6443 = vrot.slane %v6279, %v6442
        %v6444 = vlaneseq
        %v6445 = vshrl.u32 %v6444, 7
        %v6446 = vsub.s32 0, %v6445
        %v6447 = vrot.slane %v6262, %v6446
        %v6448 = vlaneseq
        %v6449 = vshrl.u32 %v6448, 7
        %v6450 = vsub.s32 0, %v6449
        %v6451 = vrot.slane %v6276, %v6450
        %v6452 = vlaneseq
        %v6453 = vshrl.u32 %v6452, 7
        %v6454 = vsub.s32 0, %v6453
        %v6455 = vrot.slane %v6278, %v6454
        %v6456 = vlaneseq
        %v6457 = vshrl.u32 %v6456, 7
        %v6458 = vsub.s32 0, %v6457
        %v6459 = vrot.slane %v6280, %v6458
        %v6460 = vlaneseq
        %v6461 = vshrl.u32 %v6460, 7
        %v6462 = vsub.s32 0, %v6461
        %v6463 = vrot.slane %v6304, %v6462
        %v6464 = vlaneseq
        %v6465 = vshrl.u32 %v6464, 7
        %v6466 = vsub.s32 0, %v6465
        %v6467 = vrot.slane %v6318, %v6466
        %v6468 = vlaneseq
        %v6469 = vshrl.u32 %v6468, 7
        %v6470 = vsub.s32 0, %v6469
        %v6471 = vrot.slane %v6326, %v6470
        %v6472 = vlaneseq
        %v6473 = vshrl.u32 %v6472, 7
        %v6474 = vsub.s32 0, %v6473
        %v6475 = vrot.slane %v6328, %v6474
        %v6476 = vlaneseq
        %v6477 = vshrl.u32 %v6476, 7
        %v6478 = vsub.s32 0, %v6477
        %v6479 = vrot.slane %v6311, %v6478
        %v6480 = vlaneseq
        %v6481 = vshrl.u32 %v6480, 7
        %v6482 = vsub.s32 0, %v6481
        %v6483 = vrot.slane %v6325, %v6482
        %v6484 = vlaneseq
        %v6485 = vshrl.u32 %v6484, 7
        %v6486 = vsub.s32 0, %v6485
        %v6487 = vrot.slane %v6327, %v6486
        %v6488 = vlaneseq
        %v6489 = vshrl.u32 %v6488, 7
        %v6490 = vsub.s32 0, %v6489
        %v6491 = vrot.slane %v6329, %v6490
        %v6492 = vlaneseq
        %v6493 = vshrl.u32 %v6492, 7
        %v6494 = vsub.s32 0, %v6493
        %v6495 = vrot.slane %v6353, %v6494
        %v6496 = vlaneseq
        %v6497 = vshrl.u32 %v6496, 7
        %v6498 = vsub.s32 0, %v6497
        %v6499 = vrot.slane %v6367, %v6498
        %v6500 = vlaneseq
        %v6501 = vshrl.u32 %v6500, 7
        %v6502 = vsub.s32 0, %v6501
        %v6503 = vrot.slane %v6375, %v6502
        %v6504 = vlaneseq
        %v6505 = vshrl.u32 %v6504, 7
        %v6506 = vsub.s32 0, %v6505
        %v6507 = vrot.slane %v6377, %v6506
        %v6508 = vlaneseq
        %v6509 = vshrl.u32 %v6508, 7
        %v6510 = vsub.s32 0, %v6509
        %v6511 = vrot.slane %v6360, %v6510
        %v6512 = vlaneseq
        %v6513 = vshrl.u32 %v6512, 7
        %v6514 = vsub.s32 0, %v6513
        %v6515 = vrot.slane %v6374, %v6514
        %v6516 = vlaneseq
        %v6517 = vshrl.u32 %v6516, 7
        %v6518 = vsub.s32 0, %v6517
        %v6519 = vrot.slane %v6376, %v6518
        %v6520 = vlaneseq
        %v6521 = vshrl.u32 %v6520, 7
        %v6522 = vsub.s32 0, %v6521
        %v6523 = vrot.slane %v6378, %v6522
        %v6524 = vlaneseq
        %v6525 = vshrl.u32 %v6524, 7
        %v6526 = vsub.s32 0, %v6525
        %v6527 = vrot.slane %v6402, %v6526
        %v6528 = vlaneseq
        %v6529 = vshrl.u32 %v6528, 7
        %v6530 = vsub.s32 0, %v6529
        %v6531 = vrot.slane %v6416, %v6530
        %v6532 = vlaneseq
        %v6533 = vshrl.u32 %v6532, 7
        %v6534 = vsub.s32 0, %v6533
        %v6535 = vrot.slane %v6424, %v6534
        %v6536 = vlaneseq
        %v6537 = vshrl.u32 %v6536, 7
        %v6538 = vsub.s32 0, %v6537
        %v6539 = vrot.slane %v6426, %v6538
        %v6540 = vlaneseq
        %v6541 = vshrl.u32 %v6540, 7
        %v6542 = vsub.s32 0, %v6541
        %v6543 = vrot.slane %v6409, %v6542
        %v6544 = vlaneseq
        %v6545 = vshrl.u32 %v6544, 7
        %v6546 = vsub.s32 0, %v6545
        %v6547 = vrot.slane %v6423, %v6546
        %v6548 = vlaneseq
        %v6549 = vshrl.u32 %v6548, 7
        %v6550 = vsub.s32 0, %v6549
        %v6551 = vrot.slane %v6425, %v6550
        %v6552 = vlaneseq
        %v6553 = vshrl.u32 %v6552, 7
        %v6554 = vsub.s32 0, %v6553
        %v6555 = vrot.slane %v6427, %v6554
        %v6588 = vsel %vm781, %v6023, %v6431
        %v6589 = vsel %vm781, %v6037, %v6435
        %v6590 = vsel %vm781, %v6045, %v6439
        %v6591 = vsel %vm781, %v6047, %v6443
        %v6592 = vsel %vm781, %v6030, %v6447
        %v6593 = vsel %vm781, %v6044, %v6451
        %v6594 = vsel %vm781, %v6046, %v6455
        %v6595 = vsel %vm781, %v6048, %v6459
        %v6596 = vsel %vm781, %v6072, %v6463
        %v6597 = vsel %vm781, %v6086, %v6467
        %v6598 = vsel %vm781, %v6094, %v6471
        %v6599 = vsel %vm781, %v6096, %v6475
        %v6600 = vsel %vm781, %v6079, %v6479
        %v6601 = vsel %vm781, %v6093, %v6483
        %v6602 = vsel %vm781, %v6095, %v6487
        %v6603 = vsel %vm781, %v6097, %v6491
        %v6604 = vsel %vm781, %v6121, %v6495
        %v6605 = vsel %vm781, %v6135, %v6499
        %v6606 = vsel %vm781, %v6143, %v6503
        %v6607 = vsel %vm781, %v6145, %v6507
        %v6608 = vsel %vm781, %v6128, %v6511
        %v6609 = vsel %vm781, %v6142, %v6515
        %v6610 = vsel %vm781, %v6144, %v6519
        %v6611 = vsel %vm781, %v6146, %v6523
        %v6612 = vsel %vm781, %v6170, %v6527
        %v6613 = vsel %vm781, %v6184, %v6531
        %v6614 = vsel %vm781, %v6192, %v6535
        %v6615 = vsel %vm781, %v6194, %v6539
        %v6616 = vsel %vm781, %v6177, %v6543
        %v6617 = vsel %vm781, %v6191, %v6547
        %v6618 = vsel %vm781, %v6193, %v6551
        %v6619 = vsel %vm781, %v6195, %v6555
        %v6652 = vcombine.low %v6588, %v6589
        %v6653 = vcombine.low %v6590, %v6591
        %v6655 = vunpack.c.l.s4 1983009808
        %v6656 = vunpack.c.0.s8 %v6655
        %v6657 = vlaneseq
        %v6658 = vshrl.u32 %v6657, 7
        %v6659 = vsub.s32 %v6656, %v6658
        %v6660 = vrot.slane %v6652, %v6659
        %v6662 = vunpack.c.l.s4 1983009808
        %v6663 = vunpack.c.0.s8 %v6662
        %v6664 = vlaneseq
        %v6665 = vshrl.u32 %v6664, 7
        %v6666 = vsub.s32 %v6663, %v6665
        %v6667 = vrot.slane %v6653, %v6666
        %v6668 = vcombine.low %v6660, %v6667
        %v6669 = vcombine.low %v6592, %v6593
        %v6670 = vcombine.low %v6594, %v6595
        %v6672 = vunpack.c.l.s4 1983009808
        %v6673 = vunpack.c.0.s8 %v6672
        %v6674 = vlaneseq
        %v6675 = vshrl.u32 %v6674, 7
        %v6676 = vsub.s32 %v6673, %v6675
        %v6677 = vrot.slane %v6669, %v6676
        %v6679 = vunpack.c.l.s4 1983009808
        %v6680 = vunpack.c.0.s8 %v6679
        %v6681 = vlaneseq
        %v6682 = vshrl.u32 %v6681, 7
        %v6683 = vsub.s32 %v6680, %v6682
        %v6684 = vrot.slane %v6670, %v6683
        %v6685 = vcombine.low %v6677, %v6684
        %v6686 = vcombine.low %v6596, %v6597
        %v6687 = vcombine.low %v6598, %v6599
        %v6689 = vunpack.c.l.s4 1983009808
        %v6690 = vunpack.c.0.s8 %v6689
        %v6691 = vlaneseq
        %v6692 = vshrl.u32 %v6691, 7
        %v6693 = vsub.s32 %v6690, %v6692
        %v6694 = vrot.slane %v6686, %v6693
        %v6696 = vunpack.c.l.s4 1983009808
        %v6697 = vunpack.c.0.s8 %v6696
        %v6698 = vlaneseq
        %v6699 = vshrl.u32 %v6698, 7
        %v6700 = vsub.s32 %v6697, %v6699
        %v6701 = vrot.slane %v6687, %v6700
        %v6702 = vcombine.low %v6694, %v6701
        %v6703 = vcombine.low %v6600, %v6601
        %v6704 = vcombine.low %v6602, %v6603
        %v6706 = vunpack.c.l.s4 1983009808
        %v6707 = vunpack.c.0.s8 %v6706
        %v6708 = vlaneseq
        %v6709 = vshrl.u32 %v6708, 7
        %v6710 = vsub.s32 %v6707, %v6709
        %v6711 = vrot.slane %v6703, %v6710
        %v6713 = vunpack.c.l.s4 1983009808
        %v6714 = vunpack.c.0.s8 %v6713
        %v6715 = vlaneseq
        %v6716 = vshrl.u32 %v6715, 7
        %v6717 = vsub.s32 %v6714, %v6716
        %v6718 = vrot.slane %v6704, %v6717
        %v6719 = vcombine.low %v6711, %v6718
        %v6720 = vcombine.low %v6604, %v6605
        %v6721 = vcombine.low %v6606, %v6607
        %v6723 = vunpack.c.l.s4 1983009808
        %v6724 = vunpack.c.0.s8 %v6723
        %v6725 = vlaneseq
        %v6726 = vshrl.u32 %v6725, 7
        %v6727 = vsub.s32 %v6724, %v6726
        %v6728 = vrot.slane %v6720, %v6727
        %v6730 = vunpack.c.l.s4 1983009808
        %v6731 = vunpack.c.0.s8 %v6730
        %v6732 = vlaneseq
        %v6733 = vshrl.u32 %v6732, 7
        %v6734 = vsub.s32 %v6731, %v6733
        %v6735 = vrot.slane %v6721, %v6734
        %v6736 = vcombine.low %v6728, %v6735
        %v6737 = vcombine.low %v6608, %v6609
        %v6738 = vcombine.low %v6610, %v6611
        %v6740 = vunpack.c.l.s4 1983009808
        %v6741 = vunpack.c.0.s8 %v6740
        %v6742 = vlaneseq
        %v6743 = vshrl.u32 %v6742, 7
        %v6744 = vsub.s32 %v6741, %v6743
        %v6745 = vrot.slane %v6737, %v6744
        %v6747 = vunpack.c.l.s4 1983009808
        %v6748 = vunpack.c.0.s8 %v6747
        %v6749 = vlaneseq
        %v6750 = vshrl.u32 %v6749, 7
        %v6751 = vsub.s32 %v6748, %v6750
        %v6752 = vrot.slane %v6738, %v6751
        %v6753 = vcombine.low %v6745, %v6752
        %v6754 = vcombine.low %v6612, %v6613
        %v6755 = vcombine.low %v6614, %v6615
        %v6757 = vunpack.c.l.s4 1983009808
        %v6758 = vunpack.c.0.s8 %v6757
        %v6759 = vlaneseq
        %v6760 = vshrl.u32 %v6759, 7
        %v6761 = vsub.s32 %v6758, %v6760
        %v6762 = vrot.slane %v6754, %v6761
        %v6764 = vunpack.c.l.s4 1983009808
        %v6765 = vunpack.c.0.s8 %v6764
        %v6766 = vlaneseq
        %v6767 = vshrl.u32 %v6766, 7
        %v6768 = vsub.s32 %v6765, %v6767
        %v6769 = vrot.slane %v6755, %v6768
        %v6770 = vcombine.low %v6762, %v6769
        %v6771 = vcombine.low %v6616, %v6617
        %v6772 = vcombine.low %v6618, %v6619
        %v6774 = vunpack.c.l.s4 1983009808
        %v6775 = vunpack.c.0.s8 %v6774
        %v6776 = vlaneseq
        %v6777 = vshrl.u32 %v6776, 7
        %v6778 = vsub.s32 %v6775, %v6777
        %v6779 = vrot.slane %v6771, %v6778
        %v6781 = vunpack.c.l.s4 1983009808
        %v6782 = vunpack.c.0.s8 %v6781
        %v6783 = vlaneseq
        %v6784 = vshrl.u32 %v6783, 7
        %v6785 = vsub.s32 %v6782, %v6784
        %v6786 = vrot.slane %v6772, %v6785
        %v6787 = vcombine.low %v6779, %v6786
        %6796 = vxpose.xlu0.b32.start [1/16] %v6668, 128
        %6797 = vxpose.xlu0.b32.cont [2/16] %v6685, 128
        %6798 = vxpose.xlu0.b32.cont [3/16] %v6702, 128
        %6799 = vxpose.xlu0.b32.cont [4/16] %v6719, 128
        %6800 = vxpose.xlu0.b32.cont [5/16] %v6736, 128
        %6801 = vxpose.xlu0.b32.cont [6/16] %v6753, 128
        %6802 = vxpose.xlu0.b32.cont [7/16] %v6770, 128
        %6803 = vxpose.xlu0.b32.cont [8/16] %v6787, 128
        %6804 = vxpose.xlu0.b32.cont [9/16] 0.0, 128
        %6805 = vxpose.xlu0.b32.cont [10/16] 0.0, 128
        %6806 = vxpose.xlu0.b32.cont [11/16] 0.0, 128
        %6807 = vxpose.xlu0.b32.cont [12/16] 0.0, 128
        %6808 = vxpose.xlu0.b32.cont [13/16] 0.0, 128
        %6809 = vxpose.xlu0.b32.cont [14/16] 0.0, 128
        %6810 = vxpose.xlu0.b32.cont [15/16] 0.0, 128
        %6811 = vxpose.xlu0.b32.end [16/16] 0.0, 128
        %v6812 = vpop.trf.xlu0
        %v6813 = vpop.trf.xlu0
        %v6814 = vpop.trf.xlu0
        %v6815 = vpop.trf.xlu0
        %v6816 = vpop.trf.xlu0
        %v6817 = vpop.trf.xlu0
        %v6818 = vpop.trf.xlu0
        %v6819 = vpop.trf.xlu0
        %v6820 = vpop.trf.xlu0
        %v6821 = vpop.trf.xlu0
        %v6822 = vpop.trf.xlu0
        %v6823 = vpop.trf.xlu0
        %v6824 = vpop.trf.xlu0
        %v6825 = vpop.trf.xlu0
        %v6826 = vpop.trf.xlu0
        %v6827 = vpop.trf.xlu0
        %v6844 = vcombine.high %v5970, %v5970
        %v6846 = vunpack.c.l.s4 1966171168
        %v6847 = vunpack.c.0.s8 %v6846
        %v6848 = vlaneseq
        %v6849 = vshrl.u32 %v6848, 7
        %v6850 = vsub.s32 %v6847, %v6849
        %v6851 = vrot.slane %v5970, %v6850
        %v6853 = vunpack.c.l.s4 1966171168
        %v6854 = vunpack.c.0.s8 %v6853
        %v6855 = vlaneseq
        %v6856 = vshrl.u32 %v6855, 7
        %v6857 = vsub.s32 %v6854, %v6856
        %v6858 = vrot.slane %v6844, %v6857
        %v6859 = vcombine.high %v6851, %v6851
        %v6860 = vcombine.high %v6858, %v6858
        %v6862 = vunpack.c.l.s4 1966171168
        %v6863 = vunpack.c.0.s8 %v6862
        %v6864 = vlaneseq
        %v6865 = vshrl.u32 %v6864, 7
        %v6866 = vsub.s32 %v6863, %v6865
        %v6867 = vrot.slane %v6851, %v6866
        %v6869 = vunpack.c.l.s4 1966171168
        %v6870 = vunpack.c.0.s8 %v6869
        %v6871 = vlaneseq
        %v6872 = vshrl.u32 %v6871, 7
        %v6873 = vsub.s32 %v6870, %v6872
        %v6874 = vrot.slane %v6858, %v6873
        %v6876 = vunpack.c.l.s4 1966171168
        %v6877 = vunpack.c.0.s8 %v6876
        %v6878 = vlaneseq
        %v6879 = vshrl.u32 %v6878, 7
        %v6880 = vsub.s32 %v6877, %v6879
        %v6881 = vrot.slane %v6859, %v6880
        %v6883 = vunpack.c.l.s4 1966171168
        %v6884 = vunpack.c.0.s8 %v6883
        %v6885 = vlaneseq
        %v6886 = vshrl.u32 %v6885, 7
        %v6887 = vsub.s32 %v6884, %v6886
        %v6888 = vrot.slane %v6860, %v6887
        %v6889 = vcombine.high %v6867, %v6867
        %v6890 = vcombine.high %v6874, %v6874
        %v6891 = vcombine.high %v6881, %v6881
        %v6892 = vcombine.high %v6888, %v6888
        %v6893 = vcombine.high %v5971, %v5971
        %v6895 = vunpack.c.l.s4 1966171168
        %v6896 = vunpack.c.0.s8 %v6895
        %v6897 = vlaneseq
        %v6898 = vshrl.u32 %v6897, 7
        %v6899 = vsub.s32 %v6896, %v6898
        %v6900 = vrot.slane %v5971, %v6899
        %v6902 = vunpack.c.l.s4 1966171168
        %v6903 = vunpack.c.0.s8 %v6902
        %v6904 = vlaneseq
        %v6905 = vshrl.u32 %v6904, 7
        %v6906 = vsub.s32 %v6903, %v6905
        %v6907 = vrot.slane %v6893, %v6906
        %v6908 = vcombine.high %v6900, %v6900
        %v6909 = vcombine.high %v6907, %v6907
        %v6911 = vunpack.c.l.s4 1966171168
        %v6912 = vunpack.c.0.s8 %v6911
        %v6913 = vlaneseq
        %v6914 = vshrl.u32 %v6913, 7
        %v6915 = vsub.s32 %v6912, %v6914
        %v6916 = vrot.slane %v6900, %v6915
        %v6918 = vunpack.c.l.s4 1966171168
        %v6919 = vunpack.c.0.s8 %v6918
        %v6920 = vlaneseq
        %v6921 = vshrl.u32 %v6920, 7
        %v6922 = vsub.s32 %v6919, %v6921
        %v6923 = vrot.slane %v6907, %v6922
        %v6925 = vunpack.c.l.s4 1966171168
        %v6926 = vunpack.c.0.s8 %v6925
        %v6927 = vlaneseq
        %v6928 = vshrl.u32 %v6927, 7
        %v6929 = vsub.s32 %v6926, %v6928
        %v6930 = vrot.slane %v6908, %v6929
        %v6932 = vunpack.c.l.s4 1966171168
        %v6933 = vunpack.c.0.s8 %v6932
        %v6934 = vlaneseq
        %v6935 = vshrl.u32 %v6934, 7
        %v6936 = vsub.s32 %v6933, %v6935
        %v6937 = vrot.slane %v6909, %v6936
        %v6938 = vcombine.high %v6916, %v6916
        %v6939 = vcombine.high %v6923, %v6923
        %v6940 = vcombine.high %v6930, %v6930
        %v6941 = vcombine.high %v6937, %v6937
        %v6942 = vcombine.high %v5972, %v5972
        %v6944 = vunpack.c.l.s4 1966171168
        %v6945 = vunpack.c.0.s8 %v6944
        %v6946 = vlaneseq
        %v6947 = vshrl.u32 %v6946, 7
        %v6948 = vsub.s32 %v6945, %v6947
        %v6949 = vrot.slane %v5972, %v6948
        %v6951 = vunpack.c.l.s4 1966171168
        %v6952 = vunpack.c.0.s8 %v6951
        %v6953 = vlaneseq
        %v6954 = vshrl.u32 %v6953, 7
        %v6955 = vsub.s32 %v6952, %v6954
        %v6956 = vrot.slane %v6942, %v6955
        %v6957 = vcombine.high %v6949, %v6949
        %v6958 = vcombine.high %v6956, %v6956
        %v6960 = vunpack.c.l.s4 1966171168
        %v6961 = vunpack.c.0.s8 %v6960
        %v6962 = vlaneseq
        %v6963 = vshrl.u32 %v6962, 7
        %v6964 = vsub.s32 %v6961, %v6963
        %v6965 = vrot.slane %v6949, %v6964
        %v6967 = vunpack.c.l.s4 1966171168
        %v6968 = vunpack.c.0.s8 %v6967
        %v6969 = vlaneseq
        %v6970 = vshrl.u32 %v6969, 7
        %v6971 = vsub.s32 %v6968, %v6970
        %v6972 = vrot.slane %v6956, %v6971
        %v6974 = vunpack.c.l.s4 1966171168
        %v6975 = vunpack.c.0.s8 %v6974
        %v6976 = vlaneseq
        %v6977 = vshrl.u32 %v6976, 7
        %v6978 = vsub.s32 %v6975, %v6977
        %v6979 = vrot.slane %v6957, %v6978
        %v6981 = vunpack.c.l.s4 1966171168
        %v6982 = vunpack.c.0.s8 %v6981
        %v6983 = vlaneseq
        %v6984 = vshrl.u32 %v6983, 7
        %v6985 = vsub.s32 %v6982, %v6984
        %v6986 = vrot.slane %v6958, %v6985
        %v6987 = vcombine.high %v6965, %v6965
        %v6988 = vcombine.high %v6972, %v6972
        %v6989 = vcombine.high %v6979, %v6979
        %v6990 = vcombine.high %v6986, %v6986
        %v6991 = vcombine.high %v5973, %v5973
        %v6993 = vunpack.c.l.s4 1966171168
        %v6994 = vunpack.c.0.s8 %v6993
        %v6995 = vlaneseq
        %v6996 = vshrl.u32 %v6995, 7
        %v6997 = vsub.s32 %v6994, %v6996
        %v6998 = vrot.slane %v5973, %v6997
        %v7000 = vunpack.c.l.s4 1966171168
        %v7001 = vunpack.c.0.s8 %v7000
        %v7002 = vlaneseq
        %v7003 = vshrl.u32 %v7002, 7
        %v7004 = vsub.s32 %v7001, %v7003
        %v7005 = vrot.slane %v6991, %v7004
        %v7006 = vcombine.high %v6998, %v6998
        %v7007 = vcombine.high %v7005, %v7005
        %v7009 = vunpack.c.l.s4 1966171168
        %v7010 = vunpack.c.0.s8 %v7009
        %v7011 = vlaneseq
        %v7012 = vshrl.u32 %v7011, 7
        %v7013 = vsub.s32 %v7010, %v7012
        %v7014 = vrot.slane %v6998, %v7013
        %v7016 = vunpack.c.l.s4 1966171168
        %v7017 = vunpack.c.0.s8 %v7016
        %v7018 = vlaneseq
        %v7019 = vshrl.u32 %v7018, 7
        %v7020 = vsub.s32 %v7017, %v7019
        %v7021 = vrot.slane %v7005, %v7020
        %v7023 = vunpack.c.l.s4 1966171168
        %v7024 = vunpack.c.0.s8 %v7023
        %v7025 = vlaneseq
        %v7026 = vshrl.u32 %v7025, 7
        %v7027 = vsub.s32 %v7024, %v7026
        %v7028 = vrot.slane %v7006, %v7027
        %v7030 = vunpack.c.l.s4 1966171168
        %v7031 = vunpack.c.0.s8 %v7030
        %v7032 = vlaneseq
        %v7033 = vshrl.u32 %v7032, 7
        %v7034 = vsub.s32 %v7031, %v7033
        %v7035 = vrot.slane %v7007, %v7034
        %v7036 = vcombine.high %v7014, %v7014
        %v7037 = vcombine.high %v7021, %v7021
        %v7038 = vcombine.high %v7028, %v7028
        %v7039 = vcombine.high %v7035, %v7035
        %v7040 = vcombine.high %v5974, %v5974
        %v7042 = vunpack.c.l.s4 1966171168
        %v7043 = vunpack.c.0.s8 %v7042
        %v7044 = vlaneseq
        %v7045 = vshrl.u32 %v7044, 7
        %v7046 = vsub.s32 %v7043, %v7045
        %v7047 = vrot.slane %v5974, %v7046
        %v7049 = vunpack.c.l.s4 1966171168
        %v7050 = vunpack.c.0.s8 %v7049
        %v7051 = vlaneseq
        %v7052 = vshrl.u32 %v7051, 7
        %v7053 = vsub.s32 %v7050, %v7052
        %v7054 = vrot.slane %v7040, %v7053
        %v7055 = vcombine.high %v7047, %v7047
        %v7056 = vcombine.high %v7054, %v7054
        %v7058 = vunpack.c.l.s4 1966171168
        %v7059 = vunpack.c.0.s8 %v7058
        %v7060 = vlaneseq
        %v7061 = vshrl.u32 %v7060, 7
        %v7062 = vsub.s32 %v7059, %v7061
        %v7063 = vrot.slane %v7047, %v7062
        %v7065 = vunpack.c.l.s4 1966171168
        %v7066 = vunpack.c.0.s8 %v7065
        %v7067 = vlaneseq
        %v7068 = vshrl.u32 %v7067, 7
        %v7069 = vsub.s32 %v7066, %v7068
        %v7070 = vrot.slane %v7054, %v7069
        %v7072 = vunpack.c.l.s4 1966171168
        %v7073 = vunpack.c.0.s8 %v7072
        %v7074 = vlaneseq
        %v7075 = vshrl.u32 %v7074, 7
        %v7076 = vsub.s32 %v7073, %v7075
        %v7077 = vrot.slane %v7055, %v7076
        %v7079 = vunpack.c.l.s4 1966171168
        %v7080 = vunpack.c.0.s8 %v7079
        %v7081 = vlaneseq
        %v7082 = vshrl.u32 %v7081, 7
        %v7083 = vsub.s32 %v7080, %v7082
        %v7084 = vrot.slane %v7056, %v7083
        %v7085 = vcombine.high %v7063, %v7063
        %v7086 = vcombine.high %v7070, %v7070
        %v7087 = vcombine.high %v7077, %v7077
        %v7088 = vcombine.high %v7084, %v7084
        %v7089 = vcombine.high %v5975, %v5975
        %v7091 = vunpack.c.l.s4 1966171168
        %v7092 = vunpack.c.0.s8 %v7091
        %v7093 = vlaneseq
        %v7094 = vshrl.u32 %v7093, 7
        %v7095 = vsub.s32 %v7092, %v7094
        %v7096 = vrot.slane %v5975, %v7095
        %v7098 = vunpack.c.l.s4 1966171168
        %v7099 = vunpack.c.0.s8 %v7098
        %v7100 = vlaneseq
        %v7101 = vshrl.u32 %v7100, 7
        %v7102 = vsub.s32 %v7099, %v7101
        %v7103 = vrot.slane %v7089, %v7102
        %v7104 = vcombine.high %v7096, %v7096
        %v7105 = vcombine.high %v7103, %v7103
        %v7107 = vunpack.c.l.s4 1966171168
        %v7108 = vunpack.c.0.s8 %v7107
        %v7109 = vlaneseq
        %v7110 = vshrl.u32 %v7109, 7
        %v7111 = vsub.s32 %v7108, %v7110
        %v7112 = vrot.slane %v7096, %v7111
        %v7114 = vunpack.c.l.s4 1966171168
        %v7115 = vunpack.c.0.s8 %v7114
        %v7116 = vlaneseq
        %v7117 = vshrl.u32 %v7116, 7
        %v7118 = vsub.s32 %v7115, %v7117
        %v7119 = vrot.slane %v7103, %v7118
        %v7121 = vunpack.c.l.s4 1966171168
        %v7122 = vunpack.c.0.s8 %v7121
        %v7123 = vlaneseq
        %v7124 = vshrl.u32 %v7123, 7
        %v7125 = vsub.s32 %v7122, %v7124
        %v7126 = vrot.slane %v7104, %v7125
        %v7128 = vunpack.c.l.s4 1966171168
        %v7129 = vunpack.c.0.s8 %v7128
        %v7130 = vlaneseq
        %v7131 = vshrl.u32 %v7130, 7
        %v7132 = vsub.s32 %v7129, %v7131
        %v7133 = vrot.slane %v7105, %v7132
        %v7134 = vcombine.high %v7112, %v7112
        %v7135 = vcombine.high %v7119, %v7119
        %v7136 = vcombine.high %v7126, %v7126
        %v7137 = vcombine.high %v7133, %v7133
        %v7138 = vcombine.high %v5976, %v5976
        %v7140 = vunpack.c.l.s4 1966171168
        %v7141 = vunpack.c.0.s8 %v7140
        %v7142 = vlaneseq
        %v7143 = vshrl.u32 %v7142, 7
        %v7144 = vsub.s32 %v7141, %v7143
        %v7145 = vrot.slane %v5976, %v7144
        %v7147 = vunpack.c.l.s4 1966171168
        %v7148 = vunpack.c.0.s8 %v7147
        %v7149 = vlaneseq
        %v7150 = vshrl.u32 %v7149, 7
        %v7151 = vsub.s32 %v7148, %v7150
        %v7152 = vrot.slane %v7138, %v7151
        %v7153 = vcombine.high %v7145, %v7145
        %v7154 = vcombine.high %v7152, %v7152
        %v7156 = vunpack.c.l.s4 1966171168
        %v7157 = vunpack.c.0.s8 %v7156
        %v7158 = vlaneseq
        %v7159 = vshrl.u32 %v7158, 7
        %v7160 = vsub.s32 %v7157, %v7159
        %v7161 = vrot.slane %v7145, %v7160
        %v7163 = vunpack.c.l.s4 1966171168
        %v7164 = vunpack.c.0.s8 %v7163
        %v7165 = vlaneseq
        %v7166 = vshrl.u32 %v7165, 7
        %v7167 = vsub.s32 %v7164, %v7166
        %v7168 = vrot.slane %v7152, %v7167
        %v7170 = vunpack.c.l.s4 1966171168
        %v7171 = vunpack.c.0.s8 %v7170
        %v7172 = vlaneseq
        %v7173 = vshrl.u32 %v7172, 7
        %v7174 = vsub.s32 %v7171, %v7173
        %v7175 = vrot.slane %v7153, %v7174
        %v7177 = vunpack.c.l.s4 1966171168
        %v7178 = vunpack.c.0.s8 %v7177
        %v7179 = vlaneseq
        %v7180 = vshrl.u32 %v7179, 7
        %v7181 = vsub.s32 %v7178, %v7180
        %v7182 = vrot.slane %v7154, %v7181
        %v7183 = vcombine.high %v7161, %v7161
        %v7184 = vcombine.high %v7168, %v7168
        %v7185 = vcombine.high %v7175, %v7175
        %v7186 = vcombine.high %v7182, %v7182
        %v7187 = vcombine.high %v5977, %v5977
        %v7189 = vunpack.c.l.s4 1966171168
        %v7190 = vunpack.c.0.s8 %v7189
        %v7191 = vlaneseq
        %v7192 = vshrl.u32 %v7191, 7
        %v7193 = vsub.s32 %v7190, %v7192
        %v7194 = vrot.slane %v5977, %v7193
        %v7196 = vunpack.c.l.s4 1966171168
        %v7197 = vunpack.c.0.s8 %v7196
        %v7198 = vlaneseq
        %v7199 = vshrl.u32 %v7198, 7
        %v7200 = vsub.s32 %v7197, %v7199
        %v7201 = vrot.slane %v7187, %v7200
        %v7202 = vcombine.high %v7194, %v7194
        %v7203 = vcombine.high %v7201, %v7201
        %v7205 = vunpack.c.l.s4 1966171168
        %v7206 = vunpack.c.0.s8 %v7205
        %v7207 = vlaneseq
        %v7208 = vshrl.u32 %v7207, 7
        %v7209 = vsub.s32 %v7206, %v7208
        %v7210 = vrot.slane %v7194, %v7209
        %v7212 = vunpack.c.l.s4 1966171168
        %v7213 = vunpack.c.0.s8 %v7212
        %v7214 = vlaneseq
        %v7215 = vshrl.u32 %v7214, 7
        %v7216 = vsub.s32 %v7213, %v7215
        %v7217 = vrot.slane %v7201, %v7216
        %v7219 = vunpack.c.l.s4 1966171168
        %v7220 = vunpack.c.0.s8 %v7219
        %v7221 = vlaneseq
        %v7222 = vshrl.u32 %v7221, 7
        %v7223 = vsub.s32 %v7220, %v7222
        %v7224 = vrot.slane %v7202, %v7223
        %v7226 = vunpack.c.l.s4 1966171168
        %v7227 = vunpack.c.0.s8 %v7226
        %v7228 = vlaneseq
        %v7229 = vshrl.u32 %v7228, 7
        %v7230 = vsub.s32 %v7227, %v7229
        %v7231 = vrot.slane %v7203, %v7230
        %v7232 = vcombine.high %v7210, %v7210
        %v7233 = vcombine.high %v7217, %v7217
        %v7234 = vcombine.high %v7224, %v7224
        %v7235 = vcombine.high %v7231, %v7231
        %v7236 = vcombine.high %v5978, %v5978
        %v7238 = vunpack.c.l.s4 1966171168
        %v7239 = vunpack.c.0.s8 %v7238
        %v7240 = vlaneseq
        %v7241 = vshrl.u32 %v7240, 7
        %v7242 = vsub.s32 %v7239, %v7241
        %v7243 = vrot.slane %v5978, %v7242
        %v7245 = vunpack.c.l.s4 1966171168
        %v7246 = vunpack.c.0.s8 %v7245
        %v7247 = vlaneseq
        %v7248 = vshrl.u32 %v7247, 7
        %v7249 = vsub.s32 %v7246, %v7248
        %v7250 = vrot.slane %v7236, %v7249
        %v7251 = vcombine.high %v7243, %v7243
        %v7252 = vcombine.high %v7250, %v7250
        %v7254 = vunpack.c.l.s4 1966171168
        %v7255 = vunpack.c.0.s8 %v7254
        %v7256 = vlaneseq
        %v7257 = vshrl.u32 %v7256, 7
        %v7258 = vsub.s32 %v7255, %v7257
        %v7259 = vrot.slane %v7243, %v7258
        %v7261 = vunpack.c.l.s4 1966171168
        %v7262 = vunpack.c.0.s8 %v7261
        %v7263 = vlaneseq
        %v7264 = vshrl.u32 %v7263, 7
        %v7265 = vsub.s32 %v7262, %v7264
        %v7266 = vrot.slane %v7250, %v7265
        %v7268 = vunpack.c.l.s4 1966171168
        %v7269 = vunpack.c.0.s8 %v7268
        %v7270 = vlaneseq
        %v7271 = vshrl.u32 %v7270, 7
        %v7272 = vsub.s32 %v7269, %v7271
        %v7273 = vrot.slane %v7251, %v7272
        %v7275 = vunpack.c.l.s4 1966171168
        %v7276 = vunpack.c.0.s8 %v7275
        %v7277 = vlaneseq
        %v7278 = vshrl.u32 %v7277, 7
        %v7279 = vsub.s32 %v7276, %v7278
        %v7280 = vrot.slane %v7252, %v7279
        %v7281 = vcombine.high %v7259, %v7259
        %v7282 = vcombine.high %v7266, %v7266
        %v7283 = vcombine.high %v7273, %v7273
        %v7284 = vcombine.high %v7280, %v7280
        %v7285 = vcombine.high %v5979, %v5979
        %v7287 = vunpack.c.l.s4 1966171168
        %v7288 = vunpack.c.0.s8 %v7287
        %v7289 = vlaneseq
        %v7290 = vshrl.u32 %v7289, 7
        %v7291 = vsub.s32 %v7288, %v7290
        %v7292 = vrot.slane %v5979, %v7291
        %v7294 = vunpack.c.l.s4 1966171168
        %v7295 = vunpack.c.0.s8 %v7294
        %v7296 = vlaneseq
        %v7297 = vshrl.u32 %v7296, 7
        %v7298 = vsub.s32 %v7295, %v7297
        %v7299 = vrot.slane %v7285, %v7298
        %v7300 = vcombine.high %v7292, %v7292
        %v7301 = vcombine.high %v7299, %v7299
        %v7303 = vunpack.c.l.s4 1966171168
        %v7304 = vunpack.c.0.s8 %v7303
        %v7305 = vlaneseq
        %v7306 = vshrl.u32 %v7305, 7
        %v7307 = vsub.s32 %v7304, %v7306
        %v7308 = vrot.slane %v7292, %v7307
        %v7310 = vunpack.c.l.s4 1966171168
        %v7311 = vunpack.c.0.s8 %v7310
        %v7312 = vlaneseq
        %v7313 = vshrl.u32 %v7312, 7
        %v7314 = vsub.s32 %v7311, %v7313
        %v7315 = vrot.slane %v7299, %v7314
        %v7317 = vunpack.c.l.s4 1966171168
        %v7318 = vunpack.c.0.s8 %v7317
        %v7319 = vlaneseq
        %v7320 = vshrl.u32 %v7319, 7
        %v7321 = vsub.s32 %v7318, %v7320
        %v7322 = vrot.slane %v7300, %v7321
        %v7324 = vunpack.c.l.s4 1966171168
        %v7325 = vunpack.c.0.s8 %v7324
        %v7326 = vlaneseq
        %v7327 = vshrl.u32 %v7326, 7
        %v7328 = vsub.s32 %v7325, %v7327
        %v7329 = vrot.slane %v7301, %v7328
        %v7330 = vcombine.high %v7308, %v7308
        %v7331 = vcombine.high %v7315, %v7315
        %v7332 = vcombine.high %v7322, %v7322
        %v7333 = vcombine.high %v7329, %v7329
        %v7334 = vcombine.high %v5980, %v5980
        %v7336 = vunpack.c.l.s4 1966171168
        %v7337 = vunpack.c.0.s8 %v7336
        %v7338 = vlaneseq
        %v7339 = vshrl.u32 %v7338, 7
        %v7340 = vsub.s32 %v7337, %v7339
        %v7341 = vrot.slane %v5980, %v7340
        %v7343 = vunpack.c.l.s4 1966171168
        %v7344 = vunpack.c.0.s8 %v7343
        %v7345 = vlaneseq
        %v7346 = vshrl.u32 %v7345, 7
        %v7347 = vsub.s32 %v7344, %v7346
        %v7348 = vrot.slane %v7334, %v7347
        %v7349 = vcombine.high %v7341, %v7341
        %v7350 = vcombine.high %v7348, %v7348
        %v7352 = vunpack.c.l.s4 1966171168
        %v7353 = vunpack.c.0.s8 %v7352
        %v7354 = vlaneseq
        %v7355 = vshrl.u32 %v7354, 7
        %v7356 = vsub.s32 %v7353, %v7355
        %v7357 = vrot.slane %v7341, %v7356
        %v7359 = vunpack.c.l.s4 1966171168
        %v7360 = vunpack.c.0.s8 %v7359
        %v7361 = vlaneseq
        %v7362 = vshrl.u32 %v7361, 7
        %v7363 = vsub.s32 %v7360, %v7362
        %v7364 = vrot.slane %v7348, %v7363
        %v7366 = vunpack.c.l.s4 1966171168
        %v7367 = vunpack.c.0.s8 %v7366
        %v7368 = vlaneseq
        %v7369 = vshrl.u32 %v7368, 7
        %v7370 = vsub.s32 %v7367, %v7369
        %v7371 = vrot.slane %v7349, %v7370
        %v7373 = vunpack.c.l.s4 1966171168
        %v7374 = vunpack.c.0.s8 %v7373
        %v7375 = vlaneseq
        %v7376 = vshrl.u32 %v7375, 7
        %v7377 = vsub.s32 %v7374, %v7376
        %v7378 = vrot.slane %v7350, %v7377
        %v7379 = vcombine.high %v7357, %v7357
        %v7380 = vcombine.high %v7364, %v7364
        %v7381 = vcombine.high %v7371, %v7371
        %v7382 = vcombine.high %v7378, %v7378
        %v7383 = vcombine.high %v5981, %v5981
        %v7385 = vunpack.c.l.s4 1966171168
        %v7386 = vunpack.c.0.s8 %v7385
        %v7387 = vlaneseq
        %v7388 = vshrl.u32 %v7387, 7
        %v7389 = vsub.s32 %v7386, %v7388
        %v7390 = vrot.slane %v5981, %v7389
        %v7392 = vunpack.c.l.s4 1966171168
        %v7393 = vunpack.c.0.s8 %v7392
        %v7394 = vlaneseq
        %v7395 = vshrl.u32 %v7394, 7
        %v7396 = vsub.s32 %v7393, %v7395
        %v7397 = vrot.slane %v7383, %v7396
        %v7398 = vcombine.high %v7390, %v7390
        %v7399 = vcombine.high %v7397, %v7397
        %v7401 = vunpack.c.l.s4 1966171168
        %v7402 = vunpack.c.0.s8 %v7401
        %v7403 = vlaneseq
        %v7404 = vshrl.u32 %v7403, 7
        %v7405 = vsub.s32 %v7402, %v7404
        %v7406 = vrot.slane %v7390, %v7405
        %v7408 = vunpack.c.l.s4 1966171168
        %v7409 = vunpack.c.0.s8 %v7408
        %v7410 = vlaneseq
        %v7411 = vshrl.u32 %v7410, 7
        %v7412 = vsub.s32 %v7409, %v7411
        %v7413 = vrot.slane %v7397, %v7412
        %v7415 = vunpack.c.l.s4 1966171168
        %v7416 = vunpack.c.0.s8 %v7415
        %v7417 = vlaneseq
        %v7418 = vshrl.u32 %v7417, 7
        %v7419 = vsub.s32 %v7416, %v7418
        %v7420 = vrot.slane %v7398, %v7419
        %v7422 = vunpack.c.l.s4 1966171168
        %v7423 = vunpack.c.0.s8 %v7422
        %v7424 = vlaneseq
        %v7425 = vshrl.u32 %v7424, 7
        %v7426 = vsub.s32 %v7423, %v7425
        %v7427 = vrot.slane %v7399, %v7426
        %v7428 = vcombine.high %v7406, %v7406
        %v7429 = vcombine.high %v7413, %v7413
        %v7430 = vcombine.high %v7420, %v7420
        %v7431 = vcombine.high %v7427, %v7427
        %v7432 = vcombine.high %v5982, %v5982
        %v7434 = vunpack.c.l.s4 1966171168
        %v7435 = vunpack.c.0.s8 %v7434
        %v7436 = vlaneseq
        %v7437 = vshrl.u32 %v7436, 7
        %v7438 = vsub.s32 %v7435, %v7437
        %v7439 = vrot.slane %v5982, %v7438
        %v7441 = vunpack.c.l.s4 1966171168
        %v7442 = vunpack.c.0.s8 %v7441
        %v7443 = vlaneseq
        %v7444 = vshrl.u32 %v7443, 7
        %v7445 = vsub.s32 %v7442, %v7444
        %v7446 = vrot.slane %v7432, %v7445
        %v7447 = vcombine.high %v7439, %v7439
        %v7448 = vcombine.high %v7446, %v7446
        %v7450 = vunpack.c.l.s4 1966171168
        %v7451 = vunpack.c.0.s8 %v7450
        %v7452 = vlaneseq
        %v7453 = vshrl.u32 %v7452, 7
        %v7454 = vsub.s32 %v7451, %v7453
        %v7455 = vrot.slane %v7439, %v7454
        %v7457 = vunpack.c.l.s4 1966171168
        %v7458 = vunpack.c.0.s8 %v7457
        %v7459 = vlaneseq
        %v7460 = vshrl.u32 %v7459, 7
        %v7461 = vsub.s32 %v7458, %v7460
        %v7462 = vrot.slane %v7446, %v7461
        %v7464 = vunpack.c.l.s4 1966171168
        %v7465 = vunpack.c.0.s8 %v7464
        %v7466 = vlaneseq
        %v7467 = vshrl.u32 %v7466, 7
        %v7468 = vsub.s32 %v7465, %v7467
        %v7469 = vrot.slane %v7447, %v7468
        %v7471 = vunpack.c.l.s4 1966171168
        %v7472 = vunpack.c.0.s8 %v7471
        %v7473 = vlaneseq
        %v7474 = vshrl.u32 %v7473, 7
        %v7475 = vsub.s32 %v7472, %v7474
        %v7476 = vrot.slane %v7448, %v7475
        %v7477 = vcombine.high %v7455, %v7455
        %v7478 = vcombine.high %v7462, %v7462
        %v7479 = vcombine.high %v7469, %v7469
        %v7480 = vcombine.high %v7476, %v7476
        %v7481 = vcombine.high %v5983, %v5983
        %v7483 = vunpack.c.l.s4 1966171168
        %v7484 = vunpack.c.0.s8 %v7483
        %v7485 = vlaneseq
        %v7486 = vshrl.u32 %v7485, 7
        %v7487 = vsub.s32 %v7484, %v7486
        %v7488 = vrot.slane %v5983, %v7487
        %v7490 = vunpack.c.l.s4 1966171168
        %v7491 = vunpack.c.0.s8 %v7490
        %v7492 = vlaneseq
        %v7493 = vshrl.u32 %v7492, 7
        %v7494 = vsub.s32 %v7491, %v7493
        %v7495 = vrot.slane %v7481, %v7494
        %v7496 = vcombine.high %v7488, %v7488
        %v7497 = vcombine.high %v7495, %v7495
        %v7499 = vunpack.c.l.s4 1966171168
        %v7500 = vunpack.c.0.s8 %v7499
        %v7501 = vlaneseq
        %v7502 = vshrl.u32 %v7501, 7
        %v7503 = vsub.s32 %v7500, %v7502
        %v7504 = vrot.slane %v7488, %v7503
        %v7506 = vunpack.c.l.s4 1966171168
        %v7507 = vunpack.c.0.s8 %v7506
        %v7508 = vlaneseq
        %v7509 = vshrl.u32 %v7508, 7
        %v7510 = vsub.s32 %v7507, %v7509
        %v7511 = vrot.slane %v7495, %v7510
        %v7513 = vunpack.c.l.s4 1966171168
        %v7514 = vunpack.c.0.s8 %v7513
        %v7515 = vlaneseq
        %v7516 = vshrl.u32 %v7515, 7
        %v7517 = vsub.s32 %v7514, %v7516
        %v7518 = vrot.slane %v7496, %v7517
        %v7520 = vunpack.c.l.s4 1966171168
        %v7521 = vunpack.c.0.s8 %v7520
        %v7522 = vlaneseq
        %v7523 = vshrl.u32 %v7522, 7
        %v7524 = vsub.s32 %v7521, %v7523
        %v7525 = vrot.slane %v7497, %v7524
        %v7526 = vcombine.high %v7504, %v7504
        %v7527 = vcombine.high %v7511, %v7511
        %v7528 = vcombine.high %v7518, %v7518
        %v7529 = vcombine.high %v7525, %v7525
        %v7530 = vcombine.high %v5984, %v5984
        %v7532 = vunpack.c.l.s4 1966171168
        %v7533 = vunpack.c.0.s8 %v7532
        %v7534 = vlaneseq
        %v7535 = vshrl.u32 %v7534, 7
        %v7536 = vsub.s32 %v7533, %v7535
        %v7537 = vrot.slane %v5984, %v7536
        %v7539 = vunpack.c.l.s4 1966171168
        %v7540 = vunpack.c.0.s8 %v7539
        %v7541 = vlaneseq
        %v7542 = vshrl.u32 %v7541, 7
        %v7543 = vsub.s32 %v7540, %v7542
        %v7544 = vrot.slane %v7530, %v7543
        %v7545 = vcombine.high %v7537, %v7537
        %v7546 = vcombine.high %v7544, %v7544
        %v7548 = vunpack.c.l.s4 1966171168
        %v7549 = vunpack.c.0.s8 %v7548
        %v7550 = vlaneseq
        %v7551 = vshrl.u32 %v7550, 7
        %v7552 = vsub.s32 %v7549, %v7551
        %v7553 = vrot.slane %v7537, %v7552
        %v7555 = vunpack.c.l.s4 1966171168
        %v7556 = vunpack.c.0.s8 %v7555
        %v7557 = vlaneseq
        %v7558 = vshrl.u32 %v7557, 7
        %v7559 = vsub.s32 %v7556, %v7558
        %v7560 = vrot.slane %v7544, %v7559
        %v7562 = vunpack.c.l.s4 1966171168
        %v7563 = vunpack.c.0.s8 %v7562
        %v7564 = vlaneseq
        %v7565 = vshrl.u32 %v7564, 7
        %v7566 = vsub.s32 %v7563, %v7565
        %v7567 = vrot.slane %v7545, %v7566
        %v7569 = vunpack.c.l.s4 1966171168
        %v7570 = vunpack.c.0.s8 %v7569
        %v7571 = vlaneseq
        %v7572 = vshrl.u32 %v7571, 7
        %v7573 = vsub.s32 %v7570, %v7572
        %v7574 = vrot.slane %v7546, %v7573
        %v7575 = vcombine.high %v7553, %v7553
        %v7576 = vcombine.high %v7560, %v7560
        %v7577 = vcombine.high %v7567, %v7567
        %v7578 = vcombine.high %v7574, %v7574
        %v7579 = vcombine.high %v5985, %v5985
        %v7581 = vunpack.c.l.s4 1966171168
        %v7582 = vunpack.c.0.s8 %v7581
        %v7583 = vlaneseq
        %v7584 = vshrl.u32 %v7583, 7
        %v7585 = vsub.s32 %v7582, %v7584
        %v7586 = vrot.slane %v5985, %v7585
        %v7588 = vunpack.c.l.s4 1966171168
        %v7589 = vunpack.c.0.s8 %v7588
        %v7590 = vlaneseq
        %v7591 = vshrl.u32 %v7590, 7
        %v7592 = vsub.s32 %v7589, %v7591
        %v7593 = vrot.slane %v7579, %v7592
        %v7594 = vcombine.high %v7586, %v7586
        %v7595 = vcombine.high %v7593, %v7593
        %v7597 = vunpack.c.l.s4 1966171168
        %v7598 = vunpack.c.0.s8 %v7597
        %v7599 = vlaneseq
        %v7600 = vshrl.u32 %v7599, 7
        %v7601 = vsub.s32 %v7598, %v7600
        %v7602 = vrot.slane %v7586, %v7601
        %v7604 = vunpack.c.l.s4 1966171168
        %v7605 = vunpack.c.0.s8 %v7604
        %v7606 = vlaneseq
        %v7607 = vshrl.u32 %v7606, 7
        %v7608 = vsub.s32 %v7605, %v7607
        %v7609 = vrot.slane %v7593, %v7608
        %v7611 = vunpack.c.l.s4 1966171168
        %v7612 = vunpack.c.0.s8 %v7611
        %v7613 = vlaneseq
        %v7614 = vshrl.u32 %v7613, 7
        %v7615 = vsub.s32 %v7612, %v7614
        %v7616 = vrot.slane %v7594, %v7615
        %v7618 = vunpack.c.l.s4 1966171168
        %v7619 = vunpack.c.0.s8 %v7618
        %v7620 = vlaneseq
        %v7621 = vshrl.u32 %v7620, 7
        %v7622 = vsub.s32 %v7619, %v7621
        %v7623 = vrot.slane %v7595, %v7622
        %v7624 = vcombine.high %v7602, %v7602
        %v7625 = vcombine.high %v7609, %v7609
        %v7626 = vcombine.high %v7616, %v7616
        %v7627 = vcombine.high %v7623, %v7623
        %v7772 = vcombine.high %v6812, %v6812
        %v7774 = vunpack.c.l.s4 1966171168
        %v7775 = vunpack.c.0.s8 %v7774
        %v7776 = vlaneseq
        %v7777 = vshrl.u32 %v7776, 7
        %v7778 = vsub.s32 %v7775, %v7777
        %v7779 = vrot.slane %v6812, %v7778
        %v7781 = vunpack.c.l.s4 1966171168
        %v7782 = vunpack.c.0.s8 %v7781
        %v7783 = vlaneseq
        %v7784 = vshrl.u32 %v7783, 7
        %v7785 = vsub.s32 %v7782, %v7784
        %v7786 = vrot.slane %v7772, %v7785
        %v7787 = vcombine.high %v7779, %v7779
        %v7788 = vcombine.high %v7786, %v7786
        %v7790 = vunpack.c.l.s4 1966171168
        %v7791 = vunpack.c.0.s8 %v7790
        %v7792 = vlaneseq
        %v7793 = vshrl.u32 %v7792, 7
        %v7794 = vsub.s32 %v7791, %v7793
        %v7795 = vrot.slane %v7779, %v7794
        %v7797 = vunpack.c.l.s4 1966171168
        %v7798 = vunpack.c.0.s8 %v7797
        %v7799 = vlaneseq
        %v7800 = vshrl.u32 %v7799, 7
        %v7801 = vsub.s32 %v7798, %v7800
        %v7802 = vrot.slane %v7786, %v7801
        %v7804 = vunpack.c.l.s4 1966171168
        %v7805 = vunpack.c.0.s8 %v7804
        %v7806 = vlaneseq
        %v7807 = vshrl.u32 %v7806, 7
        %v7808 = vsub.s32 %v7805, %v7807
        %v7809 = vrot.slane %v7787, %v7808
        %v7811 = vunpack.c.l.s4 1966171168
        %v7812 = vunpack.c.0.s8 %v7811
        %v7813 = vlaneseq
        %v7814 = vshrl.u32 %v7813, 7
        %v7815 = vsub.s32 %v7812, %v7814
        %v7816 = vrot.slane %v7788, %v7815
        %v7817 = vcombine.high %v7795, %v7795
        %v7818 = vcombine.high %v7802, %v7802
        %v7819 = vcombine.high %v7809, %v7809
        %v7820 = vcombine.high %v7816, %v7816
        %v7821 = vcombine.high %v6813, %v6813
        %v7823 = vunpack.c.l.s4 1966171168
        %v7824 = vunpack.c.0.s8 %v7823
        %v7825 = vlaneseq
        %v7826 = vshrl.u32 %v7825, 7
        %v7827 = vsub.s32 %v7824, %v7826
        %v7828 = vrot.slane %v6813, %v7827
        %v7830 = vunpack.c.l.s4 1966171168
        %v7831 = vunpack.c.0.s8 %v7830
        %v7832 = vlaneseq
        %v7833 = vshrl.u32 %v7832, 7
        %v7834 = vsub.s32 %v7831, %v7833
        %v7835 = vrot.slane %v7821, %v7834
        %v7836 = vcombine.high %v7828, %v7828
        %v7837 = vcombine.high %v7835, %v7835
        %v7839 = vunpack.c.l.s4 1966171168
        %v7840 = vunpack.c.0.s8 %v7839
        %v7841 = vlaneseq
        %v7842 = vshrl.u32 %v7841, 7
        %v7843 = vsub.s32 %v7840, %v7842
        %v7844 = vrot.slane %v7828, %v7843
        %v7846 = vunpack.c.l.s4 1966171168
        %v7847 = vunpack.c.0.s8 %v7846
        %v7848 = vlaneseq
        %v7849 = vshrl.u32 %v7848, 7
        %v7850 = vsub.s32 %v7847, %v7849
        %v7851 = vrot.slane %v7835, %v7850
        %v7853 = vunpack.c.l.s4 1966171168
        %v7854 = vunpack.c.0.s8 %v7853
        %v7855 = vlaneseq
        %v7856 = vshrl.u32 %v7855, 7
        %v7857 = vsub.s32 %v7854, %v7856
        %v7858 = vrot.slane %v7836, %v7857
        %v7860 = vunpack.c.l.s4 1966171168
        %v7861 = vunpack.c.0.s8 %v7860
        %v7862 = vlaneseq
        %v7863 = vshrl.u32 %v7862, 7
        %v7864 = vsub.s32 %v7861, %v7863
        %v7865 = vrot.slane %v7837, %v7864
        %v7866 = vcombine.high %v7844, %v7844
        %v7867 = vcombine.high %v7851, %v7851
        %v7868 = vcombine.high %v7858, %v7858
        %v7869 = vcombine.high %v7865, %v7865
        %v7870 = vcombine.high %v6814, %v6814
        %v7872 = vunpack.c.l.s4 1966171168
        %v7873 = vunpack.c.0.s8 %v7872
        %v7874 = vlaneseq
        %v7875 = vshrl.u32 %v7874, 7
        %v7876 = vsub.s32 %v7873, %v7875
        %v7877 = vrot.slane %v6814, %v7876
        %v7879 = vunpack.c.l.s4 1966171168
        %v7880 = vunpack.c.0.s8 %v7879
        %v7881 = vlaneseq
        %v7882 = vshrl.u32 %v7881, 7
        %v7883 = vsub.s32 %v7880, %v7882
        %v7884 = vrot.slane %v7870, %v7883
        %v7885 = vcombine.high %v7877, %v7877
        %v7886 = vcombine.high %v7884, %v7884
        %v7888 = vunpack.c.l.s4 1966171168
        %v7889 = vunpack.c.0.s8 %v7888
        %v7890 = vlaneseq
        %v7891 = vshrl.u32 %v7890, 7
        %v7892 = vsub.s32 %v7889, %v7891
        %v7893 = vrot.slane %v7877, %v7892
        %v7895 = vunpack.c.l.s4 1966171168
        %v7896 = vunpack.c.0.s8 %v7895
        %v7897 = vlaneseq
        %v7898 = vshrl.u32 %v7897, 7
        %v7899 = vsub.s32 %v7896, %v7898
        %v7900 = vrot.slane %v7884, %v7899
        %v7902 = vunpack.c.l.s4 1966171168
        %v7903 = vunpack.c.0.s8 %v7902
        %v7904 = vlaneseq
        %v7905 = vshrl.u32 %v7904, 7
        %v7906 = vsub.s32 %v7903, %v7905
        %v7907 = vrot.slane %v7885, %v7906
        %v7909 = vunpack.c.l.s4 1966171168
        %v7910 = vunpack.c.0.s8 %v7909
        %v7911 = vlaneseq
        %v7912 = vshrl.u32 %v7911, 7
        %v7913 = vsub.s32 %v7910, %v7912
        %v7914 = vrot.slane %v7886, %v7913
        %v7915 = vcombine.high %v7893, %v7893
        %v7916 = vcombine.high %v7900, %v7900
        %v7917 = vcombine.high %v7907, %v7907
        %v7918 = vcombine.high %v7914, %v7914
        %v7919 = vcombine.high %v6815, %v6815
        %v7921 = vunpack.c.l.s4 1966171168
        %v7922 = vunpack.c.0.s8 %v7921
        %v7923 = vlaneseq
        %v7924 = vshrl.u32 %v7923, 7
        %v7925 = vsub.s32 %v7922, %v7924
        %v7926 = vrot.slane %v6815, %v7925
        %v7928 = vunpack.c.l.s4 1966171168
        %v7929 = vunpack.c.0.s8 %v7928
        %v7930 = vlaneseq
        %v7931 = vshrl.u32 %v7930, 7
        %v7932 = vsub.s32 %v7929, %v7931
        %v7933 = vrot.slane %v7919, %v7932
        %v7934 = vcombine.high %v7926, %v7926
        %v7935 = vcombine.high %v7933, %v7933
        %v7937 = vunpack.c.l.s4 1966171168
        %v7938 = vunpack.c.0.s8 %v7937
        %v7939 = vlaneseq
        %v7940 = vshrl.u32 %v7939, 7
        %v7941 = vsub.s32 %v7938, %v7940
        %v7942 = vrot.slane %v7926, %v7941
        %v7944 = vunpack.c.l.s4 1966171168
        %v7945 = vunpack.c.0.s8 %v7944
        %v7946 = vlaneseq
        %v7947 = vshrl.u32 %v7946, 7
        %v7948 = vsub.s32 %v7945, %v7947
        %v7949 = vrot.slane %v7933, %v7948
        %v7951 = vunpack.c.l.s4 1966171168
        %v7952 = vunpack.c.0.s8 %v7951
        %v7953 = vlaneseq
        %v7954 = vshrl.u32 %v7953, 7
        %v7955 = vsub.s32 %v7952, %v7954
        %v7956 = vrot.slane %v7934, %v7955
        %v7958 = vunpack.c.l.s4 1966171168
        %v7959 = vunpack.c.0.s8 %v7958
        %v7960 = vlaneseq
        %v7961 = vshrl.u32 %v7960, 7
        %v7962 = vsub.s32 %v7959, %v7961
        %v7963 = vrot.slane %v7935, %v7962
        %v7964 = vcombine.high %v7942, %v7942
        %v7965 = vcombine.high %v7949, %v7949
        %v7966 = vcombine.high %v7956, %v7956
        %v7967 = vcombine.high %v7963, %v7963
        %v7968 = vcombine.high %v6816, %v6816
        %v7970 = vunpack.c.l.s4 1966171168
        %v7971 = vunpack.c.0.s8 %v7970
        %v7972 = vlaneseq
        %v7973 = vshrl.u32 %v7972, 7
        %v7974 = vsub.s32 %v7971, %v7973
        %v7975 = vrot.slane %v6816, %v7974
        %v7977 = vunpack.c.l.s4 1966171168
        %v7978 = vunpack.c.0.s8 %v7977
        %v7979 = vlaneseq
        %v7980 = vshrl.u32 %v7979, 7
        %v7981 = vsub.s32 %v7978, %v7980
        %v7982 = vrot.slane %v7968, %v7981
        %v7983 = vcombine.high %v7975, %v7975
        %v7984 = vcombine.high %v7982, %v7982
        %v7986 = vunpack.c.l.s4 1966171168
        %v7987 = vunpack.c.0.s8 %v7986
        %v7988 = vlaneseq
        %v7989 = vshrl.u32 %v7988, 7
        %v7990 = vsub.s32 %v7987, %v7989
        %v7991 = vrot.slane %v7975, %v7990
        %v7993 = vunpack.c.l.s4 1966171168
        %v7994 = vunpack.c.0.s8 %v7993
        %v7995 = vlaneseq
        %v7996 = vshrl.u32 %v7995, 7
        %v7997 = vsub.s32 %v7994, %v7996
        %v7998 = vrot.slane %v7982, %v7997
        %v8000 = vunpack.c.l.s4 1966171168
        %v8001 = vunpack.c.0.s8 %v8000
        %v8002 = vlaneseq
        %v8003 = vshrl.u32 %v8002, 7
        %v8004 = vsub.s32 %v8001, %v8003
        %v8005 = vrot.slane %v7983, %v8004
        %v8007 = vunpack.c.l.s4 1966171168
        %v8008 = vunpack.c.0.s8 %v8007
        %v8009 = vlaneseq
        %v8010 = vshrl.u32 %v8009, 7
        %v8011 = vsub.s32 %v8008, %v8010
        %v8012 = vrot.slane %v7984, %v8011
        %v8013 = vcombine.high %v7991, %v7991
        %v8014 = vcombine.high %v7998, %v7998
        %v8015 = vcombine.high %v8005, %v8005
        %v8016 = vcombine.high %v8012, %v8012
        %v8017 = vcombine.high %v6817, %v6817
        %v8019 = vunpack.c.l.s4 1966171168
        %v8020 = vunpack.c.0.s8 %v8019
        %v8021 = vlaneseq
        %v8022 = vshrl.u32 %v8021, 7
        %v8023 = vsub.s32 %v8020, %v8022
        %v8024 = vrot.slane %v6817, %v8023
        %v8026 = vunpack.c.l.s4 1966171168
        %v8027 = vunpack.c.0.s8 %v8026
        %v8028 = vlaneseq
        %v8029 = vshrl.u32 %v8028, 7
        %v8030 = vsub.s32 %v8027, %v8029
        %v8031 = vrot.slane %v8017, %v8030
        %v8032 = vcombine.high %v8024, %v8024
        %v8033 = vcombine.high %v8031, %v8031
        %v8035 = vunpack.c.l.s4 1966171168
        %v8036 = vunpack.c.0.s8 %v8035
        %v8037 = vlaneseq
        %v8038 = vshrl.u32 %v8037, 7
        %v8039 = vsub.s32 %v8036, %v8038
        %v8040 = vrot.slane %v8024, %v8039
        %v8042 = vunpack.c.l.s4 1966171168
        %v8043 = vunpack.c.0.s8 %v8042
        %v8044 = vlaneseq
        %v8045 = vshrl.u32 %v8044, 7
        %v8046 = vsub.s32 %v8043, %v8045
        %v8047 = vrot.slane %v8031, %v8046
        %v8049 = vunpack.c.l.s4 1966171168
        %v8050 = vunpack.c.0.s8 %v8049
        %v8051 = vlaneseq
        %v8052 = vshrl.u32 %v8051, 7
        %v8053 = vsub.s32 %v8050, %v8052
        %v8054 = vrot.slane %v8032, %v8053
        %v8056 = vunpack.c.l.s4 1966171168
        %v8057 = vunpack.c.0.s8 %v8056
        %v8058 = vlaneseq
        %v8059 = vshrl.u32 %v8058, 7
        %v8060 = vsub.s32 %v8057, %v8059
        %v8061 = vrot.slane %v8033, %v8060
        %v8062 = vcombine.high %v8040, %v8040
        %v8063 = vcombine.high %v8047, %v8047
        %v8064 = vcombine.high %v8054, %v8054
        %v8065 = vcombine.high %v8061, %v8061
        %v8066 = vcombine.high %v6818, %v6818
        %v8068 = vunpack.c.l.s4 1966171168
        %v8069 = vunpack.c.0.s8 %v8068
        %v8070 = vlaneseq
        %v8071 = vshrl.u32 %v8070, 7
        %v8072 = vsub.s32 %v8069, %v8071
        %v8073 = vrot.slane %v6818, %v8072
        %v8075 = vunpack.c.l.s4 1966171168
        %v8076 = vunpack.c.0.s8 %v8075
        %v8077 = vlaneseq
        %v8078 = vshrl.u32 %v8077, 7
        %v8079 = vsub.s32 %v8076, %v8078
        %v8080 = vrot.slane %v8066, %v8079
        %v8081 = vcombine.high %v8073, %v8073
        %v8082 = vcombine.high %v8080, %v8080
        %v8084 = vunpack.c.l.s4 1966171168
        %v8085 = vunpack.c.0.s8 %v8084
        %v8086 = vlaneseq
        %v8087 = vshrl.u32 %v8086, 7
        %v8088 = vsub.s32 %v8085, %v8087
        %v8089 = vrot.slane %v8073, %v8088
        %v8091 = vunpack.c.l.s4 1966171168
        %v8092 = vunpack.c.0.s8 %v8091
        %v8093 = vlaneseq
        %v8094 = vshrl.u32 %v8093, 7
        %v8095 = vsub.s32 %v8092, %v8094
        %v8096 = vrot.slane %v8080, %v8095
        %v8098 = vunpack.c.l.s4 1966171168
        %v8099 = vunpack.c.0.s8 %v8098
        %v8100 = vlaneseq
        %v8101 = vshrl.u32 %v8100, 7
        %v8102 = vsub.s32 %v8099, %v8101
        %v8103 = vrot.slane %v8081, %v8102
        %v8105 = vunpack.c.l.s4 1966171168
        %v8106 = vunpack.c.0.s8 %v8105
        %v8107 = vlaneseq
        %v8108 = vshrl.u32 %v8107, 7
        %v8109 = vsub.s32 %v8106, %v8108
        %v8110 = vrot.slane %v8082, %v8109
        %v8111 = vcombine.high %v8089, %v8089
        %v8112 = vcombine.high %v8096, %v8096
        %v8113 = vcombine.high %v8103, %v8103
        %v8114 = vcombine.high %v8110, %v8110
        %v8115 = vcombine.high %v6819, %v6819
        %v8117 = vunpack.c.l.s4 1966171168
        %v8118 = vunpack.c.0.s8 %v8117
        %v8119 = vlaneseq
        %v8120 = vshrl.u32 %v8119, 7
        %v8121 = vsub.s32 %v8118, %v8120
        %v8122 = vrot.slane %v6819, %v8121
        %v8124 = vunpack.c.l.s4 1966171168
        %v8125 = vunpack.c.0.s8 %v8124
        %v8126 = vlaneseq
        %v8127 = vshrl.u32 %v8126, 7
        %v8128 = vsub.s32 %v8125, %v8127
        %v8129 = vrot.slane %v8115, %v8128
        %v8130 = vcombine.high %v8122, %v8122
        %v8131 = vcombine.high %v8129, %v8129
        %v8133 = vunpack.c.l.s4 1966171168
        %v8134 = vunpack.c.0.s8 %v8133
        %v8135 = vlaneseq
        %v8136 = vshrl.u32 %v8135, 7
        %v8137 = vsub.s32 %v8134, %v8136
        %v8138 = vrot.slane %v8122, %v8137
        %v8140 = vunpack.c.l.s4 1966171168
        %v8141 = vunpack.c.0.s8 %v8140
        %v8142 = vlaneseq
        %v8143 = vshrl.u32 %v8142, 7
        %v8144 = vsub.s32 %v8141, %v8143
        %v8145 = vrot.slane %v8129, %v8144
        %v8147 = vunpack.c.l.s4 1966171168
        %v8148 = vunpack.c.0.s8 %v8147
        %v8149 = vlaneseq
        %v8150 = vshrl.u32 %v8149, 7
        %v8151 = vsub.s32 %v8148, %v8150
        %v8152 = vrot.slane %v8130, %v8151
        %v8154 = vunpack.c.l.s4 1966171168
        %v8155 = vunpack.c.0.s8 %v8154
        %v8156 = vlaneseq
        %v8157 = vshrl.u32 %v8156, 7
        %v8158 = vsub.s32 %v8155, %v8157
        %v8159 = vrot.slane %v8131, %v8158
        %v8160 = vcombine.high %v8138, %v8138
        %v8161 = vcombine.high %v8145, %v8145
        %v8162 = vcombine.high %v8152, %v8152
        %v8163 = vcombine.high %v8159, %v8159
        %v8164 = vcombine.high %v6820, %v6820
        %v8166 = vunpack.c.l.s4 1966171168
        %v8167 = vunpack.c.0.s8 %v8166
        %v8168 = vlaneseq
        %v8169 = vshrl.u32 %v8168, 7
        %v8170 = vsub.s32 %v8167, %v8169
        %v8171 = vrot.slane %v6820, %v8170
        %v8173 = vunpack.c.l.s4 1966171168
        %v8174 = vunpack.c.0.s8 %v8173
        %v8175 = vlaneseq
        %v8176 = vshrl.u32 %v8175, 7
        %v8177 = vsub.s32 %v8174, %v8176
        %v8178 = vrot.slane %v8164, %v8177
        %v8179 = vcombine.high %v8171, %v8171
        %v8180 = vcombine.high %v8178, %v8178
        %v8182 = vunpack.c.l.s4 1966171168
        %v8183 = vunpack.c.0.s8 %v8182
        %v8184 = vlaneseq
        %v8185 = vshrl.u32 %v8184, 7
        %v8186 = vsub.s32 %v8183, %v8185
        %v8187 = vrot.slane %v8171, %v8186
        %v8189 = vunpack.c.l.s4 1966171168
        %v8190 = vunpack.c.0.s8 %v8189
        %v8191 = vlaneseq
        %v8192 = vshrl.u32 %v8191, 7
        %v8193 = vsub.s32 %v8190, %v8192
        %v8194 = vrot.slane %v8178, %v8193
        %v8196 = vunpack.c.l.s4 1966171168
        %v8197 = vunpack.c.0.s8 %v8196
        %v8198 = vlaneseq
        %v8199 = vshrl.u32 %v8198, 7
        %v8200 = vsub.s32 %v8197, %v8199
        %v8201 = vrot.slane %v8179, %v8200
        %v8203 = vunpack.c.l.s4 1966171168
        %v8204 = vunpack.c.0.s8 %v8203
        %v8205 = vlaneseq
        %v8206 = vshrl.u32 %v8205, 7
        %v8207 = vsub.s32 %v8204, %v8206
        %v8208 = vrot.slane %v8180, %v8207
        %v8209 = vcombine.high %v8187, %v8187
        %v8210 = vcombine.high %v8194, %v8194
        %v8211 = vcombine.high %v8201, %v8201
        %v8212 = vcombine.high %v8208, %v8208
        %v8213 = vcombine.high %v6821, %v6821
        %v8215 = vunpack.c.l.s4 1966171168
        %v8216 = vunpack.c.0.s8 %v8215
        %v8217 = vlaneseq
        %v8218 = vshrl.u32 %v8217, 7
        %v8219 = vsub.s32 %v8216, %v8218
        %v8220 = vrot.slane %v6821, %v8219
        %v8222 = vunpack.c.l.s4 1966171168
        %v8223 = vunpack.c.0.s8 %v8222
        %v8224 = vlaneseq
        %v8225 = vshrl.u32 %v8224, 7
        %v8226 = vsub.s32 %v8223, %v8225
        %v8227 = vrot.slane %v8213, %v8226
        %v8228 = vcombine.high %v8220, %v8220
        %v8229 = vcombine.high %v8227, %v8227
        %v8231 = vunpack.c.l.s4 1966171168
        %v8232 = vunpack.c.0.s8 %v8231
        %v8233 = vlaneseq
        %v8234 = vshrl.u32 %v8233, 7
        %v8235 = vsub.s32 %v8232, %v8234
        %v8236 = vrot.slane %v8220, %v8235
        %v8238 = vunpack.c.l.s4 1966171168
        %v8239 = vunpack.c.0.s8 %v8238
        %v8240 = vlaneseq
        %v8241 = vshrl.u32 %v8240, 7
        %v8242 = vsub.s32 %v8239, %v8241
        %v8243 = vrot.slane %v8227, %v8242
        %v8245 = vunpack.c.l.s4 1966171168
        %v8246 = vunpack.c.0.s8 %v8245
        %v8247 = vlaneseq
        %v8248 = vshrl.u32 %v8247, 7
        %v8249 = vsub.s32 %v8246, %v8248
        %v8250 = vrot.slane %v8228, %v8249
        %v8252 = vunpack.c.l.s4 1966171168
        %v8253 = vunpack.c.0.s8 %v8252
        %v8254 = vlaneseq
        %v8255 = vshrl.u32 %v8254, 7
        %v8256 = vsub.s32 %v8253, %v8255
        %v8257 = vrot.slane %v8229, %v8256
        %v8258 = vcombine.high %v8236, %v8236
        %v8259 = vcombine.high %v8243, %v8243
        %v8260 = vcombine.high %v8250, %v8250
        %v8261 = vcombine.high %v8257, %v8257
        %v8262 = vcombine.high %v6822, %v6822
        %v8264 = vunpack.c.l.s4 1966171168
        %v8265 = vunpack.c.0.s8 %v8264
        %v8266 = vlaneseq
        %v8267 = vshrl.u32 %v8266, 7
        %v8268 = vsub.s32 %v8265, %v8267
        %v8269 = vrot.slane %v6822, %v8268
        %v8271 = vunpack.c.l.s4 1966171168
        %v8272 = vunpack.c.0.s8 %v8271
        %v8273 = vlaneseq
        %v8274 = vshrl.u32 %v8273, 7
        %v8275 = vsub.s32 %v8272, %v8274
        %v8276 = vrot.slane %v8262, %v8275
        %v8277 = vcombine.high %v8269, %v8269
        %v8278 = vcombine.high %v8276, %v8276
        %v8280 = vunpack.c.l.s4 1966171168
        %v8281 = vunpack.c.0.s8 %v8280
        %v8282 = vlaneseq
        %v8283 = vshrl.u32 %v8282, 7
        %v8284 = vsub.s32 %v8281, %v8283
        %v8285 = vrot.slane %v8269, %v8284
        %v8287 = vunpack.c.l.s4 1966171168
        %v8288 = vunpack.c.0.s8 %v8287
        %v8289 = vlaneseq
        %v8290 = vshrl.u32 %v8289, 7
        %v8291 = vsub.s32 %v8288, %v8290
        %v8292 = vrot.slane %v8276, %v8291
        %v8294 = vunpack.c.l.s4 1966171168
        %v8295 = vunpack.c.0.s8 %v8294
        %v8296 = vlaneseq
        %v8297 = vshrl.u32 %v8296, 7
        %v8298 = vsub.s32 %v8295, %v8297
        %v8299 = vrot.slane %v8277, %v8298
        %v8301 = vunpack.c.l.s4 1966171168
        %v8302 = vunpack.c.0.s8 %v8301
        %v8303 = vlaneseq
        %v8304 = vshrl.u32 %v8303, 7
        %v8305 = vsub.s32 %v8302, %v8304
        %v8306 = vrot.slane %v8278, %v8305
        %v8307 = vcombine.high %v8285, %v8285
        %v8308 = vcombine.high %v8292, %v8292
        %v8309 = vcombine.high %v8299, %v8299
        %v8310 = vcombine.high %v8306, %v8306
        %v8311 = vcombine.high %v6823, %v6823
        %v8313 = vunpack.c.l.s4 1966171168
        %v8314 = vunpack.c.0.s8 %v8313
        %v8315 = vlaneseq
        %v8316 = vshrl.u32 %v8315, 7
        %v8317 = vsub.s32 %v8314, %v8316
        %v8318 = vrot.slane %v6823, %v8317
        %v8320 = vunpack.c.l.s4 1966171168
        %v8321 = vunpack.c.0.s8 %v8320
        %v8322 = vlaneseq
        %v8323 = vshrl.u32 %v8322, 7
        %v8324 = vsub.s32 %v8321, %v8323
        %v8325 = vrot.slane %v8311, %v8324
        %v8326 = vcombine.high %v8318, %v8318
        %v8327 = vcombine.high %v8325, %v8325
        %v8329 = vunpack.c.l.s4 1966171168
        %v8330 = vunpack.c.0.s8 %v8329
        %v8331 = vlaneseq
        %v8332 = vshrl.u32 %v8331, 7
        %v8333 = vsub.s32 %v8330, %v8332
        %v8334 = vrot.slane %v8318, %v8333
        %v8336 = vunpack.c.l.s4 1966171168
        %v8337 = vunpack.c.0.s8 %v8336
        %v8338 = vlaneseq
        %v8339 = vshrl.u32 %v8338, 7
        %v8340 = vsub.s32 %v8337, %v8339
        %v8341 = vrot.slane %v8325, %v8340
        %v8343 = vunpack.c.l.s4 1966171168
        %v8344 = vunpack.c.0.s8 %v8343
        %v8345 = vlaneseq
        %v8346 = vshrl.u32 %v8345, 7
        %v8347 = vsub.s32 %v8344, %v8346
        %v8348 = vrot.slane %v8326, %v8347
        %v8350 = vunpack.c.l.s4 1966171168
        %v8351 = vunpack.c.0.s8 %v8350
        %v8352 = vlaneseq
        %v8353 = vshrl.u32 %v8352, 7
        %v8354 = vsub.s32 %v8351, %v8353
        %v8355 = vrot.slane %v8327, %v8354
        %v8356 = vcombine.high %v8334, %v8334
        %v8357 = vcombine.high %v8341, %v8341
        %v8358 = vcombine.high %v8348, %v8348
        %v8359 = vcombine.high %v8355, %v8355
        %v8360 = vcombine.high %v6824, %v6824
        %v8362 = vunpack.c.l.s4 1966171168
        %v8363 = vunpack.c.0.s8 %v8362
        %v8364 = vlaneseq
        %v8365 = vshrl.u32 %v8364, 7
        %v8366 = vsub.s32 %v8363, %v8365
        %v8367 = vrot.slane %v6824, %v8366
        %v8369 = vunpack.c.l.s4 1966171168
        %v8370 = vunpack.c.0.s8 %v8369
        %v8371 = vlaneseq
        %v8372 = vshrl.u32 %v8371, 7
        %v8373 = vsub.s32 %v8370, %v8372
        %v8374 = vrot.slane %v8360, %v8373
        %v8375 = vcombine.high %v8367, %v8367
        %v8376 = vcombine.high %v8374, %v8374
        %v8378 = vunpack.c.l.s4 1966171168
        %v8379 = vunpack.c.0.s8 %v8378
        %v8380 = vlaneseq
        %v8381 = vshrl.u32 %v8380, 7
        %v8382 = vsub.s32 %v8379, %v8381
        %v8383 = vrot.slane %v8367, %v8382
        %v8385 = vunpack.c.l.s4 1966171168
        %v8386 = vunpack.c.0.s8 %v8385
        %v8387 = vlaneseq
        %v8388 = vshrl.u32 %v8387, 7
        %v8389 = vsub.s32 %v8386, %v8388
        %v8390 = vrot.slane %v8374, %v8389
        %v8392 = vunpack.c.l.s4 1966171168
        %v8393 = vunpack.c.0.s8 %v8392
        %v8394 = vlaneseq
        %v8395 = vshrl.u32 %v8394, 7
        %v8396 = vsub.s32 %v8393, %v8395
        %v8397 = vrot.slane %v8375, %v8396
        %v8399 = vunpack.c.l.s4 1966171168
        %v8400 = vunpack.c.0.s8 %v8399
        %v8401 = vlaneseq
        %v8402 = vshrl.u32 %v8401, 7
        %v8403 = vsub.s32 %v8400, %v8402
        %v8404 = vrot.slane %v8376, %v8403
        %v8405 = vcombine.high %v8383, %v8383
        %v8406 = vcombine.high %v8390, %v8390
        %v8407 = vcombine.high %v8397, %v8397
        %v8408 = vcombine.high %v8404, %v8404
        %v8409 = vcombine.high %v6825, %v6825
        %v8411 = vunpack.c.l.s4 1966171168
        %v8412 = vunpack.c.0.s8 %v8411
        %v8413 = vlaneseq
        %v8414 = vshrl.u32 %v8413, 7
        %v8415 = vsub.s32 %v8412, %v8414
        %v8416 = vrot.slane %v6825, %v8415
        %v8418 = vunpack.c.l.s4 1966171168
        %v8419 = vunpack.c.0.s8 %v8418
        %v8420 = vlaneseq
        %v8421 = vshrl.u32 %v8420, 7
        %v8422 = vsub.s32 %v8419, %v8421
        %v8423 = vrot.slane %v8409, %v8422
        %v8424 = vcombine.high %v8416, %v8416
        %v8425 = vcombine.high %v8423, %v8423
        %v8427 = vunpack.c.l.s4 1966171168
        %v8428 = vunpack.c.0.s8 %v8427
        %v8429 = vlaneseq
        %v8430 = vshrl.u32 %v8429, 7
        %v8431 = vsub.s32 %v8428, %v8430
        %v8432 = vrot.slane %v8416, %v8431
        %v8434 = vunpack.c.l.s4 1966171168
        %v8435 = vunpack.c.0.s8 %v8434
        %v8436 = vlaneseq
        %v8437 = vshrl.u32 %v8436, 7
        %v8438 = vsub.s32 %v8435, %v8437
        %v8439 = vrot.slane %v8423, %v8438
        %v8441 = vunpack.c.l.s4 1966171168
        %v8442 = vunpack.c.0.s8 %v8441
        %v8443 = vlaneseq
        %v8444 = vshrl.u32 %v8443, 7
        %v8445 = vsub.s32 %v8442, %v8444
        %v8446 = vrot.slane %v8424, %v8445
        %v8448 = vunpack.c.l.s4 1966171168
        %v8449 = vunpack.c.0.s8 %v8448
        %v8450 = vlaneseq
        %v8451 = vshrl.u32 %v8450, 7
        %v8452 = vsub.s32 %v8449, %v8451
        %v8453 = vrot.slane %v8425, %v8452
        %v8454 = vcombine.high %v8432, %v8432
        %v8455 = vcombine.high %v8439, %v8439
        %v8456 = vcombine.high %v8446, %v8446
        %v8457 = vcombine.high %v8453, %v8453
        %v8458 = vcombine.high %v6826, %v6826
        %v8460 = vunpack.c.l.s4 1966171168
        %v8461 = vunpack.c.0.s8 %v8460
        %v8462 = vlaneseq
        %v8463 = vshrl.u32 %v8462, 7
        %v8464 = vsub.s32 %v8461, %v8463
        %v8465 = vrot.slane %v6826, %v8464
        %v8467 = vunpack.c.l.s4 1966171168
        %v8468 = vunpack.c.0.s8 %v8467
        %v8469 = vlaneseq
        %v8470 = vshrl.u32 %v8469, 7
        %v8471 = vsub.s32 %v8468, %v8470
        %v8472 = vrot.slane %v8458, %v8471
        %v8473 = vcombine.high %v8465, %v8465
        %v8474 = vcombine.high %v8472, %v8472
        %v8476 = vunpack.c.l.s4 1966171168
        %v8477 = vunpack.c.0.s8 %v8476
        %v8478 = vlaneseq
        %v8479 = vshrl.u32 %v8478, 7
        %v8480 = vsub.s32 %v8477, %v8479
        %v8481 = vrot.slane %v8465, %v8480
        %v8483 = vunpack.c.l.s4 1966171168
        %v8484 = vunpack.c.0.s8 %v8483
        %v8485 = vlaneseq
        %v8486 = vshrl.u32 %v8485, 7
        %v8487 = vsub.s32 %v8484, %v8486
        %v8488 = vrot.slane %v8472, %v8487
        %v8490 = vunpack.c.l.s4 1966171168
        %v8491 = vunpack.c.0.s8 %v8490
        %v8492 = vlaneseq
        %v8493 = vshrl.u32 %v8492, 7
        %v8494 = vsub.s32 %v8491, %v8493
        %v8495 = vrot.slane %v8473, %v8494
        %v8497 = vunpack.c.l.s4 1966171168
        %v8498 = vunpack.c.0.s8 %v8497
        %v8499 = vlaneseq
        %v8500 = vshrl.u32 %v8499, 7
        %v8501 = vsub.s32 %v8498, %v8500
        %v8502 = vrot.slane %v8474, %v8501
        %v8503 = vcombine.high %v8481, %v8481
        %v8504 = vcombine.high %v8488, %v8488
        %v8505 = vcombine.high %v8495, %v8495
        %v8506 = vcombine.high %v8502, %v8502
        %v8507 = vcombine.high %v6827, %v6827
        %v8509 = vunpack.c.l.s4 1966171168
        %v8510 = vunpack.c.0.s8 %v8509
        %v8511 = vlaneseq
        %v8512 = vshrl.u32 %v8511, 7
        %v8513 = vsub.s32 %v8510, %v8512
        %v8514 = vrot.slane %v6827, %v8513
        %v8516 = vunpack.c.l.s4 1966171168
        %v8517 = vunpack.c.0.s8 %v8516
        %v8518 = vlaneseq
        %v8519 = vshrl.u32 %v8518, 7
        %v8520 = vsub.s32 %v8517, %v8519
        %v8521 = vrot.slane %v8507, %v8520
        %v8522 = vcombine.high %v8514, %v8514
        %v8523 = vcombine.high %v8521, %v8521
        %v8525 = vunpack.c.l.s4 1966171168
        %v8526 = vunpack.c.0.s8 %v8525
        %v8527 = vlaneseq
        %v8528 = vshrl.u32 %v8527, 7
        %v8529 = vsub.s32 %v8526, %v8528
        %v8530 = vrot.slane %v8514, %v8529
        %v8532 = vunpack.c.l.s4 1966171168
        %v8533 = vunpack.c.0.s8 %v8532
        %v8534 = vlaneseq
        %v8535 = vshrl.u32 %v8534, 7
        %v8536 = vsub.s32 %v8533, %v8535
        %v8537 = vrot.slane %v8521, %v8536
        %v8539 = vunpack.c.l.s4 1966171168
        %v8540 = vunpack.c.0.s8 %v8539
        %v8541 = vlaneseq
        %v8542 = vshrl.u32 %v8541, 7
        %v8543 = vsub.s32 %v8540, %v8542
        %v8544 = vrot.slane %v8522, %v8543
        %v8546 = vunpack.c.l.s4 1966171168
        %v8547 = vunpack.c.0.s8 %v8546
        %v8548 = vlaneseq
        %v8549 = vshrl.u32 %v8548, 7
        %v8550 = vsub.s32 %v8547, %v8549
        %v8551 = vrot.slane %v8523, %v8550
        %v8552 = vcombine.high %v8530, %v8530
        %v8553 = vcombine.high %v8537, %v8537
        %v8554 = vcombine.high %v8544, %v8544
        %v8555 = vcombine.high %v8551, %v8551
        %v8556 = vlaneseq
        %v8557 = vshrl.u32 %v8556, 7
        %v8558 = vsub.s32 0, %v8557
        %v8559 = vrot.slane %v7795, %v8558
        %v8560 = vlaneseq
        %v8561 = vshrl.u32 %v8560, 7
        %v8562 = vsub.s32 0, %v8561
        %v8563 = vrot.slane %v7809, %v8562
        %v8564 = vlaneseq
        %v8565 = vshrl.u32 %v8564, 7
        %v8566 = vsub.s32 0, %v8565
        %v8567 = vrot.slane %v7817, %v8566
        %v8568 = vlaneseq
        %v8569 = vshrl.u32 %v8568, 7
        %v8570 = vsub.s32 0, %v8569
        %v8571 = vrot.slane %v7819, %v8570
        %v8572 = vlaneseq
        %v8573 = vshrl.u32 %v8572, 7
        %v8574 = vsub.s32 0, %v8573
        %v8575 = vrot.slane %v7802, %v8574
        %v8576 = vlaneseq
        %v8577 = vshrl.u32 %v8576, 7
        %v8578 = vsub.s32 0, %v8577
        %v8579 = vrot.slane %v7816, %v8578
        %v8580 = vlaneseq
        %v8581 = vshrl.u32 %v8580, 7
        %v8582 = vsub.s32 0, %v8581
        %v8583 = vrot.slane %v7818, %v8582
        %v8584 = vlaneseq
        %v8585 = vshrl.u32 %v8584, 7
        %v8586 = vsub.s32 0, %v8585
        %v8587 = vrot.slane %v7820, %v8586
        %v8588 = vlaneseq
        %v8589 = vshrl.u32 %v8588, 7
        %v8590 = vsub.s32 0, %v8589
        %v8591 = vrot.slane %v7844, %v8590
        %v8592 = vlaneseq
        %v8593 = vshrl.u32 %v8592, 7
        %v8594 = vsub.s32 0, %v8593
        %v8595 = vrot.slane %v7858, %v8594
        %v8596 = vlaneseq
        %v8597 = vshrl.u32 %v8596, 7
        %v8598 = vsub.s32 0, %v8597
        %v8599 = vrot.slane %v7866, %v8598
        %v8600 = vlaneseq
        %v8601 = vshrl.u32 %v8600, 7
        %v8602 = vsub.s32 0, %v8601
        %v8603 = vrot.slane %v7868, %v8602
        %v8604 = vlaneseq
        %v8605 = vshrl.u32 %v8604, 7
        %v8606 = vsub.s32 0, %v8605
        %v8607 = vrot.slane %v7851, %v8606
        %v8608 = vlaneseq
        %v8609 = vshrl.u32 %v8608, 7
        %v8610 = vsub.s32 0, %v8609
        %v8611 = vrot.slane %v7865, %v8610
        %v8612 = vlaneseq
        %v8613 = vshrl.u32 %v8612, 7
        %v8614 = vsub.s32 0, %v8613
        %v8615 = vrot.slane %v7867, %v8614
        %v8616 = vlaneseq
        %v8617 = vshrl.u32 %v8616, 7
        %v8618 = vsub.s32 0, %v8617
        %v8619 = vrot.slane %v7869, %v8618
        %v8620 = vlaneseq
        %v8621 = vshrl.u32 %v8620, 7
        %v8622 = vsub.s32 0, %v8621
        %v8623 = vrot.slane %v7893, %v8622
        %v8624 = vlaneseq
        %v8625 = vshrl.u32 %v8624, 7
        %v8626 = vsub.s32 0, %v8625
        %v8627 = vrot.slane %v7907, %v8626
        %v8628 = vlaneseq
        %v8629 = vshrl.u32 %v8628, 7
        %v8630 = vsub.s32 0, %v8629
        %v8631 = vrot.slane %v7915, %v8630
        %v8632 = vlaneseq
        %v8633 = vshrl.u32 %v8632, 7
        %v8634 = vsub.s32 0, %v8633
        %v8635 = vrot.slane %v7917, %v8634
        %v8636 = vlaneseq
        %v8637 = vshrl.u32 %v8636, 7
        %v8638 = vsub.s32 0, %v8637
        %v8639 = vrot.slane %v7900, %v8638
        %v8640 = vlaneseq
        %v8641 = vshrl.u32 %v8640, 7
        %v8642 = vsub.s32 0, %v8641
        %v8643 = vrot.slane %v7914, %v8642
        %v8644 = vlaneseq
        %v8645 = vshrl.u32 %v8644, 7
        %v8646 = vsub.s32 0, %v8645
        %v8647 = vrot.slane %v7916, %v8646
        %v8648 = vlaneseq
        %v8649 = vshrl.u32 %v8648, 7
        %v8650 = vsub.s32 0, %v8649
        %v8651 = vrot.slane %v7918, %v8650
        %v8652 = vlaneseq
        %v8653 = vshrl.u32 %v8652, 7
        %v8654 = vsub.s32 0, %v8653
        %v8655 = vrot.slane %v7942, %v8654
        %v8656 = vlaneseq
        %v8657 = vshrl.u32 %v8656, 7
        %v8658 = vsub.s32 0, %v8657
        %v8659 = vrot.slane %v7956, %v8658
        %v8660 = vlaneseq
        %v8661 = vshrl.u32 %v8660, 7
        %v8662 = vsub.s32 0, %v8661
        %v8663 = vrot.slane %v7964, %v8662
        %v8664 = vlaneseq
        %v8665 = vshrl.u32 %v8664, 7
        %v8666 = vsub.s32 0, %v8665
        %v8667 = vrot.slane %v7966, %v8666
        %v8668 = vlaneseq
        %v8669 = vshrl.u32 %v8668, 7
        %v8670 = vsub.s32 0, %v8669
        %v8671 = vrot.slane %v7949, %v8670
        %v8672 = vlaneseq
        %v8673 = vshrl.u32 %v8672, 7
        %v8674 = vsub.s32 0, %v8673
        %v8675 = vrot.slane %v7963, %v8674
        %v8676 = vlaneseq
        %v8677 = vshrl.u32 %v8676, 7
        %v8678 = vsub.s32 0, %v8677
        %v8679 = vrot.slane %v7965, %v8678
        %v8680 = vlaneseq
        %v8681 = vshrl.u32 %v8680, 7
        %v8682 = vsub.s32 0, %v8681
        %v8683 = vrot.slane %v7967, %v8682
        %v8684 = vlaneseq
        %v8685 = vshrl.u32 %v8684, 7
        %v8686 = vsub.s32 0, %v8685
        %v8687 = vrot.slane %v7991, %v8686
        %v8688 = vlaneseq
        %v8689 = vshrl.u32 %v8688, 7
        %v8690 = vsub.s32 0, %v8689
        %v8691 = vrot.slane %v8005, %v8690
        %v8692 = vlaneseq
        %v8693 = vshrl.u32 %v8692, 7
        %v8694 = vsub.s32 0, %v8693
        %v8695 = vrot.slane %v8013, %v8694
        %v8696 = vlaneseq
        %v8697 = vshrl.u32 %v8696, 7
        %v8698 = vsub.s32 0, %v8697
        %v8699 = vrot.slane %v8015, %v8698
        %v8700 = vlaneseq
        %v8701 = vshrl.u32 %v8700, 7
        %v8702 = vsub.s32 0, %v8701
        %v8703 = vrot.slane %v7998, %v8702
        %v8704 = vlaneseq
        %v8705 = vshrl.u32 %v8704, 7
        %v8706 = vsub.s32 0, %v8705
        %v8707 = vrot.slane %v8012, %v8706
        %v8708 = vlaneseq
        %v8709 = vshrl.u32 %v8708, 7
        %v8710 = vsub.s32 0, %v8709
        %v8711 = vrot.slane %v8014, %v8710
        %v8712 = vlaneseq
        %v8713 = vshrl.u32 %v8712, 7
        %v8714 = vsub.s32 0, %v8713
        %v8715 = vrot.slane %v8016, %v8714
        %v8716 = vlaneseq
        %v8717 = vshrl.u32 %v8716, 7
        %v8718 = vsub.s32 0, %v8717
        %v8719 = vrot.slane %v8040, %v8718
        %v8720 = vlaneseq
        %v8721 = vshrl.u32 %v8720, 7
        %v8722 = vsub.s32 0, %v8721
        %v8723 = vrot.slane %v8054, %v8722
        %v8724 = vlaneseq
        %v8725 = vshrl.u32 %v8724, 7
        %v8726 = vsub.s32 0, %v8725
        %v8727 = vrot.slane %v8062, %v8726
        %v8728 = vlaneseq
        %v8729 = vshrl.u32 %v8728, 7
        %v8730 = vsub.s32 0, %v8729
        %v8731 = vrot.slane %v8064, %v8730
        %v8732 = vlaneseq
        %v8733 = vshrl.u32 %v8732, 7
        %v8734 = vsub.s32 0, %v8733
        %v8735 = vrot.slane %v8047, %v8734
        %v8736 = vlaneseq
        %v8737 = vshrl.u32 %v8736, 7
        %v8738 = vsub.s32 0, %v8737
        %v8739 = vrot.slane %v8061, %v8738
        %v8740 = vlaneseq
        %v8741 = vshrl.u32 %v8740, 7
        %v8742 = vsub.s32 0, %v8741
        %v8743 = vrot.slane %v8063, %v8742
        %v8744 = vlaneseq
        %v8745 = vshrl.u32 %v8744, 7
        %v8746 = vsub.s32 0, %v8745
        %v8747 = vrot.slane %v8065, %v8746
        %v8748 = vlaneseq
        %v8749 = vshrl.u32 %v8748, 7
        %v8750 = vsub.s32 0, %v8749
        %v8751 = vrot.slane %v8089, %v8750
        %v8752 = vlaneseq
        %v8753 = vshrl.u32 %v8752, 7
        %v8754 = vsub.s32 0, %v8753
        %v8755 = vrot.slane %v8103, %v8754
        %v8756 = vlaneseq
        %v8757 = vshrl.u32 %v8756, 7
        %v8758 = vsub.s32 0, %v8757
        %v8759 = vrot.slane %v8111, %v8758
        %v8760 = vlaneseq
        %v8761 = vshrl.u32 %v8760, 7
        %v8762 = vsub.s32 0, %v8761
        %v8763 = vrot.slane %v8113, %v8762
        %v8764 = vlaneseq
        %v8765 = vshrl.u32 %v8764, 7
        %v8766 = vsub.s32 0, %v8765
        %v8767 = vrot.slane %v8096, %v8766
        %v8768 = vlaneseq
        %v8769 = vshrl.u32 %v8768, 7
        %v8770 = vsub.s32 0, %v8769
        %v8771 = vrot.slane %v8110, %v8770
        %v8772 = vlaneseq
        %v8773 = vshrl.u32 %v8772, 7
        %v8774 = vsub.s32 0, %v8773
        %v8775 = vrot.slane %v8112, %v8774
        %v8776 = vlaneseq
        %v8777 = vshrl.u32 %v8776, 7
        %v8778 = vsub.s32 0, %v8777
        %v8779 = vrot.slane %v8114, %v8778
        %v8780 = vlaneseq
        %v8781 = vshrl.u32 %v8780, 7
        %v8782 = vsub.s32 0, %v8781
        %v8783 = vrot.slane %v8138, %v8782
        %v8784 = vlaneseq
        %v8785 = vshrl.u32 %v8784, 7
        %v8786 = vsub.s32 0, %v8785
        %v8787 = vrot.slane %v8152, %v8786
        %v8788 = vlaneseq
        %v8789 = vshrl.u32 %v8788, 7
        %v8790 = vsub.s32 0, %v8789
        %v8791 = vrot.slane %v8160, %v8790
        %v8792 = vlaneseq
        %v8793 = vshrl.u32 %v8792, 7
        %v8794 = vsub.s32 0, %v8793
        %v8795 = vrot.slane %v8162, %v8794
        %v8796 = vlaneseq
        %v8797 = vshrl.u32 %v8796, 7
        %v8798 = vsub.s32 0, %v8797
        %v8799 = vrot.slane %v8145, %v8798
        %v8800 = vlaneseq
        %v8801 = vshrl.u32 %v8800, 7
        %v8802 = vsub.s32 0, %v8801
        %v8803 = vrot.slane %v8159, %v8802
        %v8804 = vlaneseq
        %v8805 = vshrl.u32 %v8804, 7
        %v8806 = vsub.s32 0, %v8805
        %v8807 = vrot.slane %v8161, %v8806
        %v8808 = vlaneseq
        %v8809 = vshrl.u32 %v8808, 7
        %v8810 = vsub.s32 0, %v8809
        %v8811 = vrot.slane %v8163, %v8810
        %v8812 = vlaneseq
        %v8813 = vshrl.u32 %v8812, 7
        %v8814 = vsub.s32 0, %v8813
        %v8815 = vrot.slane %v8187, %v8814
        %v8816 = vlaneseq
        %v8817 = vshrl.u32 %v8816, 7
        %v8818 = vsub.s32 0, %v8817
        %v8819 = vrot.slane %v8201, %v8818
        %v8820 = vlaneseq
        %v8821 = vshrl.u32 %v8820, 7
        %v8822 = vsub.s32 0, %v8821
        %v8823 = vrot.slane %v8209, %v8822
        %v8824 = vlaneseq
        %v8825 = vshrl.u32 %v8824, 7
        %v8826 = vsub.s32 0, %v8825
        %v8827 = vrot.slane %v8211, %v8826
        %v8828 = vlaneseq
        %v8829 = vshrl.u32 %v8828, 7
        %v8830 = vsub.s32 0, %v8829
        %v8831 = vrot.slane %v8194, %v8830
        %v8832 = vlaneseq
        %v8833 = vshrl.u32 %v8832, 7
        %v8834 = vsub.s32 0, %v8833
        %v8835 = vrot.slane %v8208, %v8834
        %v8836 = vlaneseq
        %v8837 = vshrl.u32 %v8836, 7
        %v8838 = vsub.s32 0, %v8837
        %v8839 = vrot.slane %v8210, %v8838
        %v8840 = vlaneseq
        %v8841 = vshrl.u32 %v8840, 7
        %v8842 = vsub.s32 0, %v8841
        %v8843 = vrot.slane %v8212, %v8842
        %v8844 = vlaneseq
        %v8845 = vshrl.u32 %v8844, 7
        %v8846 = vsub.s32 0, %v8845
        %v8847 = vrot.slane %v8236, %v8846
        %v8848 = vlaneseq
        %v8849 = vshrl.u32 %v8848, 7
        %v8850 = vsub.s32 0, %v8849
        %v8851 = vrot.slane %v8250, %v8850
        %v8852 = vlaneseq
        %v8853 = vshrl.u32 %v8852, 7
        %v8854 = vsub.s32 0, %v8853
        %v8855 = vrot.slane %v8258, %v8854
        %v8856 = vlaneseq
        %v8857 = vshrl.u32 %v8856, 7
        %v8858 = vsub.s32 0, %v8857
        %v8859 = vrot.slane %v8260, %v8858
        %v8860 = vlaneseq
        %v8861 = vshrl.u32 %v8860, 7
        %v8862 = vsub.s32 0, %v8861
        %v8863 = vrot.slane %v8243, %v8862
        %v8864 = vlaneseq
        %v8865 = vshrl.u32 %v8864, 7
        %v8866 = vsub.s32 0, %v8865
        %v8867 = vrot.slane %v8257, %v8866
        %v8868 = vlaneseq
        %v8869 = vshrl.u32 %v8868, 7
        %v8870 = vsub.s32 0, %v8869
        %v8871 = vrot.slane %v8259, %v8870
        %v8872 = vlaneseq
        %v8873 = vshrl.u32 %v8872, 7
        %v8874 = vsub.s32 0, %v8873
        %v8875 = vrot.slane %v8261, %v8874
        %v8876 = vlaneseq
        %v8877 = vshrl.u32 %v8876, 7
        %v8878 = vsub.s32 0, %v8877
        %v8879 = vrot.slane %v8285, %v8878
        %v8880 = vlaneseq
        %v8881 = vshrl.u32 %v8880, 7
        %v8882 = vsub.s32 0, %v8881
        %v8883 = vrot.slane %v8299, %v8882
        %v8884 = vlaneseq
        %v8885 = vshrl.u32 %v8884, 7
        %v8886 = vsub.s32 0, %v8885
        %v8887 = vrot.slane %v8307, %v8886
        %v8888 = vlaneseq
        %v8889 = vshrl.u32 %v8888, 7
        %v8890 = vsub.s32 0, %v8889
        %v8891 = vrot.slane %v8309, %v8890
        %v8892 = vlaneseq
        %v8893 = vshrl.u32 %v8892, 7
        %v8894 = vsub.s32 0, %v8893
        %v8895 = vrot.slane %v8292, %v8894
        %v8896 = vlaneseq
        %v8897 = vshrl.u32 %v8896, 7
        %v8898 = vsub.s32 0, %v8897
        %v8899 = vrot.slane %v8306, %v8898
        %v8900 = vlaneseq
        %v8901 = vshrl.u32 %v8900, 7
        %v8902 = vsub.s32 0, %v8901
        %v8903 = vrot.slane %v8308, %v8902
        %v8904 = vlaneseq
        %v8905 = vshrl.u32 %v8904, 7
        %v8906 = vsub.s32 0, %v8905
        %v8907 = vrot.slane %v8310, %v8906
        %v8908 = vlaneseq
        %v8909 = vshrl.u32 %v8908, 7
        %v8910 = vsub.s32 0, %v8909
        %v8911 = vrot.slane %v8334, %v8910
        %v8912 = vlaneseq
        %v8913 = vshrl.u32 %v8912, 7
        %v8914 = vsub.s32 0, %v8913
        %v8915 = vrot.slane %v8348, %v8914
        %v8916 = vlaneseq
        %v8917 = vshrl.u32 %v8916, 7
        %v8918 = vsub.s32 0, %v8917
        %v8919 = vrot.slane %v8356, %v8918
        %v8920 = vlaneseq
        %v8921 = vshrl.u32 %v8920, 7
        %v8922 = vsub.s32 0, %v8921
        %v8923 = vrot.slane %v8358, %v8922
        %v8924 = vlaneseq
        %v8925 = vshrl.u32 %v8924, 7
        %v8926 = vsub.s32 0, %v8925
        %v8927 = vrot.slane %v8341, %v8926
        %v8928 = vlaneseq
        %v8929 = vshrl.u32 %v8928, 7
        %v8930 = vsub.s32 0, %v8929
        %v8931 = vrot.slane %v8355, %v8930
        %v8932 = vlaneseq
        %v8933 = vshrl.u32 %v8932, 7
        %v8934 = vsub.s32 0, %v8933
        %v8935 = vrot.slane %v8357, %v8934
        %v8936 = vlaneseq
        %v8937 = vshrl.u32 %v8936, 7
        %v8938 = vsub.s32 0, %v8937
        %v8939 = vrot.slane %v8359, %v8938
        %v8940 = vlaneseq
        %v8941 = vshrl.u32 %v8940, 7
        %v8942 = vsub.s32 0, %v8941
        %v8943 = vrot.slane %v8383, %v8942
        %v8944 = vlaneseq
        %v8945 = vshrl.u32 %v8944, 7
        %v8946 = vsub.s32 0, %v8945
        %v8947 = vrot.slane %v8397, %v8946
        %v8948 = vlaneseq
        %v8949 = vshrl.u32 %v8948, 7
        %v8950 = vsub.s32 0, %v8949
        %v8951 = vrot.slane %v8405, %v8950
        %v8952 = vlaneseq
        %v8953 = vshrl.u32 %v8952, 7
        %v8954 = vsub.s32 0, %v8953
        %v8955 = vrot.slane %v8407, %v8954
        %v8956 = vlaneseq
        %v8957 = vshrl.u32 %v8956, 7
        %v8958 = vsub.s32 0, %v8957
        %v8959 = vrot.slane %v8390, %v8958
        %v8960 = vlaneseq
        %v8961 = vshrl.u32 %v8960, 7
        %v8962 = vsub.s32 0, %v8961
        %v8963 = vrot.slane %v8404, %v8962
        %v8964 = vlaneseq
        %v8965 = vshrl.u32 %v8964, 7
        %v8966 = vsub.s32 0, %v8965
        %v8967 = vrot.slane %v8406, %v8966
        %v8968 = vlaneseq
        %v8969 = vshrl.u32 %v8968, 7
        %v8970 = vsub.s32 0, %v8969
        %v8971 = vrot.slane %v8408, %v8970
        %v8972 = vlaneseq
        %v8973 = vshrl.u32 %v8972, 7
        %v8974 = vsub.s32 0, %v8973
        %v8975 = vrot.slane %v8432, %v8974
        %v8976 = vlaneseq
        %v8977 = vshrl.u32 %v8976, 7
        %v8978 = vsub.s32 0, %v8977
        %v8979 = vrot.slane %v8446, %v8978
        %v8980 = vlaneseq
        %v8981 = vshrl.u32 %v8980, 7
        %v8982 = vsub.s32 0, %v8981
        %v8983 = vrot.slane %v8454, %v8982
        %v8984 = vlaneseq
        %v8985 = vshrl.u32 %v8984, 7
        %v8986 = vsub.s32 0, %v8985
        %v8987 = vrot.slane %v8456, %v8986
        %v8988 = vlaneseq
        %v8989 = vshrl.u32 %v8988, 7
        %v8990 = vsub.s32 0, %v8989
        %v8991 = vrot.slane %v8439, %v8990
        %v8992 = vlaneseq
        %v8993 = vshrl.u32 %v8992, 7
        %v8994 = vsub.s32 0, %v8993
        %v8995 = vrot.slane %v8453, %v8994
        %v8996 = vlaneseq
        %v8997 = vshrl.u32 %v8996, 7
        %v8998 = vsub.s32 0, %v8997
        %v8999 = vrot.slane %v8455, %v8998
        %v9000 = vlaneseq
        %v9001 = vshrl.u32 %v9000, 7
        %v9002 = vsub.s32 0, %v9001
        %v9003 = vrot.slane %v8457, %v9002
        %v9004 = vlaneseq
        %v9005 = vshrl.u32 %v9004, 7
        %v9006 = vsub.s32 0, %v9005
        %v9007 = vrot.slane %v8481, %v9006
        %v9008 = vlaneseq
        %v9009 = vshrl.u32 %v9008, 7
        %v9010 = vsub.s32 0, %v9009
        %v9011 = vrot.slane %v8495, %v9010
        %v9012 = vlaneseq
        %v9013 = vshrl.u32 %v9012, 7
        %v9014 = vsub.s32 0, %v9013
        %v9015 = vrot.slane %v8503, %v9014
        %v9016 = vlaneseq
        %v9017 = vshrl.u32 %v9016, 7
        %v9018 = vsub.s32 0, %v9017
        %v9019 = vrot.slane %v8505, %v9018
        %v9020 = vlaneseq
        %v9021 = vshrl.u32 %v9020, 7
        %v9022 = vsub.s32 0, %v9021
        %v9023 = vrot.slane %v8488, %v9022
        %v9024 = vlaneseq
        %v9025 = vshrl.u32 %v9024, 7
        %v9026 = vsub.s32 0, %v9025
        %v9027 = vrot.slane %v8502, %v9026
        %v9028 = vlaneseq
        %v9029 = vshrl.u32 %v9028, 7
        %v9030 = vsub.s32 0, %v9029
        %v9031 = vrot.slane %v8504, %v9030
        %v9032 = vlaneseq
        %v9033 = vshrl.u32 %v9032, 7
        %v9034 = vsub.s32 0, %v9033
        %v9035 = vrot.slane %v8506, %v9034
        %v9036 = vlaneseq
        %v9037 = vshrl.u32 %v9036, 7
        %v9038 = vsub.s32 0, %v9037
        %v9039 = vrot.slane %v8530, %v9038
        %v9040 = vlaneseq
        %v9041 = vshrl.u32 %v9040, 7
        %v9042 = vsub.s32 0, %v9041
        %v9043 = vrot.slane %v8544, %v9042
        %v9044 = vlaneseq
        %v9045 = vshrl.u32 %v9044, 7
        %v9046 = vsub.s32 0, %v9045
        %v9047 = vrot.slane %v8552, %v9046
        %v9048 = vlaneseq
        %v9049 = vshrl.u32 %v9048, 7
        %v9050 = vsub.s32 0, %v9049
        %v9051 = vrot.slane %v8554, %v9050
        %v9052 = vlaneseq
        %v9053 = vshrl.u32 %v9052, 7
        %v9054 = vsub.s32 0, %v9053
        %v9055 = vrot.slane %v8537, %v9054
        %v9056 = vlaneseq
        %v9057 = vshrl.u32 %v9056, 7
        %v9058 = vsub.s32 0, %v9057
        %v9059 = vrot.slane %v8551, %v9058
        %v9060 = vlaneseq
        %v9061 = vshrl.u32 %v9060, 7
        %v9062 = vsub.s32 0, %v9061
        %v9063 = vrot.slane %v8553, %v9062
        %v9064 = vlaneseq
        %v9065 = vshrl.u32 %v9064, 7
        %v9066 = vsub.s32 0, %v9065
        %v9067 = vrot.slane %v8555, %v9066
        %v9196 = vsel %vm781, %v6867, %v8559
        %v9197 = vsel %vm781, %v6881, %v8563
        %v9198 = vsel %vm781, %v6889, %v8567
        %v9199 = vsel %vm781, %v6891, %v8571
        %v9200 = vsel %vm781, %v6874, %v8575
        %v9201 = vsel %vm781, %v6888, %v8579
        %v9202 = vsel %vm781, %v6890, %v8583
        %v9203 = vsel %vm781, %v6892, %v8587
        %v9204 = vsel %vm781, %v6916, %v8591
        %v9205 = vsel %vm781, %v6930, %v8595
        %v9206 = vsel %vm781, %v6938, %v8599
        %v9207 = vsel %vm781, %v6940, %v8603
        %v9208 = vsel %vm781, %v6923, %v8607
        %v9209 = vsel %vm781, %v6937, %v8611
        %v9210 = vsel %vm781, %v6939, %v8615
        %v9211 = vsel %vm781, %v6941, %v8619
        %v9212 = vsel %vm781, %v6965, %v8623
        %v9213 = vsel %vm781, %v6979, %v8627
        %v9214 = vsel %vm781, %v6987, %v8631
        %v9215 = vsel %vm781, %v6989, %v8635
        %v9216 = vsel %vm781, %v6972, %v8639
        %v9217 = vsel %vm781, %v6986, %v8643
        %v9218 = vsel %vm781, %v6988, %v8647
        %v9219 = vsel %vm781, %v6990, %v8651
        %v9220 = vsel %vm781, %v7014, %v8655
        %v9221 = vsel %vm781, %v7028, %v8659
        %v9222 = vsel %vm781, %v7036, %v8663
        %v9223 = vsel %vm781, %v7038, %v8667
        %v9224 = vsel %vm781, %v7021, %v8671
        %v9225 = vsel %vm781, %v7035, %v8675
        %v9226 = vsel %vm781, %v7037, %v8679
        %v9227 = vsel %vm781, %v7039, %v8683
        %v9228 = vsel %vm781, %v7063, %v8687
        %v9229 = vsel %vm781, %v7077, %v8691
        %v9230 = vsel %vm781, %v7085, %v8695
        %v9231 = vsel %vm781, %v7087, %v8699
        %v9232 = vsel %vm781, %v7070, %v8703
        %v9233 = vsel %vm781, %v7084, %v8707
        %v9234 = vsel %vm781, %v7086, %v8711
        %v9235 = vsel %vm781, %v7088, %v8715
        %v9236 = vsel %vm781, %v7112, %v8719
        %v9237 = vsel %vm781, %v7126, %v8723
        %v9238 = vsel %vm781, %v7134, %v8727
        %v9239 = vsel %vm781, %v7136, %v8731
        %v9240 = vsel %vm781, %v7119, %v8735
        %v9241 = vsel %vm781, %v7133, %v8739
        %v9242 = vsel %vm781, %v7135, %v8743
        %v9243 = vsel %vm781, %v7137, %v8747
        %v9244 = vsel %vm781, %v7161, %v8751
        %v9245 = vsel %vm781, %v7175, %v8755
        %v9246 = vsel %vm781, %v7183, %v8759
        %v9247 = vsel %vm781, %v7185, %v8763
        %v9248 = vsel %vm781, %v7168, %v8767
        %v9249 = vsel %vm781, %v7182, %v8771
        %v9250 = vsel %vm781, %v7184, %v8775
        %v9251 = vsel %vm781, %v7186, %v8779
        %v9252 = vsel %vm781, %v7210, %v8783
        %v9253 = vsel %vm781, %v7224, %v8787
        %v9254 = vsel %vm781, %v7232, %v8791
        %v9255 = vsel %vm781, %v7234, %v8795
        %v9256 = vsel %vm781, %v7217, %v8799
        %v9257 = vsel %vm781, %v7231, %v8803
        %v9258 = vsel %vm781, %v7233, %v8807
        %v9259 = vsel %vm781, %v7235, %v8811
        %v9260 = vsel %vm781, %v7259, %v8815
        %v9261 = vsel %vm781, %v7273, %v8819
        %v9262 = vsel %vm781, %v7281, %v8823
        %v9263 = vsel %vm781, %v7283, %v8827
        %v9264 = vsel %vm781, %v7266, %v8831
        %v9265 = vsel %vm781, %v7280, %v8835
        %v9266 = vsel %vm781, %v7282, %v8839
        %v9267 = vsel %vm781, %v7284, %v8843
        %v9268 = vsel %vm781, %v7308, %v8847
        %v9269 = vsel %vm781, %v7322, %v8851
        %v9270 = vsel %vm781, %v7330, %v8855
        %v9271 = vsel %vm781, %v7332, %v8859
        %v9272 = vsel %vm781, %v7315, %v8863
        %v9273 = vsel %vm781, %v7329, %v8867
        %v9274 = vsel %vm781, %v7331, %v8871
        %v9275 = vsel %vm781, %v7333, %v8875
        %v9276 = vsel %vm781, %v7357, %v8879
        %v9277 = vsel %vm781, %v7371, %v8883
        %v9278 = vsel %vm781, %v7379, %v8887
        %v9279 = vsel %vm781, %v7381, %v8891
        %v9280 = vsel %vm781, %v7364, %v8895
        %v9281 = vsel %vm781, %v7378, %v8899
        %v9282 = vsel %vm781, %v7380, %v8903
        %v9283 = vsel %vm781, %v7382, %v8907
        %v9284 = vsel %vm781, %v7406, %v8911
        %v9285 = vsel %vm781, %v7420, %v8915
        %v9286 = vsel %vm781, %v7428, %v8919
        %v9287 = vsel %vm781, %v7430, %v8923
        %v9288 = vsel %vm781, %v7413, %v8927
        %v9289 = vsel %vm781, %v7427, %v8931
        %v9290 = vsel %vm781, %v7429, %v8935
        %v9291 = vsel %vm781, %v7431, %v8939
        %v9292 = vsel %vm781, %v7455, %v8943
        %v9293 = vsel %vm781, %v7469, %v8947
        %v9294 = vsel %vm781, %v7477, %v8951
        %v9295 = vsel %vm781, %v7479, %v8955
        %v9296 = vsel %vm781, %v7462, %v8959
        %v9297 = vsel %vm781, %v7476, %v8963
        %v9298 = vsel %vm781, %v7478, %v8967
        %v9299 = vsel %vm781, %v7480, %v8971
        %v9300 = vsel %vm781, %v7504, %v8975
        %v9301 = vsel %vm781, %v7518, %v8979
        %v9302 = vsel %vm781, %v7526, %v8983
        %v9303 = vsel %vm781, %v7528, %v8987
        %v9304 = vsel %vm781, %v7511, %v8991
        %v9305 = vsel %vm781, %v7525, %v8995
        %v9306 = vsel %vm781, %v7527, %v8999
        %v9307 = vsel %vm781, %v7529, %v9003
        %v9308 = vsel %vm781, %v7553, %v9007
        %v9309 = vsel %vm781, %v7567, %v9011
        %v9310 = vsel %vm781, %v7575, %v9015
        %v9311 = vsel %vm781, %v7577, %v9019
        %v9312 = vsel %vm781, %v7560, %v9023
        %v9313 = vsel %vm781, %v7574, %v9027
        %v9314 = vsel %vm781, %v7576, %v9031
        %v9315 = vsel %vm781, %v7578, %v9035
        %v9316 = vsel %vm781, %v7602, %v9039
        %v9317 = vsel %vm781, %v7616, %v9043
        %v9318 = vsel %vm781, %v7624, %v9047
        %v9319 = vsel %vm781, %v7626, %v9051
        %v9320 = vsel %vm781, %v7609, %v9055
        %v9321 = vsel %vm781, %v7623, %v9059
        %v9322 = vsel %vm781, %v7625, %v9063
        %v9323 = vsel %vm781, %v7627, %v9067
        %v9452 = vcombine.low %v9196, %v9197
        %v9453 = vcombine.low %v9198, %v9199
        %v9455 = vunpack.c.l.s4 1983009808
        %v9456 = vunpack.c.0.s8 %v9455
        %v9457 = vlaneseq
        %v9458 = vshrl.u32 %v9457, 7
        %v9459 = vsub.s32 %v9456, %v9458
        %v9460 = vrot.slane %v9452, %v9459
        %v9462 = vunpack.c.l.s4 1983009808
        %v9463 = vunpack.c.0.s8 %v9462
        %v9464 = vlaneseq
        %v9465 = vshrl.u32 %v9464, 7
        %v9466 = vsub.s32 %v9463, %v9465
        %v9467 = vrot.slane %v9453, %v9466
        %v9468 = vcombine.low %v9460, %v9467
        %v9469 = vcombine.low %v9200, %v9201
        %v9470 = vcombine.low %v9202, %v9203
        %v9472 = vunpack.c.l.s4 1983009808
        %v9473 = vunpack.c.0.s8 %v9472
        %v9474 = vlaneseq
        %v9475 = vshrl.u32 %v9474, 7
        %v9476 = vsub.s32 %v9473, %v9475
        %v9477 = vrot.slane %v9469, %v9476
        %v9479 = vunpack.c.l.s4 1983009808
        %v9480 = vunpack.c.0.s8 %v9479
        %v9481 = vlaneseq
        %v9482 = vshrl.u32 %v9481, 7
        %v9483 = vsub.s32 %v9480, %v9482
        %v9484 = vrot.slane %v9470, %v9483
        %v9485 = vcombine.low %v9477, %v9484
        %v9486 = vcombine.low %v9204, %v9205
        %v9487 = vcombine.low %v9206, %v9207
        %v9489 = vunpack.c.l.s4 1983009808
        %v9490 = vunpack.c.0.s8 %v9489
        %v9491 = vlaneseq
        %v9492 = vshrl.u32 %v9491, 7
        %v9493 = vsub.s32 %v9490, %v9492
        %v9494 = vrot.slane %v9486, %v9493
        %v9496 = vunpack.c.l.s4 1983009808
        %v9497 = vunpack.c.0.s8 %v9496
        %v9498 = vlaneseq
        %v9499 = vshrl.u32 %v9498, 7
        %v9500 = vsub.s32 %v9497, %v9499
        %v9501 = vrot.slane %v9487, %v9500
        %v9502 = vcombine.low %v9494, %v9501
        %v9503 = vcombine.low %v9208, %v9209
        %v9504 = vcombine.low %v9210, %v9211
        %v9506 = vunpack.c.l.s4 1983009808
        %v9507 = vunpack.c.0.s8 %v9506
        %v9508 = vlaneseq
        %v9509 = vshrl.u32 %v9508, 7
        %v9510 = vsub.s32 %v9507, %v9509
        %v9511 = vrot.slane %v9503, %v9510
        %v9513 = vunpack.c.l.s4 1983009808
        %v9514 = vunpack.c.0.s8 %v9513
        %v9515 = vlaneseq
        %v9516 = vshrl.u32 %v9515, 7
        %v9517 = vsub.s32 %v9514, %v9516
        %v9518 = vrot.slane %v9504, %v9517
        %v9519 = vcombine.low %v9511, %v9518
        %v9520 = vcombine.low %v9212, %v9213
        %v9521 = vcombine.low %v9214, %v9215
        %v9523 = vunpack.c.l.s4 1983009808
        %v9524 = vunpack.c.0.s8 %v9523
        %v9525 = vlaneseq
        %v9526 = vshrl.u32 %v9525, 7
        %v9527 = vsub.s32 %v9524, %v9526
        %v9528 = vrot.slane %v9520, %v9527
        %v9530 = vunpack.c.l.s4 1983009808
        %v9531 = vunpack.c.0.s8 %v9530
        %v9532 = vlaneseq
        %v9533 = vshrl.u32 %v9532, 7
        %v9534 = vsub.s32 %v9531, %v9533
        %v9535 = vrot.slane %v9521, %v9534
        %v9536 = vcombine.low %v9528, %v9535
        %v9537 = vcombine.low %v9216, %v9217
        %v9538 = vcombine.low %v9218, %v9219
        %v9540 = vunpack.c.l.s4 1983009808
        %v9541 = vunpack.c.0.s8 %v9540
        %v9542 = vlaneseq
        %v9543 = vshrl.u32 %v9542, 7
        %v9544 = vsub.s32 %v9541, %v9543
        %v9545 = vrot.slane %v9537, %v9544
        %v9547 = vunpack.c.l.s4 1983009808
        %v9548 = vunpack.c.0.s8 %v9547
        %v9549 = vlaneseq
        %v9550 = vshrl.u32 %v9549, 7
        %v9551 = vsub.s32 %v9548, %v9550
        %v9552 = vrot.slane %v9538, %v9551
        %v9553 = vcombine.low %v9545, %v9552
        %v9554 = vcombine.low %v9220, %v9221
        %v9555 = vcombine.low %v9222, %v9223
        %v9557 = vunpack.c.l.s4 1983009808
        %v9558 = vunpack.c.0.s8 %v9557
        %v9559 = vlaneseq
        %v9560 = vshrl.u32 %v9559, 7
        %v9561 = vsub.s32 %v9558, %v9560
        %v9562 = vrot.slane %v9554, %v9561
        %v9564 = vunpack.c.l.s4 1983009808
        %v9565 = vunpack.c.0.s8 %v9564
        %v9566 = vlaneseq
        %v9567 = vshrl.u32 %v9566, 7
        %v9568 = vsub.s32 %v9565, %v9567
        %v9569 = vrot.slane %v9555, %v9568
        %v9570 = vcombine.low %v9562, %v9569
        %v9571 = vcombine.low %v9224, %v9225
        %v9572 = vcombine.low %v9226, %v9227
        %v9574 = vunpack.c.l.s4 1983009808
        %v9575 = vunpack.c.0.s8 %v9574
        %v9576 = vlaneseq
        %v9577 = vshrl.u32 %v9576, 7
        %v9578 = vsub.s32 %v9575, %v9577
        %v9579 = vrot.slane %v9571, %v9578
        %v9581 = vunpack.c.l.s4 1983009808
        %v9582 = vunpack.c.0.s8 %v9581
        %v9583 = vlaneseq
        %v9584 = vshrl.u32 %v9583, 7
        %v9585 = vsub.s32 %v9582, %v9584
        %v9586 = vrot.slane %v9572, %v9585
        %v9587 = vcombine.low %v9579, %v9586
        %v9588 = vcombine.low %v9228, %v9229
        %v9589 = vcombine.low %v9230, %v9231
        %v9591 = vunpack.c.l.s4 1983009808
        %v9592 = vunpack.c.0.s8 %v9591
        %v9593 = vlaneseq
        %v9594 = vshrl.u32 %v9593, 7
        %v9595 = vsub.s32 %v9592, %v9594
        %v9596 = vrot.slane %v9588, %v9595
        %v9598 = vunpack.c.l.s4 1983009808
        %v9599 = vunpack.c.0.s8 %v9598
        %v9600 = vlaneseq
        %v9601 = vshrl.u32 %v9600, 7
        %v9602 = vsub.s32 %v9599, %v9601
        %v9603 = vrot.slane %v9589, %v9602
        %v9604 = vcombine.low %v9596, %v9603
        %v9605 = vcombine.low %v9232, %v9233
        %v9606 = vcombine.low %v9234, %v9235
        %v9608 = vunpack.c.l.s4 1983009808
        %v9609 = vunpack.c.0.s8 %v9608
        %v9610 = vlaneseq
        %v9611 = vshrl.u32 %v9610, 7
        %v9612 = vsub.s32 %v9609, %v9611
        %v9613 = vrot.slane %v9605, %v9612
        %v9615 = vunpack.c.l.s4 1983009808
        %v9616 = vunpack.c.0.s8 %v9615
        %v9617 = vlaneseq
        %v9618 = vshrl.u32 %v9617, 7
        %v9619 = vsub.s32 %v9616, %v9618
        %v9620 = vrot.slane %v9606, %v9619
        %v9621 = vcombine.low %v9613, %v9620
        %v9622 = vcombine.low %v9236, %v9237
        %v9623 = vcombine.low %v9238, %v9239
        %v9625 = vunpack.c.l.s4 1983009808
        %v9626 = vunpack.c.0.s8 %v9625
        %v9627 = vlaneseq
        %v9628 = vshrl.u32 %v9627, 7
        %v9629 = vsub.s32 %v9626, %v9628
        %v9630 = vrot.slane %v9622, %v9629
        %v9632 = vunpack.c.l.s4 1983009808
        %v9633 = vunpack.c.0.s8 %v9632
        %v9634 = vlaneseq
        %v9635 = vshrl.u32 %v9634, 7
        %v9636 = vsub.s32 %v9633, %v9635
        %v9637 = vrot.slane %v9623, %v9636
        %v9638 = vcombine.low %v9630, %v9637
        %v9639 = vcombine.low %v9240, %v9241
        %v9640 = vcombine.low %v9242, %v9243
        %v9642 = vunpack.c.l.s4 1983009808
        %v9643 = vunpack.c.0.s8 %v9642
        %v9644 = vlaneseq
        %v9645 = vshrl.u32 %v9644, 7
        %v9646 = vsub.s32 %v9643, %v9645
        %v9647 = vrot.slane %v9639, %v9646
        %v9649 = vunpack.c.l.s4 1983009808
        %v9650 = vunpack.c.0.s8 %v9649
        %v9651 = vlaneseq
        %v9652 = vshrl.u32 %v9651, 7
        %v9653 = vsub.s32 %v9650, %v9652
        %v9654 = vrot.slane %v9640, %v9653
        %v9655 = vcombine.low %v9647, %v9654
        %v9656 = vcombine.low %v9244, %v9245
        %v9657 = vcombine.low %v9246, %v9247
        %v9659 = vunpack.c.l.s4 1983009808
        %v9660 = vunpack.c.0.s8 %v9659
        %v9661 = vlaneseq
        %v9662 = vshrl.u32 %v9661, 7
        %v9663 = vsub.s32 %v9660, %v9662
        %v9664 = vrot.slane %v9656, %v9663
        %v9666 = vunpack.c.l.s4 1983009808
        %v9667 = vunpack.c.0.s8 %v9666
        %v9668 = vlaneseq
        %v9669 = vshrl.u32 %v9668, 7
        %v9670 = vsub.s32 %v9667, %v9669
        %v9671 = vrot.slane %v9657, %v9670
        %v9672 = vcombine.low %v9664, %v9671
        %v9673 = vcombine.low %v9248, %v9249
        %v9674 = vcombine.low %v9250, %v9251
        %v9676 = vunpack.c.l.s4 1983009808
        %v9677 = vunpack.c.0.s8 %v9676
        %v9678 = vlaneseq
        %v9679 = vshrl.u32 %v9678, 7
        %v9680 = vsub.s32 %v9677, %v9679
        %v9681 = vrot.slane %v9673, %v9680
        %v9683 = vunpack.c.l.s4 1983009808
        %v9684 = vunpack.c.0.s8 %v9683
        %v9685 = vlaneseq
        %v9686 = vshrl.u32 %v9685, 7
        %v9687 = vsub.s32 %v9684, %v9686
        %v9688 = vrot.slane %v9674, %v9687
        %v9689 = vcombine.low %v9681, %v9688
        %v9690 = vcombine.low %v9252, %v9253
        %v9691 = vcombine.low %v9254, %v9255
        %v9693 = vunpack.c.l.s4 1983009808
        %v9694 = vunpack.c.0.s8 %v9693
        %v9695 = vlaneseq
        %v9696 = vshrl.u32 %v9695, 7
        %v9697 = vsub.s32 %v9694, %v9696
        %v9698 = vrot.slane %v9690, %v9697
        %v9700 = vunpack.c.l.s4 1983009808
        %v9701 = vunpack.c.0.s8 %v9700
        %v9702 = vlaneseq
        %v9703 = vshrl.u32 %v9702, 7
        %v9704 = vsub.s32 %v9701, %v9703
        %v9705 = vrot.slane %v9691, %v9704
        %v9706 = vcombine.low %v9698, %v9705
        %v9707 = vcombine.low %v9256, %v9257
        %v9708 = vcombine.low %v9258, %v9259
        %v9710 = vunpack.c.l.s4 1983009808
        %v9711 = vunpack.c.0.s8 %v9710
        %v9712 = vlaneseq
        %v9713 = vshrl.u32 %v9712, 7
        %v9714 = vsub.s32 %v9711, %v9713
        %v9715 = vrot.slane %v9707, %v9714
        %v9717 = vunpack.c.l.s4 1983009808
        %v9718 = vunpack.c.0.s8 %v9717
        %v9719 = vlaneseq
        %v9720 = vshrl.u32 %v9719, 7
        %v9721 = vsub.s32 %v9718, %v9720
        %v9722 = vrot.slane %v9708, %v9721
        %v9723 = vcombine.low %v9715, %v9722
        %v9724 = vcombine.low %v9260, %v9261
        %v9725 = vcombine.low %v9262, %v9263
        %v9727 = vunpack.c.l.s4 1983009808
        %v9728 = vunpack.c.0.s8 %v9727
        %v9729 = vlaneseq
        %v9730 = vshrl.u32 %v9729, 7
        %v9731 = vsub.s32 %v9728, %v9730
        %v9732 = vrot.slane %v9724, %v9731
        %v9734 = vunpack.c.l.s4 1983009808
        %v9735 = vunpack.c.0.s8 %v9734
        %v9736 = vlaneseq
        %v9737 = vshrl.u32 %v9736, 7
        %v9738 = vsub.s32 %v9735, %v9737
        %v9739 = vrot.slane %v9725, %v9738
        %v9740 = vcombine.low %v9732, %v9739
        %v9741 = vcombine.low %v9264, %v9265
        %v9742 = vcombine.low %v9266, %v9267
        %v9744 = vunpack.c.l.s4 1983009808
        %v9745 = vunpack.c.0.s8 %v9744
        %v9746 = vlaneseq
        %v9747 = vshrl.u32 %v9746, 7
        %v9748 = vsub.s32 %v9745, %v9747
        %v9749 = vrot.slane %v9741, %v9748
        %v9751 = vunpack.c.l.s4 1983009808
        %v9752 = vunpack.c.0.s8 %v9751
        %v9753 = vlaneseq
        %v9754 = vshrl.u32 %v9753, 7
        %v9755 = vsub.s32 %v9752, %v9754
        %v9756 = vrot.slane %v9742, %v9755
        %v9757 = vcombine.low %v9749, %v9756
        %v9758 = vcombine.low %v9268, %v9269
        %v9759 = vcombine.low %v9270, %v9271
        %v9761 = vunpack.c.l.s4 1983009808
        %v9762 = vunpack.c.0.s8 %v9761
        %v9763 = vlaneseq
        %v9764 = vshrl.u32 %v9763, 7
        %v9765 = vsub.s32 %v9762, %v9764
        %v9766 = vrot.slane %v9758, %v9765
        %v9768 = vunpack.c.l.s4 1983009808
        %v9769 = vunpack.c.0.s8 %v9768
        %v9770 = vlaneseq
        %v9771 = vshrl.u32 %v9770, 7
        %v9772 = vsub.s32 %v9769, %v9771
        %v9773 = vrot.slane %v9759, %v9772
        %v9774 = vcombine.low %v9766, %v9773
        %v9775 = vcombine.low %v9272, %v9273
        %v9776 = vcombine.low %v9274, %v9275
        %v9778 = vunpack.c.l.s4 1983009808
        %v9779 = vunpack.c.0.s8 %v9778
        %v9780 = vlaneseq
        %v9781 = vshrl.u32 %v9780, 7
        %v9782 = vsub.s32 %v9779, %v9781
        %v9783 = vrot.slane %v9775, %v9782
        %v9785 = vunpack.c.l.s4 1983009808
        %v9786 = vunpack.c.0.s8 %v9785
        %v9787 = vlaneseq
        %v9788 = vshrl.u32 %v9787, 7
        %v9789 = vsub.s32 %v9786, %v9788
        %v9790 = vrot.slane %v9776, %v9789
        %v9791 = vcombine.low %v9783, %v9790
        %v9792 = vcombine.low %v9276, %v9277
        %v9793 = vcombine.low %v9278, %v9279
        %v9795 = vunpack.c.l.s4 1983009808
        %v9796 = vunpack.c.0.s8 %v9795
        %v9797 = vlaneseq
        %v9798 = vshrl.u32 %v9797, 7
        %v9799 = vsub.s32 %v9796, %v9798
        %v9800 = vrot.slane %v9792, %v9799
        %v9802 = vunpack.c.l.s4 1983009808
        %v9803 = vunpack.c.0.s8 %v9802
        %v9804 = vlaneseq
        %v9805 = vshrl.u32 %v9804, 7
        %v9806 = vsub.s32 %v9803, %v9805
        %v9807 = vrot.slane %v9793, %v9806
        %v9808 = vcombine.low %v9800, %v9807
        %v9809 = vcombine.low %v9280, %v9281
        %v9810 = vcombine.low %v9282, %v9283
        %v9812 = vunpack.c.l.s4 1983009808
        %v9813 = vunpack.c.0.s8 %v9812
        %v9814 = vlaneseq
        %v9815 = vshrl.u32 %v9814, 7
        %v9816 = vsub.s32 %v9813, %v9815
        %v9817 = vrot.slane %v9809, %v9816
        %v9819 = vunpack.c.l.s4 1983009808
        %v9820 = vunpack.c.0.s8 %v9819
        %v9821 = vlaneseq
        %v9822 = vshrl.u32 %v9821, 7
        %v9823 = vsub.s32 %v9820, %v9822
        %v9824 = vrot.slane %v9810, %v9823
        %v9825 = vcombine.low %v9817, %v9824
        %v9826 = vcombine.low %v9284, %v9285
        %v9827 = vcombine.low %v9286, %v9287
        %v9829 = vunpack.c.l.s4 1983009808
        %v9830 = vunpack.c.0.s8 %v9829
        %v9831 = vlaneseq
        %v9832 = vshrl.u32 %v9831, 7
        %v9833 = vsub.s32 %v9830, %v9832
        %v9834 = vrot.slane %v9826, %v9833
        %v9836 = vunpack.c.l.s4 1983009808
        %v9837 = vunpack.c.0.s8 %v9836
        %v9838 = vlaneseq
        %v9839 = vshrl.u32 %v9838, 7
        %v9840 = vsub.s32 %v9837, %v9839
        %v9841 = vrot.slane %v9827, %v9840
        %v9842 = vcombine.low %v9834, %v9841
        %v9843 = vcombine.low %v9288, %v9289
        %v9844 = vcombine.low %v9290, %v9291
        %v9846 = vunpack.c.l.s4 1983009808
        %v9847 = vunpack.c.0.s8 %v9846
        %v9848 = vlaneseq
        %v9849 = vshrl.u32 %v9848, 7
        %v9850 = vsub.s32 %v9847, %v9849
        %v9851 = vrot.slane %v9843, %v9850
        %v9853 = vunpack.c.l.s4 1983009808
        %v9854 = vunpack.c.0.s8 %v9853
        %v9855 = vlaneseq
        %v9856 = vshrl.u32 %v9855, 7
        %v9857 = vsub.s32 %v9854, %v9856
        %v9858 = vrot.slane %v9844, %v9857
        %v9859 = vcombine.low %v9851, %v9858
        %v9860 = vcombine.low %v9292, %v9293
        %v9861 = vcombine.low %v9294, %v9295
        %v9863 = vunpack.c.l.s4 1983009808
        %v9864 = vunpack.c.0.s8 %v9863
        %v9865 = vlaneseq
        %v9866 = vshrl.u32 %v9865, 7
        %v9867 = vsub.s32 %v9864, %v9866
        %v9868 = vrot.slane %v9860, %v9867
        %v9870 = vunpack.c.l.s4 1983009808
        %v9871 = vunpack.c.0.s8 %v9870
        %v9872 = vlaneseq
        %v9873 = vshrl.u32 %v9872, 7
        %v9874 = vsub.s32 %v9871, %v9873
        %v9875 = vrot.slane %v9861, %v9874
        %v9876 = vcombine.low %v9868, %v9875
        %v9877 = vcombine.low %v9296, %v9297
        %v9878 = vcombine.low %v9298, %v9299
        %v9880 = vunpack.c.l.s4 1983009808
        %v9881 = vunpack.c.0.s8 %v9880
        %v9882 = vlaneseq
        %v9883 = vshrl.u32 %v9882, 7
        %v9884 = vsub.s32 %v9881, %v9883
        %v9885 = vrot.slane %v9877, %v9884
        %v9887 = vunpack.c.l.s4 1983009808
        %v9888 = vunpack.c.0.s8 %v9887
        %v9889 = vlaneseq
        %v9890 = vshrl.u32 %v9889, 7
        %v9891 = vsub.s32 %v9888, %v9890
        %v9892 = vrot.slane %v9878, %v9891
        %v9893 = vcombine.low %v9885, %v9892
        %v9894 = vcombine.low %v9300, %v9301
        %v9895 = vcombine.low %v9302, %v9303
        %v9897 = vunpack.c.l.s4 1983009808
        %v9898 = vunpack.c.0.s8 %v9897
        %v9899 = vlaneseq
        %v9900 = vshrl.u32 %v9899, 7
        %v9901 = vsub.s32 %v9898, %v9900
        %v9902 = vrot.slane %v9894, %v9901
        %v9904 = vunpack.c.l.s4 1983009808
        %v9905 = vunpack.c.0.s8 %v9904
        %v9906 = vlaneseq
        %v9907 = vshrl.u32 %v9906, 7
        %v9908 = vsub.s32 %v9905, %v9907
        %v9909 = vrot.slane %v9895, %v9908
        %v9910 = vcombine.low %v9902, %v9909
        %v9911 = vcombine.low %v9304, %v9305
        %v9912 = vcombine.low %v9306, %v9307
        %v9914 = vunpack.c.l.s4 1983009808
        %v9915 = vunpack.c.0.s8 %v9914
        %v9916 = vlaneseq
        %v9917 = vshrl.u32 %v9916, 7
        %v9918 = vsub.s32 %v9915, %v9917
        %v9919 = vrot.slane %v9911, %v9918
        %v9921 = vunpack.c.l.s4 1983009808
        %v9922 = vunpack.c.0.s8 %v9921
        %v9923 = vlaneseq
        %v9924 = vshrl.u32 %v9923, 7
        %v9925 = vsub.s32 %v9922, %v9924
        %v9926 = vrot.slane %v9912, %v9925
        %v9927 = vcombine.low %v9919, %v9926
        %v9928 = vcombine.low %v9308, %v9309
        %v9929 = vcombine.low %v9310, %v9311
        %v9931 = vunpack.c.l.s4 1983009808
        %v9932 = vunpack.c.0.s8 %v9931
        %v9933 = vlaneseq
        %v9934 = vshrl.u32 %v9933, 7
        %v9935 = vsub.s32 %v9932, %v9934
        %v9936 = vrot.slane %v9928, %v9935
        %v9938 = vunpack.c.l.s4 1983009808
        %v9939 = vunpack.c.0.s8 %v9938
        %v9940 = vlaneseq
        %v9941 = vshrl.u32 %v9940, 7
        %v9942 = vsub.s32 %v9939, %v9941
        %v9943 = vrot.slane %v9929, %v9942
        %v9944 = vcombine.low %v9936, %v9943
        %v9945 = vcombine.low %v9312, %v9313
        %v9946 = vcombine.low %v9314, %v9315
        %v9948 = vunpack.c.l.s4 1983009808
        %v9949 = vunpack.c.0.s8 %v9948
        %v9950 = vlaneseq
        %v9951 = vshrl.u32 %v9950, 7
        %v9952 = vsub.s32 %v9949, %v9951
        %v9953 = vrot.slane %v9945, %v9952
        %v9955 = vunpack.c.l.s4 1983009808
        %v9956 = vunpack.c.0.s8 %v9955
        %v9957 = vlaneseq
        %v9958 = vshrl.u32 %v9957, 7
        %v9959 = vsub.s32 %v9956, %v9958
        %v9960 = vrot.slane %v9946, %v9959
        %v9961 = vcombine.low %v9953, %v9960
        %v9962 = vcombine.low %v9316, %v9317
        %v9963 = vcombine.low %v9318, %v9319
        %v9965 = vunpack.c.l.s4 1983009808
        %v9966 = vunpack.c.0.s8 %v9965
        %v9967 = vlaneseq
        %v9968 = vshrl.u32 %v9967, 7
        %v9969 = vsub.s32 %v9966, %v9968
        %v9970 = vrot.slane %v9962, %v9969
        %v9972 = vunpack.c.l.s4 1983009808
        %v9973 = vunpack.c.0.s8 %v9972
        %v9974 = vlaneseq
        %v9975 = vshrl.u32 %v9974, 7
        %v9976 = vsub.s32 %v9973, %v9975
        %v9977 = vrot.slane %v9963, %v9976
        %v9978 = vcombine.low %v9970, %v9977
        %v9979 = vcombine.low %v9320, %v9321
        %v9980 = vcombine.low %v9322, %v9323
        %v9982 = vunpack.c.l.s4 1983009808
        %v9983 = vunpack.c.0.s8 %v9982
        %v9984 = vlaneseq
        %v9985 = vshrl.u32 %v9984, 7
        %v9986 = vsub.s32 %v9983, %v9985
        %v9987 = vrot.slane %v9979, %v9986
        %v9989 = vunpack.c.l.s4 1983009808
        %v9990 = vunpack.c.0.s8 %v9989
        %v9991 = vlaneseq
        %v9992 = vshrl.u32 %v9991, 7
        %v9993 = vsub.s32 %v9990, %v9992
        %v9994 = vrot.slane %v9980, %v9993
        %v9995 = vcombine.low %v9987, %v9994
        %10028 = vxpose.xlu0.b32.start [1/16] %v9468, 128
        %10029 = vxpose.xlu0.b32.cont [2/16] %v9485, 128
        %10030 = vxpose.xlu0.b32.cont [3/16] %v9502, 128
        %10031 = vxpose.xlu0.b32.cont [4/16] %v9519, 128
        %10032 = vxpose.xlu0.b32.cont [5/16] %v9536, 128
        %10033 = vxpose.xlu0.b32.cont [6/16] %v9553, 128
        %10034 = vxpose.xlu0.b32.cont [7/16] %v9570, 128
        %10035 = vxpose.xlu0.b32.cont [8/16] %v9587, 128
        %10036 = vxpose.xlu0.b32.cont [9/16] %v9604, 128
        %10037 = vxpose.xlu0.b32.cont [10/16] %v9621, 128
        %10038 = vxpose.xlu0.b32.cont [11/16] %v9638, 128
        %10039 = vxpose.xlu0.b32.cont [12/16] %v9655, 128
        %10040 = vxpose.xlu0.b32.cont [13/16] %v9672, 128
        %10041 = vxpose.xlu0.b32.cont [14/16] %v9689, 128
        %10042 = vxpose.xlu0.b32.cont [15/16] %v9706, 128
        %10043 = vxpose.xlu0.b32.end [16/16] %v9723, 128
        %v10044 = vpop.trf.xlu0
        %v10045 = vpop.trf.xlu0
        %v10046 = vpop.trf.xlu0
        %v10047 = vpop.trf.xlu0
        %v10048 = vpop.trf.xlu0
        %v10049 = vpop.trf.xlu0
        %v10050 = vpop.trf.xlu0
        %v10051 = vpop.trf.xlu0
        %v10052 = vpop.trf.xlu0
        %v10053 = vpop.trf.xlu0
        %v10054 = vpop.trf.xlu0
        %v10055 = vpop.trf.xlu0
        %v10056 = vpop.trf.xlu0
        %v10057 = vpop.trf.xlu0
        %v10058 = vpop.trf.xlu0
        %v10059 = vpop.trf.xlu0
        %10060 = vxpose.xlu0.b32.start [1/16] %v9740, 128
        %10061 = vxpose.xlu0.b32.cont [2/16] %v9757, 128
        %10062 = vxpose.xlu0.b32.cont [3/16] %v9774, 128
        %10063 = vxpose.xlu0.b32.cont [4/16] %v9791, 128
        %10064 = vxpose.xlu0.b32.cont [5/16] %v9808, 128
        %10065 = vxpose.xlu0.b32.cont [6/16] %v9825, 128
        %10066 = vxpose.xlu0.b32.cont [7/16] %v9842, 128
        %10067 = vxpose.xlu0.b32.cont [8/16] %v9859, 128
        %10068 = vxpose.xlu0.b32.cont [9/16] %v9876, 128
        %10069 = vxpose.xlu0.b32.cont [10/16] %v9893, 128
        %10070 = vxpose.xlu0.b32.cont [11/16] %v9910, 128
        %10071 = vxpose.xlu0.b32.cont [12/16] %v9927, 128
        %10072 = vxpose.xlu0.b32.cont [13/16] %v9944, 128
        %10073 = vxpose.xlu0.b32.cont [14/16] %v9961, 128
        %10074 = vxpose.xlu0.b32.cont [15/16] %v9978, 128
        %10075 = vxpose.xlu0.b32.end [16/16] %v9995, 128
        %v10076 = vpop.trf.xlu0
        %v10077 = vpop.trf.xlu0
        %v10078 = vpop.trf.xlu0
        %v10079 = vpop.trf.xlu0
        %v10080 = vpop.trf.xlu0
        %v10081 = vpop.trf.xlu0
        %v10082 = vpop.trf.xlu0
        %v10083 = vpop.trf.xlu0
        %v10084 = vpop.trf.xlu0
        %v10085 = vpop.trf.xlu0
        %v10086 = vpop.trf.xlu0
        %v10087 = vpop.trf.xlu0
        %v10088 = vpop.trf.xlu0
        %v10089 = vpop.trf.xlu0
        %v10090 = vpop.trf.xlu0
        %v10091 = vpop.trf.xlu0
        %s10092 = scalar_lea.vmem %s177, 32 [#allocation5]
        %10093 = vst [vmem:[%s10092] sm:$0xff] %v10044
        %10094 = vst [vmem:[%s10092 + $0x8] sm:$0xff] %v10076
        %10095 = vst [vmem:[%s10092 + $0x10] sm:$0xff] %v10045
        %10096 = vst [vmem:[%s10092 + $0x18] sm:$0xff] %v10077
        %10097 = vst [vmem:[%s10092 + $0x40] sm:$0xff] %v10046
        %10098 = vst [vmem:[%s10092 + $0x48] sm:$0xff] %v10078
        %10099 = vst [vmem:[%s10092 + $0x50] sm:$0xff] %v10047
        %10100 = vst [vmem:[%s10092 + $0x58] sm:$0xff] %v10079
        %10101 = vst [vmem:[%s10092 + $0x80] sm:$0xff] %v10048
        %10102 = vst [vmem:[%s10092 + $0x88] sm:$0xff] %v10080
        %10103 = vst [vmem:[%s10092 + $0x90] sm:$0xff] %v10049
        %10104 = vst [vmem:[%s10092 + $0x98] sm:$0xff] %v10081
        %10105 = vst [vmem:[%s10092 + $0xc0] sm:$0xff] %v10050
        %10106 = vst [vmem:[%s10092 + $0xc8] sm:$0xff] %v10082
        %10107 = vst [vmem:[%s10092 + $0xd0] sm:$0xff] %v10051
        %10108 = vst [vmem:[%s10092 + $0xd8] sm:$0xff] %v10083
        %s10109 = sand.u32 %s68, 1
        %s10110 = scalar_lea.sflag [#allocation4], %s10109
        %s10111 = sand.u32 %s68, 1
        %s10112 = smul.addr %s10111, 256
        %s10113 = scalar_lea.vmem [#allocation5], %s10112
        // Predicated region
        $region29: #{tpu_custom_call.1} parent=23 // pred_check
          %p10114 = pneg %p78
        $region30: #{tpu_custom_call.1} parent=23 // pred_check_branch
          %10116 = sbr.rel (%p10114) target = $region32
        $region31: #{tpu_custom_call.1} parent=23 // pred_region
          %s10117 = smul.u32 4, %s23
          %s10119 = ssub.s32 4096, 4096
          %10120 = vsyncadd %s10110, %s10119
          %s10121 = smul.addr %s10117, 8
          %s10122 = smul.addr %s22, 64
          %s10123 = sadd.s32 %s10121, %s10122
          %s10124 = smul.addr %s10123, 128
          %s10125 = scalar_lea.hbm %s1, %s10124
          %s10126 = sshll.u32 %s10113, 4
          %s10127 = int_to_ptr.vmem [resolvable:$true] %s10126
          %10132 = dma.vmem_to_hbm [thread:$0]  %s10127, 4096, %s10125, %s10110, 256, 256, 16
        $region32: #{tpu_custom_call.1} parent=23 // pred_fallthru
          _
      $region24: #{tpu_custom_call.1} parent=5 // pred_fallthru
        _
      %p10133 = scmp.le.s32.totalorder 2, %s13
      // Predicated region
      $region33: #{tpu_custom_call.1} parent=5 // pred_check
        %p10134 = pneg %p10133
      $region34: #{tpu_custom_call.1} parent=5 // pred_check_branch
        %10136 = sbr.rel (%p10134) target = $region36
      $region35: #{tpu_custom_call.1} parent=5 // pred_region
        %s10137 = ssub.s32 %s13, 2
        // Predicated region
        $region37: #{tpu_custom_call.1} parent=35 // pred_check
          %p10138 = pneg %p84
        $region38: #{tpu_custom_call.1} parent=35 // pred_check_branch
          %10140 = sbr.rel (%p10138) target = $region40
        $region39: #{tpu_custom_call.1} parent=35 // pred_region
          %s10141 = sand.u32 %s69, 1
          %s10142 = scalar_lea.sflag [#allocation4], %s10141
          %s10143 = sand.u32 %s69, 1
          %s10144 = smul.addr %s10143, 256
          %s10145 = scalar_lea.vmem [#allocation5], %s10144
          %10146 = dma.done %s10142, 4096
        $region40: #{tpu_custom_call.1} parent=35 // pred_fallthru
          _
      $region36: #{tpu_custom_call.1} parent=5 // pred_fallthru
        _
    $region6: #{tpu_custom_call.1} parent=1 // loop_footer
      %s17 = sadd.s32 1, %s13
    $region7: #{tpu_custom_call.1} parent=1 // loop_footer_branch
      %12 = sbr.rel target = $region3
    $region8: #{tpu_custom_call.1} parent=1 // loop_exit
      _
    %10147 = vsyncpa [#allocation3], 1
    %s10148 = scalar_lea.sflag [#allocation3], 1
    %10149 = vsyncpa %s10148, 1
    %10150 = vsyncpa [#allocation4], 1
    %s10151 = scalar_lea.sflag [#allocation4], 1
    %10152 = vsyncpa %s10151, 1

</llo_original>
